<compile_context>
chip_gen: v5e
topology: v5e:2x2
jax: 0.10.0
libtpu: 0.0.40
codegen_flags: <defaults>
</compile_context>

<pallas_src>
import functools

import jax
import jax.numpy as jnp
from jax.experimental import pallas as pl
from jax.experimental.pallas import tpu as pltpu


# ---------------------------------------------------------------------------
# Fused Pallas kernel: conv1 -> conv2 -> fc1 -> fc2 -> {mu | log_std}
# ---------------------------------------------------------------------------

def _fused_actor_kernel(p1_ref, xyz_ref,
                        w1c_ref, b1c_ref,
                        w2c_ref, b2c_ref,
                        wf1_ref, bf1_ref,
                        wf2a_ref, wf2b_ref, bf2_ref,
                        wh_ref, bh_ref,
                        out_ref,
                        c1_ref, flat_ref,
                        *, action_size, log_std_min, log_std_max):
    B, OH1, OW1, _ = p1_ref.shape          # conv1 output spatial grid
    OCP = w1c_ref.shape[1]                 # lane-padded channel width (128)
    KH2 = KW2 = 2                          # conv2 kernel (2x2, stride 1)
    OH2, OW2 = OH1 - KH2 + 1, OW1 - KW2 + 1

    # --- conv1 (4x4, stride 2) + ReLU ------------------------------------
    # im2col patches come in from the wrapper as (B, OH1, OW1, KH*KW*C);
    # one small matmul per output row-slab, stored NHWC into VMEM scratch.
    w1c = w1c_ref[...]
    b1c = b1c_ref[...]
    for b in range(B):
        for i in range(OH1):
            acts = jnp.dot(p1_ref[b, i], w1c,
                           preferred_element_type=jnp.float32)     # (OW1, OCP)
            c1_ref[b, i] = jnp.maximum(acts + b1c, 0.0)

    # --- conv2 (2x2, stride 1) + ReLU, fused with the fc1 flatten ---------
    # Per output position: gather the 4 taps from the c1 scratch (lane-dense
    # (B, OCP) loads), one (B, 4*OCP) x (4*OCP, OCP) matmul, and store the
    # result as a 128-aligned lane slice of the flattened fc1 input.
    w2c = w2c_ref[...]
    b2c = b2c_ref[...]
    for i in range(OH2):
        for j in range(OW2):
            p2 = jnp.concatenate(
                [c1_ref[:, i + ki, j + kj, :]
                 for ki in range(KH2) for kj in range(KW2)],
                axis=-1)                                            # (B, 4*OCP)
            c2 = jnp.maximum(
                jnp.dot(p2, w2c, preferred_element_type=jnp.float32) + b2c,
                0.0)                                                # (B, OCP)
            s = i * OW2 + j
            flat_ref[:, s * OCP:(s + 1) * OCP] = c2

    # --- MLP head: fc1 -> fc2(concat via split weights) -> mu | log_std ---
    flat = flat_ref[...]                                            # (B, OH2*OW2*OCP)
    h1 = jnp.maximum(
        jnp.dot(flat, wf1_ref[...], preferred_element_type=jnp.float32)
        + bf1_ref[...], 0.0)                                        # (B, OCP)
    # fc2 over concat([h1, xyz]) == h1 @ W2[:hidden] + xyz @ W2[hidden:]
    pre2 = (jnp.dot(h1, wf2a_ref[...], preferred_element_type=jnp.float32)
            + jnp.dot(xyz_ref[...], wf2b_ref[...],
                      preferred_element_type=jnp.float32)
            + bf2_ref[...])
    h2 = jnp.maximum(pre2, 0.0)                                     # (B, OCP)
    # merged heads: columns [0, A) = mu, [A, 2A) = log_std, rest = zero pad
    head = (jnp.dot(h2, wh_ref[...], preferred_element_type=jnp.float32)
            + bh_ref[...])
    col = jax.lax.broadcasted_iota(jnp.int32, head.shape, 1)
    is_log_std = (col >= action_size) & (col < 2 * action_size)
    out_ref[...] = jnp.where(is_log_std,
                             jnp.clip(head, log_std_min, log_std_max),
                             head)


# ---------------------------------------------------------------------------
# Parameter construction / one-time kernel-layout preparation
# ---------------------------------------------------------------------------

def conv_out_hw(h, w, kh, kw, stride):
    return (h - kh) // stride + 1, (w - kw) // stride + 1


def init_params(key, input_dims, action_size, hidden_size=32,
                num_rel_positions=2, init_w=0.003):
    """Deterministic synthetic init matching the PyTorch module's shapes."""
    c_img = input_dims[0] - 1
    H, W = input_dims[1], input_dims[2]
    h1, w1 = conv_out_hw(H, W, 4, 4, 2)
    h2, w2 = conv_out_hw(h1, w1, 2, 2, 1)
    fc_in = 64 * h2 * w2
    hid2 = hidden_size + num_rel_positions

    ks = jax.random.split(key, 12)
    u = lambda k, shape, lim: jax.random.uniform(k, shape, jnp.float32, -lim, lim)

    return {
        # conv weights in PyTorch (OC, IC, KH, KW) layout
        "conv1_w": u(ks[0], (32, c_img, 4, 4), 1.0 / jnp.sqrt(c_img * 16.0)),
        "conv1_b": u(ks[1], (32,), 1.0 / jnp.sqrt(c_img * 16.0)),
        "conv2_w": u(ks[2], (64, 32, 2, 2), 1.0 / jnp.sqrt(32 * 4.0)),
        "conv2_b": u(ks[3], (64,), 1.0 / jnp.sqrt(32 * 4.0)),
        # dense weights stored as (in_features, out_features)
        "w1": u(ks[4], (fc_in, hidden_size), 1.0 / jnp.sqrt(float(hidden_size))),
        "b1": u(ks[5], (hidden_size,), 1.0 / jnp.sqrt(float(fc_in))),
        "w2": u(ks[6], (hid2, hid2), 1.0 / jnp.sqrt(float(hid2))),
        "b2": u(ks[7], (hid2,), 1.0 / jnp.sqrt(float(hid2))),
        "wmu": u(ks[8], (hid2, action_size), init_w),
        "bmu": u(ks[9], (action_size,), init_w),
        "wls": u(ks[10], (hid2, action_size), init_w),
        "bls": u(ks[11], (action_size,), init_w),
    }


def prepare_kernel_params(params, input_dims, pad=128):
    """One-time re-layout of the PyTorch-shaped weights into lane-dense,
    zero-padded matrices the fused kernel consumes (all padding is exact)."""
    f32 = jnp.float32
    OCP = pad
    H, W = input_dims[1], input_dims[2]
    OH1, OW1 = conv_out_hw(H, W, 4, 4, 2)
    OH2, OW2 = conv_out_hw(OH1, OW1, 2, 2, 1)
    oc1 = params["conv1_w"].shape[0]          # 32
    oc2 = params["conv2_w"].shape[0]          # 64
    hidden = params["w1"].shape[1]            # 32
    hid2 = params["w2"].shape[0]              # 34
    A = params["wmu"].shape[1]

    def padc(x, n):                           # pad last dim up to n with zeros
        return jnp.pad(x.astype(f32),
                       [(0, 0)] * (x.ndim - 1) + [(0, n - x.shape[-1])])

    # conv1: (OC, IC, KH, KW) -> (KH*KW*IC, OCP); row order = (kh, kw, c)
    w1c = params["conv1_w"].astype(f32).transpose(2, 3, 1, 0).reshape(-1, oc1)
    w1c = padc(w1c, OCP)
    b1c = padc(params["conv1_b"].astype(f32)[None, :], OCP)

    # conv2: (OC2, OC1, 2, 2) -> (2*2*OCP, OCP) with zero rows for padded c_in
    w2c = params["conv2_w"].astype(f32).transpose(2, 3, 1, 0)       # (2,2,32,64)
    w2c = jnp.pad(w2c, ((0, 0), (0, 0), (0, OCP - oc1), (0, OCP - oc2)))
    w2c = w2c.reshape(-1, OCP)
    b2c = padc(params["conv2_b"].astype(f32)[None, :], OCP)

    # fc1: permute rows from PyTorch NCHW flatten (c, i, j) to the kernel's
    # channels-last-padded flatten ((i*OW2 + j)*OCP + c); pad cols to OCP.
    wf1 = params["w1"].astype(f32).reshape(oc2, OH2, OW2, hidden)
    wf1 = wf1.transpose(1, 2, 0, 3)                                  # (i, j, c, h)
    wf1 = jnp.pad(wf1, ((0, 0), (0, 0), (0, OCP - oc2), (0, OCP - hidden)))
    wf1 = wf1.reshape(OH2 * OW2 * OCP, OCP)
    bf1 = padc(params["b1"].astype(f32)[None, :], OCP)

    # fc2 split to avoid an in-kernel concat: rows [:hidden] act on h1,
    # rows [hidden:] act on xyz; columns padded to OCP.
    w2 = params["w2"].astype(f32)
    wf2a = jnp.pad(w2[:hidden, :], ((0, OCP - hidden), (0, OCP - hid2)))
    wf2b = padc(w2[hidden:, :], OCP)
    bf2 = padc(params["b2"].astype(f32)[None, :], OCP)

    # heads merged: columns [0, A) = mu, [A, 2A) = log_std
    wh = jnp.concatenate([params["wmu"].astype(f32),
                          params["wls"].astype(f32)], axis=1)        # (hid2, 2A)
    wh = jnp.pad(wh, ((0, OCP - hid2), (0, OCP - 2 * A)))
    bh = padc(jnp.concatenate([params["bmu"], params["bls"]]).astype(f32)[None, :],
              OCP)

    return {"w1c": w1c, "b1c": b1c, "w2c": w2c, "b2c": b2c,
            "wf1": wf1, "bf1": bf1, "wf2a": wf2a, "wf2b": wf2b, "bf2": bf2,
            "wh": wh, "bh": bh}


# ---------------------------------------------------------------------------
# Forward pass (single pallas_call)
# ---------------------------------------------------------------------------

@functools.partial(jax.jit,
                   static_argnames=("action_size", "log_std_min", "log_std_max"))
def actor_forward(kparams, state, *, action_size,
                  log_std_min=-20.0, log_std_max=2.0):
    """state: (B, C, H, W) float32 (NCHW, like the PyTorch module)."""
    state = state.astype(jnp.float32)
    B, C, H, W = state.shape
    OH1, OW1 = conv_out_hw(H, W, 4, 4, 2)
    OH2, OW2 = conv_out_hw(OH1, OW1, 2, 2, 1)
    OCP = kparams["w1c"].shape[1]
    A = action_size

    # conv1 im2col in channels-last order (kh, kw, c) -- pure XLA slicing glue.
    x = jnp.transpose(state[:, :-1, :, :], (0, 2, 3, 1))             # NHWC
    taps = [x[:, ki:ki + 2 * OH1:2, kj:kj + 2 * OW1:2, :]
            for ki in range(4) for kj in range(4)]
    p1 = jnp.concatenate(taps, axis=-1)                              # (B, OH1, OW1, 16*(C-1))
    xyz = jnp.stack([state[:, -1, 0, 0], state[:, -1, 0, 1]], axis=-1)

    kernel = functools.partial(_fused_actor_kernel,
                               action_size=A,
                               log_std_min=float(log_std_min),
                               log_std_max=float(log_std_max))

    flops = 2 * B * (OH1 * OW1 * p1.shape[-1] * OCP         # conv1
                     + OH2 * OW2 * 4 * OCP * OCP            # conv2
                     + OH2 * OW2 * OCP * OCP                # fc1
                     + OCP * OCP + 2 * OCP                  # fc2
                     + OCP * OCP)                           # heads
    bytes_accessed = (sum(int(v.size) * 4 for v in kparams.values())
                      + int(p1.size) * 4 + int(xyz.size) * 4 + B * OCP * 4)

    vmem = pl.BlockSpec(memory_space=pltpu.MemorySpace.VMEM)
    out = pl.pallas_call(
        kernel,
        out_shape=jax.ShapeDtypeStruct((B, OCP), jnp.float32),
        in_specs=[vmem] * 13,
        out_specs=vmem,
        scratch_shapes=[
            pltpu.VMEM((B, OH1, OW1, OCP), jnp.float32),    # conv1 activations
            pltpu.VMEM((B, OH2 * OW2 * OCP), jnp.float32),  # flattened fc1 input
        ],
        cost_estimate=pl.CostEstimate(flops=flops, transcendentals=0,
                                      bytes_accessed=bytes_accessed),
    )(p1, xyz,
      kparams["w1c"], kparams["b1c"],
      kparams["w2c"], kparams["b2c"],
      kparams["wf1"], kparams["bf1"],
      kparams["wf2a"], kparams["wf2b"], kparams["bf2"],
      kparams["wh"], kparams["bh"])

    mu = out[:, :A]
    log_std = out[:, A:2 * A]
    return mu, log_std


# ---------------------------------------------------------------------------
# Pure-JAX reference (correctness check against the PyTorch semantics)
# ---------------------------------------------------------------------------

def actor_forward_ref(params, state, log_std_min=-20.0, log_std_max=2.0):
    state = state.astype(jnp.float32)
    image_state = state[:, 0:-1, :, :]

    def conv_ref(x, w, b, stride):
        y = jax.lax.conv_general_dilated(
            x, w, window_strides=(stride, stride), padding="VALID",
            dimension_numbers=("NCHW", "OIHW", "NCHW"))
        return jnp.maximum(y + b[None, :, None, None], 0.0)

    c1 = conv_ref(image_state, params["conv1_w"], params["conv1_b"], 2)
    c2 = conv_ref(c1, params["conv2_w"], params["conv2_b"], 1)
    flat = c2.reshape(c2.shape[0], -1)
    h1 = jnp.maximum(flat @ params["w1"] + params["b1"], 0.0)
    xyz = jnp.stack([state[:, -1, 0, 0], state[:, -1, 0, 1]], axis=-1)
    cat = jnp.concatenate([h1, xyz], axis=1)
    h2 = jnp.maximum(cat @ params["w2"] + params["b2"], 0.0)
    mu = h2 @ params["wmu"] + params["bmu"]
    ls = jnp.clip(h2 @ params["wls"] + params["bls"], log_std_min, log_std_max)
    return mu, ls


# ---------------------------------------------------------------------------

if __name__ == "__main__":
    key = jax.random.PRNGKey(0)
    k_param, k_state = jax.random.split(key)

    B = 2
    input_dims = (4, 16, 16)    # (C, H, W): last channel holds the rel-position scalars
    action_size = 4

    params = init_params(k_param, input_dims, action_size,
                         hidden_size=32, num_rel_positions=2)
    kparams = prepare_kernel_params(params, input_dims)
    state = jax.random.normal(k_state, (B,) + input_dims, dtype=jnp.float32)

    mu, log_std = actor_forward(kparams, state, action_size=action_size)
    jax.block_until_ready((mu, log_std))

    mu_ref, log_std_ref = actor_forward_ref(params, state)
    assert mu.shape == (B, action_size) and log_std.shape == (B, action_size)
    assert jnp.allclose(mu, mu_ref, rtol=1e-3, atol=1e-3)
    assert jnp.allclose(log_std, log_std_ref, rtol=1e-3, atol=1e-3)

    print("KERNEL_OK")
</pallas_src>

<mosaic_0001>
module attributes {stable_mosaic.version = 11 : i64} {
  func.func @_fused_actor_kernel(%arg0: memref<2x7x7x48xf32, #tpu.memory_space<vmem>>, %arg1: memref<2x2xf32, #tpu.memory_space<vmem>>, %arg2: memref<48x128xf32, #tpu.memory_space<vmem>>, %arg3: memref<1x128xf32, #tpu.memory_space<vmem>>, %arg4: memref<512x128xf32, #tpu.memory_space<vmem>>, %arg5: memref<1x128xf32, #tpu.memory_space<vmem>>, %arg6: memref<4608x128xf32, #tpu.memory_space<vmem>>, %arg7: memref<1x128xf32, #tpu.memory_space<vmem>>, %arg8: memref<128x128xf32, #tpu.memory_space<vmem>>, %arg9: memref<2x128xf32, #tpu.memory_space<vmem>>, %arg10: memref<1x128xf32, #tpu.memory_space<vmem>>, %arg11: memref<128x128xf32, #tpu.memory_space<vmem>>, %arg12: memref<1x128xf32, #tpu.memory_space<vmem>>, %arg13: memref<2x128xf32, #tpu.memory_space<vmem>>, %arg14: memref<2x7x7x128xf32, #tpu.memory_space<vmem>>, %arg15: memref<2x4608xf32, #tpu.memory_space<vmem>>) attributes {dimension_semantics = [], scalar_prefetch = 0 : i64, scratch_operands = 2 : i64, tpu.core_type = #tpu.core_type<tc>} {
    %c0 = arith.constant 0 : index
    %c0_0 = arith.constant 0 : index
    %0 = vector.load %arg2[%c0, %c0_0] : memref<48x128xf32, #tpu.memory_space<vmem>>, vector<48x128xf32>
    %c0_1 = arith.constant 0 : index
    %c0_2 = arith.constant 0 : index
    %1 = vector.load %arg3[%c0_1, %c0_2] : memref<1x128xf32, #tpu.memory_space<vmem>>, vector<1x128xf32>
    %c0_3 = arith.constant 0 : index
    %c0_4 = arith.constant 0 : index
    %c0_5 = arith.constant 0 : index
    %c0_6 = arith.constant 0 : index
    %2 = vector.load %arg0[%c0_3, %c0_4, %c0_5, %c0_6] : memref<2x7x7x48xf32, #tpu.memory_space<vmem>>, vector<1x1x7x48xf32>
    %3 = vector.shape_cast %2 : vector<1x1x7x48xf32> to vector<7x48xf32>
    %cst = arith.constant dense<0.000000e+00> : vector<7x128xf32>
    %4 = tpu.matmul %3, %0, %cst {dimension_numbers = #tpu.dot_dimension_numbers<[1], [0], [0], [1], [0, 0, 1, 1], [], []>} : vector<7x48xf32>, vector<48x128xf32>, vector<7x128xf32> -> vector<7x128xf32>
    %5 = vector.broadcast %1 : vector<1x128xf32> to vector<7x128xf32>
    %6 = arith.addf %4, %5 : vector<7x128xf32>
    %cst_7 = arith.constant 0.000000e+00 : f32
    %7 = vector.broadcast %cst_7 : f32 to vector<7x128xf32>
    %8 = arith.maximumf %6, %7 : vector<7x128xf32>
    %c0_8 = arith.constant 0 : index
    %c0_9 = arith.constant 0 : index
    %c0_10 = arith.constant 0 : index
    %c0_11 = arith.constant 0 : index
    %9 = vector.load %arg14[%c0_8, %c0_9, %c0_10, %c0_11] : memref<2x7x7x128xf32, #tpu.memory_space<vmem>>, vector<1x1x7x128xf32>
    %10 = vector.shape_cast %9 : vector<1x1x7x128xf32> to vector<7x128xf32>
    %11 = vector.shape_cast %8 : vector<7x128xf32> to vector<1x1x7x128xf32>
    tpu.vector_store %arg14[%c0_8, %c0_9, %c0_10, %c0_11], %11 {strides = array<i32>} : memref<2x7x7x128xf32, #tpu.memory_space<vmem>>, vector<1x1x7x128xf32>,
    %c0_12 = arith.constant 0 : index
    %c1 = arith.constant 1 : index
    %c0_13 = arith.constant 0 : index
    %c0_14 = arith.constant 0 : index
    %12 = vector.load %arg0[%c0_12, %c1, %c0_13, %c0_14] : memref<2x7x7x48xf32, #tpu.memory_space<vmem>>, vector<1x1x7x48xf32>
    %13 = vector.shape_cast %12 : vector<1x1x7x48xf32> to vector<7x48xf32>
    %cst_15 = arith.constant dense<0.000000e+00> : vector<7x128xf32>
    %14 = tpu.matmul %13, %0, %cst_15 {dimension_numbers = #tpu.dot_dimension_numbers<[1], [0], [0], [1], [0, 0, 1, 1], [], []>} : vector<7x48xf32>, vector<48x128xf32>, vector<7x128xf32> -> vector<7x128xf32>
    %15 = vector.broadcast %1 : vector<1x128xf32> to vector<7x128xf32>
    %16 = arith.addf %14, %15 : vector<7x128xf32>
    %cst_16 = arith.constant 0.000000e+00 : f32
    %17 = vector.broadcast %cst_16 : f32 to vector<7x128xf32>
    %18 = arith.maximumf %16, %17 : vector<7x128xf32>
    %c0_17 = arith.constant 0 : index
    %c1_18 = arith.constant 1 : index
    %c0_19 = arith.constant 0 : index
    %c0_20 = arith.constant 0 : index
    %19 = vector.load %arg14[%c0_17, %c1_18, %c0_19, %c0_20] : memref<2x7x7x128xf32, #tpu.memory_space<vmem>>, vector<1x1x7x128xf32>
    %20 = vector.shape_cast %19 : vector<1x1x7x128xf32> to vector<7x128xf32>
    %21 = vector.shape_cast %18 : vector<7x128xf32> to vector<1x1x7x128xf32>
    tpu.vector_store %arg14[%c0_17, %c1_18, %c0_19, %c0_20], %21 {strides = array<i32>} : memref<2x7x7x128xf32, #tpu.memory_space<vmem>>, vector<1x1x7x128xf32>,
    %c0_21 = arith.constant 0 : index
    %c2 = arith.constant 2 : index
    %c0_22 = arith.constant 0 : index
    %c0_23 = arith.constant 0 : index
    %22 = vector.load %arg0[%c0_21, %c2, %c0_22, %c0_23] : memref<2x7x7x48xf32, #tpu.memory_space<vmem>>, vector<1x1x7x48xf32>
    %23 = vector.shape_cast %22 : vector<1x1x7x48xf32> to vector<7x48xf32>
    %cst_24 = arith.constant dense<0.000000e+00> : vector<7x128xf32>
    %24 = tpu.matmul %23, %0, %cst_24 {dimension_numbers = #tpu.dot_dimension_numbers<[1], [0], [0], [1], [0, 0, 1, 1], [], []>} : vector<7x48xf32>, vector<48x128xf32>, vector<7x128xf32> -> vector<7x128xf32>
    %25 = vector.broadcast %1 : vector<1x128xf32> to vector<7x128xf32>
    %26 = arith.addf %24, %25 : vector<7x128xf32>
    %cst_25 = arith.constant 0.000000e+00 : f32
    %27 = vector.broadcast %cst_25 : f32 to vector<7x128xf32>
    %28 = arith.maximumf %26, %27 : vector<7x128xf32>
    %c0_26 = arith.constant 0 : index
    %c2_27 = arith.constant 2 : index
    %c0_28 = arith.constant 0 : index
    %c0_29 = arith.constant 0 : index
    %29 = vector.load %arg14[%c0_26, %c2_27, %c0_28, %c0_29] : memref<2x7x7x128xf32, #tpu.memory_space<vmem>>, vector<1x1x7x128xf32>
    %30 = vector.shape_cast %29 : vector<1x1x7x128xf32> to vector<7x128xf32>
    %31 = vector.shape_cast %28 : vector<7x128xf32> to vector<1x1x7x128xf32>
    tpu.vector_store %arg14[%c0_26, %c2_27, %c0_28, %c0_29], %31 {strides = array<i32>} : memref<2x7x7x128xf32, #tpu.memory_space<vmem>>, vector<1x1x7x128xf32>,
    %c0_30 = arith.constant 0 : index
    %c3 = arith.constant 3 : index
    %c0_31 = arith.constant 0 : index
    %c0_32 = arith.constant 0 : index
    %32 = vector.load %arg0[%c0_30, %c3, %c0_31, %c0_32] : memref<2x7x7x48xf32, #tpu.memory_space<vmem>>, vector<1x1x7x48xf32>
    %33 = vector.shape_cast %32 : vector<1x1x7x48xf32> to vector<7x48xf32>
    %cst_33 = arith.constant dense<0.000000e+00> : vector<7x128xf32>
    %34 = tpu.matmul %33, %0, %cst_33 {dimension_numbers = #tpu.dot_dimension_numbers<[1], [0], [0], [1], [0, 0, 1, 1], [], []>} : vector<7x48xf32>, vector<48x128xf32>, vector<7x128xf32> -> vector<7x128xf32>
    %35 = vector.broadcast %1 : vector<1x128xf32> to vector<7x128xf32>
    %36 = arith.addf %34, %35 : vector<7x128xf32>
    %cst_34 = arith.constant 0.000000e+00 : f32
    %37 = vector.broadcast %cst_34 : f32 to vector<7x128xf32>
    %38 = arith.maximumf %36, %37 : vector<7x128xf32>
    %c0_35 = arith.constant 0 : index
    %c3_36 = arith.constant 3 : index
    %c0_37 = arith.constant 0 : index
    %c0_38 = arith.constant 0 : index
    %39 = vector.load %arg14[%c0_35, %c3_36, %c0_37, %c0_38] : memref<2x7x7x128xf32, #tpu.memory_space<vmem>>, vector<1x1x7x128xf32>
    %40 = vector.shape_cast %39 : vector<1x1x7x128xf32> to vector<7x128xf32>
    %41 = vector.shape_cast %38 : vector<7x128xf32> to vector<1x1x7x128xf32>
    tpu.vector_store %arg14[%c0_35, %c3_36, %c0_37, %c0_38], %41 {strides = array<i32>} : memref<2x7x7x128xf32, #tpu.memory_space<vmem>>, vector<1x1x7x128xf32>,
    %c0_39 = arith.constant 0 : index
    %c4 = arith.constant 4 : index
    %c0_40 = arith.constant 0 : index
    %c0_41 = arith.constant 0 : index
    %42 = vector.load %arg0[%c0_39, %c4, %c0_40, %c0_41] : memref<2x7x7x48xf32, #tpu.memory_space<vmem>>, vector<1x1x7x48xf32>
    %43 = vector.shape_cast %42 : vector<1x1x7x48xf32> to vector<7x48xf32>
    %cst_42 = arith.constant dense<0.000000e+00> : vector<7x128xf32>
    %44 = tpu.matmul %43, %0, %cst_42 {dimension_numbers = #tpu.dot_dimension_numbers<[1], [0], [0], [1], [0, 0, 1, 1], [], []>} : vector<7x48xf32>, vector<48x128xf32>, vector<7x128xf32> -> vector<7x128xf32>
    %45 = vector.broadcast %1 : vector<1x128xf32> to vector<7x128xf32>
    %46 = arith.addf %44, %45 : vector<7x128xf32>
    %cst_43 = arith.constant 0.000000e+00 : f32
    %47 = vector.broadcast %cst_43 : f32 to vector<7x128xf32>
    %48 = arith.maximumf %46, %47 : vector<7x128xf32>
    %c0_44 = arith.constant 0 : index
    %c4_45 = arith.constant 4 : index
    %c0_46 = arith.constant 0 : index
    %c0_47 = arith.constant 0 : index
    %49 = vector.load %arg14[%c0_44, %c4_45, %c0_46, %c0_47] : memref<2x7x7x128xf32, #tpu.memory_space<vmem>>, vector<1x1x7x128xf32>
    %50 = vector.shape_cast %49 : vector<1x1x7x128xf32> to vector<7x128xf32>
    %51 = vector.shape_cast %48 : vector<7x128xf32> to vector<1x1x7x128xf32>
    tpu.vector_store %arg14[%c0_44, %c4_45, %c0_46, %c0_47], %51 {strides = array<i32>} : memref<2x7x7x128xf32, #tpu.memory_space<vmem>>, vector<1x1x7x128xf32>,
    %c0_48 = arith.constant 0 : index
    %c5 = arith.constant 5 : index
    %c0_49 = arith.constant 0 : index
    %c0_50 = arith.constant 0 : index
    %52 = vector.load %arg0[%c0_48, %c5, %c0_49, %c0_50] : memref<2x7x7x48xf32, #tpu.memory_space<vmem>>, vector<1x1x7x48xf32>
    %53 = vector.shape_cast %52 : vector<1x1x7x48xf32> to vector<7x48xf32>
    %cst_51 = arith.constant dense<0.000000e+00> : vector<7x128xf32>
    %54 = tpu.matmul %53, %0, %cst_51 {dimension_numbers = #tpu.dot_dimension_numbers<[1], [0], [0], [1], [0, 0, 1, 1], [], []>} : vector<7x48xf32>, vector<48x128xf32>, vector<7x128xf32> -> vector<7x128xf32>
    %55 = vector.broadcast %1 : vector<1x128xf32> to vector<7x128xf32>
    %56 = arith.addf %54, %55 : vector<7x128xf32>
    %cst_52 = arith.constant 0.000000e+00 : f32
    %57 = vector.broadcast %cst_52 : f32 to vector<7x128xf32>
    %58 = arith.maximumf %56, %57 : vector<7x128xf32>
    %c0_53 = arith.constant 0 : index
    %c5_54 = arith.constant 5 : index
    %c0_55 = arith.constant 0 : index
    %c0_56 = arith.constant 0 : index
    %59 = vector.load %arg14[%c0_53, %c5_54, %c0_55, %c0_56] : memref<2x7x7x128xf32, #tpu.memory_space<vmem>>, vector<1x1x7x128xf32>
    %60 = vector.shape_cast %59 : vector<1x1x7x128xf32> to vector<7x128xf32>
    %61 = vector.shape_cast %58 : vector<7x128xf32> to vector<1x1x7x128xf32>
    tpu.vector_store %arg14[%c0_53, %c5_54, %c0_55, %c0_56], %61 {strides = array<i32>} : memref<2x7x7x128xf32, #tpu.memory_space<vmem>>, vector<1x1x7x128xf32>,
    %c0_57 = arith.constant 0 : index
    %c6 = arith.constant 6 : index
    %c0_58 = arith.constant 0 : index
    %c0_59 = arith.constant 0 : index
    %62 = vector.load %arg0[%c0_57, %c6, %c0_58, %c0_59] : memref<2x7x7x48xf32, #tpu.memory_space<vmem>>, vector<1x1x7x48xf32>
    %63 = vector.shape_cast %62 : vector<1x1x7x48xf32> to vector<7x48xf32>
    %cst_60 = arith.constant dense<0.000000e+00> : vector<7x128xf32>
    %64 = tpu.matmul %63, %0, %cst_60 {dimension_numbers = #tpu.dot_dimension_numbers<[1], [0], [0], [1], [0, 0, 1, 1], [], []>} : vector<7x48xf32>, vector<48x128xf32>, vector<7x128xf32> -> vector<7x128xf32>
    %65 = vector.broadcast %1 : vector<1x128xf32> to vector<7x128xf32>
    %66 = arith.addf %64, %65 : vector<7x128xf32>
    %cst_61 = arith.constant 0.000000e+00 : f32
    %67 = vector.broadcast %cst_61 : f32 to vector<7x128xf32>
    %68 = arith.maximumf %66, %67 : vector<7x128xf32>
    %c0_62 = arith.constant 0 : index
    %c6_63 = arith.constant 6 : index
    %c0_64 = arith.constant 0 : index
    %c0_65 = arith.constant 0 : index
    %69 = vector.load %arg14[%c0_62, %c6_63, %c0_64, %c0_65] : memref<2x7x7x128xf32, #tpu.memory_space<vmem>>, vector<1x1x7x128xf32>
    %70 = vector.shape_cast %69 : vector<1x1x7x128xf32> to vector<7x128xf32>
    %71 = vector.shape_cast %68 : vector<7x128xf32> to vector<1x1x7x128xf32>
    tpu.vector_store %arg14[%c0_62, %c6_63, %c0_64, %c0_65], %71 {strides = array<i32>} : memref<2x7x7x128xf32, #tpu.memory_space<vmem>>, vector<1x1x7x128xf32>,
    %c1_66 = arith.constant 1 : index
    %c0_67 = arith.constant 0 : index
    %c0_68 = arith.constant 0 : index
    %c0_69 = arith.constant 0 : index
    %72 = vector.load %arg0[%c1_66, %c0_67, %c0_68, %c0_69] : memref<2x7x7x48xf32, #tpu.memory_space<vmem>>, vector<1x1x7x48xf32>
    %73 = vector.shape_cast %72 : vector<1x1x7x48xf32> to vector<7x48xf32>
    %cst_70 = arith.constant dense<0.000000e+00> : vector<7x128xf32>
    %74 = tpu.matmul %73, %0, %cst_70 {dimension_numbers = #tpu.dot_dimension_numbers<[1], [0], [0], [1], [0, 0, 1, 1], [], []>} : vector<7x48xf32>, vector<48x128xf32>, vector<7x128xf32> -> vector<7x128xf32>
    %75 = vector.broadcast %1 : vector<1x128xf32> to vector<7x128xf32>
    %76 = arith.addf %74, %75 : vector<7x128xf32>
    %cst_71 = arith.constant 0.000000e+00 : f32
    %77 = vector.broadcast %cst_71 : f32 to vector<7x128xf32>
    %78 = arith.maximumf %76, %77 : vector<7x128xf32>
    %c1_72 = arith.constant 1 : index
    %c0_73 = arith.constant 0 : index
    %c0_74 = arith.constant 0 : index
    %c0_75 = arith.constant 0 : index
    %79 = vector.load %arg14[%c1_72, %c0_73, %c0_74, %c0_75] : memref<2x7x7x128xf32, #tpu.memory_space<vmem>>, vector<1x1x7x128xf32>
    %80 = vector.shape_cast %79 : vector<1x1x7x128xf32> to vector<7x128xf32>
    %81 = vector.shape_cast %78 : vector<7x128xf32> to vector<1x1x7x128xf32>
    tpu.vector_store %arg14[%c1_72, %c0_73, %c0_74, %c0_75], %81 {strides = array<i32>} : memref<2x7x7x128xf32, #tpu.memory_space<vmem>>, vector<1x1x7x128xf32>,
    %c1_76 = arith.constant 1 : index
    %c1_77 = arith.constant 1 : index
    %c0_78 = arith.constant 0 : index
    %c0_79 = arith.constant 0 : index
    %82 = vector.load %arg0[%c1_76, %c1_77, %c0_78, %c0_79] : memref<2x7x7x48xf32, #tpu.memory_space<vmem>>, vector<1x1x7x48xf32>
    %83 = vector.shape_cast %82 : vector<1x1x7x48xf32> to vector<7x48xf32>
    %cst_80 = arith.constant dense<0.000000e+00> : vector<7x128xf32>
    %84 = tpu.matmul %83, %0, %cst_80 {dimension_numbers = #tpu.dot_dimension_numbers<[1], [0], [0], [1], [0, 0, 1, 1], [], []>} : vector<7x48xf32>, vector<48x128xf32>, vector<7x128xf32> -> vector<7x128xf32>
    %85 = vector.broadcast %1 : vector<1x128xf32> to vector<7x128xf32>
    %86 = arith.addf %84, %85 : vector<7x128xf32>
    %cst_81 = arith.constant 0.000000e+00 : f32
    %87 = vector.broadcast %cst_81 : f32 to vector<7x128xf32>
    %88 = arith.maximumf %86, %87 : vector<7x128xf32>
    %c1_82 = arith.constant 1 : index
    %c1_83 = arith.constant 1 : index
    %c0_84 = arith.constant 0 : index
    %c0_85 = arith.constant 0 : index
    %89 = vector.load %arg14[%c1_82, %c1_83, %c0_84, %c0_85] : memref<2x7x7x128xf32, #tpu.memory_space<vmem>>, vector<1x1x7x128xf32>
    %90 = vector.shape_cast %89 : vector<1x1x7x128xf32> to vector<7x128xf32>
    %91 = vector.shape_cast %88 : vector<7x128xf32> to vector<1x1x7x128xf32>
    tpu.vector_store %arg14[%c1_82, %c1_83, %c0_84, %c0_85], %91 {strides = array<i32>} : memref<2x7x7x128xf32, #tpu.memory_space<vmem>>, vector<1x1x7x128xf32>,
    %c1_86 = arith.constant 1 : index
    %c2_87 = arith.constant 2 : index
    %c0_88 = arith.constant 0 : index
    %c0_89 = arith.constant 0 : index
    %92 = vector.load %arg0[%c1_86, %c2_87, %c0_88, %c0_89] : memref<2x7x7x48xf32, #tpu.memory_space<vmem>>, vector<1x1x7x48xf32>
    %93 = vector.shape_cast %92 : vector<1x1x7x48xf32> to vector<7x48xf32>
    %cst_90 = arith.constant dense<0.000000e+00> : vector<7x128xf32>
    %94 = tpu.matmul %93, %0, %cst_90 {dimension_numbers = #tpu.dot_dimension_numbers<[1], [0], [0], [1], [0, 0, 1, 1], [], []>} : vector<7x48xf32>, vector<48x128xf32>, vector<7x128xf32> -> vector<7x128xf32>
    %95 = vector.broadcast %1 : vector<1x128xf32> to vector<7x128xf32>
    %96 = arith.addf %94, %95 : vector<7x128xf32>
    %cst_91 = arith.constant 0.000000e+00 : f32
    %97 = vector.broadcast %cst_91 : f32 to vector<7x128xf32>
    %98 = arith.maximumf %96, %97 : vector<7x128xf32>
    %c1_92 = arith.constant 1 : index
    %c2_93 = arith.constant 2 : index
    %c0_94 = arith.constant 0 : index
    %c0_95 = arith.constant 0 : index
    %99 = vector.load %arg14[%c1_92, %c2_93, %c0_94, %c0_95] : memref<2x7x7x128xf32, #tpu.memory_space<vmem>>, vector<1x1x7x128xf32>
    %100 = vector.shape_cast %99 : vector<1x1x7x128xf32> to vector<7x128xf32>
    %101 = vector.shape_cast %98 : vector<7x128xf32> to vector<1x1x7x128xf32>
    tpu.vector_store %arg14[%c1_92, %c2_93, %c0_94, %c0_95], %101 {strides = array<i32>} : memref<2x7x7x128xf32, #tpu.memory_space<vmem>>, vector<1x1x7x128xf32>,
    %c1_96 = arith.constant 1 : index
    %c3_97 = arith.constant 3 : index
    %c0_98 = arith.constant 0 : index
    %c0_99 = arith.constant 0 : index
    %102 = vector.load %arg0[%c1_96, %c3_97, %c0_98, %c0_99] : memref<2x7x7x48xf32, #tpu.memory_space<vmem>>, vector<1x1x7x48xf32>
    %103 = vector.shape_cast %102 : vector<1x1x7x48xf32> to vector<7x48xf32>
    %cst_100 = arith.constant dense<0.000000e+00> : vector<7x128xf32>
    %104 = tpu.matmul %103, %0, %cst_100 {dimension_numbers = #tpu.dot_dimension_numbers<[1], [0], [0], [1], [0, 0, 1, 1], [], []>} : vector<7x48xf32>, vector<48x128xf32>, vector<7x128xf32> -> vector<7x128xf32>
    %105 = vector.broadcast %1 : vector<1x128xf32> to vector<7x128xf32>
    %106 = arith.addf %104, %105 : vector<7x128xf32>
    %cst_101 = arith.constant 0.000000e+00 : f32
    %107 = vector.broadcast %cst_101 : f32 to vector<7x128xf32>
    %108 = arith.maximumf %106, %107 : vector<7x128xf32>
    %c1_102 = arith.constant 1 : index
    %c3_103 = arith.constant 3 : index
    %c0_104 = arith.constant 0 : index
    %c0_105 = arith.constant 0 : index
    %109 = vector.load %arg14[%c1_102, %c3_103, %c0_104, %c0_105] : memref<2x7x7x128xf32, #tpu.memory_space<vmem>>, vector<1x1x7x128xf32>
    %110 = vector.shape_cast %109 : vector<1x1x7x128xf32> to vector<7x128xf32>
    %111 = vector.shape_cast %108 : vector<7x128xf32> to vector<1x1x7x128xf32>
    tpu.vector_store %arg14[%c1_102, %c3_103, %c0_104, %c0_105], %111 {strides = array<i32>} : memref<2x7x7x128xf32, #tpu.memory_space<vmem>>, vector<1x1x7x128xf32>,
    %c1_106 = arith.constant 1 : index
    %c4_107 = arith.constant 4 : index
    %c0_108 = arith.constant 0 : index
    %c0_109 = arith.constant 0 : index
    %112 = vector.load %arg0[%c1_106, %c4_107, %c0_108, %c0_109] : memref<2x7x7x48xf32, #tpu.memory_space<vmem>>, vector<1x1x7x48xf32>
    %113 = vector.shape_cast %112 : vector<1x1x7x48xf32> to vector<7x48xf32>
    %cst_110 = arith.constant dense<0.000000e+00> : vector<7x128xf32>
    %114 = tpu.matmul %113, %0, %cst_110 {dimension_numbers = #tpu.dot_dimension_numbers<[1], [0], [0], [1], [0, 0, 1, 1], [], []>} : vector<7x48xf32>, vector<48x128xf32>, vector<7x128xf32> -> vector<7x128xf32>
    %115 = vector.broadcast %1 : vector<1x128xf32> to vector<7x128xf32>
    %116 = arith.addf %114, %115 : vector<7x128xf32>
    %cst_111 = arith.constant 0.000000e+00 : f32
    %117 = vector.broadcast %cst_111 : f32 to vector<7x128xf32>
    %118 = arith.maximumf %116, %117 : vector<7x128xf32>
    %c1_112 = arith.constant 1 : index
    %c4_113 = arith.constant 4 : index
    %c0_114 = arith.constant 0 : index
    %c0_115 = arith.constant 0 : index
    %119 = vector.load %arg14[%c1_112, %c4_113, %c0_114, %c0_115] : memref<2x7x7x128xf32, #tpu.memory_space<vmem>>, vector<1x1x7x128xf32>
    %120 = vector.shape_cast %119 : vector<1x1x7x128xf32> to vector<7x128xf32>
    %121 = vector.shape_cast %118 : vector<7x128xf32> to vector<1x1x7x128xf32>
    tpu.vector_store %arg14[%c1_112, %c4_113, %c0_114, %c0_115], %121 {strides = array<i32>} : memref<2x7x7x128xf32, #tpu.memory_space<vmem>>, vector<1x1x7x128xf32>,
    %c1_116 = arith.constant 1 : index
    %c5_117 = arith.constant 5 : index
    %c0_118 = arith.constant 0 : index
    %c0_119 = arith.constant 0 : index
    %122 = vector.load %arg0[%c1_116, %c5_117, %c0_118, %c0_119] : memref<2x7x7x48xf32, #tpu.memory_space<vmem>>, vector<1x1x7x48xf32>
    %123 = vector.shape_cast %122 : vector<1x1x7x48xf32> to vector<7x48xf32>
    %cst_120 = arith.constant dense<0.000000e+00> : vector<7x128xf32>
    %124 = tpu.matmul %123, %0, %cst_120 {dimension_numbers = #tpu.dot_dimension_numbers<[1], [0], [0], [1], [0, 0, 1, 1], [], []>} : vector<7x48xf32>, vector<48x128xf32>, vector<7x128xf32> -> vector<7x128xf32>
    %125 = vector.broadcast %1 : vector<1x128xf32> to vector<7x128xf32>
    %126 = arith.addf %124, %125 : vector<7x128xf32>
    %cst_121 = arith.constant 0.000000e+00 : f32
    %127 = vector.broadcast %cst_121 : f32 to vector<7x128xf32>
    %128 = arith.maximumf %126, %127 : vector<7x128xf32>
    %c1_122 = arith.constant 1 : index
    %c5_123 = arith.constant 5 : index
    %c0_124 = arith.constant 0 : index
    %c0_125 = arith.constant 0 : index
    %129 = vector.load %arg14[%c1_122, %c5_123, %c0_124, %c0_125] : memref<2x7x7x128xf32, #tpu.memory_space<vmem>>, vector<1x1x7x128xf32>
    %130 = vector.shape_cast %129 : vector<1x1x7x128xf32> to vector<7x128xf32>
    %131 = vector.shape_cast %128 : vector<7x128xf32> to vector<1x1x7x128xf32>
    tpu.vector_store %arg14[%c1_122, %c5_123, %c0_124, %c0_125], %131 {strides = array<i32>} : memref<2x7x7x128xf32, #tpu.memory_space<vmem>>, vector<1x1x7x128xf32>,
    %c1_126 = arith.constant 1 : index
    %c6_127 = arith.constant 6 : index
    %c0_128 = arith.constant 0 : index
    %c0_129 = arith.constant 0 : index
    %132 = vector.load %arg0[%c1_126, %c6_127, %c0_128, %c0_129] : memref<2x7x7x48xf32, #tpu.memory_space<vmem>>, vector<1x1x7x48xf32>
    %133 = vector.shape_cast %132 : vector<1x1x7x48xf32> to vector<7x48xf32>
    %cst_130 = arith.constant dense<0.000000e+00> : vector<7x128xf32>
    %134 = tpu.matmul %133, %0, %cst_130 {dimension_numbers = #tpu.dot_dimension_numbers<[1], [0], [0], [1], [0, 0, 1, 1], [], []>} : vector<7x48xf32>, vector<48x128xf32>, vector<7x128xf32> -> vector<7x128xf32>
    %135 = vector.broadcast %1 : vector<1x128xf32> to vector<7x128xf32>
    %136 = arith.addf %134, %135 : vector<7x128xf32>
    %cst_131 = arith.constant 0.000000e+00 : f32
    %137 = vector.broadcast %cst_131 : f32 to vector<7x128xf32>
    %138 = arith.maximumf %136, %137 : vector<7x128xf32>
    %c1_132 = arith.constant 1 : index
    %c6_133 = arith.constant 6 : index
    %c0_134 = arith.constant 0 : index
    %c0_135 = arith.constant 0 : index
    %139 = vector.load %arg14[%c1_132, %c6_133, %c0_134, %c0_135] : memref<2x7x7x128xf32, #tpu.memory_space<vmem>>, vector<1x1x7x128xf32>
    %140 = vector.shape_cast %139 : vector<1x1x7x128xf32> to vector<7x128xf32>
    %141 = vector.shape_cast %138 : vector<7x128xf32> to vector<1x1x7x128xf32>
    tpu.vector_store %arg14[%c1_132, %c6_133, %c0_134, %c0_135], %141 {strides = array<i32>} : memref<2x7x7x128xf32, #tpu.memory_space<vmem>>, vector<1x1x7x128xf32>,
    %c0_136 = arith.constant 0 : index
    %c0_137 = arith.constant 0 : index
    %142 = vector.load %arg4[%c0_136, %c0_137] : memref<512x128xf32, #tpu.memory_space<vmem>>, vector<512x128xf32>
    %c0_138 = arith.constant 0 : index
    %c0_139 = arith.constant 0 : index
    %143 = vector.load %arg5[%c0_138, %c0_139] : memref<1x128xf32, #tpu.memory_space<vmem>>, vector<1x128xf32>
    %c0_140 = arith.constant 0 : index
    %c0_141 = arith.constant 0 : index
    %c0_142 = arith.constant 0 : index
    %c0_143 = arith.constant 0 : index
    %144 = vector.load %arg14[%c0_140, %c0_141, %c0_142, %c0_143] : memref<2x7x7x128xf32, #tpu.memory_space<vmem>>, vector<2x1x1x128xf32>
    %145 = vector.shape_cast %144 : vector<2x1x1x128xf32> to vector<2x128xf32>
    %c0_144 = arith.constant 0 : index
    %c0_145 = arith.constant 0 : index
    %c1_146 = arith.constant 1 : index
    %c0_147 = arith.constant 0 : index
    %146 = vector.load %arg14[%c0_144, %c0_145, %c1_146, %c0_147] : memref<2x7x7x128xf32, #tpu.memory_space<vmem>>, vector<2x1x1x128xf32>
    %147 = vector.shape_cast %146 : vector<2x1x1x128xf32> to vector<2x128xf32>
    %c0_148 = arith.constant 0 : index
    %c1_149 = arith.constant 1 : index
    %c0_150 = arith.constant 0 : index
    %c0_151 = arith.constant 0 : index
    %148 = vector.load %arg14[%c0_148, %c1_149, %c0_150, %c0_151] : memref<2x7x7x128xf32, #tpu.memory_space<vmem>>, vector<2x1x1x128xf32>
    %149 = vector.shape_cast %148 : vector<2x1x1x128xf32> to vector<2x128xf32>
    %c0_152 = arith.constant 0 : index
    %c1_153 = arith.constant 1 : index
    %c1_154 = arith.constant 1 : index
    %c0_155 = arith.constant 0 : index
    %150 = vector.load %arg14[%c0_152, %c1_153, %c1_154, %c0_155] : memref<2x7x7x128xf32, #tpu.memory_space<vmem>>, vector<2x1x1x128xf32>
    %151 = vector.shape_cast %150 : vector<2x1x1x128xf32> to vector<2x128xf32>
    %152 = tpu.concatenate %145, %147, %149, %151 in 1 : vector<2x128xf32>, vector<2x128xf32>, vector<2x128xf32>, vector<2x128xf32> -> vector<2x512xf32>
    %cst_156 = arith.constant dense<0.000000e+00> : vector<2x128xf32>
    %153 = tpu.matmul %152, %142, %cst_156 {dimension_numbers = #tpu.dot_dimension_numbers<[1], [0], [0], [1], [0, 0, 1, 1], [], []>} : vector<2x512xf32>, vector<512x128xf32>, vector<2x128xf32> -> vector<2x128xf32>
    %154 = vector.broadcast %143 : vector<1x128xf32> to vector<2x128xf32>
    %155 = arith.addf %153, %154 : vector<2x128xf32>
    %cst_157 = arith.constant 0.000000e+00 : f32
    %156 = vector.broadcast %cst_157 : f32 to vector<2x128xf32>
    %157 = arith.maximumf %155, %156 : vector<2x128xf32>
    %c0_158 = arith.constant 0 : index
    %c0_159 = arith.constant 0 : index
    %158 = vector.load %arg15[%c0_158, %c0_159] : memref<2x4608xf32, #tpu.memory_space<vmem>>, vector<2x128xf32>
    tpu.vector_store %arg15[%c0_158, %c0_159], %157 {strides = array<i32>} : memref<2x4608xf32, #tpu.memory_space<vmem>>, vector<2x128xf32>,
    %c0_160 = arith.constant 0 : index
    %c0_161 = arith.constant 0 : index
    %c1_162 = arith.constant 1 : index
    %c0_163 = arith.constant 0 : index
    %159 = vector.load %arg14[%c0_160, %c0_161, %c1_162, %c0_163] : memref<2x7x7x128xf32, #tpu.memory_space<vmem>>, vector<2x1x1x128xf32>
    %160 = vector.shape_cast %159 : vector<2x1x1x128xf32> to vector<2x128xf32>
    %c0_164 = arith.constant 0 : index
    %c0_165 = arith.constant 0 : index
    %c2_166 = arith.constant 2 : index
    %c0_167 = arith.constant 0 : index
    %161 = vector.load %arg14[%c0_164, %c0_165, %c2_166, %c0_167] : memref<2x7x7x128xf32, #tpu.memory_space<vmem>>, vector<2x1x1x128xf32>
    %162 = vector.shape_cast %161 : vector<2x1x1x128xf32> to vector<2x128xf32>
    %c0_168 = arith.constant 0 : index
    %c1_169 = arith.constant 1 : index
    %c1_170 = arith.constant 1 : index
    %c0_171 = arith.constant 0 : index
    %163 = vector.load %arg14[%c0_168, %c1_169, %c1_170, %c0_171] : memref<2x7x7x128xf32, #tpu.memory_space<vmem>>, vector<2x1x1x128xf32>
    %164 = vector.shape_cast %163 : vector<2x1x1x128xf32> to vector<2x128xf32>
    %c0_172 = arith.constant 0 : index
    %c1_173 = arith.constant 1 : index
    %c2_174 = arith.constant 2 : index
    %c0_175 = arith.constant 0 : index
    %165 = vector.load %arg14[%c0_172, %c1_173, %c2_174, %c0_175] : memref<2x7x7x128xf32, #tpu.memory_space<vmem>>, vector<2x1x1x128xf32>
    %166 = vector.shape_cast %165 : vector<2x1x1x128xf32> to vector<2x128xf32>
    %167 = tpu.concatenate %160, %162, %164, %166 in 1 : vector<2x128xf32>, vector<2x128xf32>, vector<2x128xf32>, vector<2x128xf32> -> vector<2x512xf32>
    %cst_176 = arith.constant dense<0.000000e+00> : vector<2x128xf32>
    %168 = tpu.matmul %167, %142, %cst_176 {dimension_numbers = #tpu.dot_dimension_numbers<[1], [0], [0], [1], [0, 0, 1, 1], [], []>} : vector<2x512xf32>, vector<512x128xf32>, vector<2x128xf32> -> vector<2x128xf32>
    %169 = vector.broadcast %143 : vector<1x128xf32> to vector<2x128xf32>
    %170 = arith.addf %168, %169 : vector<2x128xf32>
    %cst_177 = arith.constant 0.000000e+00 : f32
    %171 = vector.broadcast %cst_177 : f32 to vector<2x128xf32>
    %172 = arith.maximumf %170, %171 : vector<2x128xf32>
    %c0_178 = arith.constant 0 : index
    %c128 = arith.constant 128 : index
    %173 = vector.load %arg15[%c0_178, %c128] : memref<2x4608xf32, #tpu.memory_space<vmem>>, vector<2x128xf32>
    tpu.vector_store %arg15[%c0_178, %c128], %172 {strides = array<i32>} : memref<2x4608xf32, #tpu.memory_space<vmem>>, vector<2x128xf32>,
    %c0_179 = arith.constant 0 : index
    %c0_180 = arith.constant 0 : index
    %c2_181 = arith.constant 2 : index
    %c0_182 = arith.constant 0 : index
    %174 = vector.load %arg14[%c0_179, %c0_180, %c2_181, %c0_182] : memref<2x7x7x128xf32, #tpu.memory_space<vmem>>, vector<2x1x1x128xf32>
    %175 = vector.shape_cast %174 : vector<2x1x1x128xf32> to vector<2x128xf32>
    %c0_183 = arith.constant 0 : index
    %c0_184 = arith.constant 0 : index
    %c3_185 = arith.constant 3 : index
    %c0_186 = arith.constant 0 : index
    %176 = vector.load %arg14[%c0_183, %c0_184, %c3_185, %c0_186] : memref<2x7x7x128xf32, #tpu.memory_space<vmem>>, vector<2x1x1x128xf32>
    %177 = vector.shape_cast %176 : vector<2x1x1x128xf32> to vector<2x128xf32>
    %c0_187 = arith.constant 0 : index
    %c1_188 = arith.constant 1 : index
    %c2_189 = arith.constant 2 : index
    %c0_190 = arith.constant 0 : index
    %178 = vector.load %arg14[%c0_187, %c1_188, %c2_189, %c0_190] : memref<2x7x7x128xf32, #tpu.memory_space<vmem>>, vector<2x1x1x128xf32>
    %179 = vector.shape_cast %178 : vector<2x1x1x128xf32> to vector<2x128xf32>
    %c0_191 = arith.constant 0 : index
    %c1_192 = arith.constant 1 : index
    %c3_193 = arith.constant 3 : index
    %c0_194 = arith.constant 0 : index
    %180 = vector.load %arg14[%c0_191, %c1_192, %c3_193, %c0_194] : memref<2x7x7x128xf32, #tpu.memory_space<vmem>>, vector<2x1x1x128xf32>
    %181 = vector.shape_cast %180 : vector<2x1x1x128xf32> to vector<2x128xf32>
    %182 = tpu.concatenate %175, %177, %179, %181 in 1 : vector<2x128xf32>, vector<2x128xf32>, vector<2x128xf32>, vector<2x128xf32> -> vector<2x512xf32>
    %cst_195 = arith.constant dense<0.000000e+00> : vector<2x128xf32>
    %183 = tpu.matmul %182, %142, %cst_195 {dimension_numbers = #tpu.dot_dimension_numbers<[1], [0], [0], [1], [0, 0, 1, 1], [], []>} : vector<2x512xf32>, vector<512x128xf32>, vector<2x128xf32> -> vector<2x128xf32>
    %184 = vector.broadcast %143 : vector<1x128xf32> to vector<2x128xf32>
    %185 = arith.addf %183, %184 : vector<2x128xf32>
    %cst_196 = arith.constant 0.000000e+00 : f32
    %186 = vector.broadcast %cst_196 : f32 to vector<2x128xf32>
    %187 = arith.maximumf %185, %186 : vector<2x128xf32>
    %c0_197 = arith.constant 0 : index
    %c256 = arith.constant 256 : index
    %188 = vector.load %arg15[%c0_197, %c256] : memref<2x4608xf32, #tpu.memory_space<vmem>>, vector<2x128xf32>
    tpu.vector_store %arg15[%c0_197, %c256], %187 {strides = array<i32>} : memref<2x4608xf32, #tpu.memory_space<vmem>>, vector<2x128xf32>,
    %c0_198 = arith.constant 0 : index
    %c0_199 = arith.constant 0 : index
    %c3_200 = arith.constant 3 : index
    %c0_201 = arith.constant 0 : index
    %189 = vector.load %arg14[%c0_198, %c0_199, %c3_200, %c0_201] : memref<2x7x7x128xf32, #tpu.memory_space<vmem>>, vector<2x1x1x128xf32>
    %190 = vector.shape_cast %189 : vector<2x1x1x128xf32> to vector<2x128xf32>
    %c0_202 = arith.constant 0 : index
    %c0_203 = arith.constant 0 : index
    %c4_204 = arith.constant 4 : index
    %c0_205 = arith.constant 0 : index
    %191 = vector.load %arg14[%c0_202, %c0_203, %c4_204, %c0_205] : memref<2x7x7x128xf32, #tpu.memory_space<vmem>>, vector<2x1x1x128xf32>
    %192 = vector.shape_cast %191 : vector<2x1x1x128xf32> to vector<2x128xf32>
    %c0_206 = arith.constant 0 : index
    %c1_207 = arith.constant 1 : index
    %c3_208 = arith.constant 3 : index
    %c0_209 = arith.constant 0 : index
    %193 = vector.load %arg14[%c0_206, %c1_207, %c3_208, %c0_209] : memref<2x7x7x128xf32, #tpu.memory_space<vmem>>, vector<2x1x1x128xf32>
    %194 = vector.shape_cast %193 : vector<2x1x1x128xf32> to vector<2x128xf32>
    %c0_210 = arith.constant 0 : index
    %c1_211 = arith.constant 1 : index
    %c4_212 = arith.constant 4 : index
    %c0_213 = arith.constant 0 : index
    %195 = vector.load %arg14[%c0_210, %c1_211, %c4_212, %c0_213] : memref<2x7x7x128xf32, #tpu.memory_space<vmem>>, vector<2x1x1x128xf32>
    %196 = vector.shape_cast %195 : vector<2x1x1x128xf32> to vector<2x128xf32>
    %197 = tpu.concatenate %190, %192, %194, %196 in 1 : vector<2x128xf32>, vector<2x128xf32>, vector<2x128xf32>, vector<2x128xf32> -> vector<2x512xf32>
    %cst_214 = arith.constant dense<0.000000e+00> : vector<2x128xf32>
    %198 = tpu.matmul %197, %142, %cst_214 {dimension_numbers = #tpu.dot_dimension_numbers<[1], [0], [0], [1], [0, 0, 1, 1], [], []>} : vector<2x512xf32>, vector<512x128xf32>, vector<2x128xf32> -> vector<2x128xf32>
    %199 = vector.broadcast %143 : vector<1x128xf32> to vector<2x128xf32>
    %200 = arith.addf %198, %199 : vector<2x128xf32>
    %cst_215 = arith.constant 0.000000e+00 : f32
    %201 = vector.broadcast %cst_215 : f32 to vector<2x128xf32>
    %202 = arith.maximumf %200, %201 : vector<2x128xf32>
    %c0_216 = arith.constant 0 : index
    %c384 = arith.constant 384 : index
    %203 = vector.load %arg15[%c0_216, %c384] : memref<2x4608xf32, #tpu.memory_space<vmem>>, vector<2x128xf32>
    tpu.vector_store %arg15[%c0_216, %c384], %202 {strides = array<i32>} : memref<2x4608xf32, #tpu.memory_space<vmem>>, vector<2x128xf32>,
    %c0_217 = arith.constant 0 : index
    %c0_218 = arith.constant 0 : index
    %c4_219 = arith.constant 4 : index
    %c0_220 = arith.constant 0 : index
    %204 = vector.load %arg14[%c0_217, %c0_218, %c4_219, %c0_220] : memref<2x7x7x128xf32, #tpu.memory_space<vmem>>, vector<2x1x1x128xf32>
    %205 = vector.shape_cast %204 : vector<2x1x1x128xf32> to vector<2x128xf32>
    %c0_221 = arith.constant 0 : index
    %c0_222 = arith.constant 0 : index
    %c5_223 = arith.constant 5 : index
    %c0_224 = arith.constant 0 : index
    %206 = vector.load %arg14[%c0_221, %c0_222, %c5_223, %c0_224] : memref<2x7x7x128xf32, #tpu.memory_space<vmem>>, vector<2x1x1x128xf32>
    %207 = vector.shape_cast %206 : vector<2x1x1x128xf32> to vector<2x128xf32>
    %c0_225 = arith.constant 0 : index
    %c1_226 = arith.constant 1 : index
    %c4_227 = arith.constant 4 : index
    %c0_228 = arith.constant 0 : index
    %208 = vector.load %arg14[%c0_225, %c1_226, %c4_227, %c0_228] : memref<2x7x7x128xf32, #tpu.memory_space<vmem>>, vector<2x1x1x128xf32>
    %209 = vector.shape_cast %208 : vector<2x1x1x128xf32> to vector<2x128xf32>
    %c0_229 = arith.constant 0 : index
    %c1_230 = arith.constant 1 : index
    %c5_231 = arith.constant 5 : index
    %c0_232 = arith.constant 0 : index
    %210 = vector.load %arg14[%c0_229, %c1_230, %c5_231, %c0_232] : memref<2x7x7x128xf32, #tpu.memory_space<vmem>>, vector<2x1x1x128xf32>
    %211 = vector.shape_cast %210 : vector<2x1x1x128xf32> to vector<2x128xf32>
    %212 = tpu.concatenate %205, %207, %209, %211 in 1 : vector<2x128xf32>, vector<2x128xf32>, vector<2x128xf32>, vector<2x128xf32> -> vector<2x512xf32>
    %cst_233 = arith.constant dense<0.000000e+00> : vector<2x128xf32>
    %213 = tpu.matmul %212, %142, %cst_233 {dimension_numbers = #tpu.dot_dimension_numbers<[1], [0], [0], [1], [0, 0, 1, 1], [], []>} : vector<2x512xf32>, vector<512x128xf32>, vector<2x128xf32> -> vector<2x128xf32>
    %214 = vector.broadcast %143 : vector<1x128xf32> to vector<2x128xf32>
    %215 = arith.addf %213, %214 : vector<2x128xf32>
    %cst_234 = arith.constant 0.000000e+00 : f32
    %216 = vector.broadcast %cst_234 : f32 to vector<2x128xf32>
    %217 = arith.maximumf %215, %216 : vector<2x128xf32>
    %c0_235 = arith.constant 0 : index
    %c512 = arith.constant 512 : index
    %218 = vector.load %arg15[%c0_235, %c512] : memref<2x4608xf32, #tpu.memory_space<vmem>>, vector<2x128xf32>
    tpu.vector_store %arg15[%c0_235, %c512], %217 {strides = array<i32>} : memref<2x4608xf32, #tpu.memory_space<vmem>>, vector<2x128xf32>,
    %c0_236 = arith.constant 0 : index
    %c0_237 = arith.constant 0 : index
    %c5_238 = arith.constant 5 : index
    %c0_239 = arith.constant 0 : index
    %219 = vector.load %arg14[%c0_236, %c0_237, %c5_238, %c0_239] : memref<2x7x7x128xf32, #tpu.memory_space<vmem>>, vector<2x1x1x128xf32>
    %220 = vector.shape_cast %219 : vector<2x1x1x128xf32> to vector<2x128xf32>
    %c0_240 = arith.constant 0 : index
    %c0_241 = arith.constant 0 : index
    %c6_242 = arith.constant 6 : index
    %c0_243 = arith.constant 0 : index
    %221 = vector.load %arg14[%c0_240, %c0_241, %c6_242, %c0_243] : memref<2x7x7x128xf32, #tpu.memory_space<vmem>>, vector<2x1x1x128xf32>
    %222 = vector.shape_cast %221 : vector<2x1x1x128xf32> to vector<2x128xf32>
    %c0_244 = arith.constant 0 : index
    %c1_245 = arith.constant 1 : index
    %c5_246 = arith.constant 5 : index
    %c0_247 = arith.constant 0 : index
    %223 = vector.load %arg14[%c0_244, %c1_245, %c5_246, %c0_247] : memref<2x7x7x128xf32, #tpu.memory_space<vmem>>, vector<2x1x1x128xf32>
    %224 = vector.shape_cast %223 : vector<2x1x1x128xf32> to vector<2x128xf32>
    %c0_248 = arith.constant 0 : index
    %c1_249 = arith.constant 1 : index
    %c6_250 = arith.constant 6 : index
    %c0_251 = arith.constant 0 : index
    %225 = vector.load %arg14[%c0_248, %c1_249, %c6_250, %c0_251] : memref<2x7x7x128xf32, #tpu.memory_space<vmem>>, vector<2x1x1x128xf32>
    %226 = vector.shape_cast %225 : vector<2x1x1x128xf32> to vector<2x128xf32>
    %227 = tpu.concatenate %220, %222, %224, %226 in 1 : vector<2x128xf32>, vector<2x128xf32>, vector<2x128xf32>, vector<2x128xf32> -> vector<2x512xf32>
    %cst_252 = arith.constant dense<0.000000e+00> : vector<2x128xf32>
    %228 = tpu.matmul %227, %142, %cst_252 {dimension_numbers = #tpu.dot_dimension_numbers<[1], [0], [0], [1], [0, 0, 1, 1], [], []>} : vector<2x512xf32>, vector<512x128xf32>, vector<2x128xf32> -> vector<2x128xf32>
    %229 = vector.broadcast %143 : vector<1x128xf32> to vector<2x128xf32>
    %230 = arith.addf %228, %229 : vector<2x128xf32>
    %cst_253 = arith.constant 0.000000e+00 : f32
    %231 = vector.broadcast %cst_253 : f32 to vector<2x128xf32>
    %232 = arith.maximumf %230, %231 : vector<2x128xf32>
    %c0_254 = arith.constant 0 : index
    %c640 = arith.constant 640 : index
    %233 = vector.load %arg15[%c0_254, %c640] : memref<2x4608xf32, #tpu.memory_space<vmem>>, vector<2x128xf32>
    tpu.vector_store %arg15[%c0_254, %c640], %232 {strides = array<i32>} : memref<2x4608xf32, #tpu.memory_space<vmem>>, vector<2x128xf32>,
    %c0_255 = arith.constant 0 : index
    %c1_256 = arith.constant 1 : index
    %c0_257 = arith.constant 0 : index
    %c0_258 = arith.constant 0 : index
    %234 = vector.load %arg14[%c0_255, %c1_256, %c0_257, %c0_258] : memref<2x7x7x128xf32, #tpu.memory_space<vmem>>, vector<2x1x1x128xf32>
    %235 = vector.shape_cast %234 : vector<2x1x1x128xf32> to vector<2x128xf32>
    %c0_259 = arith.constant 0 : index
    %c1_260 = arith.constant 1 : index
    %c1_261 = arith.constant 1 : index
    %c0_262 = arith.constant 0 : index
    %236 = vector.load %arg14[%c0_259, %c1_260, %c1_261, %c0_262] : memref<2x7x7x128xf32, #tpu.memory_space<vmem>>, vector<2x1x1x128xf32>
    %237 = vector.shape_cast %236 : vector<2x1x1x128xf32> to vector<2x128xf32>
    %c0_263 = arith.constant 0 : index
    %c2_264 = arith.constant 2 : index
    %c0_265 = arith.constant 0 : index
    %c0_266 = arith.constant 0 : index
    %238 = vector.load %arg14[%c0_263, %c2_264, %c0_265, %c0_266] : memref<2x7x7x128xf32, #tpu.memory_space<vmem>>, vector<2x1x1x128xf32>
    %239 = vector.shape_cast %238 : vector<2x1x1x128xf32> to vector<2x128xf32>
    %c0_267 = arith.constant 0 : index
    %c2_268 = arith.constant 2 : index
    %c1_269 = arith.constant 1 : index
    %c0_270 = arith.constant 0 : index
    %240 = vector.load %arg14[%c0_267, %c2_268, %c1_269, %c0_270] : memref<2x7x7x128xf32, #tpu.memory_space<vmem>>, vector<2x1x1x128xf32>
    %241 = vector.shape_cast %240 : vector<2x1x1x128xf32> to vector<2x128xf32>
    %242 = tpu.concatenate %235, %237, %239, %241 in 1 : vector<2x128xf32>, vector<2x128xf32>, vector<2x128xf32>, vector<2x128xf32> -> vector<2x512xf32>
    %cst_271 = arith.constant dense<0.000000e+00> : vector<2x128xf32>
    %243 = tpu.matmul %242, %142, %cst_271 {dimension_numbers = #tpu.dot_dimension_numbers<[1], [0], [0], [1], [0, 0, 1, 1], [], []>} : vector<2x512xf32>, vector<512x128xf32>, vector<2x128xf32> -> vector<2x128xf32>
    %244 = vector.broadcast %143 : vector<1x128xf32> to vector<2x128xf32>
    %245 = arith.addf %243, %244 : vector<2x128xf32>
    %cst_272 = arith.constant 0.000000e+00 : f32
    %246 = vector.broadcast %cst_272 : f32 to vector<2x128xf32>
    %247 = arith.maximumf %245, %246 : vector<2x128xf32>
    %c0_273 = arith.constant 0 : index
    %c768 = arith.constant 768 : index
    %248 = vector.load %arg15[%c0_273, %c768] : memref<2x4608xf32, #tpu.memory_space<vmem>>, vector<2x128xf32>
    tpu.vector_store %arg15[%c0_273, %c768], %247 {strides = array<i32>} : memref<2x4608xf32, #tpu.memory_space<vmem>>, vector<2x128xf32>,
    %c0_274 = arith.constant 0 : index
    %c1_275 = arith.constant 1 : index
    %c1_276 = arith.constant 1 : index
    %c0_277 = arith.constant 0 : index
    %249 = vector.load %arg14[%c0_274, %c1_275, %c1_276, %c0_277] : memref<2x7x7x128xf32, #tpu.memory_space<vmem>>, vector<2x1x1x128xf32>
    %250 = vector.shape_cast %249 : vector<2x1x1x128xf32> to vector<2x128xf32>
    %c0_278 = arith.constant 0 : index
    %c1_279 = arith.constant 1 : index
    %c2_280 = arith.constant 2 : index
    %c0_281 = arith.constant 0 : index
    %251 = vector.load %arg14[%c0_278, %c1_279, %c2_280, %c0_281] : memref<2x7x7x128xf32, #tpu.memory_space<vmem>>, vector<2x1x1x128xf32>
    %252 = vector.shape_cast %251 : vector<2x1x1x128xf32> to vector<2x128xf32>
    %c0_282 = arith.constant 0 : index
    %c2_283 = arith.constant 2 : index
    %c1_284 = arith.constant 1 : index
    %c0_285 = arith.constant 0 : index
    %253 = vector.load %arg14[%c0_282, %c2_283, %c1_284, %c0_285] : memref<2x7x7x128xf32, #tpu.memory_space<vmem>>, vector<2x1x1x128xf32>
    %254 = vector.shape_cast %253 : vector<2x1x1x128xf32> to vector<2x128xf32>
    %c0_286 = arith.constant 0 : index
    %c2_287 = arith.constant 2 : index
    %c2_288 = arith.constant 2 : index
    %c0_289 = arith.constant 0 : index
    %255 = vector.load %arg14[%c0_286, %c2_287, %c2_288, %c0_289] : memref<2x7x7x128xf32, #tpu.memory_space<vmem>>, vector<2x1x1x128xf32>
    %256 = vector.shape_cast %255 : vector<2x1x1x128xf32> to vector<2x128xf32>
    %257 = tpu.concatenate %250, %252, %254, %256 in 1 : vector<2x128xf32>, vector<2x128xf32>, vector<2x128xf32>, vector<2x128xf32> -> vector<2x512xf32>
    %cst_290 = arith.constant dense<0.000000e+00> : vector<2x128xf32>
    %258 = tpu.matmul %257, %142, %cst_290 {dimension_numbers = #tpu.dot_dimension_numbers<[1], [0], [0], [1], [0, 0, 1, 1], [], []>} : vector<2x512xf32>, vector<512x128xf32>, vector<2x128xf32> -> vector<2x128xf32>
    %259 = vector.broadcast %143 : vector<1x128xf32> to vector<2x128xf32>
    %260 = arith.addf %258, %259 : vector<2x128xf32>
    %cst_291 = arith.constant 0.000000e+00 : f32
    %261 = vector.broadcast %cst_291 : f32 to vector<2x128xf32>
    %262 = arith.maximumf %260, %261 : vector<2x128xf32>
    %c0_292 = arith.constant 0 : index
    %c896 = arith.constant 896 : index
    %263 = vector.load %arg15[%c0_292, %c896] : memref<2x4608xf32, #tpu.memory_space<vmem>>, vector<2x128xf32>
    tpu.vector_store %arg15[%c0_292, %c896], %262 {strides = array<i32>} : memref<2x4608xf32, #tpu.memory_space<vmem>>, vector<2x128xf32>,
    %c0_293 = arith.constant 0 : index
    %c1_294 = arith.constant 1 : index
    %c2_295 = arith.constant 2 : index
    %c0_296 = arith.constant 0 : index
    %264 = vector.load %arg14[%c0_293, %c1_294, %c2_295, %c0_296] : memref<2x7x7x128xf32, #tpu.memory_space<vmem>>, vector<2x1x1x128xf32>
    %265 = vector.shape_cast %264 : vector<2x1x1x128xf32> to vector<2x128xf32>
    %c0_297 = arith.constant 0 : index
    %c1_298 = arith.constant 1 : index
    %c3_299 = arith.constant 3 : index
    %c0_300 = arith.constant 0 : index
    %266 = vector.load %arg14[%c0_297, %c1_298, %c3_299, %c0_300] : memref<2x7x7x128xf32, #tpu.memory_space<vmem>>, vector<2x1x1x128xf32>
    %267 = vector.shape_cast %266 : vector<2x1x1x128xf32> to vector<2x128xf32>
    %c0_301 = arith.constant 0 : index
    %c2_302 = arith.constant 2 : index
    %c2_303 = arith.constant 2 : index
    %c0_304 = arith.constant 0 : index
    %268 = vector.load %arg14[%c0_301, %c2_302, %c2_303, %c0_304] : memref<2x7x7x128xf32, #tpu.memory_space<vmem>>, vector<2x1x1x128xf32>
    %269 = vector.shape_cast %268 : vector<2x1x1x128xf32> to vector<2x128xf32>
    %c0_305 = arith.constant 0 : index
    %c2_306 = arith.constant 2 : index
    %c3_307 = arith.constant 3 : index
    %c0_308 = arith.constant 0 : index
    %270 = vector.load %arg14[%c0_305, %c2_306, %c3_307, %c0_308] : memref<2x7x7x128xf32, #tpu.memory_space<vmem>>, vector<2x1x1x128xf32>
    %271 = vector.shape_cast %270 : vector<2x1x1x128xf32> to vector<2x128xf32>
    %272 = tpu.concatenate %265, %267, %269, %271 in 1 : vector<2x128xf32>, vector<2x128xf32>, vector<2x128xf32>, vector<2x128xf32> -> vector<2x512xf32>
    %cst_309 = arith.constant dense<0.000000e+00> : vector<2x128xf32>
    %273 = tpu.matmul %272, %142, %cst_309 {dimension_numbers = #tpu.dot_dimension_numbers<[1], [0], [0], [1], [0, 0, 1, 1], [], []>} : vector<2x512xf32>, vector<512x128xf32>, vector<2x128xf32> -> vector<2x128xf32>
    %274 = vector.broadcast %143 : vector<1x128xf32> to vector<2x128xf32>
    %275 = arith.addf %273, %274 : vector<2x128xf32>
    %cst_310 = arith.constant 0.000000e+00 : f32
    %276 = vector.broadcast %cst_310 : f32 to vector<2x128xf32>
    %277 = arith.maximumf %275, %276 : vector<2x128xf32>
    %c0_311 = arith.constant 0 : index
    %c1024 = arith.constant 1024 : index
    %278 = vector.load %arg15[%c0_311, %c1024] : memref<2x4608xf32, #tpu.memory_space<vmem>>, vector<2x128xf32>
    tpu.vector_store %arg15[%c0_311, %c1024], %277 {strides = array<i32>} : memref<2x4608xf32, #tpu.memory_space<vmem>>, vector<2x128xf32>,
    %c0_312 = arith.constant 0 : index
    %c1_313 = arith.constant 1 : index
    %c3_314 = arith.constant 3 : index
    %c0_315 = arith.constant 0 : index
    %279 = vector.load %arg14[%c0_312, %c1_313, %c3_314, %c0_315] : memref<2x7x7x128xf32, #tpu.memory_space<vmem>>, vector<2x1x1x128xf32>
    %280 = vector.shape_cast %279 : vector<2x1x1x128xf32> to vector<2x128xf32>
    %c0_316 = arith.constant 0 : index
    %c1_317 = arith.constant 1 : index
    %c4_318 = arith.constant 4 : index
    %c0_319 = arith.constant 0 : index
    %281 = vector.load %arg14[%c0_316, %c1_317, %c4_318, %c0_319] : memref<2x7x7x128xf32, #tpu.memory_space<vmem>>, vector<2x1x1x128xf32>
    %282 = vector.shape_cast %281 : vector<2x1x1x128xf32> to vector<2x128xf32>
    %c0_320 = arith.constant 0 : index
    %c2_321 = arith.constant 2 : index
    %c3_322 = arith.constant 3 : index
    %c0_323 = arith.constant 0 : index
    %283 = vector.load %arg14[%c0_320, %c2_321, %c3_322, %c0_323] : memref<2x7x7x128xf32, #tpu.memory_space<vmem>>, vector<2x1x1x128xf32>
    %284 = vector.shape_cast %283 : vector<2x1x1x128xf32> to vector<2x128xf32>
    %c0_324 = arith.constant 0 : index
    %c2_325 = arith.constant 2 : index
    %c4_326 = arith.constant 4 : index
    %c0_327 = arith.constant 0 : index
    %285 = vector.load %arg14[%c0_324, %c2_325, %c4_326, %c0_327] : memref<2x7x7x128xf32, #tpu.memory_space<vmem>>, vector<2x1x1x128xf32>
    %286 = vector.shape_cast %285 : vector<2x1x1x128xf32> to vector<2x128xf32>
    %287 = tpu.concatenate %280, %282, %284, %286 in 1 : vector<2x128xf32>, vector<2x128xf32>, vector<2x128xf32>, vector<2x128xf32> -> vector<2x512xf32>
    %cst_328 = arith.constant dense<0.000000e+00> : vector<2x128xf32>
    %288 = tpu.matmul %287, %142, %cst_328 {dimension_numbers = #tpu.dot_dimension_numbers<[1], [0], [0], [1], [0, 0, 1, 1], [], []>} : vector<2x512xf32>, vector<512x128xf32>, vector<2x128xf32> -> vector<2x128xf32>
    %289 = vector.broadcast %143 : vector<1x128xf32> to vector<2x128xf32>
    %290 = arith.addf %288, %289 : vector<2x128xf32>
    %cst_329 = arith.constant 0.000000e+00 : f32
    %291 = vector.broadcast %cst_329 : f32 to vector<2x128xf32>
    %292 = arith.maximumf %290, %291 : vector<2x128xf32>
    %c0_330 = arith.constant 0 : index
    %c1152 = arith.constant 1152 : index
    %293 = vector.load %arg15[%c0_330, %c1152] : memref<2x4608xf32, #tpu.memory_space<vmem>>, vector<2x128xf32>
    tpu.vector_store %arg15[%c0_330, %c1152], %292 {strides = array<i32>} : memref<2x4608xf32, #tpu.memory_space<vmem>>, vector<2x128xf32>,
    %c0_331 = arith.constant 0 : index
    %c1_332 = arith.constant 1 : index
    %c4_333 = arith.constant 4 : index
    %c0_334 = arith.constant 0 : index
    %294 = vector.load %arg14[%c0_331, %c1_332, %c4_333, %c0_334] : memref<2x7x7x128xf32, #tpu.memory_space<vmem>>, vector<2x1x1x128xf32>
    %295 = vector.shape_cast %294 : vector<2x1x1x128xf32> to vector<2x128xf32>
    %c0_335 = arith.constant 0 : index
    %c1_336 = arith.constant 1 : index
    %c5_337 = arith.constant 5 : index
    %c0_338 = arith.constant 0 : index
    %296 = vector.load %arg14[%c0_335, %c1_336, %c5_337, %c0_338] : memref<2x7x7x128xf32, #tpu.memory_space<vmem>>, vector<2x1x1x128xf32>
    %297 = vector.shape_cast %296 : vector<2x1x1x128xf32> to vector<2x128xf32>
    %c0_339 = arith.constant 0 : index
    %c2_340 = arith.constant 2 : index
    %c4_341 = arith.constant 4 : index
    %c0_342 = arith.constant 0 : index
    %298 = vector.load %arg14[%c0_339, %c2_340, %c4_341, %c0_342] : memref<2x7x7x128xf32, #tpu.memory_space<vmem>>, vector<2x1x1x128xf32>
    %299 = vector.shape_cast %298 : vector<2x1x1x128xf32> to vector<2x128xf32>
    %c0_343 = arith.constant 0 : index
    %c2_344 = arith.constant 2 : index
    %c5_345 = arith.constant 5 : index
    %c0_346 = arith.constant 0 : index
    %300 = vector.load %arg14[%c0_343, %c2_344, %c5_345, %c0_346] : memref<2x7x7x128xf32, #tpu.memory_space<vmem>>, vector<2x1x1x128xf32>
    %301 = vector.shape_cast %300 : vector<2x1x1x128xf32> to vector<2x128xf32>
    %302 = tpu.concatenate %295, %297, %299, %301 in 1 : vector<2x128xf32>, vector<2x128xf32>, vector<2x128xf32>, vector<2x128xf32> -> vector<2x512xf32>
    %cst_347 = arith.constant dense<0.000000e+00> : vector<2x128xf32>
    %303 = tpu.matmul %302, %142, %cst_347 {dimension_numbers = #tpu.dot_dimension_numbers<[1], [0], [0], [1], [0, 0, 1, 1], [], []>} : vector<2x512xf32>, vector<512x128xf32>, vector<2x128xf32> -> vector<2x128xf32>
    %304 = vector.broadcast %143 : vector<1x128xf32> to vector<2x128xf32>
    %305 = arith.addf %303, %304 : vector<2x128xf32>
    %cst_348 = arith.constant 0.000000e+00 : f32
    %306 = vector.broadcast %cst_348 : f32 to vector<2x128xf32>
    %307 = arith.maximumf %305, %306 : vector<2x128xf32>
    %c0_349 = arith.constant 0 : index
    %c1280 = arith.constant 1280 : index
    %308 = vector.load %arg15[%c0_349, %c1280] : memref<2x4608xf32, #tpu.memory_space<vmem>>, vector<2x128xf32>
    tpu.vector_store %arg15[%c0_349, %c1280], %307 {strides = array<i32>} : memref<2x4608xf32, #tpu.memory_space<vmem>>, vector<2x128xf32>,
    %c0_350 = arith.constant 0 : index
    %c1_351 = arith.constant 1 : index
    %c5_352 = arith.constant 5 : index
    %c0_353 = arith.constant 0 : index
    %309 = vector.load %arg14[%c0_350, %c1_351, %c5_352, %c0_353] : memref<2x7x7x128xf32, #tpu.memory_space<vmem>>, vector<2x1x1x128xf32>
    %310 = vector.shape_cast %309 : vector<2x1x1x128xf32> to vector<2x128xf32>
    %c0_354 = arith.constant 0 : index
    %c1_355 = arith.constant 1 : index
    %c6_356 = arith.constant 6 : index
    %c0_357 = arith.constant 0 : index
    %311 = vector.load %arg14[%c0_354, %c1_355, %c6_356, %c0_357] : memref<2x7x7x128xf32, #tpu.memory_space<vmem>>, vector<2x1x1x128xf32>
    %312 = vector.shape_cast %311 : vector<2x1x1x128xf32> to vector<2x128xf32>
    %c0_358 = arith.constant 0 : index
    %c2_359 = arith.constant 2 : index
    %c5_360 = arith.constant 5 : index
    %c0_361 = arith.constant 0 : index
    %313 = vector.load %arg14[%c0_358, %c2_359, %c5_360, %c0_361] : memref<2x7x7x128xf32, #tpu.memory_space<vmem>>, vector<2x1x1x128xf32>
    %314 = vector.shape_cast %313 : vector<2x1x1x128xf32> to vector<2x128xf32>
    %c0_362 = arith.constant 0 : index
    %c2_363 = arith.constant 2 : index
    %c6_364 = arith.constant 6 : index
    %c0_365 = arith.constant 0 : index
    %315 = vector.load %arg14[%c0_362, %c2_363, %c6_364, %c0_365] : memref<2x7x7x128xf32, #tpu.memory_space<vmem>>, vector<2x1x1x128xf32>
    %316 = vector.shape_cast %315 : vector<2x1x1x128xf32> to vector<2x128xf32>
    %317 = tpu.concatenate %310, %312, %314, %316 in 1 : vector<2x128xf32>, vector<2x128xf32>, vector<2x128xf32>, vector<2x128xf32> -> vector<2x512xf32>
    %cst_366 = arith.constant dense<0.000000e+00> : vector<2x128xf32>
    %318 = tpu.matmul %317, %142, %cst_366 {dimension_numbers = #tpu.dot_dimension_numbers<[1], [0], [0], [1], [0, 0, 1, 1], [], []>} : vector<2x512xf32>, vector<512x128xf32>, vector<2x128xf32> -> vector<2x128xf32>
    %319 = vector.broadcast %143 : vector<1x128xf32> to vector<2x128xf32>
    %320 = arith.addf %318, %319 : vector<2x128xf32>
    %cst_367 = arith.constant 0.000000e+00 : f32
    %321 = vector.broadcast %cst_367 : f32 to vector<2x128xf32>
    %322 = arith.maximumf %320, %321 : vector<2x128xf32>
    %c0_368 = arith.constant 0 : index
    %c1408 = arith.constant 1408 : index
    %323 = vector.load %arg15[%c0_368, %c1408] : memref<2x4608xf32, #tpu.memory_space<vmem>>, vector<2x128xf32>
    tpu.vector_store %arg15[%c0_368, %c1408], %322 {strides = array<i32>} : memref<2x4608xf32, #tpu.memory_space<vmem>>, vector<2x128xf32>,
    %c0_369 = arith.constant 0 : index
    %c2_370 = arith.constant 2 : index
    %c0_371 = arith.constant 0 : index
    %c0_372 = arith.constant 0 : index
    %324 = vector.load %arg14[%c0_369, %c2_370, %c0_371, %c0_372] : memref<2x7x7x128xf32, #tpu.memory_space<vmem>>, vector<2x1x1x128xf32>
    %325 = vector.shape_cast %324 : vector<2x1x1x128xf32> to vector<2x128xf32>
    %c0_373 = arith.constant 0 : index
    %c2_374 = arith.constant 2 : index
    %c1_375 = arith.constant 1 : index
    %c0_376 = arith.constant 0 : index
    %326 = vector.load %arg14[%c0_373, %c2_374, %c1_375, %c0_376] : memref<2x7x7x128xf32, #tpu.memory_space<vmem>>, vector<2x1x1x128xf32>
    %327 = vector.shape_cast %326 : vector<2x1x1x128xf32> to vector<2x128xf32>
    %c0_377 = arith.constant 0 : index
    %c3_378 = arith.constant 3 : index
    %c0_379 = arith.constant 0 : index
    %c0_380 = arith.constant 0 : index
    %328 = vector.load %arg14[%c0_377, %c3_378, %c0_379, %c0_380] : memref<2x7x7x128xf32, #tpu.memory_space<vmem>>, vector<2x1x1x128xf32>
    %329 = vector.shape_cast %328 : vector<2x1x1x128xf32> to vector<2x128xf32>
    %c0_381 = arith.constant 0 : index
    %c3_382 = arith.constant 3 : index
    %c1_383 = arith.constant 1 : index
    %c0_384 = arith.constant 0 : index
    %330 = vector.load %arg14[%c0_381, %c3_382, %c1_383, %c0_384] : memref<2x7x7x128xf32, #tpu.memory_space<vmem>>, vector<2x1x1x128xf32>
    %331 = vector.shape_cast %330 : vector<2x1x1x128xf32> to vector<2x128xf32>
    %332 = tpu.concatenate %325, %327, %329, %331 in 1 : vector<2x128xf32>, vector<2x128xf32>, vector<2x128xf32>, vector<2x128xf32> -> vector<2x512xf32>
    %cst_385 = arith.constant dense<0.000000e+00> : vector<2x128xf32>
    %333 = tpu.matmul %332, %142, %cst_385 {dimension_numbers = #tpu.dot_dimension_numbers<[1], [0], [0], [1], [0, 0, 1, 1], [], []>} : vector<2x512xf32>, vector<512x128xf32>, vector<2x128xf32> -> vector<2x128xf32>
    %334 = vector.broadcast %143 : vector<1x128xf32> to vector<2x128xf32>
    %335 = arith.addf %333, %334 : vector<2x128xf32>
    %cst_386 = arith.constant 0.000000e+00 : f32
    %336 = vector.broadcast %cst_386 : f32 to vector<2x128xf32>
    %337 = arith.maximumf %335, %336 : vector<2x128xf32>
    %c0_387 = arith.constant 0 : index
    %c1536 = arith.constant 1536 : index
    %338 = vector.load %arg15[%c0_387, %c1536] : memref<2x4608xf32, #tpu.memory_space<vmem>>, vector<2x128xf32>
    tpu.vector_store %arg15[%c0_387, %c1536], %337 {strides = array<i32>} : memref<2x4608xf32, #tpu.memory_space<vmem>>, vector<2x128xf32>,
    %c0_388 = arith.constant 0 : index
    %c2_389 = arith.constant 2 : index
    %c1_390 = arith.constant 1 : index
    %c0_391 = arith.constant 0 : index
    %339 = vector.load %arg14[%c0_388, %c2_389, %c1_390, %c0_391] : memref<2x7x7x128xf32, #tpu.memory_space<vmem>>, vector<2x1x1x128xf32>
    %340 = vector.shape_cast %339 : vector<2x1x1x128xf32> to vector<2x128xf32>
    %c0_392 = arith.constant 0 : index
    %c2_393 = arith.constant 2 : index
    %c2_394 = arith.constant 2 : index
    %c0_395 = arith.constant 0 : index
    %341 = vector.load %arg14[%c0_392, %c2_393, %c2_394, %c0_395] : memref<2x7x7x128xf32, #tpu.memory_space<vmem>>, vector<2x1x1x128xf32>
    %342 = vector.shape_cast %341 : vector<2x1x1x128xf32> to vector<2x128xf32>
    %c0_396 = arith.constant 0 : index
    %c3_397 = arith.constant 3 : index
    %c1_398 = arith.constant 1 : index
    %c0_399 = arith.constant 0 : index
    %343 = vector.load %arg14[%c0_396, %c3_397, %c1_398, %c0_399] : memref<2x7x7x128xf32, #tpu.memory_space<vmem>>, vector<2x1x1x128xf32>
    %344 = vector.shape_cast %343 : vector<2x1x1x128xf32> to vector<2x128xf32>
    %c0_400 = arith.constant 0 : index
    %c3_401 = arith.constant 3 : index
    %c2_402 = arith.constant 2 : index
    %c0_403 = arith.constant 0 : index
    %345 = vector.load %arg14[%c0_400, %c3_401, %c2_402, %c0_403] : memref<2x7x7x128xf32, #tpu.memory_space<vmem>>, vector<2x1x1x128xf32>
    %346 = vector.shape_cast %345 : vector<2x1x1x128xf32> to vector<2x128xf32>
    %347 = tpu.concatenate %340, %342, %344, %346 in 1 : vector<2x128xf32>, vector<2x128xf32>, vector<2x128xf32>, vector<2x128xf32> -> vector<2x512xf32>
    %cst_404 = arith.constant dense<0.000000e+00> : vector<2x128xf32>
    %348 = tpu.matmul %347, %142, %cst_404 {dimension_numbers = #tpu.dot_dimension_numbers<[1], [0], [0], [1], [0, 0, 1, 1], [], []>} : vector<2x512xf32>, vector<512x128xf32>, vector<2x128xf32> -> vector<2x128xf32>
    %349 = vector.broadcast %143 : vector<1x128xf32> to vector<2x128xf32>
    %350 = arith.addf %348, %349 : vector<2x128xf32>
    %cst_405 = arith.constant 0.000000e+00 : f32
    %351 = vector.broadcast %cst_405 : f32 to vector<2x128xf32>
    %352 = arith.maximumf %350, %351 : vector<2x128xf32>
    %c0_406 = arith.constant 0 : index
    %c1664 = arith.constant 1664 : index
    %353 = vector.load %arg15[%c0_406, %c1664] : memref<2x4608xf32, #tpu.memory_space<vmem>>, vector<2x128xf32>
    tpu.vector_store %arg15[%c0_406, %c1664], %352 {strides = array<i32>} : memref<2x4608xf32, #tpu.memory_space<vmem>>, vector<2x128xf32>,
    %c0_407 = arith.constant 0 : index
    %c2_408 = arith.constant 2 : index
    %c2_409 = arith.constant 2 : index
    %c0_410 = arith.constant 0 : index
    %354 = vector.load %arg14[%c0_407, %c2_408, %c2_409, %c0_410] : memref<2x7x7x128xf32, #tpu.memory_space<vmem>>, vector<2x1x1x128xf32>
    %355 = vector.shape_cast %354 : vector<2x1x1x128xf32> to vector<2x128xf32>
    %c0_411 = arith.constant 0 : index
    %c2_412 = arith.constant 2 : index
    %c3_413 = arith.constant 3 : index
    %c0_414 = arith.constant 0 : index
    %356 = vector.load %arg14[%c0_411, %c2_412, %c3_413, %c0_414] : memref<2x7x7x128xf32, #tpu.memory_space<vmem>>, vector<2x1x1x128xf32>
    %357 = vector.shape_cast %356 : vector<2x1x1x128xf32> to vector<2x128xf32>
    %c0_415 = arith.constant 0 : index
    %c3_416 = arith.constant 3 : index
    %c2_417 = arith.constant 2 : index
    %c0_418 = arith.constant 0 : index
    %358 = vector.load %arg14[%c0_415, %c3_416, %c2_417, %c0_418] : memref<2x7x7x128xf32, #tpu.memory_space<vmem>>, vector<2x1x1x128xf32>
    %359 = vector.shape_cast %358 : vector<2x1x1x128xf32> to vector<2x128xf32>
    %c0_419 = arith.constant 0 : index
    %c3_420 = arith.constant 3 : index
    %c3_421 = arith.constant 3 : index
    %c0_422 = arith.constant 0 : index
    %360 = vector.load %arg14[%c0_419, %c3_420, %c3_421, %c0_422] : memref<2x7x7x128xf32, #tpu.memory_space<vmem>>, vector<2x1x1x128xf32>
    %361 = vector.shape_cast %360 : vector<2x1x1x128xf32> to vector<2x128xf32>
    %362 = tpu.concatenate %355, %357, %359, %361 in 1 : vector<2x128xf32>, vector<2x128xf32>, vector<2x128xf32>, vector<2x128xf32> -> vector<2x512xf32>
    %cst_423 = arith.constant dense<0.000000e+00> : vector<2x128xf32>
    %363 = tpu.matmul %362, %142, %cst_423 {dimension_numbers = #tpu.dot_dimension_numbers<[1], [0], [0], [1], [0, 0, 1, 1], [], []>} : vector<2x512xf32>, vector<512x128xf32>, vector<2x128xf32> -> vector<2x128xf32>
    %364 = vector.broadcast %143 : vector<1x128xf32> to vector<2x128xf32>
    %365 = arith.addf %363, %364 : vector<2x128xf32>
    %cst_424 = arith.constant 0.000000e+00 : f32
    %366 = vector.broadcast %cst_424 : f32 to vector<2x128xf32>
    %367 = arith.maximumf %365, %366 : vector<2x128xf32>
    %c0_425 = arith.constant 0 : index
    %c1792 = arith.constant 1792 : index
    %368 = vector.load %arg15[%c0_425, %c1792] : memref<2x4608xf32, #tpu.memory_space<vmem>>, vector<2x128xf32>
    tpu.vector_store %arg15[%c0_425, %c1792], %367 {strides = array<i32>} : memref<2x4608xf32, #tpu.memory_space<vmem>>, vector<2x128xf32>,
    %c0_426 = arith.constant 0 : index
    %c2_427 = arith.constant 2 : index
    %c3_428 = arith.constant 3 : index
    %c0_429 = arith.constant 0 : index
    %369 = vector.load %arg14[%c0_426, %c2_427, %c3_428, %c0_429] : memref<2x7x7x128xf32, #tpu.memory_space<vmem>>, vector<2x1x1x128xf32>
    %370 = vector.shape_cast %369 : vector<2x1x1x128xf32> to vector<2x128xf32>
    %c0_430 = arith.constant 0 : index
    %c2_431 = arith.constant 2 : index
    %c4_432 = arith.constant 4 : index
    %c0_433 = arith.constant 0 : index
    %371 = vector.load %arg14[%c0_430, %c2_431, %c4_432, %c0_433] : memref<2x7x7x128xf32, #tpu.memory_space<vmem>>, vector<2x1x1x128xf32>
    %372 = vector.shape_cast %371 : vector<2x1x1x128xf32> to vector<2x128xf32>
    %c0_434 = arith.constant 0 : index
    %c3_435 = arith.constant 3 : index
    %c3_436 = arith.constant 3 : index
    %c0_437 = arith.constant 0 : index
    %373 = vector.load %arg14[%c0_434, %c3_435, %c3_436, %c0_437] : memref<2x7x7x128xf32, #tpu.memory_space<vmem>>, vector<2x1x1x128xf32>
    %374 = vector.shape_cast %373 : vector<2x1x1x128xf32> to vector<2x128xf32>
    %c0_438 = arith.constant 0 : index
    %c3_439 = arith.constant 3 : index
    %c4_440 = arith.constant 4 : index
    %c0_441 = arith.constant 0 : index
    %375 = vector.load %arg14[%c0_438, %c3_439, %c4_440, %c0_441] : memref<2x7x7x128xf32, #tpu.memory_space<vmem>>, vector<2x1x1x128xf32>
    %376 = vector.shape_cast %375 : vector<2x1x1x128xf32> to vector<2x128xf32>
    %377 = tpu.concatenate %370, %372, %374, %376 in 1 : vector<2x128xf32>, vector<2x128xf32>, vector<2x128xf32>, vector<2x128xf32> -> vector<2x512xf32>
    %cst_442 = arith.constant dense<0.000000e+00> : vector<2x128xf32>
    %378 = tpu.matmul %377, %142, %cst_442 {dimension_numbers = #tpu.dot_dimension_numbers<[1], [0], [0], [1], [0, 0, 1, 1], [], []>} : vector<2x512xf32>, vector<512x128xf32>, vector<2x128xf32> -> vector<2x128xf32>
    %379 = vector.broadcast %143 : vector<1x128xf32> to vector<2x128xf32>
    %380 = arith.addf %378, %379 : vector<2x128xf32>
    %cst_443 = arith.constant 0.000000e+00 : f32
    %381 = vector.broadcast %cst_443 : f32 to vector<2x128xf32>
    %382 = arith.maximumf %380, %381 : vector<2x128xf32>
    %c0_444 = arith.constant 0 : index
    %c1920 = arith.constant 1920 : index
    %383 = vector.load %arg15[%c0_444, %c1920] : memref<2x4608xf32, #tpu.memory_space<vmem>>, vector<2x128xf32>
    tpu.vector_store %arg15[%c0_444, %c1920], %382 {strides = array<i32>} : memref<2x4608xf32, #tpu.memory_space<vmem>>, vector<2x128xf32>,
    %c0_445 = arith.constant 0 : index
    %c2_446 = arith.constant 2 : index
    %c4_447 = arith.constant 4 : index
    %c0_448 = arith.constant 0 : index
    %384 = vector.load %arg14[%c0_445, %c2_446, %c4_447, %c0_448] : memref<2x7x7x128xf32, #tpu.memory_space<vmem>>, vector<2x1x1x128xf32>
    %385 = vector.shape_cast %384 : vector<2x1x1x128xf32> to vector<2x128xf32>
    %c0_449 = arith.constant 0 : index
    %c2_450 = arith.constant 2 : index
    %c5_451 = arith.constant 5 : index
    %c0_452 = arith.constant 0 : index
    %386 = vector.load %arg14[%c0_449, %c2_450, %c5_451, %c0_452] : memref<2x7x7x128xf32, #tpu.memory_space<vmem>>, vector<2x1x1x128xf32>
    %387 = vector.shape_cast %386 : vector<2x1x1x128xf32> to vector<2x128xf32>
    %c0_453 = arith.constant 0 : index
    %c3_454 = arith.constant 3 : index
    %c4_455 = arith.constant 4 : index
    %c0_456 = arith.constant 0 : index
    %388 = vector.load %arg14[%c0_453, %c3_454, %c4_455, %c0_456] : memref<2x7x7x128xf32, #tpu.memory_space<vmem>>, vector<2x1x1x128xf32>
    %389 = vector.shape_cast %388 : vector<2x1x1x128xf32> to vector<2x128xf32>
    %c0_457 = arith.constant 0 : index
    %c3_458 = arith.constant 3 : index
    %c5_459 = arith.constant 5 : index
    %c0_460 = arith.constant 0 : index
    %390 = vector.load %arg14[%c0_457, %c3_458, %c5_459, %c0_460] : memref<2x7x7x128xf32, #tpu.memory_space<vmem>>, vector<2x1x1x128xf32>
    %391 = vector.shape_cast %390 : vector<2x1x1x128xf32> to vector<2x128xf32>
    %392 = tpu.concatenate %385, %387, %389, %391 in 1 : vector<2x128xf32>, vector<2x128xf32>, vector<2x128xf32>, vector<2x128xf32> -> vector<2x512xf32>
    %cst_461 = arith.constant dense<0.000000e+00> : vector<2x128xf32>
    %393 = tpu.matmul %392, %142, %cst_461 {dimension_numbers = #tpu.dot_dimension_numbers<[1], [0], [0], [1], [0, 0, 1, 1], [], []>} : vector<2x512xf32>, vector<512x128xf32>, vector<2x128xf32> -> vector<2x128xf32>
    %394 = vector.broadcast %143 : vector<1x128xf32> to vector<2x128xf32>
    %395 = arith.addf %393, %394 : vector<2x128xf32>
    %cst_462 = arith.constant 0.000000e+00 : f32
    %396 = vector.broadcast %cst_462 : f32 to vector<2x128xf32>
    %397 = arith.maximumf %395, %396 : vector<2x128xf32>
    %c0_463 = arith.constant 0 : index
    %c2048 = arith.constant 2048 : index
    %398 = vector.load %arg15[%c0_463, %c2048] : memref<2x4608xf32, #tpu.memory_space<vmem>>, vector<2x128xf32>
    tpu.vector_store %arg15[%c0_463, %c2048], %397 {strides = array<i32>} : memref<2x4608xf32, #tpu.memory_space<vmem>>, vector<2x128xf32>,
    %c0_464 = arith.constant 0 : index
    %c2_465 = arith.constant 2 : index
    %c5_466 = arith.constant 5 : index
    %c0_467 = arith.constant 0 : index
    %399 = vector.load %arg14[%c0_464, %c2_465, %c5_466, %c0_467] : memref<2x7x7x128xf32, #tpu.memory_space<vmem>>, vector<2x1x1x128xf32>
    %400 = vector.shape_cast %399 : vector<2x1x1x128xf32> to vector<2x128xf32>
    %c0_468 = arith.constant 0 : index
    %c2_469 = arith.constant 2 : index
    %c6_470 = arith.constant 6 : index
    %c0_471 = arith.constant 0 : index
    %401 = vector.load %arg14[%c0_468, %c2_469, %c6_470, %c0_471] : memref<2x7x7x128xf32, #tpu.memory_space<vmem>>, vector<2x1x1x128xf32>
    %402 = vector.shape_cast %401 : vector<2x1x1x128xf32> to vector<2x128xf32>
    %c0_472 = arith.constant 0 : index
    %c3_473 = arith.constant 3 : index
    %c5_474 = arith.constant 5 : index
    %c0_475 = arith.constant 0 : index
    %403 = vector.load %arg14[%c0_472, %c3_473, %c5_474, %c0_475] : memref<2x7x7x128xf32, #tpu.memory_space<vmem>>, vector<2x1x1x128xf32>
    %404 = vector.shape_cast %403 : vector<2x1x1x128xf32> to vector<2x128xf32>
    %c0_476 = arith.constant 0 : index
    %c3_477 = arith.constant 3 : index
    %c6_478 = arith.constant 6 : index
    %c0_479 = arith.constant 0 : index
    %405 = vector.load %arg14[%c0_476, %c3_477, %c6_478, %c0_479] : memref<2x7x7x128xf32, #tpu.memory_space<vmem>>, vector<2x1x1x128xf32>
    %406 = vector.shape_cast %405 : vector<2x1x1x128xf32> to vector<2x128xf32>
    %407 = tpu.concatenate %400, %402, %404, %406 in 1 : vector<2x128xf32>, vector<2x128xf32>, vector<2x128xf32>, vector<2x128xf32> -> vector<2x512xf32>
    %cst_480 = arith.constant dense<0.000000e+00> : vector<2x128xf32>
    %408 = tpu.matmul %407, %142, %cst_480 {dimension_numbers = #tpu.dot_dimension_numbers<[1], [0], [0], [1], [0, 0, 1, 1], [], []>} : vector<2x512xf32>, vector<512x128xf32>, vector<2x128xf32> -> vector<2x128xf32>
    %409 = vector.broadcast %143 : vector<1x128xf32> to vector<2x128xf32>
    %410 = arith.addf %408, %409 : vector<2x128xf32>
    %cst_481 = arith.constant 0.000000e+00 : f32
    %411 = vector.broadcast %cst_481 : f32 to vector<2x128xf32>
    %412 = arith.maximumf %410, %411 : vector<2x128xf32>
    %c0_482 = arith.constant 0 : index
    %c2176 = arith.constant 2176 : index
    %413 = vector.load %arg15[%c0_482, %c2176] : memref<2x4608xf32, #tpu.memory_space<vmem>>, vector<2x128xf32>
    tpu.vector_store %arg15[%c0_482, %c2176], %412 {strides = array<i32>} : memref<2x4608xf32, #tpu.memory_space<vmem>>, vector<2x128xf32>,
    %c0_483 = arith.constant 0 : index
    %c3_484 = arith.constant 3 : index
    %c0_485 = arith.constant 0 : index
    %c0_486 = arith.constant 0 : index
    %414 = vector.load %arg14[%c0_483, %c3_484, %c0_485, %c0_486] : memref<2x7x7x128xf32, #tpu.memory_space<vmem>>, vector<2x1x1x128xf32>
    %415 = vector.shape_cast %414 : vector<2x1x1x128xf32> to vector<2x128xf32>
    %c0_487 = arith.constant 0 : index
    %c3_488 = arith.constant 3 : index
    %c1_489 = arith.constant 1 : index
    %c0_490 = arith.constant 0 : index
    %416 = vector.load %arg14[%c0_487, %c3_488, %c1_489, %c0_490] : memref<2x7x7x128xf32, #tpu.memory_space<vmem>>, vector<2x1x1x128xf32>
    %417 = vector.shape_cast %416 : vector<2x1x1x128xf32> to vector<2x128xf32>
    %c0_491 = arith.constant 0 : index
    %c4_492 = arith.constant 4 : index
    %c0_493 = arith.constant 0 : index
    %c0_494 = arith.constant 0 : index
    %418 = vector.load %arg14[%c0_491, %c4_492, %c0_493, %c0_494] : memref<2x7x7x128xf32, #tpu.memory_space<vmem>>, vector<2x1x1x128xf32>
    %419 = vector.shape_cast %418 : vector<2x1x1x128xf32> to vector<2x128xf32>
    %c0_495 = arith.constant 0 : index
    %c4_496 = arith.constant 4 : index
    %c1_497 = arith.constant 1 : index
    %c0_498 = arith.constant 0 : index
    %420 = vector.load %arg14[%c0_495, %c4_496, %c1_497, %c0_498] : memref<2x7x7x128xf32, #tpu.memory_space<vmem>>, vector<2x1x1x128xf32>
    %421 = vector.shape_cast %420 : vector<2x1x1x128xf32> to vector<2x128xf32>
    %422 = tpu.concatenate %415, %417, %419, %421 in 1 : vector<2x128xf32>, vector<2x128xf32>, vector<2x128xf32>, vector<2x128xf32> -> vector<2x512xf32>
    %cst_499 = arith.constant dense<0.000000e+00> : vector<2x128xf32>
    %423 = tpu.matmul %422, %142, %cst_499 {dimension_numbers = #tpu.dot_dimension_numbers<[1], [0], [0], [1], [0, 0, 1, 1], [], []>} : vector<2x512xf32>, vector<512x128xf32>, vector<2x128xf32> -> vector<2x128xf32>
    %424 = vector.broadcast %143 : vector<1x128xf32> to vector<2x128xf32>
    %425 = arith.addf %423, %424 : vector<2x128xf32>
    %cst_500 = arith.constant 0.000000e+00 : f32
    %426 = vector.broadcast %cst_500 : f32 to vector<2x128xf32>
    %427 = arith.maximumf %425, %426 : vector<2x128xf32>
    %c0_501 = arith.constant 0 : index
    %c2304 = arith.constant 2304 : index
    %428 = vector.load %arg15[%c0_501, %c2304] : memref<2x4608xf32, #tpu.memory_space<vmem>>, vector<2x128xf32>
    tpu.vector_store %arg15[%c0_501, %c2304], %427 {strides = array<i32>} : memref<2x4608xf32, #tpu.memory_space<vmem>>, vector<2x128xf32>,
    %c0_502 = arith.constant 0 : index
    %c3_503 = arith.constant 3 : index
    %c1_504 = arith.constant 1 : index
    %c0_505 = arith.constant 0 : index
    %429 = vector.load %arg14[%c0_502, %c3_503, %c1_504, %c0_505] : memref<2x7x7x128xf32, #tpu.memory_space<vmem>>, vector<2x1x1x128xf32>
    %430 = vector.shape_cast %429 : vector<2x1x1x128xf32> to vector<2x128xf32>
    %c0_506 = arith.constant 0 : index
    %c3_507 = arith.constant 3 : index
    %c2_508 = arith.constant 2 : index
    %c0_509 = arith.constant 0 : index
    %431 = vector.load %arg14[%c0_506, %c3_507, %c2_508, %c0_509] : memref<2x7x7x128xf32, #tpu.memory_space<vmem>>, vector<2x1x1x128xf32>
    %432 = vector.shape_cast %431 : vector<2x1x1x128xf32> to vector<2x128xf32>
    %c0_510 = arith.constant 0 : index
    %c4_511 = arith.constant 4 : index
    %c1_512 = arith.constant 1 : index
    %c0_513 = arith.constant 0 : index
    %433 = vector.load %arg14[%c0_510, %c4_511, %c1_512, %c0_513] : memref<2x7x7x128xf32, #tpu.memory_space<vmem>>, vector<2x1x1x128xf32>
    %434 = vector.shape_cast %433 : vector<2x1x1x128xf32> to vector<2x128xf32>
    %c0_514 = arith.constant 0 : index
    %c4_515 = arith.constant 4 : index
    %c2_516 = arith.constant 2 : index
    %c0_517 = arith.constant 0 : index
    %435 = vector.load %arg14[%c0_514, %c4_515, %c2_516, %c0_517] : memref<2x7x7x128xf32, #tpu.memory_space<vmem>>, vector<2x1x1x128xf32>
    %436 = vector.shape_cast %435 : vector<2x1x1x128xf32> to vector<2x128xf32>
    %437 = tpu.concatenate %430, %432, %434, %436 in 1 : vector<2x128xf32>, vector<2x128xf32>, vector<2x128xf32>, vector<2x128xf32> -> vector<2x512xf32>
    %cst_518 = arith.constant dense<0.000000e+00> : vector<2x128xf32>
    %438 = tpu.matmul %437, %142, %cst_518 {dimension_numbers = #tpu.dot_dimension_numbers<[1], [0], [0], [1], [0, 0, 1, 1], [], []>} : vector<2x512xf32>, vector<512x128xf32>, vector<2x128xf32> -> vector<2x128xf32>
    %439 = vector.broadcast %143 : vector<1x128xf32> to vector<2x128xf32>
    %440 = arith.addf %438, %439 : vector<2x128xf32>
    %cst_519 = arith.constant 0.000000e+00 : f32
    %441 = vector.broadcast %cst_519 : f32 to vector<2x128xf32>
    %442 = arith.maximumf %440, %441 : vector<2x128xf32>
    %c0_520 = arith.constant 0 : index
    %c2432 = arith.constant 2432 : index
    %443 = vector.load %arg15[%c0_520, %c2432] : memref<2x4608xf32, #tpu.memory_space<vmem>>, vector<2x128xf32>
    tpu.vector_store %arg15[%c0_520, %c2432], %442 {strides = array<i32>} : memref<2x4608xf32, #tpu.memory_space<vmem>>, vector<2x128xf32>,
    %c0_521 = arith.constant 0 : index
    %c3_522 = arith.constant 3 : index
    %c2_523 = arith.constant 2 : index
    %c0_524 = arith.constant 0 : index
    %444 = vector.load %arg14[%c0_521, %c3_522, %c2_523, %c0_524] : memref<2x7x7x128xf32, #tpu.memory_space<vmem>>, vector<2x1x1x128xf32>
    %445 = vector.shape_cast %444 : vector<2x1x1x128xf32> to vector<2x128xf32>
    %c0_525 = arith.constant 0 : index
    %c3_526 = arith.constant 3 : index
    %c3_527 = arith.constant 3 : index
    %c0_528 = arith.constant 0 : index
    %446 = vector.load %arg14[%c0_525, %c3_526, %c3_527, %c0_528] : memref<2x7x7x128xf32, #tpu.memory_space<vmem>>, vector<2x1x1x128xf32>
    %447 = vector.shape_cast %446 : vector<2x1x1x128xf32> to vector<2x128xf32>
    %c0_529 = arith.constant 0 : index
    %c4_530 = arith.constant 4 : index
    %c2_531 = arith.constant 2 : index
    %c0_532 = arith.constant 0 : index
    %448 = vector.load %arg14[%c0_529, %c4_530, %c2_531, %c0_532] : memref<2x7x7x128xf32, #tpu.memory_space<vmem>>, vector<2x1x1x128xf32>
    %449 = vector.shape_cast %448 : vector<2x1x1x128xf32> to vector<2x128xf32>
    %c0_533 = arith.constant 0 : index
    %c4_534 = arith.constant 4 : index
    %c3_535 = arith.constant 3 : index
    %c0_536 = arith.constant 0 : index
    %450 = vector.load %arg14[%c0_533, %c4_534, %c3_535, %c0_536] : memref<2x7x7x128xf32, #tpu.memory_space<vmem>>, vector<2x1x1x128xf32>
    %451 = vector.shape_cast %450 : vector<2x1x1x128xf32> to vector<2x128xf32>
    %452 = tpu.concatenate %445, %447, %449, %451 in 1 : vector<2x128xf32>, vector<2x128xf32>, vector<2x128xf32>, vector<2x128xf32> -> vector<2x512xf32>
    %cst_537 = arith.constant dense<0.000000e+00> : vector<2x128xf32>
    %453 = tpu.matmul %452, %142, %cst_537 {dimension_numbers = #tpu.dot_dimension_numbers<[1], [0], [0], [1], [0, 0, 1, 1], [], []>} : vector<2x512xf32>, vector<512x128xf32>, vector<2x128xf32> -> vector<2x128xf32>
    %454 = vector.broadcast %143 : vector<1x128xf32> to vector<2x128xf32>
    %455 = arith.addf %453, %454 : vector<2x128xf32>
    %cst_538 = arith.constant 0.000000e+00 : f32
    %456 = vector.broadcast %cst_538 : f32 to vector<2x128xf32>
    %457 = arith.maximumf %455, %456 : vector<2x128xf32>
    %c0_539 = arith.constant 0 : index
    %c2560 = arith.constant 2560 : index
    %458 = vector.load %arg15[%c0_539, %c2560] : memref<2x4608xf32, #tpu.memory_space<vmem>>, vector<2x128xf32>
    tpu.vector_store %arg15[%c0_539, %c2560], %457 {strides = array<i32>} : memref<2x4608xf32, #tpu.memory_space<vmem>>, vector<2x128xf32>,
    %c0_540 = arith.constant 0 : index
    %c3_541 = arith.constant 3 : index
    %c3_542 = arith.constant 3 : index
    %c0_543 = arith.constant 0 : index
    %459 = vector.load %arg14[%c0_540, %c3_541, %c3_542, %c0_543] : memref<2x7x7x128xf32, #tpu.memory_space<vmem>>, vector<2x1x1x128xf32>
    %460 = vector.shape_cast %459 : vector<2x1x1x128xf32> to vector<2x128xf32>
    %c0_544 = arith.constant 0 : index
    %c3_545 = arith.constant 3 : index
    %c4_546 = arith.constant 4 : index
    %c0_547 = arith.constant 0 : index
    %461 = vector.load %arg14[%c0_544, %c3_545, %c4_546, %c0_547] : memref<2x7x7x128xf32, #tpu.memory_space<vmem>>, vector<2x1x1x128xf32>
    %462 = vector.shape_cast %461 : vector<2x1x1x128xf32> to vector<2x128xf32>
    %c0_548 = arith.constant 0 : index
    %c4_549 = arith.constant 4 : index
    %c3_550 = arith.constant 3 : index
    %c0_551 = arith.constant 0 : index
    %463 = vector.load %arg14[%c0_548, %c4_549, %c3_550, %c0_551] : memref<2x7x7x128xf32, #tpu.memory_space<vmem>>, vector<2x1x1x128xf32>
    %464 = vector.shape_cast %463 : vector<2x1x1x128xf32> to vector<2x128xf32>
    %c0_552 = arith.constant 0 : index
    %c4_553 = arith.constant 4 : index
    %c4_554 = arith.constant 4 : index
    %c0_555 = arith.constant 0 : index
    %465 = vector.load %arg14[%c0_552, %c4_553, %c4_554, %c0_555] : memref<2x7x7x128xf32, #tpu.memory_space<vmem>>, vector<2x1x1x128xf32>
    %466 = vector.shape_cast %465 : vector<2x1x1x128xf32> to vector<2x128xf32>
    %467 = tpu.concatenate %460, %462, %464, %466 in 1 : vector<2x128xf32>, vector<2x128xf32>, vector<2x128xf32>, vector<2x128xf32> -> vector<2x512xf32>
    %cst_556 = arith.constant dense<0.000000e+00> : vector<2x128xf32>
    %468 = tpu.matmul %467, %142, %cst_556 {dimension_numbers = #tpu.dot_dimension_numbers<[1], [0], [0], [1], [0, 0, 1, 1], [], []>} : vector<2x512xf32>, vector<512x128xf32>, vector<2x128xf32> -> vector<2x128xf32>
    %469 = vector.broadcast %143 : vector<1x128xf32> to vector<2x128xf32>
    %470 = arith.addf %468, %469 : vector<2x128xf32>
    %cst_557 = arith.constant 0.000000e+00 : f32
    %471 = vector.broadcast %cst_557 : f32 to vector<2x128xf32>
    %472 = arith.maximumf %470, %471 : vector<2x128xf32>
    %c0_558 = arith.constant 0 : index
    %c2688 = arith.constant 2688 : index
    %473 = vector.load %arg15[%c0_558, %c2688] : memref<2x4608xf32, #tpu.memory_space<vmem>>, vector<2x128xf32>
    tpu.vector_store %arg15[%c0_558, %c2688], %472 {strides = array<i32>} : memref<2x4608xf32, #tpu.memory_space<vmem>>, vector<2x128xf32>,
    %c0_559 = arith.constant 0 : index
    %c3_560 = arith.constant 3 : index
    %c4_561 = arith.constant 4 : index
    %c0_562 = arith.constant 0 : index
    %474 = vector.load %arg14[%c0_559, %c3_560, %c4_561, %c0_562] : memref<2x7x7x128xf32, #tpu.memory_space<vmem>>, vector<2x1x1x128xf32>
    %475 = vector.shape_cast %474 : vector<2x1x1x128xf32> to vector<2x128xf32>
    %c0_563 = arith.constant 0 : index
    %c3_564 = arith.constant 3 : index
    %c5_565 = arith.constant 5 : index
    %c0_566 = arith.constant 0 : index
    %476 = vector.load %arg14[%c0_563, %c3_564, %c5_565, %c0_566] : memref<2x7x7x128xf32, #tpu.memory_space<vmem>>, vector<2x1x1x128xf32>
    %477 = vector.shape_cast %476 : vector<2x1x1x128xf32> to vector<2x128xf32>
    %c0_567 = arith.constant 0 : index
    %c4_568 = arith.constant 4 : index
    %c4_569 = arith.constant 4 : index
    %c0_570 = arith.constant 0 : index
    %478 = vector.load %arg14[%c0_567, %c4_568, %c4_569, %c0_570] : memref<2x7x7x128xf32, #tpu.memory_space<vmem>>, vector<2x1x1x128xf32>
    %479 = vector.shape_cast %478 : vector<2x1x1x128xf32> to vector<2x128xf32>
    %c0_571 = arith.constant 0 : index
    %c4_572 = arith.constant 4 : index
    %c5_573 = arith.constant 5 : index
    %c0_574 = arith.constant 0 : index
    %480 = vector.load %arg14[%c0_571, %c4_572, %c5_573, %c0_574] : memref<2x7x7x128xf32, #tpu.memory_space<vmem>>, vector<2x1x1x128xf32>
    %481 = vector.shape_cast %480 : vector<2x1x1x128xf32> to vector<2x128xf32>
    %482 = tpu.concatenate %475, %477, %479, %481 in 1 : vector<2x128xf32>, vector<2x128xf32>, vector<2x128xf32>, vector<2x128xf32> -> vector<2x512xf32>
    %cst_575 = arith.constant dense<0.000000e+00> : vector<2x128xf32>
    %483 = tpu.matmul %482, %142, %cst_575 {dimension_numbers = #tpu.dot_dimension_numbers<[1], [0], [0], [1], [0, 0, 1, 1], [], []>} : vector<2x512xf32>, vector<512x128xf32>, vector<2x128xf32> -> vector<2x128xf32>
    %484 = vector.broadcast %143 : vector<1x128xf32> to vector<2x128xf32>
    %485 = arith.addf %483, %484 : vector<2x128xf32>
    %cst_576 = arith.constant 0.000000e+00 : f32
    %486 = vector.broadcast %cst_576 : f32 to vector<2x128xf32>
    %487 = arith.maximumf %485, %486 : vector<2x128xf32>
    %c0_577 = arith.constant 0 : index
    %c2816 = arith.constant 2816 : index
    %488 = vector.load %arg15[%c0_577, %c2816] : memref<2x4608xf32, #tpu.memory_space<vmem>>, vector<2x128xf32>
    tpu.vector_store %arg15[%c0_577, %c2816], %487 {strides = array<i32>} : memref<2x4608xf32, #tpu.memory_space<vmem>>, vector<2x128xf32>,
    %c0_578 = arith.constant 0 : index
    %c3_579 = arith.constant 3 : index
    %c5_580 = arith.constant 5 : index
    %c0_581 = arith.constant 0 : index
    %489 = vector.load %arg14[%c0_578, %c3_579, %c5_580, %c0_581] : memref<2x7x7x128xf32, #tpu.memory_space<vmem>>, vector<2x1x1x128xf32>
    %490 = vector.shape_cast %489 : vector<2x1x1x128xf32> to vector<2x128xf32>
    %c0_582 = arith.constant 0 : index
    %c3_583 = arith.constant 3 : index
    %c6_584 = arith.constant 6 : index
    %c0_585 = arith.constant 0 : index
    %491 = vector.load %arg14[%c0_582, %c3_583, %c6_584, %c0_585] : memref<2x7x7x128xf32, #tpu.memory_space<vmem>>, vector<2x1x1x128xf32>
    %492 = vector.shape_cast %491 : vector<2x1x1x128xf32> to vector<2x128xf32>
    %c0_586 = arith.constant 0 : index
    %c4_587 = arith.constant 4 : index
    %c5_588 = arith.constant 5 : index
    %c0_589 = arith.constant 0 : index
    %493 = vector.load %arg14[%c0_586, %c4_587, %c5_588, %c0_589] : memref<2x7x7x128xf32, #tpu.memory_space<vmem>>, vector<2x1x1x128xf32>
    %494 = vector.shape_cast %493 : vector<2x1x1x128xf32> to vector<2x128xf32>
    %c0_590 = arith.constant 0 : index
    %c4_591 = arith.constant 4 : index
    %c6_592 = arith.constant 6 : index
    %c0_593 = arith.constant 0 : index
    %495 = vector.load %arg14[%c0_590, %c4_591, %c6_592, %c0_593] : memref<2x7x7x128xf32, #tpu.memory_space<vmem>>, vector<2x1x1x128xf32>
    %496 = vector.shape_cast %495 : vector<2x1x1x128xf32> to vector<2x128xf32>
    %497 = tpu.concatenate %490, %492, %494, %496 in 1 : vector<2x128xf32>, vector<2x128xf32>, vector<2x128xf32>, vector<2x128xf32> -> vector<2x512xf32>
    %cst_594 = arith.constant dense<0.000000e+00> : vector<2x128xf32>
    %498 = tpu.matmul %497, %142, %cst_594 {dimension_numbers = #tpu.dot_dimension_numbers<[1], [0], [0], [1], [0, 0, 1, 1], [], []>} : vector<2x512xf32>, vector<512x128xf32>, vector<2x128xf32> -> vector<2x128xf32>
    %499 = vector.broadcast %143 : vector<1x128xf32> to vector<2x128xf32>
    %500 = arith.addf %498, %499 : vector<2x128xf32>
    %cst_595 = arith.constant 0.000000e+00 : f32
    %501 = vector.broadcast %cst_595 : f32 to vector<2x128xf32>
    %502 = arith.maximumf %500, %501 : vector<2x128xf32>
    %c0_596 = arith.constant 0 : index
    %c2944 = arith.constant 2944 : index
    %503 = vector.load %arg15[%c0_596, %c2944] : memref<2x4608xf32, #tpu.memory_space<vmem>>, vector<2x128xf32>
    tpu.vector_store %arg15[%c0_596, %c2944], %502 {strides = array<i32>} : memref<2x4608xf32, #tpu.memory_space<vmem>>, vector<2x128xf32>,
    %c0_597 = arith.constant 0 : index
    %c4_598 = arith.constant 4 : index
    %c0_599 = arith.constant 0 : index
    %c0_600 = arith.constant 0 : index
    %504 = vector.load %arg14[%c0_597, %c4_598, %c0_599, %c0_600] : memref<2x7x7x128xf32, #tpu.memory_space<vmem>>, vector<2x1x1x128xf32>
    %505 = vector.shape_cast %504 : vector<2x1x1x128xf32> to vector<2x128xf32>
    %c0_601 = arith.constant 0 : index
    %c4_602 = arith.constant 4 : index
    %c1_603 = arith.constant 1 : index
    %c0_604 = arith.constant 0 : index
    %506 = vector.load %arg14[%c0_601, %c4_602, %c1_603, %c0_604] : memref<2x7x7x128xf32, #tpu.memory_space<vmem>>, vector<2x1x1x128xf32>
    %507 = vector.shape_cast %506 : vector<2x1x1x128xf32> to vector<2x128xf32>
    %c0_605 = arith.constant 0 : index
    %c5_606 = arith.constant 5 : index
    %c0_607 = arith.constant 0 : index
    %c0_608 = arith.constant 0 : index
    %508 = vector.load %arg14[%c0_605, %c5_606, %c0_607, %c0_608] : memref<2x7x7x128xf32, #tpu.memory_space<vmem>>, vector<2x1x1x128xf32>
    %509 = vector.shape_cast %508 : vector<2x1x1x128xf32> to vector<2x128xf32>
    %c0_609 = arith.constant 0 : index
    %c5_610 = arith.constant 5 : index
    %c1_611 = arith.constant 1 : index
    %c0_612 = arith.constant 0 : index
    %510 = vector.load %arg14[%c0_609, %c5_610, %c1_611, %c0_612] : memref<2x7x7x128xf32, #tpu.memory_space<vmem>>, vector<2x1x1x128xf32>
    %511 = vector.shape_cast %510 : vector<2x1x1x128xf32> to vector<2x128xf32>
    %512 = tpu.concatenate %505, %507, %509, %511 in 1 : vector<2x128xf32>, vector<2x128xf32>, vector<2x128xf32>, vector<2x128xf32> -> vector<2x512xf32>
    %cst_613 = arith.constant dense<0.000000e+00> : vector<2x128xf32>
    %513 = tpu.matmul %512, %142, %cst_613 {dimension_numbers = #tpu.dot_dimension_numbers<[1], [0], [0], [1], [0, 0, 1, 1], [], []>} : vector<2x512xf32>, vector<512x128xf32>, vector<2x128xf32> -> vector<2x128xf32>
    %514 = vector.broadcast %143 : vector<1x128xf32> to vector<2x128xf32>
    %515 = arith.addf %513, %514 : vector<2x128xf32>
    %cst_614 = arith.constant 0.000000e+00 : f32
    %516 = vector.broadcast %cst_614 : f32 to vector<2x128xf32>
    %517 = arith.maximumf %515, %516 : vector<2x128xf32>
    %c0_615 = arith.constant 0 : index
    %c3072 = arith.constant 3072 : index
    %518 = vector.load %arg15[%c0_615, %c3072] : memref<2x4608xf32, #tpu.memory_space<vmem>>, vector<2x128xf32>
    tpu.vector_store %arg15[%c0_615, %c3072], %517 {strides = array<i32>} : memref<2x4608xf32, #tpu.memory_space<vmem>>, vector<2x128xf32>,
    %c0_616 = arith.constant 0 : index
    %c4_617 = arith.constant 4 : index
    %c1_618 = arith.constant 1 : index
    %c0_619 = arith.constant 0 : index
    %519 = vector.load %arg14[%c0_616, %c4_617, %c1_618, %c0_619] : memref<2x7x7x128xf32, #tpu.memory_space<vmem>>, vector<2x1x1x128xf32>
    %520 = vector.shape_cast %519 : vector<2x1x1x128xf32> to vector<2x128xf32>
    %c0_620 = arith.constant 0 : index
    %c4_621 = arith.constant 4 : index
    %c2_622 = arith.constant 2 : index
    %c0_623 = arith.constant 0 : index
    %521 = vector.load %arg14[%c0_620, %c4_621, %c2_622, %c0_623] : memref<2x7x7x128xf32, #tpu.memory_space<vmem>>, vector<2x1x1x128xf32>
    %522 = vector.shape_cast %521 : vector<2x1x1x128xf32> to vector<2x128xf32>
    %c0_624 = arith.constant 0 : index
    %c5_625 = arith.constant 5 : index
    %c1_626 = arith.constant 1 : index
    %c0_627 = arith.constant 0 : index
    %523 = vector.load %arg14[%c0_624, %c5_625, %c1_626, %c0_627] : memref<2x7x7x128xf32, #tpu.memory_space<vmem>>, vector<2x1x1x128xf32>
    %524 = vector.shape_cast %523 : vector<2x1x1x128xf32> to vector<2x128xf32>
    %c0_628 = arith.constant 0 : index
    %c5_629 = arith.constant 5 : index
    %c2_630 = arith.constant 2 : index
    %c0_631 = arith.constant 0 : index
    %525 = vector.load %arg14[%c0_628, %c5_629, %c2_630, %c0_631] : memref<2x7x7x128xf32, #tpu.memory_space<vmem>>, vector<2x1x1x128xf32>
    %526 = vector.shape_cast %525 : vector<2x1x1x128xf32> to vector<2x128xf32>
    %527 = tpu.concatenate %520, %522, %524, %526 in 1 : vector<2x128xf32>, vector<2x128xf32>, vector<2x128xf32>, vector<2x128xf32> -> vector<2x512xf32>
    %cst_632 = arith.constant dense<0.000000e+00> : vector<2x128xf32>
    %528 = tpu.matmul %527, %142, %cst_632 {dimension_numbers = #tpu.dot_dimension_numbers<[1], [0], [0], [1], [0, 0, 1, 1], [], []>} : vector<2x512xf32>, vector<512x128xf32>, vector<2x128xf32> -> vector<2x128xf32>
    %529 = vector.broadcast %143 : vector<1x128xf32> to vector<2x128xf32>
    %530 = arith.addf %528, %529 : vector<2x128xf32>
    %cst_633 = arith.constant 0.000000e+00 : f32
    %531 = vector.broadcast %cst_633 : f32 to vector<2x128xf32>
    %532 = arith.maximumf %530, %531 : vector<2x128xf32>
    %c0_634 = arith.constant 0 : index
    %c3200 = arith.constant 3200 : index
    %533 = vector.load %arg15[%c0_634, %c3200] : memref<2x4608xf32, #tpu.memory_space<vmem>>, vector<2x128xf32>
    tpu.vector_store %arg15[%c0_634, %c3200], %532 {strides = array<i32>} : memref<2x4608xf32, #tpu.memory_space<vmem>>, vector<2x128xf32>,
    %c0_635 = arith.constant 0 : index
    %c4_636 = arith.constant 4 : index
    %c2_637 = arith.constant 2 : index
    %c0_638 = arith.constant 0 : index
    %534 = vector.load %arg14[%c0_635, %c4_636, %c2_637, %c0_638] : memref<2x7x7x128xf32, #tpu.memory_space<vmem>>, vector<2x1x1x128xf32>
    %535 = vector.shape_cast %534 : vector<2x1x1x128xf32> to vector<2x128xf32>
    %c0_639 = arith.constant 0 : index
    %c4_640 = arith.constant 4 : index
    %c3_641 = arith.constant 3 : index
    %c0_642 = arith.constant 0 : index
    %536 = vector.load %arg14[%c0_639, %c4_640, %c3_641, %c0_642] : memref<2x7x7x128xf32, #tpu.memory_space<vmem>>, vector<2x1x1x128xf32>
    %537 = vector.shape_cast %536 : vector<2x1x1x128xf32> to vector<2x128xf32>
    %c0_643 = arith.constant 0 : index
    %c5_644 = arith.constant 5 : index
    %c2_645 = arith.constant 2 : index
    %c0_646 = arith.constant 0 : index
    %538 = vector.load %arg14[%c0_643, %c5_644, %c2_645, %c0_646] : memref<2x7x7x128xf32, #tpu.memory_space<vmem>>, vector<2x1x1x128xf32>
    %539 = vector.shape_cast %538 : vector<2x1x1x128xf32> to vector<2x128xf32>
    %c0_647 = arith.constant 0 : index
    %c5_648 = arith.constant 5 : index
    %c3_649 = arith.constant 3 : index
    %c0_650 = arith.constant 0 : index
    %540 = vector.load %arg14[%c0_647, %c5_648, %c3_649, %c0_650] : memref<2x7x7x128xf32, #tpu.memory_space<vmem>>, vector<2x1x1x128xf32>
    %541 = vector.shape_cast %540 : vector<2x1x1x128xf32> to vector<2x128xf32>
    %542 = tpu.concatenate %535, %537, %539, %541 in 1 : vector<2x128xf32>, vector<2x128xf32>, vector<2x128xf32>, vector<2x128xf32> -> vector<2x512xf32>
    %cst_651 = arith.constant dense<0.000000e+00> : vector<2x128xf32>
    %543 = tpu.matmul %542, %142, %cst_651 {dimension_numbers = #tpu.dot_dimension_numbers<[1], [0], [0], [1], [0, 0, 1, 1], [], []>} : vector<2x512xf32>, vector<512x128xf32>, vector<2x128xf32> -> vector<2x128xf32>
    %544 = vector.broadcast %143 : vector<1x128xf32> to vector<2x128xf32>
    %545 = arith.addf %543, %544 : vector<2x128xf32>
    %cst_652 = arith.constant 0.000000e+00 : f32
    %546 = vector.broadcast %cst_652 : f32 to vector<2x128xf32>
    %547 = arith.maximumf %545, %546 : vector<2x128xf32>
    %c0_653 = arith.constant 0 : index
    %c3328 = arith.constant 3328 : index
    %548 = vector.load %arg15[%c0_653, %c3328] : memref<2x4608xf32, #tpu.memory_space<vmem>>, vector<2x128xf32>
    tpu.vector_store %arg15[%c0_653, %c3328], %547 {strides = array<i32>} : memref<2x4608xf32, #tpu.memory_space<vmem>>, vector<2x128xf32>,
    %c0_654 = arith.constant 0 : index
    %c4_655 = arith.constant 4 : index
    %c3_656 = arith.constant 3 : index
    %c0_657 = arith.constant 0 : index
    %549 = vector.load %arg14[%c0_654, %c4_655, %c3_656, %c0_657] : memref<2x7x7x128xf32, #tpu.memory_space<vmem>>, vector<2x1x1x128xf32>
    %550 = vector.shape_cast %549 : vector<2x1x1x128xf32> to vector<2x128xf32>
    %c0_658 = arith.constant 0 : index
    %c4_659 = arith.constant 4 : index
    %c4_660 = arith.constant 4 : index
    %c0_661 = arith.constant 0 : index
    %551 = vector.load %arg14[%c0_658, %c4_659, %c4_660, %c0_661] : memref<2x7x7x128xf32, #tpu.memory_space<vmem>>, vector<2x1x1x128xf32>
    %552 = vector.shape_cast %551 : vector<2x1x1x128xf32> to vector<2x128xf32>
    %c0_662 = arith.constant 0 : index
    %c5_663 = arith.constant 5 : index
    %c3_664 = arith.constant 3 : index
    %c0_665 = arith.constant 0 : index
    %553 = vector.load %arg14[%c0_662, %c5_663, %c3_664, %c0_665] : memref<2x7x7x128xf32, #tpu.memory_space<vmem>>, vector<2x1x1x128xf32>
    %554 = vector.shape_cast %553 : vector<2x1x1x128xf32> to vector<2x128xf32>
    %c0_666 = arith.constant 0 : index
    %c5_667 = arith.constant 5 : index
    %c4_668 = arith.constant 4 : index
    %c0_669 = arith.constant 0 : index
    %555 = vector.load %arg14[%c0_666, %c5_667, %c4_668, %c0_669] : memref<2x7x7x128xf32, #tpu.memory_space<vmem>>, vector<2x1x1x128xf32>
    %556 = vector.shape_cast %555 : vector<2x1x1x128xf32> to vector<2x128xf32>
    %557 = tpu.concatenate %550, %552, %554, %556 in 1 : vector<2x128xf32>, vector<2x128xf32>, vector<2x128xf32>, vector<2x128xf32> -> vector<2x512xf32>
    %cst_670 = arith.constant dense<0.000000e+00> : vector<2x128xf32>
    %558 = tpu.matmul %557, %142, %cst_670 {dimension_numbers = #tpu.dot_dimension_numbers<[1], [0], [0], [1], [0, 0, 1, 1], [], []>} : vector<2x512xf32>, vector<512x128xf32>, vector<2x128xf32> -> vector<2x128xf32>
    %559 = vector.broadcast %143 : vector<1x128xf32> to vector<2x128xf32>
    %560 = arith.addf %558, %559 : vector<2x128xf32>
    %cst_671 = arith.constant 0.000000e+00 : f32
    %561 = vector.broadcast %cst_671 : f32 to vector<2x128xf32>
    %562 = arith.maximumf %560, %561 : vector<2x128xf32>
    %c0_672 = arith.constant 0 : index
    %c3456 = arith.constant 3456 : index
    %563 = vector.load %arg15[%c0_672, %c3456] : memref<2x4608xf32, #tpu.memory_space<vmem>>, vector<2x128xf32>
    tpu.vector_store %arg15[%c0_672, %c3456], %562 {strides = array<i32>} : memref<2x4608xf32, #tpu.memory_space<vmem>>, vector<2x128xf32>,
    %c0_673 = arith.constant 0 : index
    %c4_674 = arith.constant 4 : index
    %c4_675 = arith.constant 4 : index
    %c0_676 = arith.constant 0 : index
    %564 = vector.load %arg14[%c0_673, %c4_674, %c4_675, %c0_676] : memref<2x7x7x128xf32, #tpu.memory_space<vmem>>, vector<2x1x1x128xf32>
    %565 = vector.shape_cast %564 : vector<2x1x1x128xf32> to vector<2x128xf32>
    %c0_677 = arith.constant 0 : index
    %c4_678 = arith.constant 4 : index
    %c5_679 = arith.constant 5 : index
    %c0_680 = arith.constant 0 : index
    %566 = vector.load %arg14[%c0_677, %c4_678, %c5_679, %c0_680] : memref<2x7x7x128xf32, #tpu.memory_space<vmem>>, vector<2x1x1x128xf32>
    %567 = vector.shape_cast %566 : vector<2x1x1x128xf32> to vector<2x128xf32>
    %c0_681 = arith.constant 0 : index
    %c5_682 = arith.constant 5 : index
    %c4_683 = arith.constant 4 : index
    %c0_684 = arith.constant 0 : index
    %568 = vector.load %arg14[%c0_681, %c5_682, %c4_683, %c0_684] : memref<2x7x7x128xf32, #tpu.memory_space<vmem>>, vector<2x1x1x128xf32>
    %569 = vector.shape_cast %568 : vector<2x1x1x128xf32> to vector<2x128xf32>
    %c0_685 = arith.constant 0 : index
    %c5_686 = arith.constant 5 : index
    %c5_687 = arith.constant 5 : index
    %c0_688 = arith.constant 0 : index
    %570 = vector.load %arg14[%c0_685, %c5_686, %c5_687, %c0_688] : memref<2x7x7x128xf32, #tpu.memory_space<vmem>>, vector<2x1x1x128xf32>
    %571 = vector.shape_cast %570 : vector<2x1x1x128xf32> to vector<2x128xf32>
    %572 = tpu.concatenate %565, %567, %569, %571 in 1 : vector<2x128xf32>, vector<2x128xf32>, vector<2x128xf32>, vector<2x128xf32> -> vector<2x512xf32>
    %cst_689 = arith.constant dense<0.000000e+00> : vector<2x128xf32>
    %573 = tpu.matmul %572, %142, %cst_689 {dimension_numbers = #tpu.dot_dimension_numbers<[1], [0], [0], [1], [0, 0, 1, 1], [], []>} : vector<2x512xf32>, vector<512x128xf32>, vector<2x128xf32> -> vector<2x128xf32>
    %574 = vector.broadcast %143 : vector<1x128xf32> to vector<2x128xf32>
    %575 = arith.addf %573, %574 : vector<2x128xf32>
    %cst_690 = arith.constant 0.000000e+00 : f32
    %576 = vector.broadcast %cst_690 : f32 to vector<2x128xf32>
    %577 = arith.maximumf %575, %576 : vector<2x128xf32>
    %c0_691 = arith.constant 0 : index
    %c3584 = arith.constant 3584 : index
    %578 = vector.load %arg15[%c0_691, %c3584] : memref<2x4608xf32, #tpu.memory_space<vmem>>, vector<2x128xf32>
    tpu.vector_store %arg15[%c0_691, %c3584], %577 {strides = array<i32>} : memref<2x4608xf32, #tpu.memory_space<vmem>>, vector<2x128xf32>,
    %c0_692 = arith.constant 0 : index
    %c4_693 = arith.constant 4 : index
    %c5_694 = arith.constant 5 : index
    %c0_695 = arith.constant 0 : index
    %579 = vector.load %arg14[%c0_692, %c4_693, %c5_694, %c0_695] : memref<2x7x7x128xf32, #tpu.memory_space<vmem>>, vector<2x1x1x128xf32>
    %580 = vector.shape_cast %579 : vector<2x1x1x128xf32> to vector<2x128xf32>
    %c0_696 = arith.constant 0 : index
    %c4_697 = arith.constant 4 : index
    %c6_698 = arith.constant 6 : index
    %c0_699 = arith.constant 0 : index
    %581 = vector.load %arg14[%c0_696, %c4_697, %c6_698, %c0_699] : memref<2x7x7x128xf32, #tpu.memory_space<vmem>>, vector<2x1x1x128xf32>
    %582 = vector.shape_cast %581 : vector<2x1x1x128xf32> to vector<2x128xf32>
    %c0_700 = arith.constant 0 : index
    %c5_701 = arith.constant 5 : index
    %c5_702 = arith.constant 5 : index
    %c0_703 = arith.constant 0 : index
    %583 = vector.load %arg14[%c0_700, %c5_701, %c5_702, %c0_703] : memref<2x7x7x128xf32, #tpu.memory_space<vmem>>, vector<2x1x1x128xf32>
    %584 = vector.shape_cast %583 : vector<2x1x1x128xf32> to vector<2x128xf32>
    %c0_704 = arith.constant 0 : index
    %c5_705 = arith.constant 5 : index
    %c6_706 = arith.constant 6 : index
    %c0_707 = arith.constant 0 : index
    %585 = vector.load %arg14[%c0_704, %c5_705, %c6_706, %c0_707] : memref<2x7x7x128xf32, #tpu.memory_space<vmem>>, vector<2x1x1x128xf32>
    %586 = vector.shape_cast %585 : vector<2x1x1x128xf32> to vector<2x128xf32>
    %587 = tpu.concatenate %580, %582, %584, %586 in 1 : vector<2x128xf32>, vector<2x128xf32>, vector<2x128xf32>, vector<2x128xf32> -> vector<2x512xf32>
    %cst_708 = arith.constant dense<0.000000e+00> : vector<2x128xf32>
    %588 = tpu.matmul %587, %142, %cst_708 {dimension_numbers = #tpu.dot_dimension_numbers<[1], [0], [0], [1], [0, 0, 1, 1], [], []>} : vector<2x512xf32>, vector<512x128xf32>, vector<2x128xf32> -> vector<2x128xf32>
    %589 = vector.broadcast %143 : vector<1x128xf32> to vector<2x128xf32>
    %590 = arith.addf %588, %589 : vector<2x128xf32>
    %cst_709 = arith.constant 0.000000e+00 : f32
    %591 = vector.broadcast %cst_709 : f32 to vector<2x128xf32>
    %592 = arith.maximumf %590, %591 : vector<2x128xf32>
    %c0_710 = arith.constant 0 : index
    %c3712 = arith.constant 3712 : index
    %593 = vector.load %arg15[%c0_710, %c3712] : memref<2x4608xf32, #tpu.memory_space<vmem>>, vector<2x128xf32>
    tpu.vector_store %arg15[%c0_710, %c3712], %592 {strides = array<i32>} : memref<2x4608xf32, #tpu.memory_space<vmem>>, vector<2x128xf32>,
    %c0_711 = arith.constant 0 : index
    %c5_712 = arith.constant 5 : index
    %c0_713 = arith.constant 0 : index
    %c0_714 = arith.constant 0 : index
    %594 = vector.load %arg14[%c0_711, %c5_712, %c0_713, %c0_714] : memref<2x7x7x128xf32, #tpu.memory_space<vmem>>, vector<2x1x1x128xf32>
    %595 = vector.shape_cast %594 : vector<2x1x1x128xf32> to vector<2x128xf32>
    %c0_715 = arith.constant 0 : index
    %c5_716 = arith.constant 5 : index
    %c1_717 = arith.constant 1 : index
    %c0_718 = arith.constant 0 : index
    %596 = vector.load %arg14[%c0_715, %c5_716, %c1_717, %c0_718] : memref<2x7x7x128xf32, #tpu.memory_space<vmem>>, vector<2x1x1x128xf32>
    %597 = vector.shape_cast %596 : vector<2x1x1x128xf32> to vector<2x128xf32>
    %c0_719 = arith.constant 0 : index
    %c6_720 = arith.constant 6 : index
    %c0_721 = arith.constant 0 : index
    %c0_722 = arith.constant 0 : index
    %598 = vector.load %arg14[%c0_719, %c6_720, %c0_721, %c0_722] : memref<2x7x7x128xf32, #tpu.memory_space<vmem>>, vector<2x1x1x128xf32>
    %599 = vector.shape_cast %598 : vector<2x1x1x128xf32> to vector<2x128xf32>
    %c0_723 = arith.constant 0 : index
    %c6_724 = arith.constant 6 : index
    %c1_725 = arith.constant 1 : index
    %c0_726 = arith.constant 0 : index
    %600 = vector.load %arg14[%c0_723, %c6_724, %c1_725, %c0_726] : memref<2x7x7x128xf32, #tpu.memory_space<vmem>>, vector<2x1x1x128xf32>
    %601 = vector.shape_cast %600 : vector<2x1x1x128xf32> to vector<2x128xf32>
    %602 = tpu.concatenate %595, %597, %599, %601 in 1 : vector<2x128xf32>, vector<2x128xf32>, vector<2x128xf32>, vector<2x128xf32> -> vector<2x512xf32>
    %cst_727 = arith.constant dense<0.000000e+00> : vector<2x128xf32>
    %603 = tpu.matmul %602, %142, %cst_727 {dimension_numbers = #tpu.dot_dimension_numbers<[1], [0], [0], [1], [0, 0, 1, 1], [], []>} : vector<2x512xf32>, vector<512x128xf32>, vector<2x128xf32> -> vector<2x128xf32>
    %604 = vector.broadcast %143 : vector<1x128xf32> to vector<2x128xf32>
    %605 = arith.addf %603, %604 : vector<2x128xf32>
    %cst_728 = arith.constant 0.000000e+00 : f32
    %606 = vector.broadcast %cst_728 : f32 to vector<2x128xf32>
    %607 = arith.maximumf %605, %606 : vector<2x128xf32>
    %c0_729 = arith.constant 0 : index
    %c3840 = arith.constant 3840 : index
    %608 = vector.load %arg15[%c0_729, %c3840] : memref<2x4608xf32, #tpu.memory_space<vmem>>, vector<2x128xf32>
    tpu.vector_store %arg15[%c0_729, %c3840], %607 {strides = array<i32>} : memref<2x4608xf32, #tpu.memory_space<vmem>>, vector<2x128xf32>,
    %c0_730 = arith.constant 0 : index
    %c5_731 = arith.constant 5 : index
    %c1_732 = arith.constant 1 : index
    %c0_733 = arith.constant 0 : index
    %609 = vector.load %arg14[%c0_730, %c5_731, %c1_732, %c0_733] : memref<2x7x7x128xf32, #tpu.memory_space<vmem>>, vector<2x1x1x128xf32>
    %610 = vector.shape_cast %609 : vector<2x1x1x128xf32> to vector<2x128xf32>
    %c0_734 = arith.constant 0 : index
    %c5_735 = arith.constant 5 : index
    %c2_736 = arith.constant 2 : index
    %c0_737 = arith.constant 0 : index
    %611 = vector.load %arg14[%c0_734, %c5_735, %c2_736, %c0_737] : memref<2x7x7x128xf32, #tpu.memory_space<vmem>>, vector<2x1x1x128xf32>
    %612 = vector.shape_cast %611 : vector<2x1x1x128xf32> to vector<2x128xf32>
    %c0_738 = arith.constant 0 : index
    %c6_739 = arith.constant 6 : index
    %c1_740 = arith.constant 1 : index
    %c0_741 = arith.constant 0 : index
    %613 = vector.load %arg14[%c0_738, %c6_739, %c1_740, %c0_741] : memref<2x7x7x128xf32, #tpu.memory_space<vmem>>, vector<2x1x1x128xf32>
    %614 = vector.shape_cast %613 : vector<2x1x1x128xf32> to vector<2x128xf32>
    %c0_742 = arith.constant 0 : index
    %c6_743 = arith.constant 6 : index
    %c2_744 = arith.constant 2 : index
    %c0_745 = arith.constant 0 : index
    %615 = vector.load %arg14[%c0_742, %c6_743, %c2_744, %c0_745] : memref<2x7x7x128xf32, #tpu.memory_space<vmem>>, vector<2x1x1x128xf32>
    %616 = vector.shape_cast %615 : vector<2x1x1x128xf32> to vector<2x128xf32>
    %617 = tpu.concatenate %610, %612, %614, %616 in 1 : vector<2x128xf32>, vector<2x128xf32>, vector<2x128xf32>, vector<2x128xf32> -> vector<2x512xf32>
    %cst_746 = arith.constant dense<0.000000e+00> : vector<2x128xf32>
    %618 = tpu.matmul %617, %142, %cst_746 {dimension_numbers = #tpu.dot_dimension_numbers<[1], [0], [0], [1], [0, 0, 1, 1], [], []>} : vector<2x512xf32>, vector<512x128xf32>, vector<2x128xf32> -> vector<2x128xf32>
    %619 = vector.broadcast %143 : vector<1x128xf32> to vector<2x128xf32>
    %620 = arith.addf %618, %619 : vector<2x128xf32>
    %cst_747 = arith.constant 0.000000e+00 : f32
    %621 = vector.broadcast %cst_747 : f32 to vector<2x128xf32>
    %622 = arith.maximumf %620, %621 : vector<2x128xf32>
    %c0_748 = arith.constant 0 : index
    %c3968 = arith.constant 3968 : index
    %623 = vector.load %arg15[%c0_748, %c3968] : memref<2x4608xf32, #tpu.memory_space<vmem>>, vector<2x128xf32>
    tpu.vector_store %arg15[%c0_748, %c3968], %622 {strides = array<i32>} : memref<2x4608xf32, #tpu.memory_space<vmem>>, vector<2x128xf32>,
    %c0_749 = arith.constant 0 : index
    %c5_750 = arith.constant 5 : index
    %c2_751 = arith.constant 2 : index
    %c0_752 = arith.constant 0 : index
    %624 = vector.load %arg14[%c0_749, %c5_750, %c2_751, %c0_752] : memref<2x7x7x128xf32, #tpu.memory_space<vmem>>, vector<2x1x1x128xf32>
    %625 = vector.shape_cast %624 : vector<2x1x1x128xf32> to vector<2x128xf32>
    %c0_753 = arith.constant 0 : index
    %c5_754 = arith.constant 5 : index
    %c3_755 = arith.constant 3 : index
    %c0_756 = arith.constant 0 : index
    %626 = vector.load %arg14[%c0_753, %c5_754, %c3_755, %c0_756] : memref<2x7x7x128xf32, #tpu.memory_space<vmem>>, vector<2x1x1x128xf32>
    %627 = vector.shape_cast %626 : vector<2x1x1x128xf32> to vector<2x128xf32>
    %c0_757 = arith.constant 0 : index
    %c6_758 = arith.constant 6 : index
    %c2_759 = arith.constant 2 : index
    %c0_760 = arith.constant 0 : index
    %628 = vector.load %arg14[%c0_757, %c6_758, %c2_759, %c0_760] : memref<2x7x7x128xf32, #tpu.memory_space<vmem>>, vector<2x1x1x128xf32>
    %629 = vector.shape_cast %628 : vector<2x1x1x128xf32> to vector<2x128xf32>
    %c0_761 = arith.constant 0 : index
    %c6_762 = arith.constant 6 : index
    %c3_763 = arith.constant 3 : index
    %c0_764 = arith.constant 0 : index
    %630 = vector.load %arg14[%c0_761, %c6_762, %c3_763, %c0_764] : memref<2x7x7x128xf32, #tpu.memory_space<vmem>>, vector<2x1x1x128xf32>
    %631 = vector.shape_cast %630 : vector<2x1x1x128xf32> to vector<2x128xf32>
    %632 = tpu.concatenate %625, %627, %629, %631 in 1 : vector<2x128xf32>, vector<2x128xf32>, vector<2x128xf32>, vector<2x128xf32> -> vector<2x512xf32>
    %cst_765 = arith.constant dense<0.000000e+00> : vector<2x128xf32>
    %633 = tpu.matmul %632, %142, %cst_765 {dimension_numbers = #tpu.dot_dimension_numbers<[1], [0], [0], [1], [0, 0, 1, 1], [], []>} : vector<2x512xf32>, vector<512x128xf32>, vector<2x128xf32> -> vector<2x128xf32>
    %634 = vector.broadcast %143 : vector<1x128xf32> to vector<2x128xf32>
    %635 = arith.addf %633, %634 : vector<2x128xf32>
    %cst_766 = arith.constant 0.000000e+00 : f32
    %636 = vector.broadcast %cst_766 : f32 to vector<2x128xf32>
    %637 = arith.maximumf %635, %636 : vector<2x128xf32>
    %c0_767 = arith.constant 0 : index
    %c4096 = arith.constant 4096 : index
    %638 = vector.load %arg15[%c0_767, %c4096] : memref<2x4608xf32, #tpu.memory_space<vmem>>, vector<2x128xf32>
    tpu.vector_store %arg15[%c0_767, %c4096], %637 {strides = array<i32>} : memref<2x4608xf32, #tpu.memory_space<vmem>>, vector<2x128xf32>,
    %c0_768 = arith.constant 0 : index
    %c5_769 = arith.constant 5 : index
    %c3_770 = arith.constant 3 : index
    %c0_771 = arith.constant 0 : index
    %639 = vector.load %arg14[%c0_768, %c5_769, %c3_770, %c0_771] : memref<2x7x7x128xf32, #tpu.memory_space<vmem>>, vector<2x1x1x128xf32>
    %640 = vector.shape_cast %639 : vector<2x1x1x128xf32> to vector<2x128xf32>
    %c0_772 = arith.constant 0 : index
    %c5_773 = arith.constant 5 : index
    %c4_774 = arith.constant 4 : index
    %c0_775 = arith.constant 0 : index
    %641 = vector.load %arg14[%c0_772, %c5_773, %c4_774, %c0_775] : memref<2x7x7x128xf32, #tpu.memory_space<vmem>>, vector<2x1x1x128xf32>
    %642 = vector.shape_cast %641 : vector<2x1x1x128xf32> to vector<2x128xf32>
    %c0_776 = arith.constant 0 : index
    %c6_777 = arith.constant 6 : index
    %c3_778 = arith.constant 3 : index
    %c0_779 = arith.constant 0 : index
    %643 = vector.load %arg14[%c0_776, %c6_777, %c3_778, %c0_779] : memref<2x7x7x128xf32, #tpu.memory_space<vmem>>, vector<2x1x1x128xf32>
    %644 = vector.shape_cast %643 : vector<2x1x1x128xf32> to vector<2x128xf32>
    %c0_780 = arith.constant 0 : index
    %c6_781 = arith.constant 6 : index
    %c4_782 = arith.constant 4 : index
    %c0_783 = arith.constant 0 : index
    %645 = vector.load %arg14[%c0_780, %c6_781, %c4_782, %c0_783] : memref<2x7x7x128xf32, #tpu.memory_space<vmem>>, vector<2x1x1x128xf32>
    %646 = vector.shape_cast %645 : vector<2x1x1x128xf32> to vector<2x128xf32>
    %647 = tpu.concatenate %640, %642, %644, %646 in 1 : vector<2x128xf32>, vector<2x128xf32>, vector<2x128xf32>, vector<2x128xf32> -> vector<2x512xf32>
    %cst_784 = arith.constant dense<0.000000e+00> : vector<2x128xf32>
    %648 = tpu.matmul %647, %142, %cst_784 {dimension_numbers = #tpu.dot_dimension_numbers<[1], [0], [0], [1], [0, 0, 1, 1], [], []>} : vector<2x512xf32>, vector<512x128xf32>, vector<2x128xf32> -> vector<2x128xf32>
    %649 = vector.broadcast %143 : vector<1x128xf32> to vector<2x128xf32>
    %650 = arith.addf %648, %649 : vector<2x128xf32>
    %cst_785 = arith.constant 0.000000e+00 : f32
    %651 = vector.broadcast %cst_785 : f32 to vector<2x128xf32>
    %652 = arith.maximumf %650, %651 : vector<2x128xf32>
    %c0_786 = arith.constant 0 : index
    %c4224 = arith.constant 4224 : index
    %653 = vector.load %arg15[%c0_786, %c4224] : memref<2x4608xf32, #tpu.memory_space<vmem>>, vector<2x128xf32>
    tpu.vector_store %arg15[%c0_786, %c4224], %652 {strides = array<i32>} : memref<2x4608xf32, #tpu.memory_space<vmem>>, vector<2x128xf32>,
    %c0_787 = arith.constant 0 : index
    %c5_788 = arith.constant 5 : index
    %c4_789 = arith.constant 4 : index
    %c0_790 = arith.constant 0 : index
    %654 = vector.load %arg14[%c0_787, %c5_788, %c4_789, %c0_790] : memref<2x7x7x128xf32, #tpu.memory_space<vmem>>, vector<2x1x1x128xf32>
    %655 = vector.shape_cast %654 : vector<2x1x1x128xf32> to vector<2x128xf32>
    %c0_791 = arith.constant 0 : index
    %c5_792 = arith.constant 5 : index
    %c5_793 = arith.constant 5 : index
    %c0_794 = arith.constant 0 : index
    %656 = vector.load %arg14[%c0_791, %c5_792, %c5_793, %c0_794] : memref<2x7x7x128xf32, #tpu.memory_space<vmem>>, vector<2x1x1x128xf32>
    %657 = vector.shape_cast %656 : vector<2x1x1x128xf32> to vector<2x128xf32>
    %c0_795 = arith.constant 0 : index
    %c6_796 = arith.constant 6 : index
    %c4_797 = arith.constant 4 : index
    %c0_798 = arith.constant 0 : index
    %658 = vector.load %arg14[%c0_795, %c6_796, %c4_797, %c0_798] : memref<2x7x7x128xf32, #tpu.memory_space<vmem>>, vector<2x1x1x128xf32>
    %659 = vector.shape_cast %658 : vector<2x1x1x128xf32> to vector<2x128xf32>
    %c0_799 = arith.constant 0 : index
    %c6_800 = arith.constant 6 : index
    %c5_801 = arith.constant 5 : index
    %c0_802 = arith.constant 0 : index
    %660 = vector.load %arg14[%c0_799, %c6_800, %c5_801, %c0_802] : memref<2x7x7x128xf32, #tpu.memory_space<vmem>>, vector<2x1x1x128xf32>
    %661 = vector.shape_cast %660 : vector<2x1x1x128xf32> to vector<2x128xf32>
    %662 = tpu.concatenate %655, %657, %659, %661 in 1 : vector<2x128xf32>, vector<2x128xf32>, vector<2x128xf32>, vector<2x128xf32> -> vector<2x512xf32>
    %cst_803 = arith.constant dense<0.000000e+00> : vector<2x128xf32>
    %663 = tpu.matmul %662, %142, %cst_803 {dimension_numbers = #tpu.dot_dimension_numbers<[1], [0], [0], [1], [0, 0, 1, 1], [], []>} : vector<2x512xf32>, vector<512x128xf32>, vector<2x128xf32> -> vector<2x128xf32>
    %664 = vector.broadcast %143 : vector<1x128xf32> to vector<2x128xf32>
    %665 = arith.addf %663, %664 : vector<2x128xf32>
    %cst_804 = arith.constant 0.000000e+00 : f32
    %666 = vector.broadcast %cst_804 : f32 to vector<2x128xf32>
    %667 = arith.maximumf %665, %666 : vector<2x128xf32>
    %c0_805 = arith.constant 0 : index
    %c4352 = arith.constant 4352 : index
    %668 = vector.load %arg15[%c0_805, %c4352] : memref<2x4608xf32, #tpu.memory_space<vmem>>, vector<2x128xf32>
    tpu.vector_store %arg15[%c0_805, %c4352], %667 {strides = array<i32>} : memref<2x4608xf32, #tpu.memory_space<vmem>>, vector<2x128xf32>,
    %c0_806 = arith.constant 0 : index
    %c5_807 = arith.constant 5 : index
    %c5_808 = arith.constant 5 : index
    %c0_809 = arith.constant 0 : index
    %669 = vector.load %arg14[%c0_806, %c5_807, %c5_808, %c0_809] : memref<2x7x7x128xf32, #tpu.memory_space<vmem>>, vector<2x1x1x128xf32>
    %670 = vector.shape_cast %669 : vector<2x1x1x128xf32> to vector<2x128xf32>
    %c0_810 = arith.constant 0 : index
    %c5_811 = arith.constant 5 : index
    %c6_812 = arith.constant 6 : index
    %c0_813 = arith.constant 0 : index
    %671 = vector.load %arg14[%c0_810, %c5_811, %c6_812, %c0_813] : memref<2x7x7x128xf32, #tpu.memory_space<vmem>>, vector<2x1x1x128xf32>
    %672 = vector.shape_cast %671 : vector<2x1x1x128xf32> to vector<2x128xf32>
    %c0_814 = arith.constant 0 : index
    %c6_815 = arith.constant 6 : index
    %c5_816 = arith.constant 5 : index
    %c0_817 = arith.constant 0 : index
    %673 = vector.load %arg14[%c0_814, %c6_815, %c5_816, %c0_817] : memref<2x7x7x128xf32, #tpu.memory_space<vmem>>, vector<2x1x1x128xf32>
    %674 = vector.shape_cast %673 : vector<2x1x1x128xf32> to vector<2x128xf32>
    %c0_818 = arith.constant 0 : index
    %c6_819 = arith.constant 6 : index
    %c6_820 = arith.constant 6 : index
    %c0_821 = arith.constant 0 : index
    %675 = vector.load %arg14[%c0_818, %c6_819, %c6_820, %c0_821] : memref<2x7x7x128xf32, #tpu.memory_space<vmem>>, vector<2x1x1x128xf32>
    %676 = vector.shape_cast %675 : vector<2x1x1x128xf32> to vector<2x128xf32>
    %677 = tpu.concatenate %670, %672, %674, %676 in 1 : vector<2x128xf32>, vector<2x128xf32>, vector<2x128xf32>, vector<2x128xf32> -> vector<2x512xf32>
    %cst_822 = arith.constant dense<0.000000e+00> : vector<2x128xf32>
    %678 = tpu.matmul %677, %142, %cst_822 {dimension_numbers = #tpu.dot_dimension_numbers<[1], [0], [0], [1], [0, 0, 1, 1], [], []>} : vector<2x512xf32>, vector<512x128xf32>, vector<2x128xf32> -> vector<2x128xf32>
    %679 = vector.broadcast %143 : vector<1x128xf32> to vector<2x128xf32>
    %680 = arith.addf %678, %679 : vector<2x128xf32>
    %cst_823 = arith.constant 0.000000e+00 : f32
    %681 = vector.broadcast %cst_823 : f32 to vector<2x128xf32>
    %682 = arith.maximumf %680, %681 : vector<2x128xf32>
    %c0_824 = arith.constant 0 : index
    %c4480 = arith.constant 4480 : index
    %683 = vector.load %arg15[%c0_824, %c4480] : memref<2x4608xf32, #tpu.memory_space<vmem>>, vector<2x128xf32>
    tpu.vector_store %arg15[%c0_824, %c4480], %682 {strides = array<i32>} : memref<2x4608xf32, #tpu.memory_space<vmem>>, vector<2x128xf32>,
    %c0_825 = arith.constant 0 : index
    %c0_826 = arith.constant 0 : index
    %684 = vector.load %arg15[%c0_825, %c0_826] : memref<2x4608xf32, #tpu.memory_space<vmem>>, vector<2x4608xf32>
    %c0_827 = arith.constant 0 : index
    %c0_828 = arith.constant 0 : index
    %685 = vector.load %arg6[%c0_827, %c0_828] : memref<4608x128xf32, #tpu.memory_space<vmem>>, vector<4608x128xf32>
    %cst_829 = arith.constant dense<0.000000e+00> : vector<2x128xf32>
    %686 = tpu.matmul %684, %685, %cst_829 {dimension_numbers = #tpu.dot_dimension_numbers<[1], [0], [0], [1], [0, 0, 1, 1], [], []>} : vector<2x4608xf32>, vector<4608x128xf32>, vector<2x128xf32> -> vector<2x128xf32>
    %c0_830 = arith.constant 0 : index
    %c0_831 = arith.constant 0 : index
    %687 = vector.load %arg7[%c0_830, %c0_831] : memref<1x128xf32, #tpu.memory_space<vmem>>, vector<1x128xf32>
    %688 = vector.broadcast %687 : vector<1x128xf32> to vector<2x128xf32>
    %689 = arith.addf %686, %688 : vector<2x128xf32>
    %cst_832 = arith.constant 0.000000e+00 : f32
    %690 = vector.broadcast %cst_832 : f32 to vector<2x128xf32>
    %691 = arith.maximumf %689, %690 : vector<2x128xf32>
    %c0_833 = arith.constant 0 : index
    %c0_834 = arith.constant 0 : index
    %692 = vector.load %arg8[%c0_833, %c0_834] : memref<128x128xf32, #tpu.memory_space<vmem>>, vector<128x128xf32>
    %cst_835 = arith.constant dense<0.000000e+00> : vector<2x128xf32>
    %693 = tpu.matmul %691, %692, %cst_835 {dimension_numbers = #tpu.dot_dimension_numbers<[1], [0], [0], [1], [0, 0, 1, 1], [], []>} : vector<2x128xf32>, vector<128x128xf32>, vector<2x128xf32> -> vector<2x128xf32>
    %c0_836 = arith.constant 0 : index
    %c0_837 = arith.constant 0 : index
    %694 = vector.load %arg1[%c0_836, %c0_837] : memref<2x2xf32, #tpu.memory_space<vmem>>, vector<2x2xf32>
    %c0_838 = arith.constant 0 : index
    %c0_839 = arith.constant 0 : index
    %695 = vector.load %arg9[%c0_838, %c0_839] : memref<2x128xf32, #tpu.memory_space<vmem>>, vector<2x128xf32>
    %cst_840 = arith.constant dense<0.000000e+00> : vector<2x128xf32>
    %696 = tpu.matmul %694, %695, %cst_840 {dimension_numbers = #tpu.dot_dimension_numbers<[1], [0], [0], [1], [0, 0, 1, 1], [], []>} : vector<2x2xf32>, vector<2x128xf32>, vector<2x128xf32> -> vector<2x128xf32>
    %697 = arith.addf %693, %696 : vector<2x128xf32>
    %c0_841 = arith.constant 0 : index
    %c0_842 = arith.constant 0 : index
    %698 = vector.load %arg10[%c0_841, %c0_842] : memref<1x128xf32, #tpu.memory_space<vmem>>, vector<1x128xf32>
    %699 = vector.broadcast %698 : vector<1x128xf32> to vector<2x128xf32>
    %700 = arith.addf %697, %699 : vector<2x128xf32>
    %cst_843 = arith.constant 0.000000e+00 : f32
    %701 = vector.broadcast %cst_843 : f32 to vector<2x128xf32>
    %702 = arith.maximumf %700, %701 : vector<2x128xf32>
    %c0_844 = arith.constant 0 : index
    %c0_845 = arith.constant 0 : index
    %703 = vector.load %arg11[%c0_844, %c0_845] : memref<128x128xf32, #tpu.memory_space<vmem>>, vector<128x128xf32>
    %cst_846 = arith.constant dense<0.000000e+00> : vector<2x128xf32>
    %704 = tpu.matmul %702, %703, %cst_846 {dimension_numbers = #tpu.dot_dimension_numbers<[1], [0], [0], [1], [0, 0, 1, 1], [], []>} : vector<2x128xf32>, vector<128x128xf32>, vector<2x128xf32> -> vector<2x128xf32>
    %c0_847 = arith.constant 0 : index
    %c0_848 = arith.constant 0 : index
    %705 = vector.load %arg12[%c0_847, %c0_848] : memref<1x128xf32, #tpu.memory_space<vmem>>, vector<1x128xf32>
    %706 = vector.broadcast %705 : vector<1x128xf32> to vector<2x128xf32>
    %707 = arith.addf %704, %706 : vector<2x128xf32>
    %708 = tpu.iota {dimensions = array<i32: 1>} : vector<2x128xi32>
    %c4_i32 = arith.constant 4 : i32
    %709 = vector.broadcast %c4_i32 : i32 to vector<2x128xi32>
    %710 = arith.cmpi sge, %708, %709 : vector<2x128xi32>
    %c8_i32 = arith.constant 8 : i32
    %711 = vector.broadcast %c8_i32 : i32 to vector<2x128xi32>
    %712 = arith.cmpi slt, %708, %711 : vector<2x128xi32>
    %713 = arith.andi %710, %712 : vector<2x128xi1>
    %cst_849 = arith.constant -2.000000e+01 : f32
    %cst_850 = arith.constant 2.000000e+00 : f32
    %714 = vector.broadcast %cst_849 : f32 to vector<2x128xf32>
    %715 = arith.maximumf %714, %707 : vector<2x128xf32>
    %716 = vector.broadcast %cst_850 : f32 to vector<2x128xf32>
    %717 = arith.minimumf %716, %715 : vector<2x128xf32>
    %718 = arith.select %713, %717, %707 : vector<2x128xi1>, vector<2x128xf32>
    %c0_851 = arith.constant 0 : index
    %c0_852 = arith.constant 0 : index
    %719 = vector.load %arg13[%c0_851, %c0_852] : memref<2x128xf32, #tpu.memory_space<vmem>>, vector<2x128xf32>
    tpu.vector_store %arg13[%c0_851, %c0_852], %718 {strides = array<i32>} : memref<2x128xf32, #tpu.memory_space<vmem>>, vector<2x128xf32>,
    return
  }
}

</mosaic_0001>

<llo_original>
// kernel: actor_forward.1
$region0: #{actor_forward.1}
  #allocation0 [shape = 'u32[]', space=smem, size = 0x4, offset = 0x4, fixed_abs, tag = 'smem constant byte address 0x4 - core index']
  #allocation1 [shape = 'u32[72,128]{1,0:T(1,128)}', space=vmem, size = 0x9000, scoped, tag = 'internal scratch']
  #allocation2 [shape = 'f32[2,7,7,128]{3,2,1,0:T(8,128)}', space=vmem, size = 0xe000, scoped, tag = 'scratch operand']
  #allocation3 [shape = 'f32[2,4608]{1,0:T(2,128)}', space=vmem, size = 0x9000, scoped, tag = 'scratch operand']
  %s0 = inlined_call_operand.vmem [shape: f32[2,7,7,48], index: 0, kind: input, shape index: {}]
  %s1 = inlined_call_operand.vmem [shape: f32[2,2], index: 1, kind: input, shape index: {}]
  %s2 = inlined_call_operand.vmem [shape: f32[48,128], index: 2, kind: input, shape index: {}]
  %s3 = inlined_call_operand.vmem [shape: f32[1,128], index: 3, kind: input, shape index: {}]
  %s4 = inlined_call_operand.vmem [shape: f32[512,128], index: 4, kind: input, shape index: {}]
  %s5 = inlined_call_operand.vmem [shape: f32[1,128], index: 5, kind: input, shape index: {}]
  %s6 = inlined_call_operand.vmem [shape: f32[4608,128], index: 6, kind: input, shape index: {}]
  %s7 = inlined_call_operand.vmem [shape: f32[1,128], index: 7, kind: input, shape index: {}]
  %s8 = inlined_call_operand.vmem [shape: f32[128,128], index: 8, kind: input, shape index: {}]
  %s9 = inlined_call_operand.vmem [shape: f32[2,128], index: 9, kind: input, shape index: {}]
  %s10 = inlined_call_operand.vmem [shape: f32[1,128], index: 10, kind: input, shape index: {}]
  %s11 = inlined_call_operand.vmem [shape: f32[128,128], index: 11, kind: input, shape index: {}]
  %s12 = inlined_call_operand.vmem [shape: f32[1,128], index: 12, kind: input, shape index: {}]
  %s13 = inlined_call_operand.vmem [shape: f32[2,128], index: 13, kind: output, shape index: {}]
  %s14 = sld [smem:[#allocation0]]
  $region62: #{actor_forward.1} parent=0
    _
  %s16 = ssub.s32 1, %s14
  %s17 = scalar_select 0, %s16, %s14
  // Predicated region
  $region2: #{actor_forward.1} parent=0 // pred_check
    _
  $region3: #{actor_forward.1} parent=0 // pred_check_branch
    %19 = sbr.rel (0) target = $region5
  $region4: #{actor_forward.1} parent=0 // pred_region
    _
  $region5: #{actor_forward.1} parent=0 // pred_fallthru
    _
  // Predicated region
  $region6: #{actor_forward.1} parent=0 // pred_check
    _
  $region7: #{actor_forward.1} parent=0 // pred_check_branch
    %21 = sbr.rel (0) target = $region9
  $region8: #{actor_forward.1} parent=0 // pred_region
    _
  $region9: #{actor_forward.1} parent=0 // pred_fallthru
    _
  // Predicated region
  $region10: #{actor_forward.1} parent=0 // pred_check
    _
  $region11: #{actor_forward.1} parent=0 // pred_check_branch
    %23 = sbr.rel (0) target = $region13
  $region12: #{actor_forward.1} parent=0 // pred_region
    _
  $region13: #{actor_forward.1} parent=0 // pred_fallthru
    _
  // Predicated region
  $region14: #{actor_forward.1} parent=0 // pred_check
    _
  $region15: #{actor_forward.1} parent=0 // pred_check_branch
    %25 = sbr.rel (0) target = $region17
  $region16: #{actor_forward.1} parent=0 // pred_region
    _
  $region17: #{actor_forward.1} parent=0 // pred_fallthru
    _
  // Predicated region
  $region18: #{actor_forward.1} parent=0 // pred_check
    _
  $region19: #{actor_forward.1} parent=0 // pred_check_branch
    %27 = sbr.rel (0) target = $region21
  $region20: #{actor_forward.1} parent=0 // pred_region
    _
  $region21: #{actor_forward.1} parent=0 // pred_fallthru
    _
  // Predicated region
  $region22: #{actor_forward.1} parent=0 // pred_check
    _
  $region23: #{actor_forward.1} parent=0 // pred_check_branch
    %29 = sbr.rel (0) target = $region25
  $region24: #{actor_forward.1} parent=0 // pred_region
    _
  $region25: #{actor_forward.1} parent=0 // pred_fallthru
    _
  // Predicated region
  $region26: #{actor_forward.1} parent=0 // pred_check
    _
  $region27: #{actor_forward.1} parent=0 // pred_check_branch
    %31 = sbr.rel (0) target = $region29
  $region28: #{actor_forward.1} parent=0 // pred_region
    _
  $region29: #{actor_forward.1} parent=0 // pred_fallthru
    _
  // Predicated region
  $region30: #{actor_forward.1} parent=0 // pred_check
    _
  $region31: #{actor_forward.1} parent=0 // pred_check_branch
    %33 = sbr.rel (0) target = $region33
  $region32: #{actor_forward.1} parent=0 // pred_region
    _
  $region33: #{actor_forward.1} parent=0 // pred_fallthru
    _
  // Predicated region
  $region34: #{actor_forward.1} parent=0 // pred_check
    _
  $region35: #{actor_forward.1} parent=0 // pred_check_branch
    %35 = sbr.rel (0) target = $region37
  $region36: #{actor_forward.1} parent=0 // pred_region
    _
  $region37: #{actor_forward.1} parent=0 // pred_fallthru
    _
  // Predicated region
  $region38: #{actor_forward.1} parent=0 // pred_check
    _
  $region39: #{actor_forward.1} parent=0 // pred_check_branch
    %37 = sbr.rel (0) target = $region41
  $region40: #{actor_forward.1} parent=0 // pred_region
    _
  $region41: #{actor_forward.1} parent=0 // pred_fallthru
    _
  // Predicated region
  $region42: #{actor_forward.1} parent=0 // pred_check
    _
  $region43: #{actor_forward.1} parent=0 // pred_check_branch
    %39 = sbr.rel (0) target = $region45
  $region44: #{actor_forward.1} parent=0 // pred_region
    _
  $region45: #{actor_forward.1} parent=0 // pred_fallthru
    _
  // Predicated region
  $region46: #{actor_forward.1} parent=0 // pred_check
    _
  $region47: #{actor_forward.1} parent=0 // pred_check_branch
    %41 = sbr.rel (0) target = $region49
  $region48: #{actor_forward.1} parent=0 // pred_region
    _
  $region49: #{actor_forward.1} parent=0 // pred_fallthru
    _
  // Predicated region
  $region50: #{actor_forward.1} parent=0 // pred_check
    _
  $region51: #{actor_forward.1} parent=0 // pred_check_branch
    %43 = sbr.rel (0) target = $region53
  $region52: #{actor_forward.1} parent=0 // pred_region
    _
  $region53: #{actor_forward.1} parent=0 // pred_fallthru
    _
  %v44 = vld [vmem:[%s2] sm:$0xff]
  %v45 = vld [vmem:[%s2 + $0x8] sm:$0xff]
  %v46 = vld [vmem:[%s2 + $0x10] sm:$0xff]
  %v47 = vld [vmem:[%s2 + $0x18] sm:$0xff]
  %v48 = vld [vmem:[%s2 + $0x20] sm:$0xff]
  %v49 = vld [vmem:[%s2 + $0x28] sm:$0xff]
  %v50 = vld [vmem:[%s3] sm:$0x1]
  %v51 = vld [vmem:[%s0] sm:$0x7f]
  %v53 = vperm.slane %v50, 0
  %vm55 = vcmask 392192
  %v57 = vsel %vm55, %v51, 0
  %59 = vmatpush.msra.mxu0 0.0
  %60 = vmatpush.msra.mxu0 0.0
  %61 = vmatpush.msra.mxu0 0.0
  %62 = vmatpush.msra.mxu0 0.0
  %63 = vmatpush.msra.mxu0 0.0
  %64 = vmatpush.msra.mxu0 0.0
  %65 = vmatpush.msra.mxu0 0.0
  %66 = vmatpush.msra.mxu0 0.0
  %67 = vmatpush.msra.mxu0 0.0
  %68 = vmatpush.msra.mxu0 0.0
  %69 = vmatpush.msra.mxu0 %v49
  %70 = vmatpush.msra.mxu0 %v48
  %71 = vmatpush.msra.mxu0 %v47
  %72 = vmatpush.msra.mxu0 %v46
  %73 = vmatpush.msra.mxu0 %v45
  %74 = vmatpush.msra.mxu0 %v44
  %75 = vmatmul.f32.gmra.mxu0 %v57
  %v76 = vpop.f32.mrf.mxu0
  %v77 = vadd.f32 %v53, %v76
  %78 = vdwg.mxu0
  %v79 = vmax.f32 %v77, 0.0
  %80 = vst [vmem:[#allocation2] sm:$0x7f] %v79
  %s81 = scalar_lea.vmem %s0, 8
  %v82 = vld [vmem:[%s81] sm:$0x7f]
  %v84 = vsel %vm55, %v82, 0
  %86 = vmatpush.msra.mxu0 0.0
  %87 = vmatpush.msra.mxu0 0.0
  %88 = vmatpush.msra.mxu0 0.0
  %89 = vmatpush.msra.mxu0 0.0
  %90 = vmatpush.msra.mxu0 0.0
  %91 = vmatpush.msra.mxu0 0.0
  %92 = vmatpush.msra.mxu0 0.0
  %93 = vmatpush.msra.mxu0 0.0
  %94 = vmatpush.msra.mxu0 0.0
  %95 = vmatpush.msra.mxu0 0.0
  %96 = vmatpush.msra.mxu0 %v49
  %97 = vmatpush.msra.mxu0 %v48
  %98 = vmatpush.msra.mxu0 %v47
  %99 = vmatpush.msra.mxu0 %v46
  %100 = vmatpush.msra.mxu0 %v45
  %101 = vmatpush.msra.mxu0 %v44
  %102 = vmatmul.f32.gmra.mxu0 %v84
  %v103 = vpop.f32.mrf.mxu0
  %v104 = vadd.f32 %v53, %v103
  %105 = vdwg.mxu0
  %v106 = vmax.f32 %v104, 0.0
  %s107 = scalar_lea.vmem [#allocation2], 8
  %108 = vst [vmem:[%s107] sm:$0x7f] %v106
  %s109 = scalar_lea.vmem %s0, 16
  %v110 = vld [vmem:[%s109] sm:$0x7f]
  %v112 = vsel %vm55, %v110, 0
  %114 = vmatpush.msra.mxu0 0.0
  %115 = vmatpush.msra.mxu0 0.0
  %116 = vmatpush.msra.mxu0 0.0
  %117 = vmatpush.msra.mxu0 0.0
  %118 = vmatpush.msra.mxu0 0.0
  %119 = vmatpush.msra.mxu0 0.0
  %120 = vmatpush.msra.mxu0 0.0
  %121 = vmatpush.msra.mxu0 0.0
  %122 = vmatpush.msra.mxu0 0.0
  %123 = vmatpush.msra.mxu0 0.0
  %124 = vmatpush.msra.mxu0 %v49
  %125 = vmatpush.msra.mxu0 %v48
  %126 = vmatpush.msra.mxu0 %v47
  %127 = vmatpush.msra.mxu0 %v46
  %128 = vmatpush.msra.mxu0 %v45
  %129 = vmatpush.msra.mxu0 %v44
  %130 = vmatmul.f32.gmra.mxu0 %v112
  %v131 = vpop.f32.mrf.mxu0
  %v132 = vadd.f32 %v53, %v131
  %133 = vdwg.mxu0
  %v134 = vmax.f32 %v132, 0.0
  %s135 = scalar_lea.vmem [#allocation2], 16
  %136 = vst [vmem:[%s135] sm:$0x7f] %v134
  %s137 = scalar_lea.vmem %s0, 24
  %v138 = vld [vmem:[%s137] sm:$0x7f]
  %v140 = vsel %vm55, %v138, 0
  %142 = vmatpush.msra.mxu0 0.0
  %143 = vmatpush.msra.mxu0 0.0
  %144 = vmatpush.msra.mxu0 0.0
  %145 = vmatpush.msra.mxu0 0.0
  %146 = vmatpush.msra.mxu0 0.0
  %147 = vmatpush.msra.mxu0 0.0
  %148 = vmatpush.msra.mxu0 0.0
  %149 = vmatpush.msra.mxu0 0.0
  %150 = vmatpush.msra.mxu0 0.0
  %151 = vmatpush.msra.mxu0 0.0
  %152 = vmatpush.msra.mxu0 %v49
  %153 = vmatpush.msra.mxu0 %v48
  %154 = vmatpush.msra.mxu0 %v47
  %155 = vmatpush.msra.mxu0 %v46
  %156 = vmatpush.msra.mxu0 %v45
  %157 = vmatpush.msra.mxu0 %v44
  %158 = vmatmul.f32.gmra.mxu0 %v140
  %v159 = vpop.f32.mrf.mxu0
  %v160 = vadd.f32 %v53, %v159
  %161 = vdwg.mxu0
  %v162 = vmax.f32 %v160, 0.0
  %s163 = scalar_lea.vmem [#allocation2], 24
  %164 = vst [vmem:[%s163] sm:$0x7f] %v162
  %s165 = scalar_lea.vmem %s0, 32
  %v166 = vld [vmem:[%s165] sm:$0x7f]
  %v168 = vsel %vm55, %v166, 0
  %170 = vmatpush.msra.mxu0 0.0
  %171 = vmatpush.msra.mxu0 0.0
  %172 = vmatpush.msra.mxu0 0.0
  %173 = vmatpush.msra.mxu0 0.0
  %174 = vmatpush.msra.mxu0 0.0
  %175 = vmatpush.msra.mxu0 0.0
  %176 = vmatpush.msra.mxu0 0.0
  %177 = vmatpush.msra.mxu0 0.0
  %178 = vmatpush.msra.mxu0 0.0
  %179 = vmatpush.msra.mxu0 0.0
  %180 = vmatpush.msra.mxu0 %v49
  %181 = vmatpush.msra.mxu0 %v48
  %182 = vmatpush.msra.mxu0 %v47
  %183 = vmatpush.msra.mxu0 %v46
  %184 = vmatpush.msra.mxu0 %v45
  %185 = vmatpush.msra.mxu0 %v44
  %186 = vmatmul.f32.gmra.mxu0 %v168
  %v187 = vpop.f32.mrf.mxu0
  %v188 = vadd.f32 %v53, %v187
  %189 = vdwg.mxu0
  %v190 = vmax.f32 %v188, 0.0
  %s191 = scalar_lea.vmem [#allocation2], 32
  %192 = vst [vmem:[%s191] sm:$0x7f] %v190
  %s193 = scalar_lea.vmem %s0, 40
  %v194 = vld [vmem:[%s193] sm:$0x7f]
  %v196 = vsel %vm55, %v194, 0
  %198 = vmatpush.msra.mxu0 0.0
  %199 = vmatpush.msra.mxu0 0.0
  %200 = vmatpush.msra.mxu0 0.0
  %201 = vmatpush.msra.mxu0 0.0
  %202 = vmatpush.msra.mxu0 0.0
  %203 = vmatpush.msra.mxu0 0.0
  %204 = vmatpush.msra.mxu0 0.0
  %205 = vmatpush.msra.mxu0 0.0
  %206 = vmatpush.msra.mxu0 0.0
  %207 = vmatpush.msra.mxu0 0.0
  %208 = vmatpush.msra.mxu0 %v49
  %209 = vmatpush.msra.mxu0 %v48
  %210 = vmatpush.msra.mxu0 %v47
  %211 = vmatpush.msra.mxu0 %v46
  %212 = vmatpush.msra.mxu0 %v45
  %213 = vmatpush.msra.mxu0 %v44
  %214 = vmatmul.f32.gmra.mxu0 %v196
  %v215 = vpop.f32.mrf.mxu0
  %v216 = vadd.f32 %v53, %v215
  %217 = vdwg.mxu0
  %v218 = vmax.f32 %v216, 0.0
  %s219 = scalar_lea.vmem [#allocation2], 40
  %220 = vst [vmem:[%s219] sm:$0x7f] %v218
  %s221 = scalar_lea.vmem %s0, 48
  %v222 = vld [vmem:[%s221] sm:$0x7f]
  %v224 = vsel %vm55, %v222, 0
  %226 = vmatpush.msra.mxu0 0.0
  %227 = vmatpush.msra.mxu0 0.0
  %228 = vmatpush.msra.mxu0 0.0
  %229 = vmatpush.msra.mxu0 0.0
  %230 = vmatpush.msra.mxu0 0.0
  %231 = vmatpush.msra.mxu0 0.0
  %232 = vmatpush.msra.mxu0 0.0
  %233 = vmatpush.msra.mxu0 0.0
  %234 = vmatpush.msra.mxu0 0.0
  %235 = vmatpush.msra.mxu0 0.0
  %236 = vmatpush.msra.mxu0 %v49
  %237 = vmatpush.msra.mxu0 %v48
  %238 = vmatpush.msra.mxu0 %v47
  %239 = vmatpush.msra.mxu0 %v46
  %240 = vmatpush.msra.mxu0 %v45
  %241 = vmatpush.msra.mxu0 %v44
  %242 = vmatmul.f32.gmra.mxu0 %v224
  %v243 = vpop.f32.mrf.mxu0
  %v244 = vadd.f32 %v53, %v243
  %245 = vdwg.mxu0
  %v246 = vmax.f32 %v244, 0.0
  %s247 = scalar_lea.vmem [#allocation2], 48
  %248 = vst [vmem:[%s247] sm:$0x7f] %v246
  %s249 = scalar_lea.vmem %s0, 56
  %v250 = vld [vmem:[%s249] sm:$0x7f]
  %v252 = vsel %vm55, %v250, 0
  %254 = vmatpush.msra.mxu0 0.0
  %255 = vmatpush.msra.mxu0 0.0
  %256 = vmatpush.msra.mxu0 0.0
  %257 = vmatpush.msra.mxu0 0.0
  %258 = vmatpush.msra.mxu0 0.0
  %259 = vmatpush.msra.mxu0 0.0
  %260 = vmatpush.msra.mxu0 0.0
  %261 = vmatpush.msra.mxu0 0.0
  %262 = vmatpush.msra.mxu0 0.0
  %263 = vmatpush.msra.mxu0 0.0
  %264 = vmatpush.msra.mxu0 %v49
  %265 = vmatpush.msra.mxu0 %v48
  %266 = vmatpush.msra.mxu0 %v47
  %267 = vmatpush.msra.mxu0 %v46
  %268 = vmatpush.msra.mxu0 %v45
  %269 = vmatpush.msra.mxu0 %v44
  %270 = vmatmul.f32.gmra.mxu0 %v252
  %v271 = vpop.f32.mrf.mxu0
  %v272 = vadd.f32 %v53, %v271
  %273 = vdwg.mxu0
  %v274 = vmax.f32 %v272, 0.0
  %s275 = scalar_lea.vmem [#allocation2], 56
  %276 = vst [vmem:[%s275] sm:$0x7f] %v274
  %s277 = scalar_lea.vmem %s0, 64
  %v278 = vld [vmem:[%s277] sm:$0x7f]
  %v280 = vsel %vm55, %v278, 0
  %282 = vmatpush.msra.mxu0 0.0
  %283 = vmatpush.msra.mxu0 0.0
  %284 = vmatpush.msra.mxu0 0.0
  %285 = vmatpush.msra.mxu0 0.0
  %286 = vmatpush.msra.mxu0 0.0
  %287 = vmatpush.msra.mxu0 0.0
  %288 = vmatpush.msra.mxu0 0.0
  %289 = vmatpush.msra.mxu0 0.0
  %290 = vmatpush.msra.mxu0 0.0
  %291 = vmatpush.msra.mxu0 0.0
  %292 = vmatpush.msra.mxu0 %v49
  %293 = vmatpush.msra.mxu0 %v48
  %294 = vmatpush.msra.mxu0 %v47
  %295 = vmatpush.msra.mxu0 %v46
  %296 = vmatpush.msra.mxu0 %v45
  %297 = vmatpush.msra.mxu0 %v44
  %298 = vmatmul.f32.gmra.mxu0 %v280
  %v299 = vpop.f32.mrf.mxu0
  %v300 = vadd.f32 %v53, %v299
  %301 = vdwg.mxu0
  %v302 = vmax.f32 %v300, 0.0
  %s303 = scalar_lea.vmem [#allocation2], 64
  %304 = vst [vmem:[%s303] sm:$0x7f] %v302
  %s305 = scalar_lea.vmem %s0, 72
  %v306 = vld [vmem:[%s305] sm:$0x7f]
  %v308 = vsel %vm55, %v306, 0
  %310 = vmatpush.msra.mxu0 0.0
  %311 = vmatpush.msra.mxu0 0.0
  %312 = vmatpush.msra.mxu0 0.0
  %313 = vmatpush.msra.mxu0 0.0
  %314 = vmatpush.msra.mxu0 0.0
  %315 = vmatpush.msra.mxu0 0.0
  %316 = vmatpush.msra.mxu0 0.0
  %317 = vmatpush.msra.mxu0 0.0
  %318 = vmatpush.msra.mxu0 0.0
  %319 = vmatpush.msra.mxu0 0.0
  %320 = vmatpush.msra.mxu0 %v49
  %321 = vmatpush.msra.mxu0 %v48
  %322 = vmatpush.msra.mxu0 %v47
  %323 = vmatpush.msra.mxu0 %v46
  %324 = vmatpush.msra.mxu0 %v45
  %325 = vmatpush.msra.mxu0 %v44
  %326 = vmatmul.f32.gmra.mxu0 %v308
  %v327 = vpop.f32.mrf.mxu0
  %v328 = vadd.f32 %v53, %v327
  %329 = vdwg.mxu0
  %v330 = vmax.f32 %v328, 0.0
  %s331 = scalar_lea.vmem [#allocation2], 72
  %332 = vst [vmem:[%s331] sm:$0x7f] %v330
  %s333 = scalar_lea.vmem %s0, 80
  %v334 = vld [vmem:[%s333] sm:$0x7f]
  %v336 = vsel %vm55, %v334, 0
  %338 = vmatpush.msra.mxu0 0.0
  %339 = vmatpush.msra.mxu0 0.0
  %340 = vmatpush.msra.mxu0 0.0
  %341 = vmatpush.msra.mxu0 0.0
  %342 = vmatpush.msra.mxu0 0.0
  %343 = vmatpush.msra.mxu0 0.0
  %344 = vmatpush.msra.mxu0 0.0
  %345 = vmatpush.msra.mxu0 0.0
  %346 = vmatpush.msra.mxu0 0.0
  %347 = vmatpush.msra.mxu0 0.0
  %348 = vmatpush.msra.mxu0 %v49
  %349 = vmatpush.msra.mxu0 %v48
  %350 = vmatpush.msra.mxu0 %v47
  %351 = vmatpush.msra.mxu0 %v46
  %352 = vmatpush.msra.mxu0 %v45
  %353 = vmatpush.msra.mxu0 %v44
  %354 = vmatmul.f32.gmra.mxu0 %v336
  %v355 = vpop.f32.mrf.mxu0
  %v356 = vadd.f32 %v53, %v355
  %357 = vdwg.mxu0
  %v358 = vmax.f32 %v356, 0.0
  %s359 = scalar_lea.vmem [#allocation2], 80
  %360 = vst [vmem:[%s359] sm:$0x7f] %v358
  %s361 = scalar_lea.vmem %s0, 88
  %v362 = vld [vmem:[%s361] sm:$0x7f]
  %v364 = vsel %vm55, %v362, 0
  %366 = vmatpush.msra.mxu0 0.0
  %367 = vmatpush.msra.mxu0 0.0
  %368 = vmatpush.msra.mxu0 0.0
  %369 = vmatpush.msra.mxu0 0.0
  %370 = vmatpush.msra.mxu0 0.0
  %371 = vmatpush.msra.mxu0 0.0
  %372 = vmatpush.msra.mxu0 0.0
  %373 = vmatpush.msra.mxu0 0.0
  %374 = vmatpush.msra.mxu0 0.0
  %375 = vmatpush.msra.mxu0 0.0
  %376 = vmatpush.msra.mxu0 %v49
  %377 = vmatpush.msra.mxu0 %v48
  %378 = vmatpush.msra.mxu0 %v47
  %379 = vmatpush.msra.mxu0 %v46
  %380 = vmatpush.msra.mxu0 %v45
  %381 = vmatpush.msra.mxu0 %v44
  %382 = vmatmul.f32.gmra.mxu0 %v364
  %v383 = vpop.f32.mrf.mxu0
  %v384 = vadd.f32 %v53, %v383
  %385 = vdwg.mxu0
  %v386 = vmax.f32 %v384, 0.0
  %s387 = scalar_lea.vmem [#allocation2], 88
  %388 = vst [vmem:[%s387] sm:$0x7f] %v386
  %s389 = scalar_lea.vmem %s0, 96
  %v390 = vld [vmem:[%s389] sm:$0x7f]
  %v392 = vsel %vm55, %v390, 0
  %394 = vmatpush.msra.mxu0 0.0
  %395 = vmatpush.msra.mxu0 0.0
  %396 = vmatpush.msra.mxu0 0.0
  %397 = vmatpush.msra.mxu0 0.0
  %398 = vmatpush.msra.mxu0 0.0
  %399 = vmatpush.msra.mxu0 0.0
  %400 = vmatpush.msra.mxu0 0.0
  %401 = vmatpush.msra.mxu0 0.0
  %402 = vmatpush.msra.mxu0 0.0
  %403 = vmatpush.msra.mxu0 0.0
  %404 = vmatpush.msra.mxu0 %v49
  %405 = vmatpush.msra.mxu0 %v48
  %406 = vmatpush.msra.mxu0 %v47
  %407 = vmatpush.msra.mxu0 %v46
  %408 = vmatpush.msra.mxu0 %v45
  %409 = vmatpush.msra.mxu0 %v44
  %410 = vmatmul.f32.gmra.mxu0 %v392
  %v411 = vpop.f32.mrf.mxu0
  %v412 = vadd.f32 %v53, %v411
  %413 = vdwg.mxu0
  %v414 = vmax.f32 %v412, 0.0
  %s415 = scalar_lea.vmem [#allocation2], 96
  %416 = vst [vmem:[%s415] sm:$0x7f] %v414
  %s417 = scalar_lea.vmem %s0, 104
  %v418 = vld [vmem:[%s417] sm:$0x7f]
  %v420 = vsel %vm55, %v418, 0
  %422 = vmatpush.msra.mxu0 0.0
  %423 = vmatpush.msra.mxu0 0.0
  %424 = vmatpush.msra.mxu0 0.0
  %425 = vmatpush.msra.mxu0 0.0
  %426 = vmatpush.msra.mxu0 0.0
  %427 = vmatpush.msra.mxu0 0.0
  %428 = vmatpush.msra.mxu0 0.0
  %429 = vmatpush.msra.mxu0 0.0
  %430 = vmatpush.msra.mxu0 0.0
  %431 = vmatpush.msra.mxu0 0.0
  %432 = vmatpush.msra.mxu0 %v49
  %433 = vmatpush.msra.mxu0 %v48
  %434 = vmatpush.msra.mxu0 %v47
  %435 = vmatpush.msra.mxu0 %v46
  %436 = vmatpush.msra.mxu0 %v45
  %437 = vmatpush.msra.mxu0 %v44
  %438 = vmatmul.f32.gmra.mxu0 %v420
  %v439 = vpop.f32.mrf.mxu0
  %v440 = vadd.f32 %v53, %v439
  %441 = vdwg.mxu0
  %v442 = vmax.f32 %v440, 0.0
  %s443 = scalar_lea.vmem [#allocation2], 104
  %444 = vst [vmem:[%s443] sm:$0x7f] %v442
  %v445 = vld [vmem:[%s4] sm:$0xff]
  %v446 = vld [vmem:[%s4 + $0x8] sm:$0xff]
  %v447 = vld [vmem:[%s4 + $0x10] sm:$0xff]
  %v448 = vld [vmem:[%s4 + $0x18] sm:$0xff]
  %v449 = vld [vmem:[%s4 + $0x20] sm:$0xff]
  %v450 = vld [vmem:[%s4 + $0x28] sm:$0xff]
  %v451 = vld [vmem:[%s4 + $0x30] sm:$0xff]
  %v452 = vld [vmem:[%s4 + $0x38] sm:$0xff]
  %v453 = vld [vmem:[%s4 + $0x40] sm:$0xff]
  %v454 = vld [vmem:[%s4 + $0x48] sm:$0xff]
  %v455 = vld [vmem:[%s4 + $0x50] sm:$0xff]
  %v456 = vld [vmem:[%s4 + $0x58] sm:$0xff]
  %v457 = vld [vmem:[%s4 + $0x60] sm:$0xff]
  %v458 = vld [vmem:[%s4 + $0x68] sm:$0xff]
  %v459 = vld [vmem:[%s4 + $0x70] sm:$0xff]
  %v460 = vld [vmem:[%s4 + $0x78] sm:$0xff]
  %v461 = vld [vmem:[%s4 + $0x80] sm:$0xff]
  %v462 = vld [vmem:[%s4 + $0x88] sm:$0xff]
  %v463 = vld [vmem:[%s4 + $0x90] sm:$0xff]
  %v464 = vld [vmem:[%s4 + $0x98] sm:$0xff]
  %v465 = vld [vmem:[%s4 + $0xa0] sm:$0xff]
  %v466 = vld [vmem:[%s4 + $0xa8] sm:$0xff]
  %v467 = vld [vmem:[%s4 + $0xb0] sm:$0xff]
  %v468 = vld [vmem:[%s4 + $0xb8] sm:$0xff]
  %v469 = vld [vmem:[%s4 + $0xc0] sm:$0xff]
  %v470 = vld [vmem:[%s4 + $0xc8] sm:$0xff]
  %v471 = vld [vmem:[%s4 + $0xd0] sm:$0xff]
  %v472 = vld [vmem:[%s4 + $0xd8] sm:$0xff]
  %v473 = vld [vmem:[%s4 + $0xe0] sm:$0xff]
  %v474 = vld [vmem:[%s4 + $0xe8] sm:$0xff]
  %v475 = vld [vmem:[%s4 + $0xf0] sm:$0xff]
  %v476 = vld [vmem:[%s4 + $0xf8] sm:$0xff]
  %v477 = vld [vmem:[%s4 + $0x100] sm:$0xff]
  %v478 = vld [vmem:[%s4 + $0x108] sm:$0xff]
  %v479 = vld [vmem:[%s4 + $0x110] sm:$0xff]
  %v480 = vld [vmem:[%s4 + $0x118] sm:$0xff]
  %v481 = vld [vmem:[%s4 + $0x120] sm:$0xff]
  %v482 = vld [vmem:[%s4 + $0x128] sm:$0xff]
  %v483 = vld [vmem:[%s4 + $0x130] sm:$0xff]
  %v484 = vld [vmem:[%s4 + $0x138] sm:$0xff]
  %v485 = vld [vmem:[%s4 + $0x140] sm:$0xff]
  %v486 = vld [vmem:[%s4 + $0x148] sm:$0xff]
  %v487 = vld [vmem:[%s4 + $0x150] sm:$0xff]
  %v488 = vld [vmem:[%s4 + $0x158] sm:$0xff]
  %v489 = vld [vmem:[%s4 + $0x160] sm:$0xff]
  %v490 = vld [vmem:[%s4 + $0x168] sm:$0xff]
  %v491 = vld [vmem:[%s4 + $0x170] sm:$0xff]
  %v492 = vld [vmem:[%s4 + $0x178] sm:$0xff]
  %v493 = vld [vmem:[%s4 + $0x180] sm:$0xff]
  %v494 = vld [vmem:[%s4 + $0x188] sm:$0xff]
  %v495 = vld [vmem:[%s4 + $0x190] sm:$0xff]
  %v496 = vld [vmem:[%s4 + $0x198] sm:$0xff]
  %v497 = vld [vmem:[%s4 + $0x1a0] sm:$0xff]
  %v498 = vld [vmem:[%s4 + $0x1a8] sm:$0xff]
  %v499 = vld [vmem:[%s4 + $0x1b0] sm:$0xff]
  %v500 = vld [vmem:[%s4 + $0x1b8] sm:$0xff]
  %v501 = vld [vmem:[%s4 + $0x1c0] sm:$0xff]
  %v502 = vld [vmem:[%s4 + $0x1c8] sm:$0xff]
  %v503 = vld [vmem:[%s4 + $0x1d0] sm:$0xff]
  %v504 = vld [vmem:[%s4 + $0x1d8] sm:$0xff]
  %v505 = vld [vmem:[%s4 + $0x1e0] sm:$0xff]
  %v506 = vld [vmem:[%s4 + $0x1e8] sm:$0xff]
  %v507 = vld [vmem:[%s4 + $0x1f0] sm:$0xff]
  %v508 = vld [vmem:[%s4 + $0x1f8] sm:$0xff]
  %v509 = vld [vmem:[%s5] sm:$0x1]
  %v510 = vld [vmem:[#allocation2] sm:$0x1]
  %v511 = vld [vmem:[#allocation2 + $0x38] sm:$0x1]
  %v512 = vld [vmem:[#allocation2 + $0x1] sm:$0x1]
  %v513 = vld [vmem:[#allocation2 + $0x39] sm:$0x1]
  %v514 = vld [vmem:[%s107] sm:$0x1]
  %v515 = vld [vmem:[%s107 + $0x38] sm:$0x1]
  %v516 = vld [vmem:[%s107 + $0x1] sm:$0x1]
  %v517 = vld [vmem:[%s107 + $0x39] sm:$0x1]
  %v520 = vrot.slane %v511, 7
  %vm521 = vcmask 1041409
  %v522 = vsel %vm521, %v520, %v510
  %v526 = vrot.slane %v513, 7
  %v527 = vsel %vm521, %v526, %v512
  %v531 = vrot.slane %v515, 7
  %v532 = vsel %vm521, %v531, %v514
  %v536 = vrot.slane %v517, 7
  %v537 = vsel %vm521, %v536, %v516
  %v540 = vperm.slane %v509, 0
  %542 = vmatpush.msra.mxu0 %v460
  %543 = vmatpush.msra.mxu0 %v459
  %544 = vmatpush.msra.mxu0 %v458
  %545 = vmatpush.msra.mxu0 %v457
  %546 = vmatpush.msra.mxu0 %v456
  %547 = vmatpush.msra.mxu0 %v455
  %548 = vmatpush.msra.mxu0 %v454
  %549 = vmatpush.msra.mxu0 %v453
  %550 = vmatpush.msra.mxu0 %v452
  %551 = vmatpush.msra.mxu0 %v451
  %552 = vmatpush.msra.mxu0 %v450
  %553 = vmatpush.msra.mxu0 %v449
  %554 = vmatpush.msra.mxu0 %v448
  %555 = vmatpush.msra.mxu0 %v447
  %556 = vmatpush.msra.mxu0 %v446
  %557 = vmatpush.msra.mxu0 %v445
  %558 = vmatmul.f32.gmra.mxu0 %v522
  %v559 = vpop.f32.mrf.mxu0
  %v560 = vadd.f32 %v540, %v559
  %561 = vdwg.mxu0
  %562 = vmatpush.msra.mxu0 %v476
  %563 = vmatpush.msra.mxu0 %v475
  %564 = vmatpush.msra.mxu0 %v474
  %565 = vmatpush.msra.mxu0 %v473
  %566 = vmatpush.msra.mxu0 %v472
  %567 = vmatpush.msra.mxu0 %v471
  %568 = vmatpush.msra.mxu0 %v470
  %569 = vmatpush.msra.mxu0 %v469
  %570 = vmatpush.msra.mxu0 %v468
  %571 = vmatpush.msra.mxu0 %v467
  %572 = vmatpush.msra.mxu0 %v466
  %573 = vmatpush.msra.mxu0 %v465
  %574 = vmatpush.msra.mxu0 %v464
  %575 = vmatpush.msra.mxu0 %v463
  %576 = vmatpush.msra.mxu0 %v462
  %577 = vmatpush.msra.mxu0 %v461
  %578 = vmatmul.f32.gmra.mxu0 %v527
  %v579 = vpop.f32.mrf.mxu0
  %v580 = vadd.f32 %v560, %v579
  %581 = vdwg.mxu0
  %582 = vmatpush.msra.mxu0 %v492
  %583 = vmatpush.msra.mxu0 %v491
  %584 = vmatpush.msra.mxu0 %v490
  %585 = vmatpush.msra.mxu0 %v489
  %586 = vmatpush.msra.mxu0 %v488
  %587 = vmatpush.msra.mxu0 %v487
  %588 = vmatpush.msra.mxu0 %v486
  %589 = vmatpush.msra.mxu0 %v485
  %590 = vmatpush.msra.mxu0 %v484
  %591 = vmatpush.msra.mxu0 %v483
  %592 = vmatpush.msra.mxu0 %v482
  %593 = vmatpush.msra.mxu0 %v481
  %594 = vmatpush.msra.mxu0 %v480
  %595 = vmatpush.msra.mxu0 %v479
  %596 = vmatpush.msra.mxu0 %v478
  %597 = vmatpush.msra.mxu0 %v477
  %598 = vmatmul.f32.gmra.mxu0 %v532
  %v599 = vpop.f32.mrf.mxu0
  %v600 = vadd.f32 %v580, %v599
  %601 = vdwg.mxu0
  %602 = vmatpush.msra.mxu0 %v508
  %603 = vmatpush.msra.mxu0 %v507
  %604 = vmatpush.msra.mxu0 %v506
  %605 = vmatpush.msra.mxu0 %v505
  %606 = vmatpush.msra.mxu0 %v504
  %607 = vmatpush.msra.mxu0 %v503
  %608 = vmatpush.msra.mxu0 %v502
  %609 = vmatpush.msra.mxu0 %v501
  %610 = vmatpush.msra.mxu0 %v500
  %611 = vmatpush.msra.mxu0 %v499
  %612 = vmatpush.msra.mxu0 %v498
  %613 = vmatpush.msra.mxu0 %v497
  %614 = vmatpush.msra.mxu0 %v496
  %615 = vmatpush.msra.mxu0 %v495
  %616 = vmatpush.msra.mxu0 %v494
  %617 = vmatpush.msra.mxu0 %v493
  %618 = vmatmul.f32.gmra.mxu0 %v537
  %v619 = vpop.f32.mrf.mxu0
  %v620 = vadd.f32 %v600, %v619
  %621 = vdwg.mxu0
  %v622 = vmax.f32 %v620, 0.0
  %623 = vst [vmem:[#allocation3] sm:$0x3] %v622
  %v624 = vld [vmem:[#allocation2 + $0x1] sm:$0x1]
  %v625 = vld [vmem:[#allocation2 + $0x39] sm:$0x1]
  %v626 = vld [vmem:[#allocation2 + $0x2] sm:$0x1]
  %v627 = vld [vmem:[#allocation2 + $0x3a] sm:$0x1]
  %v628 = vld [vmem:[%s107 + $0x1] sm:$0x1]
  %v629 = vld [vmem:[%s107 + $0x39] sm:$0x1]
  %v630 = vld [vmem:[%s107 + $0x2] sm:$0x1]
  %v631 = vld [vmem:[%s107 + $0x3a] sm:$0x1]
  %v634 = vrot.slane %v625, 7
  %v635 = vsel %vm521, %v634, %v624
  %v639 = vrot.slane %v627, 7
  %v640 = vsel %vm521, %v639, %v626
  %v644 = vrot.slane %v629, 7
  %v645 = vsel %vm521, %v644, %v628
  %v649 = vrot.slane %v631, 7
  %v650 = vsel %vm521, %v649, %v630
  %652 = vmatpush.msra.mxu0 %v460
  %653 = vmatpush.msra.mxu0 %v459
  %654 = vmatpush.msra.mxu0 %v458
  %655 = vmatpush.msra.mxu0 %v457
  %656 = vmatpush.msra.mxu0 %v456
  %657 = vmatpush.msra.mxu0 %v455
  %658 = vmatpush.msra.mxu0 %v454
  %659 = vmatpush.msra.mxu0 %v453
  %660 = vmatpush.msra.mxu0 %v452
  %661 = vmatpush.msra.mxu0 %v451
  %662 = vmatpush.msra.mxu0 %v450
  %663 = vmatpush.msra.mxu0 %v449
  %664 = vmatpush.msra.mxu0 %v448
  %665 = vmatpush.msra.mxu0 %v447
  %666 = vmatpush.msra.mxu0 %v446
  %667 = vmatpush.msra.mxu0 %v445
  %668 = vmatmul.f32.gmra.mxu0 %v635
  %v669 = vpop.f32.mrf.mxu0
  %v670 = vadd.f32 %v540, %v669
  %671 = vdwg.mxu0
  %672 = vmatpush.msra.mxu0 %v476
  %673 = vmatpush.msra.mxu0 %v475
  %674 = vmatpush.msra.mxu0 %v474
  %675 = vmatpush.msra.mxu0 %v473
  %676 = vmatpush.msra.mxu0 %v472
  %677 = vmatpush.msra.mxu0 %v471
  %678 = vmatpush.msra.mxu0 %v470
  %679 = vmatpush.msra.mxu0 %v469
  %680 = vmatpush.msra.mxu0 %v468
  %681 = vmatpush.msra.mxu0 %v467
  %682 = vmatpush.msra.mxu0 %v466
  %683 = vmatpush.msra.mxu0 %v465
  %684 = vmatpush.msra.mxu0 %v464
  %685 = vmatpush.msra.mxu0 %v463
  %686 = vmatpush.msra.mxu0 %v462
  %687 = vmatpush.msra.mxu0 %v461
  %688 = vmatmul.f32.gmra.mxu0 %v640
  %v689 = vpop.f32.mrf.mxu0
  %v690 = vadd.f32 %v670, %v689
  %691 = vdwg.mxu0
  %692 = vmatpush.msra.mxu0 %v492
  %693 = vmatpush.msra.mxu0 %v491
  %694 = vmatpush.msra.mxu0 %v490
  %695 = vmatpush.msra.mxu0 %v489
  %696 = vmatpush.msra.mxu0 %v488
  %697 = vmatpush.msra.mxu0 %v487
  %698 = vmatpush.msra.mxu0 %v486
  %699 = vmatpush.msra.mxu0 %v485
  %700 = vmatpush.msra.mxu0 %v484
  %701 = vmatpush.msra.mxu0 %v483
  %702 = vmatpush.msra.mxu0 %v482
  %703 = vmatpush.msra.mxu0 %v481
  %704 = vmatpush.msra.mxu0 %v480
  %705 = vmatpush.msra.mxu0 %v479
  %706 = vmatpush.msra.mxu0 %v478
  %707 = vmatpush.msra.mxu0 %v477
  %708 = vmatmul.f32.gmra.mxu0 %v645
  %v709 = vpop.f32.mrf.mxu0
  %v710 = vadd.f32 %v690, %v709
  %711 = vdwg.mxu0
  %712 = vmatpush.msra.mxu0 %v508
  %713 = vmatpush.msra.mxu0 %v507
  %714 = vmatpush.msra.mxu0 %v506
  %715 = vmatpush.msra.mxu0 %v505
  %716 = vmatpush.msra.mxu0 %v504
  %717 = vmatpush.msra.mxu0 %v503
  %718 = vmatpush.msra.mxu0 %v502
  %719 = vmatpush.msra.mxu0 %v501
  %720 = vmatpush.msra.mxu0 %v500
  %721 = vmatpush.msra.mxu0 %v499
  %722 = vmatpush.msra.mxu0 %v498
  %723 = vmatpush.msra.mxu0 %v497
  %724 = vmatpush.msra.mxu0 %v496
  %725 = vmatpush.msra.mxu0 %v495
  %726 = vmatpush.msra.mxu0 %v494
  %727 = vmatpush.msra.mxu0 %v493
  %728 = vmatmul.f32.gmra.mxu0 %v650
  %v729 = vpop.f32.mrf.mxu0
  %v730 = vadd.f32 %v710, %v729
  %731 = vdwg.mxu0
  %v732 = vmax.f32 %v730, 0.0
  %733 = vst [vmem:[#allocation3 + $0x2] sm:$0x3] %v732
  %v734 = vld [vmem:[#allocation2 + $0x2] sm:$0x1]
  %v735 = vld [vmem:[#allocation2 + $0x3a] sm:$0x1]
  %v736 = vld [vmem:[#allocation2 + $0x3] sm:$0x1]
  %v737 = vld [vmem:[#allocation2 + $0x3b] sm:$0x1]
  %v738 = vld [vmem:[%s107 + $0x2] sm:$0x1]
  %v739 = vld [vmem:[%s107 + $0x3a] sm:$0x1]
  %v740 = vld [vmem:[%s107 + $0x3] sm:$0x1]
  %v741 = vld [vmem:[%s107 + $0x3b] sm:$0x1]
  %v744 = vrot.slane %v735, 7
  %v745 = vsel %vm521, %v744, %v734
  %v749 = vrot.slane %v737, 7
  %v750 = vsel %vm521, %v749, %v736
  %v754 = vrot.slane %v739, 7
  %v755 = vsel %vm521, %v754, %v738
  %v759 = vrot.slane %v741, 7
  %v760 = vsel %vm521, %v759, %v740
  %762 = vmatpush.msra.mxu0 %v460
  %763 = vmatpush.msra.mxu0 %v459
  %764 = vmatpush.msra.mxu0 %v458
  %765 = vmatpush.msra.mxu0 %v457
  %766 = vmatpush.msra.mxu0 %v456
  %767 = vmatpush.msra.mxu0 %v455
  %768 = vmatpush.msra.mxu0 %v454
  %769 = vmatpush.msra.mxu0 %v453
  %770 = vmatpush.msra.mxu0 %v452
  %771 = vmatpush.msra.mxu0 %v451
  %772 = vmatpush.msra.mxu0 %v450
  %773 = vmatpush.msra.mxu0 %v449
  %774 = vmatpush.msra.mxu0 %v448
  %775 = vmatpush.msra.mxu0 %v447
  %776 = vmatpush.msra.mxu0 %v446
  %777 = vmatpush.msra.mxu0 %v445
  %778 = vmatmul.f32.gmra.mxu0 %v745
  %v779 = vpop.f32.mrf.mxu0
  %v780 = vadd.f32 %v540, %v779
  %781 = vdwg.mxu0
  %782 = vmatpush.msra.mxu0 %v476
  %783 = vmatpush.msra.mxu0 %v475
  %784 = vmatpush.msra.mxu0 %v474
  %785 = vmatpush.msra.mxu0 %v473
  %786 = vmatpush.msra.mxu0 %v472
  %787 = vmatpush.msra.mxu0 %v471
  %788 = vmatpush.msra.mxu0 %v470
  %789 = vmatpush.msra.mxu0 %v469
  %790 = vmatpush.msra.mxu0 %v468
  %791 = vmatpush.msra.mxu0 %v467
  %792 = vmatpush.msra.mxu0 %v466
  %793 = vmatpush.msra.mxu0 %v465
  %794 = vmatpush.msra.mxu0 %v464
  %795 = vmatpush.msra.mxu0 %v463
  %796 = vmatpush.msra.mxu0 %v462
  %797 = vmatpush.msra.mxu0 %v461
  %798 = vmatmul.f32.gmra.mxu0 %v750
  %v799 = vpop.f32.mrf.mxu0
  %v800 = vadd.f32 %v780, %v799
  %801 = vdwg.mxu0
  %802 = vmatpush.msra.mxu0 %v492
  %803 = vmatpush.msra.mxu0 %v491
  %804 = vmatpush.msra.mxu0 %v490
  %805 = vmatpush.msra.mxu0 %v489
  %806 = vmatpush.msra.mxu0 %v488
  %807 = vmatpush.msra.mxu0 %v487
  %808 = vmatpush.msra.mxu0 %v486
  %809 = vmatpush.msra.mxu0 %v485
  %810 = vmatpush.msra.mxu0 %v484
  %811 = vmatpush.msra.mxu0 %v483
  %812 = vmatpush.msra.mxu0 %v482
  %813 = vmatpush.msra.mxu0 %v481
  %814 = vmatpush.msra.mxu0 %v480
  %815 = vmatpush.msra.mxu0 %v479
  %816 = vmatpush.msra.mxu0 %v478
  %817 = vmatpush.msra.mxu0 %v477
  %818 = vmatmul.f32.gmra.mxu0 %v755
  %v819 = vpop.f32.mrf.mxu0
  %v820 = vadd.f32 %v800, %v819
  %821 = vdwg.mxu0
  %822 = vmatpush.msra.mxu0 %v508
  %823 = vmatpush.msra.mxu0 %v507
  %824 = vmatpush.msra.mxu0 %v506
  %825 = vmatpush.msra.mxu0 %v505
  %826 = vmatpush.msra.mxu0 %v504
  %827 = vmatpush.msra.mxu0 %v503
  %828 = vmatpush.msra.mxu0 %v502
  %829 = vmatpush.msra.mxu0 %v501
  %830 = vmatpush.msra.mxu0 %v500
  %831 = vmatpush.msra.mxu0 %v499
  %832 = vmatpush.msra.mxu0 %v498
  %833 = vmatpush.msra.mxu0 %v497
  %834 = vmatpush.msra.mxu0 %v496
  %835 = vmatpush.msra.mxu0 %v495
  %836 = vmatpush.msra.mxu0 %v494
  %837 = vmatpush.msra.mxu0 %v493
  %838 = vmatmul.f32.gmra.mxu0 %v760
  %v839 = vpop.f32.mrf.mxu0
  %v840 = vadd.f32 %v820, %v839
  %841 = vdwg.mxu0
  %v842 = vmax.f32 %v840, 0.0
  %843 = vst [vmem:[#allocation3 + $0x4] sm:$0x3] %v842
  %v844 = vld [vmem:[#allocation2 + $0x3] sm:$0x1]
  %v845 = vld [vmem:[#allocation2 + $0x3b] sm:$0x1]
  %v846 = vld [vmem:[#allocation2 + $0x4] sm:$0x1]
  %v847 = vld [vmem:[#allocation2 + $0x3c] sm:$0x1]
  %v848 = vld [vmem:[%s107 + $0x3] sm:$0x1]
  %v849 = vld [vmem:[%s107 + $0x3b] sm:$0x1]
  %v850 = vld [vmem:[%s107 + $0x4] sm:$0x1]
  %v851 = vld [vmem:[%s107 + $0x3c] sm:$0x1]
  %v854 = vrot.slane %v845, 7
  %v855 = vsel %vm521, %v854, %v844
  %v859 = vrot.slane %v847, 7
  %v860 = vsel %vm521, %v859, %v846
  %v864 = vrot.slane %v849, 7
  %v865 = vsel %vm521, %v864, %v848
  %v869 = vrot.slane %v851, 7
  %v870 = vsel %vm521, %v869, %v850
  %872 = vmatpush.msra.mxu0 %v460
  %873 = vmatpush.msra.mxu0 %v459
  %874 = vmatpush.msra.mxu0 %v458
  %875 = vmatpush.msra.mxu0 %v457
  %876 = vmatpush.msra.mxu0 %v456
  %877 = vmatpush.msra.mxu0 %v455
  %878 = vmatpush.msra.mxu0 %v454
  %879 = vmatpush.msra.mxu0 %v453
  %880 = vmatpush.msra.mxu0 %v452
  %881 = vmatpush.msra.mxu0 %v451
  %882 = vmatpush.msra.mxu0 %v450
  %883 = vmatpush.msra.mxu0 %v449
  %884 = vmatpush.msra.mxu0 %v448
  %885 = vmatpush.msra.mxu0 %v447
  %886 = vmatpush.msra.mxu0 %v446
  %887 = vmatpush.msra.mxu0 %v445
  %888 = vmatmul.f32.gmra.mxu0 %v855
  %v889 = vpop.f32.mrf.mxu0
  %v890 = vadd.f32 %v540, %v889
  %891 = vdwg.mxu0
  %892 = vmatpush.msra.mxu0 %v476
  %893 = vmatpush.msra.mxu0 %v475
  %894 = vmatpush.msra.mxu0 %v474
  %895 = vmatpush.msra.mxu0 %v473
  %896 = vmatpush.msra.mxu0 %v472
  %897 = vmatpush.msra.mxu0 %v471
  %898 = vmatpush.msra.mxu0 %v470
  %899 = vmatpush.msra.mxu0 %v469
  %900 = vmatpush.msra.mxu0 %v468
  %901 = vmatpush.msra.mxu0 %v467
  %902 = vmatpush.msra.mxu0 %v466
  %903 = vmatpush.msra.mxu0 %v465
  %904 = vmatpush.msra.mxu0 %v464
  %905 = vmatpush.msra.mxu0 %v463
  %906 = vmatpush.msra.mxu0 %v462
  %907 = vmatpush.msra.mxu0 %v461
  %908 = vmatmul.f32.gmra.mxu0 %v860
  %v909 = vpop.f32.mrf.mxu0
  %v910 = vadd.f32 %v890, %v909
  %911 = vdwg.mxu0
  %912 = vmatpush.msra.mxu0 %v492
  %913 = vmatpush.msra.mxu0 %v491
  %914 = vmatpush.msra.mxu0 %v490
  %915 = vmatpush.msra.mxu0 %v489
  %916 = vmatpush.msra.mxu0 %v488
  %917 = vmatpush.msra.mxu0 %v487
  %918 = vmatpush.msra.mxu0 %v486
  %919 = vmatpush.msra.mxu0 %v485
  %920 = vmatpush.msra.mxu0 %v484
  %921 = vmatpush.msra.mxu0 %v483
  %922 = vmatpush.msra.mxu0 %v482
  %923 = vmatpush.msra.mxu0 %v481
  %924 = vmatpush.msra.mxu0 %v480
  %925 = vmatpush.msra.mxu0 %v479
  %926 = vmatpush.msra.mxu0 %v478
  %927 = vmatpush.msra.mxu0 %v477
  %928 = vmatmul.f32.gmra.mxu0 %v865
  %v929 = vpop.f32.mrf.mxu0
  %v930 = vadd.f32 %v910, %v929
  %931 = vdwg.mxu0
  %932 = vmatpush.msra.mxu0 %v508
  %933 = vmatpush.msra.mxu0 %v507
  %934 = vmatpush.msra.mxu0 %v506
  %935 = vmatpush.msra.mxu0 %v505
  %936 = vmatpush.msra.mxu0 %v504
  %937 = vmatpush.msra.mxu0 %v503
  %938 = vmatpush.msra.mxu0 %v502
  %939 = vmatpush.msra.mxu0 %v501
  %940 = vmatpush.msra.mxu0 %v500
  %941 = vmatpush.msra.mxu0 %v499
  %942 = vmatpush.msra.mxu0 %v498
  %943 = vmatpush.msra.mxu0 %v497
  %944 = vmatpush.msra.mxu0 %v496
  %945 = vmatpush.msra.mxu0 %v495
  %946 = vmatpush.msra.mxu0 %v494
  %947 = vmatpush.msra.mxu0 %v493
  %948 = vmatmul.f32.gmra.mxu0 %v870
  %v949 = vpop.f32.mrf.mxu0
  %v950 = vadd.f32 %v930, %v949
  %951 = vdwg.mxu0
  %v952 = vmax.f32 %v950, 0.0
  %953 = vst [vmem:[#allocation3 + $0x6] sm:$0x3] %v952
  %v954 = vld [vmem:[#allocation2 + $0x4] sm:$0x1]
  %v955 = vld [vmem:[#allocation2 + $0x3c] sm:$0x1]
  %v956 = vld [vmem:[#allocation2 + $0x5] sm:$0x1]
  %v957 = vld [vmem:[#allocation2 + $0x3d] sm:$0x1]
  %v958 = vld [vmem:[%s107 + $0x4] sm:$0x1]
  %v959 = vld [vmem:[%s107 + $0x3c] sm:$0x1]
  %v960 = vld [vmem:[%s107 + $0x5] sm:$0x1]
  %v961 = vld [vmem:[%s107 + $0x3d] sm:$0x1]
  %v964 = vrot.slane %v955, 7
  %v965 = vsel %vm521, %v964, %v954
  %v969 = vrot.slane %v957, 7
  %v970 = vsel %vm521, %v969, %v956
  %v974 = vrot.slane %v959, 7
  %v975 = vsel %vm521, %v974, %v958
  %v979 = vrot.slane %v961, 7
  %v980 = vsel %vm521, %v979, %v960
  %982 = vmatpush.msra.mxu0 %v460
  %983 = vmatpush.msra.mxu0 %v459
  %984 = vmatpush.msra.mxu0 %v458
  %985 = vmatpush.msra.mxu0 %v457
  %986 = vmatpush.msra.mxu0 %v456
  %987 = vmatpush.msra.mxu0 %v455
  %988 = vmatpush.msra.mxu0 %v454
  %989 = vmatpush.msra.mxu0 %v453
  %990 = vmatpush.msra.mxu0 %v452
  %991 = vmatpush.msra.mxu0 %v451
  %992 = vmatpush.msra.mxu0 %v450
  %993 = vmatpush.msra.mxu0 %v449
  %994 = vmatpush.msra.mxu0 %v448
  %995 = vmatpush.msra.mxu0 %v447
  %996 = vmatpush.msra.mxu0 %v446
  %997 = vmatpush.msra.mxu0 %v445
  %998 = vmatmul.f32.gmra.mxu0 %v965
  %v999 = vpop.f32.mrf.mxu0
  %v1000 = vadd.f32 %v540, %v999
  %1001 = vdwg.mxu0
  %1002 = vmatpush.msra.mxu0 %v476
  %1003 = vmatpush.msra.mxu0 %v475
  %1004 = vmatpush.msra.mxu0 %v474
  %1005 = vmatpush.msra.mxu0 %v473
  %1006 = vmatpush.msra.mxu0 %v472
  %1007 = vmatpush.msra.mxu0 %v471
  %1008 = vmatpush.msra.mxu0 %v470
  %1009 = vmatpush.msra.mxu0 %v469
  %1010 = vmatpush.msra.mxu0 %v468
  %1011 = vmatpush.msra.mxu0 %v467
  %1012 = vmatpush.msra.mxu0 %v466
  %1013 = vmatpush.msra.mxu0 %v465
  %1014 = vmatpush.msra.mxu0 %v464
  %1015 = vmatpush.msra.mxu0 %v463
  %1016 = vmatpush.msra.mxu0 %v462
  %1017 = vmatpush.msra.mxu0 %v461
  %1018 = vmatmul.f32.gmra.mxu0 %v970
  %v1019 = vpop.f32.mrf.mxu0
  %v1020 = vadd.f32 %v1000, %v1019
  %1021 = vdwg.mxu0
  %1022 = vmatpush.msra.mxu0 %v492
  %1023 = vmatpush.msra.mxu0 %v491
  %1024 = vmatpush.msra.mxu0 %v490
  %1025 = vmatpush.msra.mxu0 %v489
  %1026 = vmatpush.msra.mxu0 %v488
  %1027 = vmatpush.msra.mxu0 %v487
  %1028 = vmatpush.msra.mxu0 %v486
  %1029 = vmatpush.msra.mxu0 %v485
  %1030 = vmatpush.msra.mxu0 %v484
  %1031 = vmatpush.msra.mxu0 %v483
  %1032 = vmatpush.msra.mxu0 %v482
  %1033 = vmatpush.msra.mxu0 %v481
  %1034 = vmatpush.msra.mxu0 %v480
  %1035 = vmatpush.msra.mxu0 %v479
  %1036 = vmatpush.msra.mxu0 %v478
  %1037 = vmatpush.msra.mxu0 %v477
  %1038 = vmatmul.f32.gmra.mxu0 %v975
  %v1039 = vpop.f32.mrf.mxu0
  %v1040 = vadd.f32 %v1020, %v1039
  %1041 = vdwg.mxu0
  %1042 = vmatpush.msra.mxu0 %v508
  %1043 = vmatpush.msra.mxu0 %v507
  %1044 = vmatpush.msra.mxu0 %v506
  %1045 = vmatpush.msra.mxu0 %v505
  %1046 = vmatpush.msra.mxu0 %v504
  %1047 = vmatpush.msra.mxu0 %v503
  %1048 = vmatpush.msra.mxu0 %v502
  %1049 = vmatpush.msra.mxu0 %v501
  %1050 = vmatpush.msra.mxu0 %v500
  %1051 = vmatpush.msra.mxu0 %v499
  %1052 = vmatpush.msra.mxu0 %v498
  %1053 = vmatpush.msra.mxu0 %v497
  %1054 = vmatpush.msra.mxu0 %v496
  %1055 = vmatpush.msra.mxu0 %v495
  %1056 = vmatpush.msra.mxu0 %v494
  %1057 = vmatpush.msra.mxu0 %v493
  %1058 = vmatmul.f32.gmra.mxu0 %v980
  %v1059 = vpop.f32.mrf.mxu0
  %v1060 = vadd.f32 %v1040, %v1059
  %1061 = vdwg.mxu0
  %v1062 = vmax.f32 %v1060, 0.0
  %1063 = vst [vmem:[#allocation3 + $0x8] sm:$0x3] %v1062
  %v1064 = vld [vmem:[#allocation2 + $0x5] sm:$0x1]
  %v1065 = vld [vmem:[#allocation2 + $0x3d] sm:$0x1]
  %v1066 = vld [vmem:[#allocation2 + $0x6] sm:$0x1]
  %v1067 = vld [vmem:[#allocation2 + $0x3e] sm:$0x1]
  %v1068 = vld [vmem:[%s107 + $0x5] sm:$0x1]
  %v1069 = vld [vmem:[%s107 + $0x3d] sm:$0x1]
  %v1070 = vld [vmem:[%s107 + $0x6] sm:$0x1]
  %v1071 = vld [vmem:[%s107 + $0x3e] sm:$0x1]
  %v1074 = vrot.slane %v1065, 7
  %v1075 = vsel %vm521, %v1074, %v1064
  %v1079 = vrot.slane %v1067, 7
  %v1080 = vsel %vm521, %v1079, %v1066
  %v1084 = vrot.slane %v1069, 7
  %v1085 = vsel %vm521, %v1084, %v1068
  %v1089 = vrot.slane %v1071, 7
  %v1090 = vsel %vm521, %v1089, %v1070
  %1092 = vmatpush.msra.mxu0 %v460
  %1093 = vmatpush.msra.mxu0 %v459
  %1094 = vmatpush.msra.mxu0 %v458
  %1095 = vmatpush.msra.mxu0 %v457
  %1096 = vmatpush.msra.mxu0 %v456
  %1097 = vmatpush.msra.mxu0 %v455
  %1098 = vmatpush.msra.mxu0 %v454
  %1099 = vmatpush.msra.mxu0 %v453
  %1100 = vmatpush.msra.mxu0 %v452
  %1101 = vmatpush.msra.mxu0 %v451
  %1102 = vmatpush.msra.mxu0 %v450
  %1103 = vmatpush.msra.mxu0 %v449
  %1104 = vmatpush.msra.mxu0 %v448
  %1105 = vmatpush.msra.mxu0 %v447
  %1106 = vmatpush.msra.mxu0 %v446
  %1107 = vmatpush.msra.mxu0 %v445
  %1108 = vmatmul.f32.gmra.mxu0 %v1075
  %v1109 = vpop.f32.mrf.mxu0
  %v1110 = vadd.f32 %v540, %v1109
  %1111 = vdwg.mxu0
  %1112 = vmatpush.msra.mxu0 %v476
  %1113 = vmatpush.msra.mxu0 %v475
  %1114 = vmatpush.msra.mxu0 %v474
  %1115 = vmatpush.msra.mxu0 %v473
  %1116 = vmatpush.msra.mxu0 %v472
  %1117 = vmatpush.msra.mxu0 %v471
  %1118 = vmatpush.msra.mxu0 %v470
  %1119 = vmatpush.msra.mxu0 %v469
  %1120 = vmatpush.msra.mxu0 %v468
  %1121 = vmatpush.msra.mxu0 %v467
  %1122 = vmatpush.msra.mxu0 %v466
  %1123 = vmatpush.msra.mxu0 %v465
  %1124 = vmatpush.msra.mxu0 %v464
  %1125 = vmatpush.msra.mxu0 %v463
  %1126 = vmatpush.msra.mxu0 %v462
  %1127 = vmatpush.msra.mxu0 %v461
  %1128 = vmatmul.f32.gmra.mxu0 %v1080
  %v1129 = vpop.f32.mrf.mxu0
  %v1130 = vadd.f32 %v1110, %v1129
  %1131 = vdwg.mxu0
  %1132 = vmatpush.msra.mxu0 %v492
  %1133 = vmatpush.msra.mxu0 %v491
  %1134 = vmatpush.msra.mxu0 %v490
  %1135 = vmatpush.msra.mxu0 %v489
  %1136 = vmatpush.msra.mxu0 %v488
  %1137 = vmatpush.msra.mxu0 %v487
  %1138 = vmatpush.msra.mxu0 %v486
  %1139 = vmatpush.msra.mxu0 %v485
  %1140 = vmatpush.msra.mxu0 %v484
  %1141 = vmatpush.msra.mxu0 %v483
  %1142 = vmatpush.msra.mxu0 %v482
  %1143 = vmatpush.msra.mxu0 %v481
  %1144 = vmatpush.msra.mxu0 %v480
  %1145 = vmatpush.msra.mxu0 %v479
  %1146 = vmatpush.msra.mxu0 %v478
  %1147 = vmatpush.msra.mxu0 %v477
  %1148 = vmatmul.f32.gmra.mxu0 %v1085
  %v1149 = vpop.f32.mrf.mxu0
  %v1150 = vadd.f32 %v1130, %v1149
  %1151 = vdwg.mxu0
  %1152 = vmatpush.msra.mxu0 %v508
  %1153 = vmatpush.msra.mxu0 %v507
  %1154 = vmatpush.msra.mxu0 %v506
  %1155 = vmatpush.msra.mxu0 %v505
  %1156 = vmatpush.msra.mxu0 %v504
  %1157 = vmatpush.msra.mxu0 %v503
  %1158 = vmatpush.msra.mxu0 %v502
  %1159 = vmatpush.msra.mxu0 %v501
  %1160 = vmatpush.msra.mxu0 %v500
  %1161 = vmatpush.msra.mxu0 %v499
  %1162 = vmatpush.msra.mxu0 %v498
  %1163 = vmatpush.msra.mxu0 %v497
  %1164 = vmatpush.msra.mxu0 %v496
  %1165 = vmatpush.msra.mxu0 %v495
  %1166 = vmatpush.msra.mxu0 %v494
  %1167 = vmatpush.msra.mxu0 %v493
  %1168 = vmatmul.f32.gmra.mxu0 %v1090
  %v1169 = vpop.f32.mrf.mxu0
  %v1170 = vadd.f32 %v1150, %v1169
  %1171 = vdwg.mxu0
  %v1172 = vmax.f32 %v1170, 0.0
  %1173 = vst [vmem:[#allocation3 + $0xa] sm:$0x3] %v1172
  %v1174 = vld [vmem:[%s107] sm:$0x1]
  %v1175 = vld [vmem:[%s107 + $0x38] sm:$0x1]
  %v1176 = vld [vmem:[%s107 + $0x1] sm:$0x1]
  %v1177 = vld [vmem:[%s107 + $0x39] sm:$0x1]
  %v1178 = vld [vmem:[%s135] sm:$0x1]
  %v1179 = vld [vmem:[%s135 + $0x38] sm:$0x1]
  %v1180 = vld [vmem:[%s135 + $0x1] sm:$0x1]
  %v1181 = vld [vmem:[%s135 + $0x39] sm:$0x1]
  %v1184 = vrot.slane %v1175, 7
  %v1185 = vsel %vm521, %v1184, %v1174
  %v1189 = vrot.slane %v1177, 7
  %v1190 = vsel %vm521, %v1189, %v1176
  %v1194 = vrot.slane %v1179, 7
  %v1195 = vsel %vm521, %v1194, %v1178
  %v1199 = vrot.slane %v1181, 7
  %v1200 = vsel %vm521, %v1199, %v1180
  %1202 = vmatpush.msra.mxu0 %v460
  %1203 = vmatpush.msra.mxu0 %v459
  %1204 = vmatpush.msra.mxu0 %v458
  %1205 = vmatpush.msra.mxu0 %v457
  %1206 = vmatpush.msra.mxu0 %v456
  %1207 = vmatpush.msra.mxu0 %v455
  %1208 = vmatpush.msra.mxu0 %v454
  %1209 = vmatpush.msra.mxu0 %v453
  %1210 = vmatpush.msra.mxu0 %v452
  %1211 = vmatpush.msra.mxu0 %v451
  %1212 = vmatpush.msra.mxu0 %v450
  %1213 = vmatpush.msra.mxu0 %v449
  %1214 = vmatpush.msra.mxu0 %v448
  %1215 = vmatpush.msra.mxu0 %v447
  %1216 = vmatpush.msra.mxu0 %v446
  %1217 = vmatpush.msra.mxu0 %v445
  %1218 = vmatmul.f32.gmra.mxu0 %v1185
  %v1219 = vpop.f32.mrf.mxu0
  %v1220 = vadd.f32 %v540, %v1219
  %1221 = vdwg.mxu0
  %1222 = vmatpush.msra.mxu0 %v476
  %1223 = vmatpush.msra.mxu0 %v475
  %1224 = vmatpush.msra.mxu0 %v474
  %1225 = vmatpush.msra.mxu0 %v473
  %1226 = vmatpush.msra.mxu0 %v472
  %1227 = vmatpush.msra.mxu0 %v471
  %1228 = vmatpush.msra.mxu0 %v470
  %1229 = vmatpush.msra.mxu0 %v469
  %1230 = vmatpush.msra.mxu0 %v468
  %1231 = vmatpush.msra.mxu0 %v467
  %1232 = vmatpush.msra.mxu0 %v466
  %1233 = vmatpush.msra.mxu0 %v465
  %1234 = vmatpush.msra.mxu0 %v464
  %1235 = vmatpush.msra.mxu0 %v463
  %1236 = vmatpush.msra.mxu0 %v462
  %1237 = vmatpush.msra.mxu0 %v461
  %1238 = vmatmul.f32.gmra.mxu0 %v1190
  %v1239 = vpop.f32.mrf.mxu0
  %v1240 = vadd.f32 %v1220, %v1239
  %1241 = vdwg.mxu0
  %1242 = vmatpush.msra.mxu0 %v492
  %1243 = vmatpush.msra.mxu0 %v491
  %1244 = vmatpush.msra.mxu0 %v490
  %1245 = vmatpush.msra.mxu0 %v489
  %1246 = vmatpush.msra.mxu0 %v488
  %1247 = vmatpush.msra.mxu0 %v487
  %1248 = vmatpush.msra.mxu0 %v486
  %1249 = vmatpush.msra.mxu0 %v485
  %1250 = vmatpush.msra.mxu0 %v484
  %1251 = vmatpush.msra.mxu0 %v483
  %1252 = vmatpush.msra.mxu0 %v482
  %1253 = vmatpush.msra.mxu0 %v481
  %1254 = vmatpush.msra.mxu0 %v480
  %1255 = vmatpush.msra.mxu0 %v479
  %1256 = vmatpush.msra.mxu0 %v478
  %1257 = vmatpush.msra.mxu0 %v477
  %1258 = vmatmul.f32.gmra.mxu0 %v1195
  %v1259 = vpop.f32.mrf.mxu0
  %v1260 = vadd.f32 %v1240, %v1259
  %1261 = vdwg.mxu0
  %1262 = vmatpush.msra.mxu0 %v508
  %1263 = vmatpush.msra.mxu0 %v507
  %1264 = vmatpush.msra.mxu0 %v506
  %1265 = vmatpush.msra.mxu0 %v505
  %1266 = vmatpush.msra.mxu0 %v504
  %1267 = vmatpush.msra.mxu0 %v503
  %1268 = vmatpush.msra.mxu0 %v502
  %1269 = vmatpush.msra.mxu0 %v501
  %1270 = vmatpush.msra.mxu0 %v500
  %1271 = vmatpush.msra.mxu0 %v499
  %1272 = vmatpush.msra.mxu0 %v498
  %1273 = vmatpush.msra.mxu0 %v497
  %1274 = vmatpush.msra.mxu0 %v496
  %1275 = vmatpush.msra.mxu0 %v495
  %1276 = vmatpush.msra.mxu0 %v494
  %1277 = vmatpush.msra.mxu0 %v493
  %1278 = vmatmul.f32.gmra.mxu0 %v1200
  %v1279 = vpop.f32.mrf.mxu0
  %v1280 = vadd.f32 %v1260, %v1279
  %1281 = vdwg.mxu0
  %v1282 = vmax.f32 %v1280, 0.0
  %1283 = vst [vmem:[#allocation3 + $0xc] sm:$0x3] %v1282
  %v1284 = vld [vmem:[%s107 + $0x1] sm:$0x1]
  %v1285 = vld [vmem:[%s107 + $0x39] sm:$0x1]
  %v1286 = vld [vmem:[%s107 + $0x2] sm:$0x1]
  %v1287 = vld [vmem:[%s107 + $0x3a] sm:$0x1]
  %v1288 = vld [vmem:[%s135 + $0x1] sm:$0x1]
  %v1289 = vld [vmem:[%s135 + $0x39] sm:$0x1]
  %v1290 = vld [vmem:[%s135 + $0x2] sm:$0x1]
  %v1291 = vld [vmem:[%s135 + $0x3a] sm:$0x1]
  %v1294 = vrot.slane %v1285, 7
  %v1295 = vsel %vm521, %v1294, %v1284
  %v1299 = vrot.slane %v1287, 7
  %v1300 = vsel %vm521, %v1299, %v1286
  %v1304 = vrot.slane %v1289, 7
  %v1305 = vsel %vm521, %v1304, %v1288
  %v1309 = vrot.slane %v1291, 7
  %v1310 = vsel %vm521, %v1309, %v1290
  %1312 = vmatpush.msra.mxu0 %v460
  %1313 = vmatpush.msra.mxu0 %v459
  %1314 = vmatpush.msra.mxu0 %v458
  %1315 = vmatpush.msra.mxu0 %v457
  %1316 = vmatpush.msra.mxu0 %v456
  %1317 = vmatpush.msra.mxu0 %v455
  %1318 = vmatpush.msra.mxu0 %v454
  %1319 = vmatpush.msra.mxu0 %v453
  %1320 = vmatpush.msra.mxu0 %v452
  %1321 = vmatpush.msra.mxu0 %v451
  %1322 = vmatpush.msra.mxu0 %v450
  %1323 = vmatpush.msra.mxu0 %v449
  %1324 = vmatpush.msra.mxu0 %v448
  %1325 = vmatpush.msra.mxu0 %v447
  %1326 = vmatpush.msra.mxu0 %v446
  %1327 = vmatpush.msra.mxu0 %v445
  %1328 = vmatmul.f32.gmra.mxu0 %v1295
  %v1329 = vpop.f32.mrf.mxu0
  %v1330 = vadd.f32 %v540, %v1329
  %1331 = vdwg.mxu0
  %1332 = vmatpush.msra.mxu0 %v476
  %1333 = vmatpush.msra.mxu0 %v475
  %1334 = vmatpush.msra.mxu0 %v474
  %1335 = vmatpush.msra.mxu0 %v473
  %1336 = vmatpush.msra.mxu0 %v472
  %1337 = vmatpush.msra.mxu0 %v471
  %1338 = vmatpush.msra.mxu0 %v470
  %1339 = vmatpush.msra.mxu0 %v469
  %1340 = vmatpush.msra.mxu0 %v468
  %1341 = vmatpush.msra.mxu0 %v467
  %1342 = vmatpush.msra.mxu0 %v466
  %1343 = vmatpush.msra.mxu0 %v465
  %1344 = vmatpush.msra.mxu0 %v464
  %1345 = vmatpush.msra.mxu0 %v463
  %1346 = vmatpush.msra.mxu0 %v462
  %1347 = vmatpush.msra.mxu0 %v461
  %1348 = vmatmul.f32.gmra.mxu0 %v1300
  %v1349 = vpop.f32.mrf.mxu0
  %v1350 = vadd.f32 %v1330, %v1349
  %1351 = vdwg.mxu0
  %1352 = vmatpush.msra.mxu0 %v492
  %1353 = vmatpush.msra.mxu0 %v491
  %1354 = vmatpush.msra.mxu0 %v490
  %1355 = vmatpush.msra.mxu0 %v489
  %1356 = vmatpush.msra.mxu0 %v488
  %1357 = vmatpush.msra.mxu0 %v487
  %1358 = vmatpush.msra.mxu0 %v486
  %1359 = vmatpush.msra.mxu0 %v485
  %1360 = vmatpush.msra.mxu0 %v484
  %1361 = vmatpush.msra.mxu0 %v483
  %1362 = vmatpush.msra.mxu0 %v482
  %1363 = vmatpush.msra.mxu0 %v481
  %1364 = vmatpush.msra.mxu0 %v480
  %1365 = vmatpush.msra.mxu0 %v479
  %1366 = vmatpush.msra.mxu0 %v478
  %1367 = vmatpush.msra.mxu0 %v477
  %1368 = vmatmul.f32.gmra.mxu0 %v1305
  %v1369 = vpop.f32.mrf.mxu0
  %v1370 = vadd.f32 %v1350, %v1369
  %1371 = vdwg.mxu0
  %1372 = vmatpush.msra.mxu0 %v508
  %1373 = vmatpush.msra.mxu0 %v507
  %1374 = vmatpush.msra.mxu0 %v506
  %1375 = vmatpush.msra.mxu0 %v505
  %1376 = vmatpush.msra.mxu0 %v504
  %1377 = vmatpush.msra.mxu0 %v503
  %1378 = vmatpush.msra.mxu0 %v502
  %1379 = vmatpush.msra.mxu0 %v501
  %1380 = vmatpush.msra.mxu0 %v500
  %1381 = vmatpush.msra.mxu0 %v499
  %1382 = vmatpush.msra.mxu0 %v498
  %1383 = vmatpush.msra.mxu0 %v497
  %1384 = vmatpush.msra.mxu0 %v496
  %1385 = vmatpush.msra.mxu0 %v495
  %1386 = vmatpush.msra.mxu0 %v494
  %1387 = vmatpush.msra.mxu0 %v493
  %1388 = vmatmul.f32.gmra.mxu0 %v1310
  %v1389 = vpop.f32.mrf.mxu0
  %v1390 = vadd.f32 %v1370, %v1389
  %1391 = vdwg.mxu0
  %v1392 = vmax.f32 %v1390, 0.0
  %1393 = vst [vmem:[#allocation3 + $0xe] sm:$0x3] %v1392
  %v1394 = vld [vmem:[%s107 + $0x2] sm:$0x1]
  %v1395 = vld [vmem:[%s107 + $0x3a] sm:$0x1]
  %v1396 = vld [vmem:[%s107 + $0x3] sm:$0x1]
  %v1397 = vld [vmem:[%s107 + $0x3b] sm:$0x1]
  %v1398 = vld [vmem:[%s135 + $0x2] sm:$0x1]
  %v1399 = vld [vmem:[%s135 + $0x3a] sm:$0x1]
  %v1400 = vld [vmem:[%s135 + $0x3] sm:$0x1]
  %v1401 = vld [vmem:[%s135 + $0x3b] sm:$0x1]
  %v1404 = vrot.slane %v1395, 7
  %v1405 = vsel %vm521, %v1404, %v1394
  %v1409 = vrot.slane %v1397, 7
  %v1410 = vsel %vm521, %v1409, %v1396
  %v1414 = vrot.slane %v1399, 7
  %v1415 = vsel %vm521, %v1414, %v1398
  %v1419 = vrot.slane %v1401, 7
  %v1420 = vsel %vm521, %v1419, %v1400
  %1422 = vmatpush.msra.mxu0 %v460
  %1423 = vmatpush.msra.mxu0 %v459
  %1424 = vmatpush.msra.mxu0 %v458
  %1425 = vmatpush.msra.mxu0 %v457
  %1426 = vmatpush.msra.mxu0 %v456
  %1427 = vmatpush.msra.mxu0 %v455
  %1428 = vmatpush.msra.mxu0 %v454
  %1429 = vmatpush.msra.mxu0 %v453
  %1430 = vmatpush.msra.mxu0 %v452
  %1431 = vmatpush.msra.mxu0 %v451
  %1432 = vmatpush.msra.mxu0 %v450
  %1433 = vmatpush.msra.mxu0 %v449
  %1434 = vmatpush.msra.mxu0 %v448
  %1435 = vmatpush.msra.mxu0 %v447
  %1436 = vmatpush.msra.mxu0 %v446
  %1437 = vmatpush.msra.mxu0 %v445
  %1438 = vmatmul.f32.gmra.mxu0 %v1405
  %v1439 = vpop.f32.mrf.mxu0
  %v1440 = vadd.f32 %v540, %v1439
  %1441 = vdwg.mxu0
  %1442 = vmatpush.msra.mxu0 %v476
  %1443 = vmatpush.msra.mxu0 %v475
  %1444 = vmatpush.msra.mxu0 %v474
  %1445 = vmatpush.msra.mxu0 %v473
  %1446 = vmatpush.msra.mxu0 %v472
  %1447 = vmatpush.msra.mxu0 %v471
  %1448 = vmatpush.msra.mxu0 %v470
  %1449 = vmatpush.msra.mxu0 %v469
  %1450 = vmatpush.msra.mxu0 %v468
  %1451 = vmatpush.msra.mxu0 %v467
  %1452 = vmatpush.msra.mxu0 %v466
  %1453 = vmatpush.msra.mxu0 %v465
  %1454 = vmatpush.msra.mxu0 %v464
  %1455 = vmatpush.msra.mxu0 %v463
  %1456 = vmatpush.msra.mxu0 %v462
  %1457 = vmatpush.msra.mxu0 %v461
  %1458 = vmatmul.f32.gmra.mxu0 %v1410
  %v1459 = vpop.f32.mrf.mxu0
  %v1460 = vadd.f32 %v1440, %v1459
  %1461 = vdwg.mxu0
  %1462 = vmatpush.msra.mxu0 %v492
  %1463 = vmatpush.msra.mxu0 %v491
  %1464 = vmatpush.msra.mxu0 %v490
  %1465 = vmatpush.msra.mxu0 %v489
  %1466 = vmatpush.msra.mxu0 %v488
  %1467 = vmatpush.msra.mxu0 %v487
  %1468 = vmatpush.msra.mxu0 %v486
  %1469 = vmatpush.msra.mxu0 %v485
  %1470 = vmatpush.msra.mxu0 %v484
  %1471 = vmatpush.msra.mxu0 %v483
  %1472 = vmatpush.msra.mxu0 %v482
  %1473 = vmatpush.msra.mxu0 %v481
  %1474 = vmatpush.msra.mxu0 %v480
  %1475 = vmatpush.msra.mxu0 %v479
  %1476 = vmatpush.msra.mxu0 %v478
  %1477 = vmatpush.msra.mxu0 %v477
  %1478 = vmatmul.f32.gmra.mxu0 %v1415
  %v1479 = vpop.f32.mrf.mxu0
  %v1480 = vadd.f32 %v1460, %v1479
  %1481 = vdwg.mxu0
  %1482 = vmatpush.msra.mxu0 %v508
  %1483 = vmatpush.msra.mxu0 %v507
  %1484 = vmatpush.msra.mxu0 %v506
  %1485 = vmatpush.msra.mxu0 %v505
  %1486 = vmatpush.msra.mxu0 %v504
  %1487 = vmatpush.msra.mxu0 %v503
  %1488 = vmatpush.msra.mxu0 %v502
  %1489 = vmatpush.msra.mxu0 %v501
  %1490 = vmatpush.msra.mxu0 %v500
  %1491 = vmatpush.msra.mxu0 %v499
  %1492 = vmatpush.msra.mxu0 %v498
  %1493 = vmatpush.msra.mxu0 %v497
  %1494 = vmatpush.msra.mxu0 %v496
  %1495 = vmatpush.msra.mxu0 %v495
  %1496 = vmatpush.msra.mxu0 %v494
  %1497 = vmatpush.msra.mxu0 %v493
  %1498 = vmatmul.f32.gmra.mxu0 %v1420
  %v1499 = vpop.f32.mrf.mxu0
  %v1500 = vadd.f32 %v1480, %v1499
  %1501 = vdwg.mxu0
  %v1502 = vmax.f32 %v1500, 0.0
  %1503 = vst [vmem:[#allocation3 + $0x10] sm:$0x3] %v1502
  %v1504 = vld [vmem:[%s107 + $0x3] sm:$0x1]
  %v1505 = vld [vmem:[%s107 + $0x3b] sm:$0x1]
  %v1506 = vld [vmem:[%s107 + $0x4] sm:$0x1]
  %v1507 = vld [vmem:[%s107 + $0x3c] sm:$0x1]
  %v1508 = vld [vmem:[%s135 + $0x3] sm:$0x1]
  %v1509 = vld [vmem:[%s135 + $0x3b] sm:$0x1]
  %v1510 = vld [vmem:[%s135 + $0x4] sm:$0x1]
  %v1511 = vld [vmem:[%s135 + $0x3c] sm:$0x1]
  %v1514 = vrot.slane %v1505, 7
  %v1515 = vsel %vm521, %v1514, %v1504
  %v1519 = vrot.slane %v1507, 7
  %v1520 = vsel %vm521, %v1519, %v1506
  %v1524 = vrot.slane %v1509, 7
  %v1525 = vsel %vm521, %v1524, %v1508
  %v1529 = vrot.slane %v1511, 7
  %v1530 = vsel %vm521, %v1529, %v1510
  %1532 = vmatpush.msra.mxu0 %v460
  %1533 = vmatpush.msra.mxu0 %v459
  %1534 = vmatpush.msra.mxu0 %v458
  %1535 = vmatpush.msra.mxu0 %v457
  %1536 = vmatpush.msra.mxu0 %v456
  %1537 = vmatpush.msra.mxu0 %v455
  %1538 = vmatpush.msra.mxu0 %v454
  %1539 = vmatpush.msra.mxu0 %v453
  %1540 = vmatpush.msra.mxu0 %v452
  %1541 = vmatpush.msra.mxu0 %v451
  %1542 = vmatpush.msra.mxu0 %v450
  %1543 = vmatpush.msra.mxu0 %v449
  %1544 = vmatpush.msra.mxu0 %v448
  %1545 = vmatpush.msra.mxu0 %v447
  %1546 = vmatpush.msra.mxu0 %v446
  %1547 = vmatpush.msra.mxu0 %v445
  %1548 = vmatmul.f32.gmra.mxu0 %v1515
  %v1549 = vpop.f32.mrf.mxu0
  %v1550 = vadd.f32 %v540, %v1549
  %1551 = vdwg.mxu0
  %1552 = vmatpush.msra.mxu0 %v476
  %1553 = vmatpush.msra.mxu0 %v475
  %1554 = vmatpush.msra.mxu0 %v474
  %1555 = vmatpush.msra.mxu0 %v473
  %1556 = vmatpush.msra.mxu0 %v472
  %1557 = vmatpush.msra.mxu0 %v471
  %1558 = vmatpush.msra.mxu0 %v470
  %1559 = vmatpush.msra.mxu0 %v469
  %1560 = vmatpush.msra.mxu0 %v468
  %1561 = vmatpush.msra.mxu0 %v467
  %1562 = vmatpush.msra.mxu0 %v466
  %1563 = vmatpush.msra.mxu0 %v465
  %1564 = vmatpush.msra.mxu0 %v464
  %1565 = vmatpush.msra.mxu0 %v463
  %1566 = vmatpush.msra.mxu0 %v462
  %1567 = vmatpush.msra.mxu0 %v461
  %1568 = vmatmul.f32.gmra.mxu0 %v1520
  %v1569 = vpop.f32.mrf.mxu0
  %v1570 = vadd.f32 %v1550, %v1569
  %1571 = vdwg.mxu0
  %1572 = vmatpush.msra.mxu0 %v492
  %1573 = vmatpush.msra.mxu0 %v491
  %1574 = vmatpush.msra.mxu0 %v490
  %1575 = vmatpush.msra.mxu0 %v489
  %1576 = vmatpush.msra.mxu0 %v488
  %1577 = vmatpush.msra.mxu0 %v487
  %1578 = vmatpush.msra.mxu0 %v486
  %1579 = vmatpush.msra.mxu0 %v485
  %1580 = vmatpush.msra.mxu0 %v484
  %1581 = vmatpush.msra.mxu0 %v483
  %1582 = vmatpush.msra.mxu0 %v482
  %1583 = vmatpush.msra.mxu0 %v481
  %1584 = vmatpush.msra.mxu0 %v480
  %1585 = vmatpush.msra.mxu0 %v479
  %1586 = vmatpush.msra.mxu0 %v478
  %1587 = vmatpush.msra.mxu0 %v477
  %1588 = vmatmul.f32.gmra.mxu0 %v1525
  %v1589 = vpop.f32.mrf.mxu0
  %v1590 = vadd.f32 %v1570, %v1589
  %1591 = vdwg.mxu0
  %1592 = vmatpush.msra.mxu0 %v508
  %1593 = vmatpush.msra.mxu0 %v507
  %1594 = vmatpush.msra.mxu0 %v506
  %1595 = vmatpush.msra.mxu0 %v505
  %1596 = vmatpush.msra.mxu0 %v504
  %1597 = vmatpush.msra.mxu0 %v503
  %1598 = vmatpush.msra.mxu0 %v502
  %1599 = vmatpush.msra.mxu0 %v501
  %1600 = vmatpush.msra.mxu0 %v500
  %1601 = vmatpush.msra.mxu0 %v499
  %1602 = vmatpush.msra.mxu0 %v498
  %1603 = vmatpush.msra.mxu0 %v497
  %1604 = vmatpush.msra.mxu0 %v496
  %1605 = vmatpush.msra.mxu0 %v495
  %1606 = vmatpush.msra.mxu0 %v494
  %1607 = vmatpush.msra.mxu0 %v493
  %1608 = vmatmul.f32.gmra.mxu0 %v1530
  %v1609 = vpop.f32.mrf.mxu0
  %v1610 = vadd.f32 %v1590, %v1609
  %1611 = vdwg.mxu0
  %v1612 = vmax.f32 %v1610, 0.0
  %1613 = vst [vmem:[#allocation3 + $0x12] sm:$0x3] %v1612
  %v1614 = vld [vmem:[%s107 + $0x4] sm:$0x1]
  %v1615 = vld [vmem:[%s107 + $0x3c] sm:$0x1]
  %v1616 = vld [vmem:[%s107 + $0x5] sm:$0x1]
  %v1617 = vld [vmem:[%s107 + $0x3d] sm:$0x1]
  %v1618 = vld [vmem:[%s135 + $0x4] sm:$0x1]
  %v1619 = vld [vmem:[%s135 + $0x3c] sm:$0x1]
  %v1620 = vld [vmem:[%s135 + $0x5] sm:$0x1]
  %v1621 = vld [vmem:[%s135 + $0x3d] sm:$0x1]
  %v1624 = vrot.slane %v1615, 7
  %v1625 = vsel %vm521, %v1624, %v1614
  %v1629 = vrot.slane %v1617, 7
  %v1630 = vsel %vm521, %v1629, %v1616
  %v1634 = vrot.slane %v1619, 7
  %v1635 = vsel %vm521, %v1634, %v1618
  %v1639 = vrot.slane %v1621, 7
  %v1640 = vsel %vm521, %v1639, %v1620
  %1642 = vmatpush.msra.mxu0 %v460
  %1643 = vmatpush.msra.mxu0 %v459
  %1644 = vmatpush.msra.mxu0 %v458
  %1645 = vmatpush.msra.mxu0 %v457
  %1646 = vmatpush.msra.mxu0 %v456
  %1647 = vmatpush.msra.mxu0 %v455
  %1648 = vmatpush.msra.mxu0 %v454
  %1649 = vmatpush.msra.mxu0 %v453
  %1650 = vmatpush.msra.mxu0 %v452
  %1651 = vmatpush.msra.mxu0 %v451
  %1652 = vmatpush.msra.mxu0 %v450
  %1653 = vmatpush.msra.mxu0 %v449
  %1654 = vmatpush.msra.mxu0 %v448
  %1655 = vmatpush.msra.mxu0 %v447
  %1656 = vmatpush.msra.mxu0 %v446
  %1657 = vmatpush.msra.mxu0 %v445
  %1658 = vmatmul.f32.gmra.mxu0 %v1625
  %v1659 = vpop.f32.mrf.mxu0
  %v1660 = vadd.f32 %v540, %v1659
  %1661 = vdwg.mxu0
  %1662 = vmatpush.msra.mxu0 %v476
  %1663 = vmatpush.msra.mxu0 %v475
  %1664 = vmatpush.msra.mxu0 %v474
  %1665 = vmatpush.msra.mxu0 %v473
  %1666 = vmatpush.msra.mxu0 %v472
  %1667 = vmatpush.msra.mxu0 %v471
  %1668 = vmatpush.msra.mxu0 %v470
  %1669 = vmatpush.msra.mxu0 %v469
  %1670 = vmatpush.msra.mxu0 %v468
  %1671 = vmatpush.msra.mxu0 %v467
  %1672 = vmatpush.msra.mxu0 %v466
  %1673 = vmatpush.msra.mxu0 %v465
  %1674 = vmatpush.msra.mxu0 %v464
  %1675 = vmatpush.msra.mxu0 %v463
  %1676 = vmatpush.msra.mxu0 %v462
  %1677 = vmatpush.msra.mxu0 %v461
  %1678 = vmatmul.f32.gmra.mxu0 %v1630
  %v1679 = vpop.f32.mrf.mxu0
  %v1680 = vadd.f32 %v1660, %v1679
  %1681 = vdwg.mxu0
  %1682 = vmatpush.msra.mxu0 %v492
  %1683 = vmatpush.msra.mxu0 %v491
  %1684 = vmatpush.msra.mxu0 %v490
  %1685 = vmatpush.msra.mxu0 %v489
  %1686 = vmatpush.msra.mxu0 %v488
  %1687 = vmatpush.msra.mxu0 %v487
  %1688 = vmatpush.msra.mxu0 %v486
  %1689 = vmatpush.msra.mxu0 %v485
  %1690 = vmatpush.msra.mxu0 %v484
  %1691 = vmatpush.msra.mxu0 %v483
  %1692 = vmatpush.msra.mxu0 %v482
  %1693 = vmatpush.msra.mxu0 %v481
  %1694 = vmatpush.msra.mxu0 %v480
  %1695 = vmatpush.msra.mxu0 %v479
  %1696 = vmatpush.msra.mxu0 %v478
  %1697 = vmatpush.msra.mxu0 %v477
  %1698 = vmatmul.f32.gmra.mxu0 %v1635
  %v1699 = vpop.f32.mrf.mxu0
  %v1700 = vadd.f32 %v1680, %v1699
  %1701 = vdwg.mxu0
  %1702 = vmatpush.msra.mxu0 %v508
  %1703 = vmatpush.msra.mxu0 %v507
  %1704 = vmatpush.msra.mxu0 %v506
  %1705 = vmatpush.msra.mxu0 %v505
  %1706 = vmatpush.msra.mxu0 %v504
  %1707 = vmatpush.msra.mxu0 %v503
  %1708 = vmatpush.msra.mxu0 %v502
  %1709 = vmatpush.msra.mxu0 %v501
  %1710 = vmatpush.msra.mxu0 %v500
  %1711 = vmatpush.msra.mxu0 %v499
  %1712 = vmatpush.msra.mxu0 %v498
  %1713 = vmatpush.msra.mxu0 %v497
  %1714 = vmatpush.msra.mxu0 %v496
  %1715 = vmatpush.msra.mxu0 %v495
  %1716 = vmatpush.msra.mxu0 %v494
  %1717 = vmatpush.msra.mxu0 %v493
  %1718 = vmatmul.f32.gmra.mxu0 %v1640
  %v1719 = vpop.f32.mrf.mxu0
  %v1720 = vadd.f32 %v1700, %v1719
  %1721 = vdwg.mxu0
  %v1722 = vmax.f32 %v1720, 0.0
  %1723 = vst [vmem:[#allocation3 + $0x14] sm:$0x3] %v1722
  %v1724 = vld [vmem:[%s107 + $0x5] sm:$0x1]
  %v1725 = vld [vmem:[%s107 + $0x3d] sm:$0x1]
  %v1726 = vld [vmem:[%s107 + $0x6] sm:$0x1]
  %v1727 = vld [vmem:[%s107 + $0x3e] sm:$0x1]
  %v1728 = vld [vmem:[%s135 + $0x5] sm:$0x1]
  %v1729 = vld [vmem:[%s135 + $0x3d] sm:$0x1]
  %v1730 = vld [vmem:[%s135 + $0x6] sm:$0x1]
  %v1731 = vld [vmem:[%s135 + $0x3e] sm:$0x1]
  %v1734 = vrot.slane %v1725, 7
  %v1735 = vsel %vm521, %v1734, %v1724
  %v1739 = vrot.slane %v1727, 7
  %v1740 = vsel %vm521, %v1739, %v1726
  %v1744 = vrot.slane %v1729, 7
  %v1745 = vsel %vm521, %v1744, %v1728
  %v1749 = vrot.slane %v1731, 7
  %v1750 = vsel %vm521, %v1749, %v1730
  %1752 = vmatpush.msra.mxu0 %v460
  %1753 = vmatpush.msra.mxu0 %v459
  %1754 = vmatpush.msra.mxu0 %v458
  %1755 = vmatpush.msra.mxu0 %v457
  %1756 = vmatpush.msra.mxu0 %v456
  %1757 = vmatpush.msra.mxu0 %v455
  %1758 = vmatpush.msra.mxu0 %v454
  %1759 = vmatpush.msra.mxu0 %v453
  %1760 = vmatpush.msra.mxu0 %v452
  %1761 = vmatpush.msra.mxu0 %v451
  %1762 = vmatpush.msra.mxu0 %v450
  %1763 = vmatpush.msra.mxu0 %v449
  %1764 = vmatpush.msra.mxu0 %v448
  %1765 = vmatpush.msra.mxu0 %v447
  %1766 = vmatpush.msra.mxu0 %v446
  %1767 = vmatpush.msra.mxu0 %v445
  %1768 = vmatmul.f32.gmra.mxu0 %v1735
  %v1769 = vpop.f32.mrf.mxu0
  %v1770 = vadd.f32 %v540, %v1769
  %1771 = vdwg.mxu0
  %1772 = vmatpush.msra.mxu0 %v476
  %1773 = vmatpush.msra.mxu0 %v475
  %1774 = vmatpush.msra.mxu0 %v474
  %1775 = vmatpush.msra.mxu0 %v473
  %1776 = vmatpush.msra.mxu0 %v472
  %1777 = vmatpush.msra.mxu0 %v471
  %1778 = vmatpush.msra.mxu0 %v470
  %1779 = vmatpush.msra.mxu0 %v469
  %1780 = vmatpush.msra.mxu0 %v468
  %1781 = vmatpush.msra.mxu0 %v467
  %1782 = vmatpush.msra.mxu0 %v466
  %1783 = vmatpush.msra.mxu0 %v465
  %1784 = vmatpush.msra.mxu0 %v464
  %1785 = vmatpush.msra.mxu0 %v463
  %1786 = vmatpush.msra.mxu0 %v462
  %1787 = vmatpush.msra.mxu0 %v461
  %1788 = vmatmul.f32.gmra.mxu0 %v1740
  %v1789 = vpop.f32.mrf.mxu0
  %v1790 = vadd.f32 %v1770, %v1789
  %1791 = vdwg.mxu0
  %1792 = vmatpush.msra.mxu0 %v492
  %1793 = vmatpush.msra.mxu0 %v491
  %1794 = vmatpush.msra.mxu0 %v490
  %1795 = vmatpush.msra.mxu0 %v489
  %1796 = vmatpush.msra.mxu0 %v488
  %1797 = vmatpush.msra.mxu0 %v487
  %1798 = vmatpush.msra.mxu0 %v486
  %1799 = vmatpush.msra.mxu0 %v485
  %1800 = vmatpush.msra.mxu0 %v484
  %1801 = vmatpush.msra.mxu0 %v483
  %1802 = vmatpush.msra.mxu0 %v482
  %1803 = vmatpush.msra.mxu0 %v481
  %1804 = vmatpush.msra.mxu0 %v480
  %1805 = vmatpush.msra.mxu0 %v479
  %1806 = vmatpush.msra.mxu0 %v478
  %1807 = vmatpush.msra.mxu0 %v477
  %1808 = vmatmul.f32.gmra.mxu0 %v1745
  %v1809 = vpop.f32.mrf.mxu0
  %v1810 = vadd.f32 %v1790, %v1809
  %1811 = vdwg.mxu0
  %1812 = vmatpush.msra.mxu0 %v508
  %1813 = vmatpush.msra.mxu0 %v507
  %1814 = vmatpush.msra.mxu0 %v506
  %1815 = vmatpush.msra.mxu0 %v505
  %1816 = vmatpush.msra.mxu0 %v504
  %1817 = vmatpush.msra.mxu0 %v503
  %1818 = vmatpush.msra.mxu0 %v502
  %1819 = vmatpush.msra.mxu0 %v501
  %1820 = vmatpush.msra.mxu0 %v500
  %1821 = vmatpush.msra.mxu0 %v499
  %1822 = vmatpush.msra.mxu0 %v498
  %1823 = vmatpush.msra.mxu0 %v497
  %1824 = vmatpush.msra.mxu0 %v496
  %1825 = vmatpush.msra.mxu0 %v495
  %1826 = vmatpush.msra.mxu0 %v494
  %1827 = vmatpush.msra.mxu0 %v493
  %1828 = vmatmul.f32.gmra.mxu0 %v1750
  %v1829 = vpop.f32.mrf.mxu0
  %v1830 = vadd.f32 %v1810, %v1829
  %1831 = vdwg.mxu0
  %v1832 = vmax.f32 %v1830, 0.0
  %1833 = vst [vmem:[#allocation3 + $0x16] sm:$0x3] %v1832
  %v1834 = vld [vmem:[%s135] sm:$0x1]
  %v1835 = vld [vmem:[%s135 + $0x38] sm:$0x1]
  %v1836 = vld [vmem:[%s135 + $0x1] sm:$0x1]
  %v1837 = vld [vmem:[%s135 + $0x39] sm:$0x1]
  %v1838 = vld [vmem:[%s163] sm:$0x1]
  %v1839 = vld [vmem:[%s163 + $0x38] sm:$0x1]
  %v1840 = vld [vmem:[%s163 + $0x1] sm:$0x1]
  %v1841 = vld [vmem:[%s163 + $0x39] sm:$0x1]
  %v1844 = vrot.slane %v1835, 7
  %v1845 = vsel %vm521, %v1844, %v1834
  %v1849 = vrot.slane %v1837, 7
  %v1850 = vsel %vm521, %v1849, %v1836
  %v1854 = vrot.slane %v1839, 7
  %v1855 = vsel %vm521, %v1854, %v1838
  %v1859 = vrot.slane %v1841, 7
  %v1860 = vsel %vm521, %v1859, %v1840
  %1862 = vmatpush.msra.mxu0 %v460
  %1863 = vmatpush.msra.mxu0 %v459
  %1864 = vmatpush.msra.mxu0 %v458
  %1865 = vmatpush.msra.mxu0 %v457
  %1866 = vmatpush.msra.mxu0 %v456
  %1867 = vmatpush.msra.mxu0 %v455
  %1868 = vmatpush.msra.mxu0 %v454
  %1869 = vmatpush.msra.mxu0 %v453
  %1870 = vmatpush.msra.mxu0 %v452
  %1871 = vmatpush.msra.mxu0 %v451
  %1872 = vmatpush.msra.mxu0 %v450
  %1873 = vmatpush.msra.mxu0 %v449
  %1874 = vmatpush.msra.mxu0 %v448
  %1875 = vmatpush.msra.mxu0 %v447
  %1876 = vmatpush.msra.mxu0 %v446
  %1877 = vmatpush.msra.mxu0 %v445
  %1878 = vmatmul.f32.gmra.mxu0 %v1845
  %v1879 = vpop.f32.mrf.mxu0
  %v1880 = vadd.f32 %v540, %v1879
  %1881 = vdwg.mxu0
  %1882 = vmatpush.msra.mxu0 %v476
  %1883 = vmatpush.msra.mxu0 %v475
  %1884 = vmatpush.msra.mxu0 %v474
  %1885 = vmatpush.msra.mxu0 %v473
  %1886 = vmatpush.msra.mxu0 %v472
  %1887 = vmatpush.msra.mxu0 %v471
  %1888 = vmatpush.msra.mxu0 %v470
  %1889 = vmatpush.msra.mxu0 %v469
  %1890 = vmatpush.msra.mxu0 %v468
  %1891 = vmatpush.msra.mxu0 %v467
  %1892 = vmatpush.msra.mxu0 %v466
  %1893 = vmatpush.msra.mxu0 %v465
  %1894 = vmatpush.msra.mxu0 %v464
  %1895 = vmatpush.msra.mxu0 %v463
  %1896 = vmatpush.msra.mxu0 %v462
  %1897 = vmatpush.msra.mxu0 %v461
  %1898 = vmatmul.f32.gmra.mxu0 %v1850
  %v1899 = vpop.f32.mrf.mxu0
  %v1900 = vadd.f32 %v1880, %v1899
  %1901 = vdwg.mxu0
  %1902 = vmatpush.msra.mxu0 %v492
  %1903 = vmatpush.msra.mxu0 %v491
  %1904 = vmatpush.msra.mxu0 %v490
  %1905 = vmatpush.msra.mxu0 %v489
  %1906 = vmatpush.msra.mxu0 %v488
  %1907 = vmatpush.msra.mxu0 %v487
  %1908 = vmatpush.msra.mxu0 %v486
  %1909 = vmatpush.msra.mxu0 %v485
  %1910 = vmatpush.msra.mxu0 %v484
  %1911 = vmatpush.msra.mxu0 %v483
  %1912 = vmatpush.msra.mxu0 %v482
  %1913 = vmatpush.msra.mxu0 %v481
  %1914 = vmatpush.msra.mxu0 %v480
  %1915 = vmatpush.msra.mxu0 %v479
  %1916 = vmatpush.msra.mxu0 %v478
  %1917 = vmatpush.msra.mxu0 %v477
  %1918 = vmatmul.f32.gmra.mxu0 %v1855
  %v1919 = vpop.f32.mrf.mxu0
  %v1920 = vadd.f32 %v1900, %v1919
  %1921 = vdwg.mxu0
  %1922 = vmatpush.msra.mxu0 %v508
  %1923 = vmatpush.msra.mxu0 %v507
  %1924 = vmatpush.msra.mxu0 %v506
  %1925 = vmatpush.msra.mxu0 %v505
  %1926 = vmatpush.msra.mxu0 %v504
  %1927 = vmatpush.msra.mxu0 %v503
  %1928 = vmatpush.msra.mxu0 %v502
  %1929 = vmatpush.msra.mxu0 %v501
  %1930 = vmatpush.msra.mxu0 %v500
  %1931 = vmatpush.msra.mxu0 %v499
  %1932 = vmatpush.msra.mxu0 %v498
  %1933 = vmatpush.msra.mxu0 %v497
  %1934 = vmatpush.msra.mxu0 %v496
  %1935 = vmatpush.msra.mxu0 %v495
  %1936 = vmatpush.msra.mxu0 %v494
  %1937 = vmatpush.msra.mxu0 %v493
  %1938 = vmatmul.f32.gmra.mxu0 %v1860
  %v1939 = vpop.f32.mrf.mxu0
  %v1940 = vadd.f32 %v1920, %v1939
  %1941 = vdwg.mxu0
  %v1942 = vmax.f32 %v1940, 0.0
  %1943 = vst [vmem:[#allocation3 + $0x18] sm:$0x3] %v1942
  %v1944 = vld [vmem:[%s135 + $0x1] sm:$0x1]
  %v1945 = vld [vmem:[%s135 + $0x39] sm:$0x1]
  %v1946 = vld [vmem:[%s135 + $0x2] sm:$0x1]
  %v1947 = vld [vmem:[%s135 + $0x3a] sm:$0x1]
  %v1948 = vld [vmem:[%s163 + $0x1] sm:$0x1]
  %v1949 = vld [vmem:[%s163 + $0x39] sm:$0x1]
  %v1950 = vld [vmem:[%s163 + $0x2] sm:$0x1]
  %v1951 = vld [vmem:[%s163 + $0x3a] sm:$0x1]
  %v1954 = vrot.slane %v1945, 7
  %v1955 = vsel %vm521, %v1954, %v1944
  %v1959 = vrot.slane %v1947, 7
  %v1960 = vsel %vm521, %v1959, %v1946
  %v1964 = vrot.slane %v1949, 7
  %v1965 = vsel %vm521, %v1964, %v1948
  %v1969 = vrot.slane %v1951, 7
  %v1970 = vsel %vm521, %v1969, %v1950
  %1972 = vmatpush.msra.mxu0 %v460
  %1973 = vmatpush.msra.mxu0 %v459
  %1974 = vmatpush.msra.mxu0 %v458
  %1975 = vmatpush.msra.mxu0 %v457
  %1976 = vmatpush.msra.mxu0 %v456
  %1977 = vmatpush.msra.mxu0 %v455
  %1978 = vmatpush.msra.mxu0 %v454
  %1979 = vmatpush.msra.mxu0 %v453
  %1980 = vmatpush.msra.mxu0 %v452
  %1981 = vmatpush.msra.mxu0 %v451
  %1982 = vmatpush.msra.mxu0 %v450
  %1983 = vmatpush.msra.mxu0 %v449
  %1984 = vmatpush.msra.mxu0 %v448
  %1985 = vmatpush.msra.mxu0 %v447
  %1986 = vmatpush.msra.mxu0 %v446
  %1987 = vmatpush.msra.mxu0 %v445
  %1988 = vmatmul.f32.gmra.mxu0 %v1955
  %v1989 = vpop.f32.mrf.mxu0
  %v1990 = vadd.f32 %v540, %v1989
  %1991 = vdwg.mxu0
  %1992 = vmatpush.msra.mxu0 %v476
  %1993 = vmatpush.msra.mxu0 %v475
  %1994 = vmatpush.msra.mxu0 %v474
  %1995 = vmatpush.msra.mxu0 %v473
  %1996 = vmatpush.msra.mxu0 %v472
  %1997 = vmatpush.msra.mxu0 %v471
  %1998 = vmatpush.msra.mxu0 %v470
  %1999 = vmatpush.msra.mxu0 %v469
  %2000 = vmatpush.msra.mxu0 %v468
  %2001 = vmatpush.msra.mxu0 %v467
  %2002 = vmatpush.msra.mxu0 %v466
  %2003 = vmatpush.msra.mxu0 %v465
  %2004 = vmatpush.msra.mxu0 %v464
  %2005 = vmatpush.msra.mxu0 %v463
  %2006 = vmatpush.msra.mxu0 %v462
  %2007 = vmatpush.msra.mxu0 %v461
  %2008 = vmatmul.f32.gmra.mxu0 %v1960
  %v2009 = vpop.f32.mrf.mxu0
  %v2010 = vadd.f32 %v1990, %v2009
  %2011 = vdwg.mxu0
  %2012 = vmatpush.msra.mxu0 %v492
  %2013 = vmatpush.msra.mxu0 %v491
  %2014 = vmatpush.msra.mxu0 %v490
  %2015 = vmatpush.msra.mxu0 %v489
  %2016 = vmatpush.msra.mxu0 %v488
  %2017 = vmatpush.msra.mxu0 %v487
  %2018 = vmatpush.msra.mxu0 %v486
  %2019 = vmatpush.msra.mxu0 %v485
  %2020 = vmatpush.msra.mxu0 %v484
  %2021 = vmatpush.msra.mxu0 %v483
  %2022 = vmatpush.msra.mxu0 %v482
  %2023 = vmatpush.msra.mxu0 %v481
  %2024 = vmatpush.msra.mxu0 %v480
  %2025 = vmatpush.msra.mxu0 %v479
  %2026 = vmatpush.msra.mxu0 %v478
  %2027 = vmatpush.msra.mxu0 %v477
  %2028 = vmatmul.f32.gmra.mxu0 %v1965
  %v2029 = vpop.f32.mrf.mxu0
  %v2030 = vadd.f32 %v2010, %v2029
  %2031 = vdwg.mxu0
  %2032 = vmatpush.msra.mxu0 %v508
  %2033 = vmatpush.msra.mxu0 %v507
  %2034 = vmatpush.msra.mxu0 %v506
  %2035 = vmatpush.msra.mxu0 %v505
  %2036 = vmatpush.msra.mxu0 %v504
  %2037 = vmatpush.msra.mxu0 %v503
  %2038 = vmatpush.msra.mxu0 %v502
  %2039 = vmatpush.msra.mxu0 %v501
  %2040 = vmatpush.msra.mxu0 %v500
  %2041 = vmatpush.msra.mxu0 %v499
  %2042 = vmatpush.msra.mxu0 %v498
  %2043 = vmatpush.msra.mxu0 %v497
  %2044 = vmatpush.msra.mxu0 %v496
  %2045 = vmatpush.msra.mxu0 %v495
  %2046 = vmatpush.msra.mxu0 %v494
  %2047 = vmatpush.msra.mxu0 %v493
  %2048 = vmatmul.f32.gmra.mxu0 %v1970
  %v2049 = vpop.f32.mrf.mxu0
  %v2050 = vadd.f32 %v2030, %v2049
  %2051 = vdwg.mxu0
  %v2052 = vmax.f32 %v2050, 0.0
  %2053 = vst [vmem:[#allocation3 + $0x1a] sm:$0x3] %v2052
  %v2054 = vld [vmem:[%s135 + $0x2] sm:$0x1]
  %v2055 = vld [vmem:[%s135 + $0x3a] sm:$0x1]
  %v2056 = vld [vmem:[%s135 + $0x3] sm:$0x1]
  %v2057 = vld [vmem:[%s135 + $0x3b] sm:$0x1]
  %v2058 = vld [vmem:[%s163 + $0x2] sm:$0x1]
  %v2059 = vld [vmem:[%s163 + $0x3a] sm:$0x1]
  %v2060 = vld [vmem:[%s163 + $0x3] sm:$0x1]
  %v2061 = vld [vmem:[%s163 + $0x3b] sm:$0x1]
  %v2064 = vrot.slane %v2055, 7
  %v2065 = vsel %vm521, %v2064, %v2054
  %v2069 = vrot.slane %v2057, 7
  %v2070 = vsel %vm521, %v2069, %v2056
  %v2074 = vrot.slane %v2059, 7
  %v2075 = vsel %vm521, %v2074, %v2058
  %v2079 = vrot.slane %v2061, 7
  %v2080 = vsel %vm521, %v2079, %v2060
  %2082 = vmatpush.msra.mxu0 %v460
  %2083 = vmatpush.msra.mxu0 %v459
  %2084 = vmatpush.msra.mxu0 %v458
  %2085 = vmatpush.msra.mxu0 %v457
  %2086 = vmatpush.msra.mxu0 %v456
  %2087 = vmatpush.msra.mxu0 %v455
  %2088 = vmatpush.msra.mxu0 %v454
  %2089 = vmatpush.msra.mxu0 %v453
  %2090 = vmatpush.msra.mxu0 %v452
  %2091 = vmatpush.msra.mxu0 %v451
  %2092 = vmatpush.msra.mxu0 %v450
  %2093 = vmatpush.msra.mxu0 %v449
  %2094 = vmatpush.msra.mxu0 %v448
  %2095 = vmatpush.msra.mxu0 %v447
  %2096 = vmatpush.msra.mxu0 %v446
  %2097 = vmatpush.msra.mxu0 %v445
  %2098 = vmatmul.f32.gmra.mxu0 %v2065
  %v2099 = vpop.f32.mrf.mxu0
  %v2100 = vadd.f32 %v540, %v2099
  %2101 = vdwg.mxu0
  %2102 = vmatpush.msra.mxu0 %v476
  %2103 = vmatpush.msra.mxu0 %v475
  %2104 = vmatpush.msra.mxu0 %v474
  %2105 = vmatpush.msra.mxu0 %v473
  %2106 = vmatpush.msra.mxu0 %v472
  %2107 = vmatpush.msra.mxu0 %v471
  %2108 = vmatpush.msra.mxu0 %v470
  %2109 = vmatpush.msra.mxu0 %v469
  %2110 = vmatpush.msra.mxu0 %v468
  %2111 = vmatpush.msra.mxu0 %v467
  %2112 = vmatpush.msra.mxu0 %v466
  %2113 = vmatpush.msra.mxu0 %v465
  %2114 = vmatpush.msra.mxu0 %v464
  %2115 = vmatpush.msra.mxu0 %v463
  %2116 = vmatpush.msra.mxu0 %v462
  %2117 = vmatpush.msra.mxu0 %v461
  %2118 = vmatmul.f32.gmra.mxu0 %v2070
  %v2119 = vpop.f32.mrf.mxu0
  %v2120 = vadd.f32 %v2100, %v2119
  %2121 = vdwg.mxu0
  %2122 = vmatpush.msra.mxu0 %v492
  %2123 = vmatpush.msra.mxu0 %v491
  %2124 = vmatpush.msra.mxu0 %v490
  %2125 = vmatpush.msra.mxu0 %v489
  %2126 = vmatpush.msra.mxu0 %v488
  %2127 = vmatpush.msra.mxu0 %v487
  %2128 = vmatpush.msra.mxu0 %v486
  %2129 = vmatpush.msra.mxu0 %v485
  %2130 = vmatpush.msra.mxu0 %v484
  %2131 = vmatpush.msra.mxu0 %v483
  %2132 = vmatpush.msra.mxu0 %v482
  %2133 = vmatpush.msra.mxu0 %v481
  %2134 = vmatpush.msra.mxu0 %v480
  %2135 = vmatpush.msra.mxu0 %v479
  %2136 = vmatpush.msra.mxu0 %v478
  %2137 = vmatpush.msra.mxu0 %v477
  %2138 = vmatmul.f32.gmra.mxu0 %v2075
  %v2139 = vpop.f32.mrf.mxu0
  %v2140 = vadd.f32 %v2120, %v2139
  %2141 = vdwg.mxu0
  %2142 = vmatpush.msra.mxu0 %v508
  %2143 = vmatpush.msra.mxu0 %v507
  %2144 = vmatpush.msra.mxu0 %v506
  %2145 = vmatpush.msra.mxu0 %v505
  %2146 = vmatpush.msra.mxu0 %v504
  %2147 = vmatpush.msra.mxu0 %v503
  %2148 = vmatpush.msra.mxu0 %v502
  %2149 = vmatpush.msra.mxu0 %v501
  %2150 = vmatpush.msra.mxu0 %v500
  %2151 = vmatpush.msra.mxu0 %v499
  %2152 = vmatpush.msra.mxu0 %v498
  %2153 = vmatpush.msra.mxu0 %v497
  %2154 = vmatpush.msra.mxu0 %v496
  %2155 = vmatpush.msra.mxu0 %v495
  %2156 = vmatpush.msra.mxu0 %v494
  %2157 = vmatpush.msra.mxu0 %v493
  %2158 = vmatmul.f32.gmra.mxu0 %v2080
  %v2159 = vpop.f32.mrf.mxu0
  %v2160 = vadd.f32 %v2140, %v2159
  %2161 = vdwg.mxu0
  %v2162 = vmax.f32 %v2160, 0.0
  %2163 = vst [vmem:[#allocation3 + $0x1c] sm:$0x3] %v2162
  %v2164 = vld [vmem:[%s135 + $0x3] sm:$0x1]
  %v2165 = vld [vmem:[%s135 + $0x3b] sm:$0x1]
  %v2166 = vld [vmem:[%s135 + $0x4] sm:$0x1]
  %v2167 = vld [vmem:[%s135 + $0x3c] sm:$0x1]
  %v2168 = vld [vmem:[%s163 + $0x3] sm:$0x1]
  %v2169 = vld [vmem:[%s163 + $0x3b] sm:$0x1]
  %v2170 = vld [vmem:[%s163 + $0x4] sm:$0x1]
  %v2171 = vld [vmem:[%s163 + $0x3c] sm:$0x1]
  %v2174 = vrot.slane %v2165, 7
  %v2175 = vsel %vm521, %v2174, %v2164
  %v2179 = vrot.slane %v2167, 7
  %v2180 = vsel %vm521, %v2179, %v2166
  %v2184 = vrot.slane %v2169, 7
  %v2185 = vsel %vm521, %v2184, %v2168
  %v2189 = vrot.slane %v2171, 7
  %v2190 = vsel %vm521, %v2189, %v2170
  %2192 = vmatpush.msra.mxu0 %v460
  %2193 = vmatpush.msra.mxu0 %v459
  %2194 = vmatpush.msra.mxu0 %v458
  %2195 = vmatpush.msra.mxu0 %v457
  %2196 = vmatpush.msra.mxu0 %v456
  %2197 = vmatpush.msra.mxu0 %v455
  %2198 = vmatpush.msra.mxu0 %v454
  %2199 = vmatpush.msra.mxu0 %v453
  %2200 = vmatpush.msra.mxu0 %v452
  %2201 = vmatpush.msra.mxu0 %v451
  %2202 = vmatpush.msra.mxu0 %v450
  %2203 = vmatpush.msra.mxu0 %v449
  %2204 = vmatpush.msra.mxu0 %v448
  %2205 = vmatpush.msra.mxu0 %v447
  %2206 = vmatpush.msra.mxu0 %v446
  %2207 = vmatpush.msra.mxu0 %v445
  %2208 = vmatmul.f32.gmra.mxu0 %v2175
  %v2209 = vpop.f32.mrf.mxu0
  %v2210 = vadd.f32 %v540, %v2209
  %2211 = vdwg.mxu0
  %2212 = vmatpush.msra.mxu0 %v476
  %2213 = vmatpush.msra.mxu0 %v475
  %2214 = vmatpush.msra.mxu0 %v474
  %2215 = vmatpush.msra.mxu0 %v473
  %2216 = vmatpush.msra.mxu0 %v472
  %2217 = vmatpush.msra.mxu0 %v471
  %2218 = vmatpush.msra.mxu0 %v470
  %2219 = vmatpush.msra.mxu0 %v469
  %2220 = vmatpush.msra.mxu0 %v468
  %2221 = vmatpush.msra.mxu0 %v467
  %2222 = vmatpush.msra.mxu0 %v466
  %2223 = vmatpush.msra.mxu0 %v465
  %2224 = vmatpush.msra.mxu0 %v464
  %2225 = vmatpush.msra.mxu0 %v463
  %2226 = vmatpush.msra.mxu0 %v462
  %2227 = vmatpush.msra.mxu0 %v461
  %2228 = vmatmul.f32.gmra.mxu0 %v2180
  %v2229 = vpop.f32.mrf.mxu0
  %v2230 = vadd.f32 %v2210, %v2229
  %2231 = vdwg.mxu0
  %2232 = vmatpush.msra.mxu0 %v492
  %2233 = vmatpush.msra.mxu0 %v491
  %2234 = vmatpush.msra.mxu0 %v490
  %2235 = vmatpush.msra.mxu0 %v489
  %2236 = vmatpush.msra.mxu0 %v488
  %2237 = vmatpush.msra.mxu0 %v487
  %2238 = vmatpush.msra.mxu0 %v486
  %2239 = vmatpush.msra.mxu0 %v485
  %2240 = vmatpush.msra.mxu0 %v484
  %2241 = vmatpush.msra.mxu0 %v483
  %2242 = vmatpush.msra.mxu0 %v482
  %2243 = vmatpush.msra.mxu0 %v481
  %2244 = vmatpush.msra.mxu0 %v480
  %2245 = vmatpush.msra.mxu0 %v479
  %2246 = vmatpush.msra.mxu0 %v478
  %2247 = vmatpush.msra.mxu0 %v477
  %2248 = vmatmul.f32.gmra.mxu0 %v2185
  %v2249 = vpop.f32.mrf.mxu0
  %v2250 = vadd.f32 %v2230, %v2249
  %2251 = vdwg.mxu0
  %2252 = vmatpush.msra.mxu0 %v508
  %2253 = vmatpush.msra.mxu0 %v507
  %2254 = vmatpush.msra.mxu0 %v506
  %2255 = vmatpush.msra.mxu0 %v505
  %2256 = vmatpush.msra.mxu0 %v504
  %2257 = vmatpush.msra.mxu0 %v503
  %2258 = vmatpush.msra.mxu0 %v502
  %2259 = vmatpush.msra.mxu0 %v501
  %2260 = vmatpush.msra.mxu0 %v500
  %2261 = vmatpush.msra.mxu0 %v499
  %2262 = vmatpush.msra.mxu0 %v498
  %2263 = vmatpush.msra.mxu0 %v497
  %2264 = vmatpush.msra.mxu0 %v496
  %2265 = vmatpush.msra.mxu0 %v495
  %2266 = vmatpush.msra.mxu0 %v494
  %2267 = vmatpush.msra.mxu0 %v493
  %2268 = vmatmul.f32.gmra.mxu0 %v2190
  %v2269 = vpop.f32.mrf.mxu0
  %v2270 = vadd.f32 %v2250, %v2269
  %2271 = vdwg.mxu0
  %v2272 = vmax.f32 %v2270, 0.0
  %2273 = vst [vmem:[#allocation3 + $0x1e] sm:$0x3] %v2272
  %v2274 = vld [vmem:[%s135 + $0x4] sm:$0x1]
  %v2275 = vld [vmem:[%s135 + $0x3c] sm:$0x1]
  %v2276 = vld [vmem:[%s135 + $0x5] sm:$0x1]
  %v2277 = vld [vmem:[%s135 + $0x3d] sm:$0x1]
  %v2278 = vld [vmem:[%s163 + $0x4] sm:$0x1]
  %v2279 = vld [vmem:[%s163 + $0x3c] sm:$0x1]
  %v2280 = vld [vmem:[%s163 + $0x5] sm:$0x1]
  %v2281 = vld [vmem:[%s163 + $0x3d] sm:$0x1]
  %v2284 = vrot.slane %v2275, 7
  %v2285 = vsel %vm521, %v2284, %v2274
  %v2289 = vrot.slane %v2277, 7
  %v2290 = vsel %vm521, %v2289, %v2276
  %v2294 = vrot.slane %v2279, 7
  %v2295 = vsel %vm521, %v2294, %v2278
  %v2299 = vrot.slane %v2281, 7
  %v2300 = vsel %vm521, %v2299, %v2280
  %2302 = vmatpush.msra.mxu0 %v460
  %2303 = vmatpush.msra.mxu0 %v459
  %2304 = vmatpush.msra.mxu0 %v458
  %2305 = vmatpush.msra.mxu0 %v457
  %2306 = vmatpush.msra.mxu0 %v456
  %2307 = vmatpush.msra.mxu0 %v455
  %2308 = vmatpush.msra.mxu0 %v454
  %2309 = vmatpush.msra.mxu0 %v453
  %2310 = vmatpush.msra.mxu0 %v452
  %2311 = vmatpush.msra.mxu0 %v451
  %2312 = vmatpush.msra.mxu0 %v450
  %2313 = vmatpush.msra.mxu0 %v449
  %2314 = vmatpush.msra.mxu0 %v448
  %2315 = vmatpush.msra.mxu0 %v447
  %2316 = vmatpush.msra.mxu0 %v446
  %2317 = vmatpush.msra.mxu0 %v445
  %2318 = vmatmul.f32.gmra.mxu0 %v2285
  %v2319 = vpop.f32.mrf.mxu0
  %v2320 = vadd.f32 %v540, %v2319
  %2321 = vdwg.mxu0
  %2322 = vmatpush.msra.mxu0 %v476
  %2323 = vmatpush.msra.mxu0 %v475
  %2324 = vmatpush.msra.mxu0 %v474
  %2325 = vmatpush.msra.mxu0 %v473
  %2326 = vmatpush.msra.mxu0 %v472
  %2327 = vmatpush.msra.mxu0 %v471
  %2328 = vmatpush.msra.mxu0 %v470
  %2329 = vmatpush.msra.mxu0 %v469
  %2330 = vmatpush.msra.mxu0 %v468
  %2331 = vmatpush.msra.mxu0 %v467
  %2332 = vmatpush.msra.mxu0 %v466
  %2333 = vmatpush.msra.mxu0 %v465
  %2334 = vmatpush.msra.mxu0 %v464
  %2335 = vmatpush.msra.mxu0 %v463
  %2336 = vmatpush.msra.mxu0 %v462
  %2337 = vmatpush.msra.mxu0 %v461
  %2338 = vmatmul.f32.gmra.mxu0 %v2290
  %v2339 = vpop.f32.mrf.mxu0
  %v2340 = vadd.f32 %v2320, %v2339
  %2341 = vdwg.mxu0
  %2342 = vmatpush.msra.mxu0 %v492
  %2343 = vmatpush.msra.mxu0 %v491
  %2344 = vmatpush.msra.mxu0 %v490
  %2345 = vmatpush.msra.mxu0 %v489
  %2346 = vmatpush.msra.mxu0 %v488
  %2347 = vmatpush.msra.mxu0 %v487
  %2348 = vmatpush.msra.mxu0 %v486
  %2349 = vmatpush.msra.mxu0 %v485
  %2350 = vmatpush.msra.mxu0 %v484
  %2351 = vmatpush.msra.mxu0 %v483
  %2352 = vmatpush.msra.mxu0 %v482
  %2353 = vmatpush.msra.mxu0 %v481
  %2354 = vmatpush.msra.mxu0 %v480
  %2355 = vmatpush.msra.mxu0 %v479
  %2356 = vmatpush.msra.mxu0 %v478
  %2357 = vmatpush.msra.mxu0 %v477
  %2358 = vmatmul.f32.gmra.mxu0 %v2295
  %v2359 = vpop.f32.mrf.mxu0
  %v2360 = vadd.f32 %v2340, %v2359
  %2361 = vdwg.mxu0
  %2362 = vmatpush.msra.mxu0 %v508
  %2363 = vmatpush.msra.mxu0 %v507
  %2364 = vmatpush.msra.mxu0 %v506
  %2365 = vmatpush.msra.mxu0 %v505
  %2366 = vmatpush.msra.mxu0 %v504
  %2367 = vmatpush.msra.mxu0 %v503
  %2368 = vmatpush.msra.mxu0 %v502
  %2369 = vmatpush.msra.mxu0 %v501
  %2370 = vmatpush.msra.mxu0 %v500
  %2371 = vmatpush.msra.mxu0 %v499
  %2372 = vmatpush.msra.mxu0 %v498
  %2373 = vmatpush.msra.mxu0 %v497
  %2374 = vmatpush.msra.mxu0 %v496
  %2375 = vmatpush.msra.mxu0 %v495
  %2376 = vmatpush.msra.mxu0 %v494
  %2377 = vmatpush.msra.mxu0 %v493
  %2378 = vmatmul.f32.gmra.mxu0 %v2300
  %v2379 = vpop.f32.mrf.mxu0
  %v2380 = vadd.f32 %v2360, %v2379
  %2381 = vdwg.mxu0
  %v2382 = vmax.f32 %v2380, 0.0
  %2383 = vst [vmem:[#allocation3 + $0x20] sm:$0x3] %v2382
  %v2384 = vld [vmem:[%s135 + $0x5] sm:$0x1]
  %v2385 = vld [vmem:[%s135 + $0x3d] sm:$0x1]
  %v2386 = vld [vmem:[%s135 + $0x6] sm:$0x1]
  %v2387 = vld [vmem:[%s135 + $0x3e] sm:$0x1]
  %v2388 = vld [vmem:[%s163 + $0x5] sm:$0x1]
  %v2389 = vld [vmem:[%s163 + $0x3d] sm:$0x1]
  %v2390 = vld [vmem:[%s163 + $0x6] sm:$0x1]
  %v2391 = vld [vmem:[%s163 + $0x3e] sm:$0x1]
  %v2394 = vrot.slane %v2385, 7
  %v2395 = vsel %vm521, %v2394, %v2384
  %v2399 = vrot.slane %v2387, 7
  %v2400 = vsel %vm521, %v2399, %v2386
  %v2404 = vrot.slane %v2389, 7
  %v2405 = vsel %vm521, %v2404, %v2388
  %v2409 = vrot.slane %v2391, 7
  %v2410 = vsel %vm521, %v2409, %v2390
  %2412 = vmatpush.msra.mxu0 %v460
  %2413 = vmatpush.msra.mxu0 %v459
  %2414 = vmatpush.msra.mxu0 %v458
  %2415 = vmatpush.msra.mxu0 %v457
  %2416 = vmatpush.msra.mxu0 %v456
  %2417 = vmatpush.msra.mxu0 %v455
  %2418 = vmatpush.msra.mxu0 %v454
  %2419 = vmatpush.msra.mxu0 %v453
  %2420 = vmatpush.msra.mxu0 %v452
  %2421 = vmatpush.msra.mxu0 %v451
  %2422 = vmatpush.msra.mxu0 %v450
  %2423 = vmatpush.msra.mxu0 %v449
  %2424 = vmatpush.msra.mxu0 %v448
  %2425 = vmatpush.msra.mxu0 %v447
  %2426 = vmatpush.msra.mxu0 %v446
  %2427 = vmatpush.msra.mxu0 %v445
  %2428 = vmatmul.f32.gmra.mxu0 %v2395
  %v2429 = vpop.f32.mrf.mxu0
  %v2430 = vadd.f32 %v540, %v2429
  %2431 = vdwg.mxu0
  %2432 = vmatpush.msra.mxu0 %v476
  %2433 = vmatpush.msra.mxu0 %v475
  %2434 = vmatpush.msra.mxu0 %v474
  %2435 = vmatpush.msra.mxu0 %v473
  %2436 = vmatpush.msra.mxu0 %v472
  %2437 = vmatpush.msra.mxu0 %v471
  %2438 = vmatpush.msra.mxu0 %v470
  %2439 = vmatpush.msra.mxu0 %v469
  %2440 = vmatpush.msra.mxu0 %v468
  %2441 = vmatpush.msra.mxu0 %v467
  %2442 = vmatpush.msra.mxu0 %v466
  %2443 = vmatpush.msra.mxu0 %v465
  %2444 = vmatpush.msra.mxu0 %v464
  %2445 = vmatpush.msra.mxu0 %v463
  %2446 = vmatpush.msra.mxu0 %v462
  %2447 = vmatpush.msra.mxu0 %v461
  %2448 = vmatmul.f32.gmra.mxu0 %v2400
  %v2449 = vpop.f32.mrf.mxu0
  %v2450 = vadd.f32 %v2430, %v2449
  %2451 = vdwg.mxu0
  %2452 = vmatpush.msra.mxu0 %v492
  %2453 = vmatpush.msra.mxu0 %v491
  %2454 = vmatpush.msra.mxu0 %v490
  %2455 = vmatpush.msra.mxu0 %v489
  %2456 = vmatpush.msra.mxu0 %v488
  %2457 = vmatpush.msra.mxu0 %v487
  %2458 = vmatpush.msra.mxu0 %v486
  %2459 = vmatpush.msra.mxu0 %v485
  %2460 = vmatpush.msra.mxu0 %v484
  %2461 = vmatpush.msra.mxu0 %v483
  %2462 = vmatpush.msra.mxu0 %v482
  %2463 = vmatpush.msra.mxu0 %v481
  %2464 = vmatpush.msra.mxu0 %v480
  %2465 = vmatpush.msra.mxu0 %v479
  %2466 = vmatpush.msra.mxu0 %v478
  %2467 = vmatpush.msra.mxu0 %v477
  %2468 = vmatmul.f32.gmra.mxu0 %v2405
  %v2469 = vpop.f32.mrf.mxu0
  %v2470 = vadd.f32 %v2450, %v2469
  %2471 = vdwg.mxu0
  %2472 = vmatpush.msra.mxu0 %v508
  %2473 = vmatpush.msra.mxu0 %v507
  %2474 = vmatpush.msra.mxu0 %v506
  %2475 = vmatpush.msra.mxu0 %v505
  %2476 = vmatpush.msra.mxu0 %v504
  %2477 = vmatpush.msra.mxu0 %v503
  %2478 = vmatpush.msra.mxu0 %v502
  %2479 = vmatpush.msra.mxu0 %v501
  %2480 = vmatpush.msra.mxu0 %v500
  %2481 = vmatpush.msra.mxu0 %v499
  %2482 = vmatpush.msra.mxu0 %v498
  %2483 = vmatpush.msra.mxu0 %v497
  %2484 = vmatpush.msra.mxu0 %v496
  %2485 = vmatpush.msra.mxu0 %v495
  %2486 = vmatpush.msra.mxu0 %v494
  %2487 = vmatpush.msra.mxu0 %v493
  %2488 = vmatmul.f32.gmra.mxu0 %v2410
  %v2489 = vpop.f32.mrf.mxu0
  %v2490 = vadd.f32 %v2470, %v2489
  %2491 = vdwg.mxu0
  %v2492 = vmax.f32 %v2490, 0.0
  %2493 = vst [vmem:[#allocation3 + $0x22] sm:$0x3] %v2492
  %v2494 = vld [vmem:[%s163] sm:$0x1]
  %v2495 = vld [vmem:[%s163 + $0x38] sm:$0x1]
  %v2496 = vld [vmem:[%s163 + $0x1] sm:$0x1]
  %v2497 = vld [vmem:[%s163 + $0x39] sm:$0x1]
  %v2498 = vld [vmem:[%s191] sm:$0x1]
  %v2499 = vld [vmem:[%s191 + $0x38] sm:$0x1]
  %v2500 = vld [vmem:[%s191 + $0x1] sm:$0x1]
  %v2501 = vld [vmem:[%s191 + $0x39] sm:$0x1]
  %v2504 = vrot.slane %v2495, 7
  %v2505 = vsel %vm521, %v2504, %v2494
  %v2509 = vrot.slane %v2497, 7
  %v2510 = vsel %vm521, %v2509, %v2496
  %v2514 = vrot.slane %v2499, 7
  %v2515 = vsel %vm521, %v2514, %v2498
  %v2519 = vrot.slane %v2501, 7
  %v2520 = vsel %vm521, %v2519, %v2500
  %2522 = vmatpush.msra.mxu0 %v460
  %2523 = vmatpush.msra.mxu0 %v459
  %2524 = vmatpush.msra.mxu0 %v458
  %2525 = vmatpush.msra.mxu0 %v457
  %2526 = vmatpush.msra.mxu0 %v456
  %2527 = vmatpush.msra.mxu0 %v455
  %2528 = vmatpush.msra.mxu0 %v454
  %2529 = vmatpush.msra.mxu0 %v453
  %2530 = vmatpush.msra.mxu0 %v452
  %2531 = vmatpush.msra.mxu0 %v451
  %2532 = vmatpush.msra.mxu0 %v450
  %2533 = vmatpush.msra.mxu0 %v449
  %2534 = vmatpush.msra.mxu0 %v448
  %2535 = vmatpush.msra.mxu0 %v447
  %2536 = vmatpush.msra.mxu0 %v446
  %2537 = vmatpush.msra.mxu0 %v445
  %2538 = vmatmul.f32.gmra.mxu0 %v2505
  %v2539 = vpop.f32.mrf.mxu0
  %v2540 = vadd.f32 %v540, %v2539
  %2541 = vdwg.mxu0
  %2542 = vmatpush.msra.mxu0 %v476
  %2543 = vmatpush.msra.mxu0 %v475
  %2544 = vmatpush.msra.mxu0 %v474
  %2545 = vmatpush.msra.mxu0 %v473
  %2546 = vmatpush.msra.mxu0 %v472
  %2547 = vmatpush.msra.mxu0 %v471
  %2548 = vmatpush.msra.mxu0 %v470
  %2549 = vmatpush.msra.mxu0 %v469
  %2550 = vmatpush.msra.mxu0 %v468
  %2551 = vmatpush.msra.mxu0 %v467
  %2552 = vmatpush.msra.mxu0 %v466
  %2553 = vmatpush.msra.mxu0 %v465
  %2554 = vmatpush.msra.mxu0 %v464
  %2555 = vmatpush.msra.mxu0 %v463
  %2556 = vmatpush.msra.mxu0 %v462
  %2557 = vmatpush.msra.mxu0 %v461
  %2558 = vmatmul.f32.gmra.mxu0 %v2510
  %v2559 = vpop.f32.mrf.mxu0
  %v2560 = vadd.f32 %v2540, %v2559
  %2561 = vdwg.mxu0
  %2562 = vmatpush.msra.mxu0 %v492
  %2563 = vmatpush.msra.mxu0 %v491
  %2564 = vmatpush.msra.mxu0 %v490
  %2565 = vmatpush.msra.mxu0 %v489
  %2566 = vmatpush.msra.mxu0 %v488
  %2567 = vmatpush.msra.mxu0 %v487
  %2568 = vmatpush.msra.mxu0 %v486
  %2569 = vmatpush.msra.mxu0 %v485
  %2570 = vmatpush.msra.mxu0 %v484
  %2571 = vmatpush.msra.mxu0 %v483
  %2572 = vmatpush.msra.mxu0 %v482
  %2573 = vmatpush.msra.mxu0 %v481
  %2574 = vmatpush.msra.mxu0 %v480
  %2575 = vmatpush.msra.mxu0 %v479
  %2576 = vmatpush.msra.mxu0 %v478
  %2577 = vmatpush.msra.mxu0 %v477
  %2578 = vmatmul.f32.gmra.mxu0 %v2515
  %v2579 = vpop.f32.mrf.mxu0
  %v2580 = vadd.f32 %v2560, %v2579
  %2581 = vdwg.mxu0
  %2582 = vmatpush.msra.mxu0 %v508
  %2583 = vmatpush.msra.mxu0 %v507
  %2584 = vmatpush.msra.mxu0 %v506
  %2585 = vmatpush.msra.mxu0 %v505
  %2586 = vmatpush.msra.mxu0 %v504
  %2587 = vmatpush.msra.mxu0 %v503
  %2588 = vmatpush.msra.mxu0 %v502
  %2589 = vmatpush.msra.mxu0 %v501
  %2590 = vmatpush.msra.mxu0 %v500
  %2591 = vmatpush.msra.mxu0 %v499
  %2592 = vmatpush.msra.mxu0 %v498
  %2593 = vmatpush.msra.mxu0 %v497
  %2594 = vmatpush.msra.mxu0 %v496
  %2595 = vmatpush.msra.mxu0 %v495
  %2596 = vmatpush.msra.mxu0 %v494
  %2597 = vmatpush.msra.mxu0 %v493
  %2598 = vmatmul.f32.gmra.mxu0 %v2520
  %v2599 = vpop.f32.mrf.mxu0
  %v2600 = vadd.f32 %v2580, %v2599
  %2601 = vdwg.mxu0
  %v2602 = vmax.f32 %v2600, 0.0
  %2603 = vst [vmem:[#allocation3 + $0x24] sm:$0x3] %v2602
  %v2604 = vld [vmem:[%s163 + $0x1] sm:$0x1]
  %v2605 = vld [vmem:[%s163 + $0x39] sm:$0x1]
  %v2606 = vld [vmem:[%s163 + $0x2] sm:$0x1]
  %v2607 = vld [vmem:[%s163 + $0x3a] sm:$0x1]
  %v2608 = vld [vmem:[%s191 + $0x1] sm:$0x1]
  %v2609 = vld [vmem:[%s191 + $0x39] sm:$0x1]
  %v2610 = vld [vmem:[%s191 + $0x2] sm:$0x1]
  %v2611 = vld [vmem:[%s191 + $0x3a] sm:$0x1]
  %v2614 = vrot.slane %v2605, 7
  %v2615 = vsel %vm521, %v2614, %v2604
  %v2619 = vrot.slane %v2607, 7
  %v2620 = vsel %vm521, %v2619, %v2606
  %v2624 = vrot.slane %v2609, 7
  %v2625 = vsel %vm521, %v2624, %v2608
  %v2629 = vrot.slane %v2611, 7
  %v2630 = vsel %vm521, %v2629, %v2610
  %2632 = vmatpush.msra.mxu0 %v460
  %2633 = vmatpush.msra.mxu0 %v459
  %2634 = vmatpush.msra.mxu0 %v458
  %2635 = vmatpush.msra.mxu0 %v457
  %2636 = vmatpush.msra.mxu0 %v456
  %2637 = vmatpush.msra.mxu0 %v455
  %2638 = vmatpush.msra.mxu0 %v454
  %2639 = vmatpush.msra.mxu0 %v453
  %2640 = vmatpush.msra.mxu0 %v452
  %2641 = vmatpush.msra.mxu0 %v451
  %2642 = vmatpush.msra.mxu0 %v450
  %2643 = vmatpush.msra.mxu0 %v449
  %2644 = vmatpush.msra.mxu0 %v448
  %2645 = vmatpush.msra.mxu0 %v447
  %2646 = vmatpush.msra.mxu0 %v446
  %2647 = vmatpush.msra.mxu0 %v445
  %2648 = vmatmul.f32.gmra.mxu0 %v2615
  %v2649 = vpop.f32.mrf.mxu0
  %v2650 = vadd.f32 %v540, %v2649
  %2651 = vdwg.mxu0
  %2652 = vmatpush.msra.mxu0 %v476
  %2653 = vmatpush.msra.mxu0 %v475
  %2654 = vmatpush.msra.mxu0 %v474
  %2655 = vmatpush.msra.mxu0 %v473
  %2656 = vmatpush.msra.mxu0 %v472
  %2657 = vmatpush.msra.mxu0 %v471
  %2658 = vmatpush.msra.mxu0 %v470
  %2659 = vmatpush.msra.mxu0 %v469
  %2660 = vmatpush.msra.mxu0 %v468
  %2661 = vmatpush.msra.mxu0 %v467
  %2662 = vmatpush.msra.mxu0 %v466
  %2663 = vmatpush.msra.mxu0 %v465
  %2664 = vmatpush.msra.mxu0 %v464
  %2665 = vmatpush.msra.mxu0 %v463
  %2666 = vmatpush.msra.mxu0 %v462
  %2667 = vmatpush.msra.mxu0 %v461
  %2668 = vmatmul.f32.gmra.mxu0 %v2620
  %v2669 = vpop.f32.mrf.mxu0
  %v2670 = vadd.f32 %v2650, %v2669
  %2671 = vdwg.mxu0
  %2672 = vmatpush.msra.mxu0 %v492
  %2673 = vmatpush.msra.mxu0 %v491
  %2674 = vmatpush.msra.mxu0 %v490
  %2675 = vmatpush.msra.mxu0 %v489
  %2676 = vmatpush.msra.mxu0 %v488
  %2677 = vmatpush.msra.mxu0 %v487
  %2678 = vmatpush.msra.mxu0 %v486
  %2679 = vmatpush.msra.mxu0 %v485
  %2680 = vmatpush.msra.mxu0 %v484
  %2681 = vmatpush.msra.mxu0 %v483
  %2682 = vmatpush.msra.mxu0 %v482
  %2683 = vmatpush.msra.mxu0 %v481
  %2684 = vmatpush.msra.mxu0 %v480
  %2685 = vmatpush.msra.mxu0 %v479
  %2686 = vmatpush.msra.mxu0 %v478
  %2687 = vmatpush.msra.mxu0 %v477
  %2688 = vmatmul.f32.gmra.mxu0 %v2625
  %v2689 = vpop.f32.mrf.mxu0
  %v2690 = vadd.f32 %v2670, %v2689
  %2691 = vdwg.mxu0
  %2692 = vmatpush.msra.mxu0 %v508
  %2693 = vmatpush.msra.mxu0 %v507
  %2694 = vmatpush.msra.mxu0 %v506
  %2695 = vmatpush.msra.mxu0 %v505
  %2696 = vmatpush.msra.mxu0 %v504
  %2697 = vmatpush.msra.mxu0 %v503
  %2698 = vmatpush.msra.mxu0 %v502
  %2699 = vmatpush.msra.mxu0 %v501
  %2700 = vmatpush.msra.mxu0 %v500
  %2701 = vmatpush.msra.mxu0 %v499
  %2702 = vmatpush.msra.mxu0 %v498
  %2703 = vmatpush.msra.mxu0 %v497
  %2704 = vmatpush.msra.mxu0 %v496
  %2705 = vmatpush.msra.mxu0 %v495
  %2706 = vmatpush.msra.mxu0 %v494
  %2707 = vmatpush.msra.mxu0 %v493
  %2708 = vmatmul.f32.gmra.mxu0 %v2630
  %v2709 = vpop.f32.mrf.mxu0
  %v2710 = vadd.f32 %v2690, %v2709
  %2711 = vdwg.mxu0
  %v2712 = vmax.f32 %v2710, 0.0
  %2713 = vst [vmem:[#allocation3 + $0x26] sm:$0x3] %v2712
  %v2714 = vld [vmem:[%s163 + $0x2] sm:$0x1]
  %v2715 = vld [vmem:[%s163 + $0x3a] sm:$0x1]
  %v2716 = vld [vmem:[%s163 + $0x3] sm:$0x1]
  %v2717 = vld [vmem:[%s163 + $0x3b] sm:$0x1]
  %v2718 = vld [vmem:[%s191 + $0x2] sm:$0x1]
  %v2719 = vld [vmem:[%s191 + $0x3a] sm:$0x1]
  %v2720 = vld [vmem:[%s191 + $0x3] sm:$0x1]
  %v2721 = vld [vmem:[%s191 + $0x3b] sm:$0x1]
  %v2724 = vrot.slane %v2715, 7
  %v2725 = vsel %vm521, %v2724, %v2714
  %v2729 = vrot.slane %v2717, 7
  %v2730 = vsel %vm521, %v2729, %v2716
  %v2734 = vrot.slane %v2719, 7
  %v2735 = vsel %vm521, %v2734, %v2718
  %v2739 = vrot.slane %v2721, 7
  %v2740 = vsel %vm521, %v2739, %v2720
  %2742 = vmatpush.msra.mxu0 %v460
  %2743 = vmatpush.msra.mxu0 %v459
  %2744 = vmatpush.msra.mxu0 %v458
  %2745 = vmatpush.msra.mxu0 %v457
  %2746 = vmatpush.msra.mxu0 %v456
  %2747 = vmatpush.msra.mxu0 %v455
  %2748 = vmatpush.msra.mxu0 %v454
  %2749 = vmatpush.msra.mxu0 %v453
  %2750 = vmatpush.msra.mxu0 %v452
  %2751 = vmatpush.msra.mxu0 %v451
  %2752 = vmatpush.msra.mxu0 %v450
  %2753 = vmatpush.msra.mxu0 %v449
  %2754 = vmatpush.msra.mxu0 %v448
  %2755 = vmatpush.msra.mxu0 %v447
  %2756 = vmatpush.msra.mxu0 %v446
  %2757 = vmatpush.msra.mxu0 %v445
  %2758 = vmatmul.f32.gmra.mxu0 %v2725
  %v2759 = vpop.f32.mrf.mxu0
  %v2760 = vadd.f32 %v540, %v2759
  %2761 = vdwg.mxu0
  %2762 = vmatpush.msra.mxu0 %v476
  %2763 = vmatpush.msra.mxu0 %v475
  %2764 = vmatpush.msra.mxu0 %v474
  %2765 = vmatpush.msra.mxu0 %v473
  %2766 = vmatpush.msra.mxu0 %v472
  %2767 = vmatpush.msra.mxu0 %v471
  %2768 = vmatpush.msra.mxu0 %v470
  %2769 = vmatpush.msra.mxu0 %v469
  %2770 = vmatpush.msra.mxu0 %v468
  %2771 = vmatpush.msra.mxu0 %v467
  %2772 = vmatpush.msra.mxu0 %v466
  %2773 = vmatpush.msra.mxu0 %v465
  %2774 = vmatpush.msra.mxu0 %v464
  %2775 = vmatpush.msra.mxu0 %v463
  %2776 = vmatpush.msra.mxu0 %v462
  %2777 = vmatpush.msra.mxu0 %v461
  %2778 = vmatmul.f32.gmra.mxu0 %v2730
  %v2779 = vpop.f32.mrf.mxu0
  %v2780 = vadd.f32 %v2760, %v2779
  %2781 = vdwg.mxu0
  %2782 = vmatpush.msra.mxu0 %v492
  %2783 = vmatpush.msra.mxu0 %v491
  %2784 = vmatpush.msra.mxu0 %v490
  %2785 = vmatpush.msra.mxu0 %v489
  %2786 = vmatpush.msra.mxu0 %v488
  %2787 = vmatpush.msra.mxu0 %v487
  %2788 = vmatpush.msra.mxu0 %v486
  %2789 = vmatpush.msra.mxu0 %v485
  %2790 = vmatpush.msra.mxu0 %v484
  %2791 = vmatpush.msra.mxu0 %v483
  %2792 = vmatpush.msra.mxu0 %v482
  %2793 = vmatpush.msra.mxu0 %v481
  %2794 = vmatpush.msra.mxu0 %v480
  %2795 = vmatpush.msra.mxu0 %v479
  %2796 = vmatpush.msra.mxu0 %v478
  %2797 = vmatpush.msra.mxu0 %v477
  %2798 = vmatmul.f32.gmra.mxu0 %v2735
  %v2799 = vpop.f32.mrf.mxu0
  %v2800 = vadd.f32 %v2780, %v2799
  %2801 = vdwg.mxu0
  %2802 = vmatpush.msra.mxu0 %v508
  %2803 = vmatpush.msra.mxu0 %v507
  %2804 = vmatpush.msra.mxu0 %v506
  %2805 = vmatpush.msra.mxu0 %v505
  %2806 = vmatpush.msra.mxu0 %v504
  %2807 = vmatpush.msra.mxu0 %v503
  %2808 = vmatpush.msra.mxu0 %v502
  %2809 = vmatpush.msra.mxu0 %v501
  %2810 = vmatpush.msra.mxu0 %v500
  %2811 = vmatpush.msra.mxu0 %v499
  %2812 = vmatpush.msra.mxu0 %v498
  %2813 = vmatpush.msra.mxu0 %v497
  %2814 = vmatpush.msra.mxu0 %v496
  %2815 = vmatpush.msra.mxu0 %v495
  %2816 = vmatpush.msra.mxu0 %v494
  %2817 = vmatpush.msra.mxu0 %v493
  %2818 = vmatmul.f32.gmra.mxu0 %v2740
  %v2819 = vpop.f32.mrf.mxu0
  %v2820 = vadd.f32 %v2800, %v2819
  %2821 = vdwg.mxu0
  %v2822 = vmax.f32 %v2820, 0.0
  %2823 = vst [vmem:[#allocation3 + $0x28] sm:$0x3] %v2822
  %v2824 = vld [vmem:[%s163 + $0x3] sm:$0x1]
  %v2825 = vld [vmem:[%s163 + $0x3b] sm:$0x1]
  %v2826 = vld [vmem:[%s163 + $0x4] sm:$0x1]
  %v2827 = vld [vmem:[%s163 + $0x3c] sm:$0x1]
  %v2828 = vld [vmem:[%s191 + $0x3] sm:$0x1]
  %v2829 = vld [vmem:[%s191 + $0x3b] sm:$0x1]
  %v2830 = vld [vmem:[%s191 + $0x4] sm:$0x1]
  %v2831 = vld [vmem:[%s191 + $0x3c] sm:$0x1]
  %v2834 = vrot.slane %v2825, 7
  %v2835 = vsel %vm521, %v2834, %v2824
  %v2839 = vrot.slane %v2827, 7
  %v2840 = vsel %vm521, %v2839, %v2826
  %v2844 = vrot.slane %v2829, 7
  %v2845 = vsel %vm521, %v2844, %v2828
  %v2849 = vrot.slane %v2831, 7
  %v2850 = vsel %vm521, %v2849, %v2830
  %2852 = vmatpush.msra.mxu0 %v460
  %2853 = vmatpush.msra.mxu0 %v459
  %2854 = vmatpush.msra.mxu0 %v458
  %2855 = vmatpush.msra.mxu0 %v457
  %2856 = vmatpush.msra.mxu0 %v456
  %2857 = vmatpush.msra.mxu0 %v455
  %2858 = vmatpush.msra.mxu0 %v454
  %2859 = vmatpush.msra.mxu0 %v453
  %2860 = vmatpush.msra.mxu0 %v452
  %2861 = vmatpush.msra.mxu0 %v451
  %2862 = vmatpush.msra.mxu0 %v450
  %2863 = vmatpush.msra.mxu0 %v449
  %2864 = vmatpush.msra.mxu0 %v448
  %2865 = vmatpush.msra.mxu0 %v447
  %2866 = vmatpush.msra.mxu0 %v446
  %2867 = vmatpush.msra.mxu0 %v445
  %2868 = vmatmul.f32.gmra.mxu0 %v2835
  %v2869 = vpop.f32.mrf.mxu0
  %v2870 = vadd.f32 %v540, %v2869
  %2871 = vdwg.mxu0
  %2872 = vmatpush.msra.mxu0 %v476
  %2873 = vmatpush.msra.mxu0 %v475
  %2874 = vmatpush.msra.mxu0 %v474
  %2875 = vmatpush.msra.mxu0 %v473
  %2876 = vmatpush.msra.mxu0 %v472
  %2877 = vmatpush.msra.mxu0 %v471
  %2878 = vmatpush.msra.mxu0 %v470
  %2879 = vmatpush.msra.mxu0 %v469
  %2880 = vmatpush.msra.mxu0 %v468
  %2881 = vmatpush.msra.mxu0 %v467
  %2882 = vmatpush.msra.mxu0 %v466
  %2883 = vmatpush.msra.mxu0 %v465
  %2884 = vmatpush.msra.mxu0 %v464
  %2885 = vmatpush.msra.mxu0 %v463
  %2886 = vmatpush.msra.mxu0 %v462
  %2887 = vmatpush.msra.mxu0 %v461
  %2888 = vmatmul.f32.gmra.mxu0 %v2840
  %v2889 = vpop.f32.mrf.mxu0
  %v2890 = vadd.f32 %v2870, %v2889
  %2891 = vdwg.mxu0
  %2892 = vmatpush.msra.mxu0 %v492
  %2893 = vmatpush.msra.mxu0 %v491
  %2894 = vmatpush.msra.mxu0 %v490
  %2895 = vmatpush.msra.mxu0 %v489
  %2896 = vmatpush.msra.mxu0 %v488
  %2897 = vmatpush.msra.mxu0 %v487
  %2898 = vmatpush.msra.mxu0 %v486
  %2899 = vmatpush.msra.mxu0 %v485
  %2900 = vmatpush.msra.mxu0 %v484
  %2901 = vmatpush.msra.mxu0 %v483
  %2902 = vmatpush.msra.mxu0 %v482
  %2903 = vmatpush.msra.mxu0 %v481
  %2904 = vmatpush.msra.mxu0 %v480
  %2905 = vmatpush.msra.mxu0 %v479
  %2906 = vmatpush.msra.mxu0 %v478
  %2907 = vmatpush.msra.mxu0 %v477
  %2908 = vmatmul.f32.gmra.mxu0 %v2845
  %v2909 = vpop.f32.mrf.mxu0
  %v2910 = vadd.f32 %v2890, %v2909
  %2911 = vdwg.mxu0
  %2912 = vmatpush.msra.mxu0 %v508
  %2913 = vmatpush.msra.mxu0 %v507
  %2914 = vmatpush.msra.mxu0 %v506
  %2915 = vmatpush.msra.mxu0 %v505
  %2916 = vmatpush.msra.mxu0 %v504
  %2917 = vmatpush.msra.mxu0 %v503
  %2918 = vmatpush.msra.mxu0 %v502
  %2919 = vmatpush.msra.mxu0 %v501
  %2920 = vmatpush.msra.mxu0 %v500
  %2921 = vmatpush.msra.mxu0 %v499
  %2922 = vmatpush.msra.mxu0 %v498
  %2923 = vmatpush.msra.mxu0 %v497
  %2924 = vmatpush.msra.mxu0 %v496
  %2925 = vmatpush.msra.mxu0 %v495
  %2926 = vmatpush.msra.mxu0 %v494
  %2927 = vmatpush.msra.mxu0 %v493
  %2928 = vmatmul.f32.gmra.mxu0 %v2850
  %v2929 = vpop.f32.mrf.mxu0
  %v2930 = vadd.f32 %v2910, %v2929
  %2931 = vdwg.mxu0
  %v2932 = vmax.f32 %v2930, 0.0
  %2933 = vst [vmem:[#allocation3 + $0x2a] sm:$0x3] %v2932
  %v2934 = vld [vmem:[%s163 + $0x4] sm:$0x1]
  %v2935 = vld [vmem:[%s163 + $0x3c] sm:$0x1]
  %v2936 = vld [vmem:[%s163 + $0x5] sm:$0x1]
  %v2937 = vld [vmem:[%s163 + $0x3d] sm:$0x1]
  %v2938 = vld [vmem:[%s191 + $0x4] sm:$0x1]
  %v2939 = vld [vmem:[%s191 + $0x3c] sm:$0x1]
  %v2940 = vld [vmem:[%s191 + $0x5] sm:$0x1]
  %v2941 = vld [vmem:[%s191 + $0x3d] sm:$0x1]
  %v2944 = vrot.slane %v2935, 7
  %v2945 = vsel %vm521, %v2944, %v2934
  %v2949 = vrot.slane %v2937, 7
  %v2950 = vsel %vm521, %v2949, %v2936
  %v2954 = vrot.slane %v2939, 7
  %v2955 = vsel %vm521, %v2954, %v2938
  %v2959 = vrot.slane %v2941, 7
  %v2960 = vsel %vm521, %v2959, %v2940
  %2962 = vmatpush.msra.mxu0 %v460
  %2963 = vmatpush.msra.mxu0 %v459
  %2964 = vmatpush.msra.mxu0 %v458
  %2965 = vmatpush.msra.mxu0 %v457
  %2966 = vmatpush.msra.mxu0 %v456
  %2967 = vmatpush.msra.mxu0 %v455
  %2968 = vmatpush.msra.mxu0 %v454
  %2969 = vmatpush.msra.mxu0 %v453
  %2970 = vmatpush.msra.mxu0 %v452
  %2971 = vmatpush.msra.mxu0 %v451
  %2972 = vmatpush.msra.mxu0 %v450
  %2973 = vmatpush.msra.mxu0 %v449
  %2974 = vmatpush.msra.mxu0 %v448
  %2975 = vmatpush.msra.mxu0 %v447
  %2976 = vmatpush.msra.mxu0 %v446
  %2977 = vmatpush.msra.mxu0 %v445
  %2978 = vmatmul.f32.gmra.mxu0 %v2945
  %v2979 = vpop.f32.mrf.mxu0
  %v2980 = vadd.f32 %v540, %v2979
  %2981 = vdwg.mxu0
  %2982 = vmatpush.msra.mxu0 %v476
  %2983 = vmatpush.msra.mxu0 %v475
  %2984 = vmatpush.msra.mxu0 %v474
  %2985 = vmatpush.msra.mxu0 %v473
  %2986 = vmatpush.msra.mxu0 %v472
  %2987 = vmatpush.msra.mxu0 %v471
  %2988 = vmatpush.msra.mxu0 %v470
  %2989 = vmatpush.msra.mxu0 %v469
  %2990 = vmatpush.msra.mxu0 %v468
  %2991 = vmatpush.msra.mxu0 %v467
  %2992 = vmatpush.msra.mxu0 %v466
  %2993 = vmatpush.msra.mxu0 %v465
  %2994 = vmatpush.msra.mxu0 %v464
  %2995 = vmatpush.msra.mxu0 %v463
  %2996 = vmatpush.msra.mxu0 %v462
  %2997 = vmatpush.msra.mxu0 %v461
  %2998 = vmatmul.f32.gmra.mxu0 %v2950
  %v2999 = vpop.f32.mrf.mxu0
  %v3000 = vadd.f32 %v2980, %v2999
  %3001 = vdwg.mxu0
  %3002 = vmatpush.msra.mxu0 %v492
  %3003 = vmatpush.msra.mxu0 %v491
  %3004 = vmatpush.msra.mxu0 %v490
  %3005 = vmatpush.msra.mxu0 %v489
  %3006 = vmatpush.msra.mxu0 %v488
  %3007 = vmatpush.msra.mxu0 %v487
  %3008 = vmatpush.msra.mxu0 %v486
  %3009 = vmatpush.msra.mxu0 %v485
  %3010 = vmatpush.msra.mxu0 %v484
  %3011 = vmatpush.msra.mxu0 %v483
  %3012 = vmatpush.msra.mxu0 %v482
  %3013 = vmatpush.msra.mxu0 %v481
  %3014 = vmatpush.msra.mxu0 %v480
  %3015 = vmatpush.msra.mxu0 %v479
  %3016 = vmatpush.msra.mxu0 %v478
  %3017 = vmatpush.msra.mxu0 %v477
  %3018 = vmatmul.f32.gmra.mxu0 %v2955
  %v3019 = vpop.f32.mrf.mxu0
  %v3020 = vadd.f32 %v3000, %v3019
  %3021 = vdwg.mxu0
  %3022 = vmatpush.msra.mxu0 %v508
  %3023 = vmatpush.msra.mxu0 %v507
  %3024 = vmatpush.msra.mxu0 %v506
  %3025 = vmatpush.msra.mxu0 %v505
  %3026 = vmatpush.msra.mxu0 %v504
  %3027 = vmatpush.msra.mxu0 %v503
  %3028 = vmatpush.msra.mxu0 %v502
  %3029 = vmatpush.msra.mxu0 %v501
  %3030 = vmatpush.msra.mxu0 %v500
  %3031 = vmatpush.msra.mxu0 %v499
  %3032 = vmatpush.msra.mxu0 %v498
  %3033 = vmatpush.msra.mxu0 %v497
  %3034 = vmatpush.msra.mxu0 %v496
  %3035 = vmatpush.msra.mxu0 %v495
  %3036 = vmatpush.msra.mxu0 %v494
  %3037 = vmatpush.msra.mxu0 %v493
  %3038 = vmatmul.f32.gmra.mxu0 %v2960
  %v3039 = vpop.f32.mrf.mxu0
  %v3040 = vadd.f32 %v3020, %v3039
  %3041 = vdwg.mxu0
  %v3042 = vmax.f32 %v3040, 0.0
  %3043 = vst [vmem:[#allocation3 + $0x2c] sm:$0x3] %v3042
  %v3044 = vld [vmem:[%s163 + $0x5] sm:$0x1]
  %v3045 = vld [vmem:[%s163 + $0x3d] sm:$0x1]
  %v3046 = vld [vmem:[%s163 + $0x6] sm:$0x1]
  %v3047 = vld [vmem:[%s163 + $0x3e] sm:$0x1]
  %v3048 = vld [vmem:[%s191 + $0x5] sm:$0x1]
  %v3049 = vld [vmem:[%s191 + $0x3d] sm:$0x1]
  %v3050 = vld [vmem:[%s191 + $0x6] sm:$0x1]
  %v3051 = vld [vmem:[%s191 + $0x3e] sm:$0x1]
  %v3054 = vrot.slane %v3045, 7
  %v3055 = vsel %vm521, %v3054, %v3044
  %v3059 = vrot.slane %v3047, 7
  %v3060 = vsel %vm521, %v3059, %v3046
  %v3064 = vrot.slane %v3049, 7
  %v3065 = vsel %vm521, %v3064, %v3048
  %v3069 = vrot.slane %v3051, 7
  %v3070 = vsel %vm521, %v3069, %v3050
  %3072 = vmatpush.msra.mxu0 %v460
  %3073 = vmatpush.msra.mxu0 %v459
  %3074 = vmatpush.msra.mxu0 %v458
  %3075 = vmatpush.msra.mxu0 %v457
  %3076 = vmatpush.msra.mxu0 %v456
  %3077 = vmatpush.msra.mxu0 %v455
  %3078 = vmatpush.msra.mxu0 %v454
  %3079 = vmatpush.msra.mxu0 %v453
  %3080 = vmatpush.msra.mxu0 %v452
  %3081 = vmatpush.msra.mxu0 %v451
  %3082 = vmatpush.msra.mxu0 %v450
  %3083 = vmatpush.msra.mxu0 %v449
  %3084 = vmatpush.msra.mxu0 %v448
  %3085 = vmatpush.msra.mxu0 %v447
  %3086 = vmatpush.msra.mxu0 %v446
  %3087 = vmatpush.msra.mxu0 %v445
  %3088 = vmatmul.f32.gmra.mxu0 %v3055
  %v3089 = vpop.f32.mrf.mxu0
  %v3090 = vadd.f32 %v540, %v3089
  %3091 = vdwg.mxu0
  %3092 = vmatpush.msra.mxu0 %v476
  %3093 = vmatpush.msra.mxu0 %v475
  %3094 = vmatpush.msra.mxu0 %v474
  %3095 = vmatpush.msra.mxu0 %v473
  %3096 = vmatpush.msra.mxu0 %v472
  %3097 = vmatpush.msra.mxu0 %v471
  %3098 = vmatpush.msra.mxu0 %v470
  %3099 = vmatpush.msra.mxu0 %v469
  %3100 = vmatpush.msra.mxu0 %v468
  %3101 = vmatpush.msra.mxu0 %v467
  %3102 = vmatpush.msra.mxu0 %v466
  %3103 = vmatpush.msra.mxu0 %v465
  %3104 = vmatpush.msra.mxu0 %v464
  %3105 = vmatpush.msra.mxu0 %v463
  %3106 = vmatpush.msra.mxu0 %v462
  %3107 = vmatpush.msra.mxu0 %v461
  %3108 = vmatmul.f32.gmra.mxu0 %v3060
  %v3109 = vpop.f32.mrf.mxu0
  %v3110 = vadd.f32 %v3090, %v3109
  %3111 = vdwg.mxu0
  %3112 = vmatpush.msra.mxu0 %v492
  %3113 = vmatpush.msra.mxu0 %v491
  %3114 = vmatpush.msra.mxu0 %v490
  %3115 = vmatpush.msra.mxu0 %v489
  %3116 = vmatpush.msra.mxu0 %v488
  %3117 = vmatpush.msra.mxu0 %v487
  %3118 = vmatpush.msra.mxu0 %v486
  %3119 = vmatpush.msra.mxu0 %v485
  %3120 = vmatpush.msra.mxu0 %v484
  %3121 = vmatpush.msra.mxu0 %v483
  %3122 = vmatpush.msra.mxu0 %v482
  %3123 = vmatpush.msra.mxu0 %v481
  %3124 = vmatpush.msra.mxu0 %v480
  %3125 = vmatpush.msra.mxu0 %v479
  %3126 = vmatpush.msra.mxu0 %v478
  %3127 = vmatpush.msra.mxu0 %v477
  %3128 = vmatmul.f32.gmra.mxu0 %v3065
  %v3129 = vpop.f32.mrf.mxu0
  %v3130 = vadd.f32 %v3110, %v3129
  %3131 = vdwg.mxu0
  %3132 = vmatpush.msra.mxu0 %v508
  %3133 = vmatpush.msra.mxu0 %v507
  %3134 = vmatpush.msra.mxu0 %v506
  %3135 = vmatpush.msra.mxu0 %v505
  %3136 = vmatpush.msra.mxu0 %v504
  %3137 = vmatpush.msra.mxu0 %v503
  %3138 = vmatpush.msra.mxu0 %v502
  %3139 = vmatpush.msra.mxu0 %v501
  %3140 = vmatpush.msra.mxu0 %v500
  %3141 = vmatpush.msra.mxu0 %v499
  %3142 = vmatpush.msra.mxu0 %v498
  %3143 = vmatpush.msra.mxu0 %v497
  %3144 = vmatpush.msra.mxu0 %v496
  %3145 = vmatpush.msra.mxu0 %v495
  %3146 = vmatpush.msra.mxu0 %v494
  %3147 = vmatpush.msra.mxu0 %v493
  %3148 = vmatmul.f32.gmra.mxu0 %v3070
  %v3149 = vpop.f32.mrf.mxu0
  %v3150 = vadd.f32 %v3130, %v3149
  %3151 = vdwg.mxu0
  %v3152 = vmax.f32 %v3150, 0.0
  %3153 = vst [vmem:[#allocation3 + $0x2e] sm:$0x3] %v3152
  %v3154 = vld [vmem:[%s191] sm:$0x1]
  %v3155 = vld [vmem:[%s191 + $0x38] sm:$0x1]
  %v3156 = vld [vmem:[%s191 + $0x1] sm:$0x1]
  %v3157 = vld [vmem:[%s191 + $0x39] sm:$0x1]
  %v3158 = vld [vmem:[%s219] sm:$0x1]
  %v3159 = vld [vmem:[%s219 + $0x38] sm:$0x1]
  %v3160 = vld [vmem:[%s219 + $0x1] sm:$0x1]
  %v3161 = vld [vmem:[%s219 + $0x39] sm:$0x1]
  %v3164 = vrot.slane %v3155, 7
  %v3165 = vsel %vm521, %v3164, %v3154
  %v3169 = vrot.slane %v3157, 7
  %v3170 = vsel %vm521, %v3169, %v3156
  %v3174 = vrot.slane %v3159, 7
  %v3175 = vsel %vm521, %v3174, %v3158
  %v3179 = vrot.slane %v3161, 7
  %v3180 = vsel %vm521, %v3179, %v3160
  %3182 = vmatpush.msra.mxu0 %v460
  %3183 = vmatpush.msra.mxu0 %v459
  %3184 = vmatpush.msra.mxu0 %v458
  %3185 = vmatpush.msra.mxu0 %v457
  %3186 = vmatpush.msra.mxu0 %v456
  %3187 = vmatpush.msra.mxu0 %v455
  %3188 = vmatpush.msra.mxu0 %v454
  %3189 = vmatpush.msra.mxu0 %v453
  %3190 = vmatpush.msra.mxu0 %v452
  %3191 = vmatpush.msra.mxu0 %v451
  %3192 = vmatpush.msra.mxu0 %v450
  %3193 = vmatpush.msra.mxu0 %v449
  %3194 = vmatpush.msra.mxu0 %v448
  %3195 = vmatpush.msra.mxu0 %v447
  %3196 = vmatpush.msra.mxu0 %v446
  %3197 = vmatpush.msra.mxu0 %v445
  %3198 = vmatmul.f32.gmra.mxu0 %v3165
  %v3199 = vpop.f32.mrf.mxu0
  %v3200 = vadd.f32 %v540, %v3199
  %3201 = vdwg.mxu0
  %3202 = vmatpush.msra.mxu0 %v476
  %3203 = vmatpush.msra.mxu0 %v475
  %3204 = vmatpush.msra.mxu0 %v474
  %3205 = vmatpush.msra.mxu0 %v473
  %3206 = vmatpush.msra.mxu0 %v472
  %3207 = vmatpush.msra.mxu0 %v471
  %3208 = vmatpush.msra.mxu0 %v470
  %3209 = vmatpush.msra.mxu0 %v469
  %3210 = vmatpush.msra.mxu0 %v468
  %3211 = vmatpush.msra.mxu0 %v467
  %3212 = vmatpush.msra.mxu0 %v466
  %3213 = vmatpush.msra.mxu0 %v465
  %3214 = vmatpush.msra.mxu0 %v464
  %3215 = vmatpush.msra.mxu0 %v463
  %3216 = vmatpush.msra.mxu0 %v462
  %3217 = vmatpush.msra.mxu0 %v461
  %3218 = vmatmul.f32.gmra.mxu0 %v3170
  %v3219 = vpop.f32.mrf.mxu0
  %v3220 = vadd.f32 %v3200, %v3219
  %3221 = vdwg.mxu0
  %3222 = vmatpush.msra.mxu0 %v492
  %3223 = vmatpush.msra.mxu0 %v491
  %3224 = vmatpush.msra.mxu0 %v490
  %3225 = vmatpush.msra.mxu0 %v489
  %3226 = vmatpush.msra.mxu0 %v488
  %3227 = vmatpush.msra.mxu0 %v487
  %3228 = vmatpush.msra.mxu0 %v486
  %3229 = vmatpush.msra.mxu0 %v485
  %3230 = vmatpush.msra.mxu0 %v484
  %3231 = vmatpush.msra.mxu0 %v483
  %3232 = vmatpush.msra.mxu0 %v482
  %3233 = vmatpush.msra.mxu0 %v481
  %3234 = vmatpush.msra.mxu0 %v480
  %3235 = vmatpush.msra.mxu0 %v479
  %3236 = vmatpush.msra.mxu0 %v478
  %3237 = vmatpush.msra.mxu0 %v477
  %3238 = vmatmul.f32.gmra.mxu0 %v3175
  %v3239 = vpop.f32.mrf.mxu0
  %v3240 = vadd.f32 %v3220, %v3239
  %3241 = vdwg.mxu0
  %3242 = vmatpush.msra.mxu0 %v508
  %3243 = vmatpush.msra.mxu0 %v507
  %3244 = vmatpush.msra.mxu0 %v506
  %3245 = vmatpush.msra.mxu0 %v505
  %3246 = vmatpush.msra.mxu0 %v504
  %3247 = vmatpush.msra.mxu0 %v503
  %3248 = vmatpush.msra.mxu0 %v502
  %3249 = vmatpush.msra.mxu0 %v501
  %3250 = vmatpush.msra.mxu0 %v500
  %3251 = vmatpush.msra.mxu0 %v499
  %3252 = vmatpush.msra.mxu0 %v498
  %3253 = vmatpush.msra.mxu0 %v497
  %3254 = vmatpush.msra.mxu0 %v496
  %3255 = vmatpush.msra.mxu0 %v495
  %3256 = vmatpush.msra.mxu0 %v494
  %3257 = vmatpush.msra.mxu0 %v493
  %3258 = vmatmul.f32.gmra.mxu0 %v3180
  %v3259 = vpop.f32.mrf.mxu0
  %v3260 = vadd.f32 %v3240, %v3259
  %3261 = vdwg.mxu0
  %v3262 = vmax.f32 %v3260, 0.0
  %3263 = vst [vmem:[#allocation3 + $0x30] sm:$0x3] %v3262
  %v3264 = vld [vmem:[%s191 + $0x1] sm:$0x1]
  %v3265 = vld [vmem:[%s191 + $0x39] sm:$0x1]
  %v3266 = vld [vmem:[%s191 + $0x2] sm:$0x1]
  %v3267 = vld [vmem:[%s191 + $0x3a] sm:$0x1]
  %v3268 = vld [vmem:[%s219 + $0x1] sm:$0x1]
  %v3269 = vld [vmem:[%s219 + $0x39] sm:$0x1]
  %v3270 = vld [vmem:[%s219 + $0x2] sm:$0x1]
  %v3271 = vld [vmem:[%s219 + $0x3a] sm:$0x1]
  %v3274 = vrot.slane %v3265, 7
  %v3275 = vsel %vm521, %v3274, %v3264
  %v3279 = vrot.slane %v3267, 7
  %v3280 = vsel %vm521, %v3279, %v3266
  %v3284 = vrot.slane %v3269, 7
  %v3285 = vsel %vm521, %v3284, %v3268
  %v3289 = vrot.slane %v3271, 7
  %v3290 = vsel %vm521, %v3289, %v3270
  %3292 = vmatpush.msra.mxu0 %v460
  %3293 = vmatpush.msra.mxu0 %v459
  %3294 = vmatpush.msra.mxu0 %v458
  %3295 = vmatpush.msra.mxu0 %v457
  %3296 = vmatpush.msra.mxu0 %v456
  %3297 = vmatpush.msra.mxu0 %v455
  %3298 = vmatpush.msra.mxu0 %v454
  %3299 = vmatpush.msra.mxu0 %v453
  %3300 = vmatpush.msra.mxu0 %v452
  %3301 = vmatpush.msra.mxu0 %v451
  %3302 = vmatpush.msra.mxu0 %v450
  %3303 = vmatpush.msra.mxu0 %v449
  %3304 = vmatpush.msra.mxu0 %v448
  %3305 = vmatpush.msra.mxu0 %v447
  %3306 = vmatpush.msra.mxu0 %v446
  %3307 = vmatpush.msra.mxu0 %v445
  %3308 = vmatmul.f32.gmra.mxu0 %v3275
  %v3309 = vpop.f32.mrf.mxu0
  %v3310 = vadd.f32 %v540, %v3309
  %3311 = vdwg.mxu0
  %3312 = vmatpush.msra.mxu0 %v476
  %3313 = vmatpush.msra.mxu0 %v475
  %3314 = vmatpush.msra.mxu0 %v474
  %3315 = vmatpush.msra.mxu0 %v473
  %3316 = vmatpush.msra.mxu0 %v472
  %3317 = vmatpush.msra.mxu0 %v471
  %3318 = vmatpush.msra.mxu0 %v470
  %3319 = vmatpush.msra.mxu0 %v469
  %3320 = vmatpush.msra.mxu0 %v468
  %3321 = vmatpush.msra.mxu0 %v467
  %3322 = vmatpush.msra.mxu0 %v466
  %3323 = vmatpush.msra.mxu0 %v465
  %3324 = vmatpush.msra.mxu0 %v464
  %3325 = vmatpush.msra.mxu0 %v463
  %3326 = vmatpush.msra.mxu0 %v462
  %3327 = vmatpush.msra.mxu0 %v461
  %3328 = vmatmul.f32.gmra.mxu0 %v3280
  %v3329 = vpop.f32.mrf.mxu0
  %v3330 = vadd.f32 %v3310, %v3329
  %3331 = vdwg.mxu0
  %3332 = vmatpush.msra.mxu0 %v492
  %3333 = vmatpush.msra.mxu0 %v491
  %3334 = vmatpush.msra.mxu0 %v490
  %3335 = vmatpush.msra.mxu0 %v489
  %3336 = vmatpush.msra.mxu0 %v488
  %3337 = vmatpush.msra.mxu0 %v487
  %3338 = vmatpush.msra.mxu0 %v486
  %3339 = vmatpush.msra.mxu0 %v485
  %3340 = vmatpush.msra.mxu0 %v484
  %3341 = vmatpush.msra.mxu0 %v483
  %3342 = vmatpush.msra.mxu0 %v482
  %3343 = vmatpush.msra.mxu0 %v481
  %3344 = vmatpush.msra.mxu0 %v480
  %3345 = vmatpush.msra.mxu0 %v479
  %3346 = vmatpush.msra.mxu0 %v478
  %3347 = vmatpush.msra.mxu0 %v477
  %3348 = vmatmul.f32.gmra.mxu0 %v3285
  %v3349 = vpop.f32.mrf.mxu0
  %v3350 = vadd.f32 %v3330, %v3349
  %3351 = vdwg.mxu0
  %3352 = vmatpush.msra.mxu0 %v508
  %3353 = vmatpush.msra.mxu0 %v507
  %3354 = vmatpush.msra.mxu0 %v506
  %3355 = vmatpush.msra.mxu0 %v505
  %3356 = vmatpush.msra.mxu0 %v504
  %3357 = vmatpush.msra.mxu0 %v503
  %3358 = vmatpush.msra.mxu0 %v502
  %3359 = vmatpush.msra.mxu0 %v501
  %3360 = vmatpush.msra.mxu0 %v500
  %3361 = vmatpush.msra.mxu0 %v499
  %3362 = vmatpush.msra.mxu0 %v498
  %3363 = vmatpush.msra.mxu0 %v497
  %3364 = vmatpush.msra.mxu0 %v496
  %3365 = vmatpush.msra.mxu0 %v495
  %3366 = vmatpush.msra.mxu0 %v494
  %3367 = vmatpush.msra.mxu0 %v493
  %3368 = vmatmul.f32.gmra.mxu0 %v3290
  %v3369 = vpop.f32.mrf.mxu0
  %v3370 = vadd.f32 %v3350, %v3369
  %3371 = vdwg.mxu0
  %v3372 = vmax.f32 %v3370, 0.0
  %3373 = vst [vmem:[#allocation3 + $0x32] sm:$0x3] %v3372
  %v3374 = vld [vmem:[%s191 + $0x2] sm:$0x1]
  %v3375 = vld [vmem:[%s191 + $0x3a] sm:$0x1]
  %v3376 = vld [vmem:[%s191 + $0x3] sm:$0x1]
  %v3377 = vld [vmem:[%s191 + $0x3b] sm:$0x1]
  %v3378 = vld [vmem:[%s219 + $0x2] sm:$0x1]
  %v3379 = vld [vmem:[%s219 + $0x3a] sm:$0x1]
  %v3380 = vld [vmem:[%s219 + $0x3] sm:$0x1]
  %v3381 = vld [vmem:[%s219 + $0x3b] sm:$0x1]
  %v3384 = vrot.slane %v3375, 7
  %v3385 = vsel %vm521, %v3384, %v3374
  %v3389 = vrot.slane %v3377, 7
  %v3390 = vsel %vm521, %v3389, %v3376
  %v3394 = vrot.slane %v3379, 7
  %v3395 = vsel %vm521, %v3394, %v3378
  %v3399 = vrot.slane %v3381, 7
  %v3400 = vsel %vm521, %v3399, %v3380
  %3402 = vmatpush.msra.mxu0 %v460
  %3403 = vmatpush.msra.mxu0 %v459
  %3404 = vmatpush.msra.mxu0 %v458
  %3405 = vmatpush.msra.mxu0 %v457
  %3406 = vmatpush.msra.mxu0 %v456
  %3407 = vmatpush.msra.mxu0 %v455
  %3408 = vmatpush.msra.mxu0 %v454
  %3409 = vmatpush.msra.mxu0 %v453
  %3410 = vmatpush.msra.mxu0 %v452
  %3411 = vmatpush.msra.mxu0 %v451
  %3412 = vmatpush.msra.mxu0 %v450
  %3413 = vmatpush.msra.mxu0 %v449
  %3414 = vmatpush.msra.mxu0 %v448
  %3415 = vmatpush.msra.mxu0 %v447
  %3416 = vmatpush.msra.mxu0 %v446
  %3417 = vmatpush.msra.mxu0 %v445
  %3418 = vmatmul.f32.gmra.mxu0 %v3385
  %v3419 = vpop.f32.mrf.mxu0
  %v3420 = vadd.f32 %v540, %v3419
  %3421 = vdwg.mxu0
  %3422 = vmatpush.msra.mxu0 %v476
  %3423 = vmatpush.msra.mxu0 %v475
  %3424 = vmatpush.msra.mxu0 %v474
  %3425 = vmatpush.msra.mxu0 %v473
  %3426 = vmatpush.msra.mxu0 %v472
  %3427 = vmatpush.msra.mxu0 %v471
  %3428 = vmatpush.msra.mxu0 %v470
  %3429 = vmatpush.msra.mxu0 %v469
  %3430 = vmatpush.msra.mxu0 %v468
  %3431 = vmatpush.msra.mxu0 %v467
  %3432 = vmatpush.msra.mxu0 %v466
  %3433 = vmatpush.msra.mxu0 %v465
  %3434 = vmatpush.msra.mxu0 %v464
  %3435 = vmatpush.msra.mxu0 %v463
  %3436 = vmatpush.msra.mxu0 %v462
  %3437 = vmatpush.msra.mxu0 %v461
  %3438 = vmatmul.f32.gmra.mxu0 %v3390
  %v3439 = vpop.f32.mrf.mxu0
  %v3440 = vadd.f32 %v3420, %v3439
  %3441 = vdwg.mxu0
  %3442 = vmatpush.msra.mxu0 %v492
  %3443 = vmatpush.msra.mxu0 %v491
  %3444 = vmatpush.msra.mxu0 %v490
  %3445 = vmatpush.msra.mxu0 %v489
  %3446 = vmatpush.msra.mxu0 %v488
  %3447 = vmatpush.msra.mxu0 %v487
  %3448 = vmatpush.msra.mxu0 %v486
  %3449 = vmatpush.msra.mxu0 %v485
  %3450 = vmatpush.msra.mxu0 %v484
  %3451 = vmatpush.msra.mxu0 %v483
  %3452 = vmatpush.msra.mxu0 %v482
  %3453 = vmatpush.msra.mxu0 %v481
  %3454 = vmatpush.msra.mxu0 %v480
  %3455 = vmatpush.msra.mxu0 %v479
  %3456 = vmatpush.msra.mxu0 %v478
  %3457 = vmatpush.msra.mxu0 %v477
  %3458 = vmatmul.f32.gmra.mxu0 %v3395
  %v3459 = vpop.f32.mrf.mxu0
  %v3460 = vadd.f32 %v3440, %v3459
  %3461 = vdwg.mxu0
  %3462 = vmatpush.msra.mxu0 %v508
  %3463 = vmatpush.msra.mxu0 %v507
  %3464 = vmatpush.msra.mxu0 %v506
  %3465 = vmatpush.msra.mxu0 %v505
  %3466 = vmatpush.msra.mxu0 %v504
  %3467 = vmatpush.msra.mxu0 %v503
  %3468 = vmatpush.msra.mxu0 %v502
  %3469 = vmatpush.msra.mxu0 %v501
  %3470 = vmatpush.msra.mxu0 %v500
  %3471 = vmatpush.msra.mxu0 %v499
  %3472 = vmatpush.msra.mxu0 %v498
  %3473 = vmatpush.msra.mxu0 %v497
  %3474 = vmatpush.msra.mxu0 %v496
  %3475 = vmatpush.msra.mxu0 %v495
  %3476 = vmatpush.msra.mxu0 %v494
  %3477 = vmatpush.msra.mxu0 %v493
  %3478 = vmatmul.f32.gmra.mxu0 %v3400
  %v3479 = vpop.f32.mrf.mxu0
  %v3480 = vadd.f32 %v3460, %v3479
  %3481 = vdwg.mxu0
  %v3482 = vmax.f32 %v3480, 0.0
  %3483 = vst [vmem:[#allocation3 + $0x34] sm:$0x3] %v3482
  %v3484 = vld [vmem:[%s191 + $0x3] sm:$0x1]
  %v3485 = vld [vmem:[%s191 + $0x3b] sm:$0x1]
  %v3486 = vld [vmem:[%s191 + $0x4] sm:$0x1]
  %v3487 = vld [vmem:[%s191 + $0x3c] sm:$0x1]
  %v3488 = vld [vmem:[%s219 + $0x3] sm:$0x1]
  %v3489 = vld [vmem:[%s219 + $0x3b] sm:$0x1]
  %v3490 = vld [vmem:[%s219 + $0x4] sm:$0x1]
  %v3491 = vld [vmem:[%s219 + $0x3c] sm:$0x1]
  %v3494 = vrot.slane %v3485, 7
  %v3495 = vsel %vm521, %v3494, %v3484
  %v3499 = vrot.slane %v3487, 7
  %v3500 = vsel %vm521, %v3499, %v3486
  %v3504 = vrot.slane %v3489, 7
  %v3505 = vsel %vm521, %v3504, %v3488
  %v3509 = vrot.slane %v3491, 7
  %v3510 = vsel %vm521, %v3509, %v3490
  %3512 = vmatpush.msra.mxu0 %v460
  %3513 = vmatpush.msra.mxu0 %v459
  %3514 = vmatpush.msra.mxu0 %v458
  %3515 = vmatpush.msra.mxu0 %v457
  %3516 = vmatpush.msra.mxu0 %v456
  %3517 = vmatpush.msra.mxu0 %v455
  %3518 = vmatpush.msra.mxu0 %v454
  %3519 = vmatpush.msra.mxu0 %v453
  %3520 = vmatpush.msra.mxu0 %v452
  %3521 = vmatpush.msra.mxu0 %v451
  %3522 = vmatpush.msra.mxu0 %v450
  %3523 = vmatpush.msra.mxu0 %v449
  %3524 = vmatpush.msra.mxu0 %v448
  %3525 = vmatpush.msra.mxu0 %v447
  %3526 = vmatpush.msra.mxu0 %v446
  %3527 = vmatpush.msra.mxu0 %v445
  %3528 = vmatmul.f32.gmra.mxu0 %v3495
  %v3529 = vpop.f32.mrf.mxu0
  %v3530 = vadd.f32 %v540, %v3529
  %3531 = vdwg.mxu0
  %3532 = vmatpush.msra.mxu0 %v476
  %3533 = vmatpush.msra.mxu0 %v475
  %3534 = vmatpush.msra.mxu0 %v474
  %3535 = vmatpush.msra.mxu0 %v473
  %3536 = vmatpush.msra.mxu0 %v472
  %3537 = vmatpush.msra.mxu0 %v471
  %3538 = vmatpush.msra.mxu0 %v470
  %3539 = vmatpush.msra.mxu0 %v469
  %3540 = vmatpush.msra.mxu0 %v468
  %3541 = vmatpush.msra.mxu0 %v467
  %3542 = vmatpush.msra.mxu0 %v466
  %3543 = vmatpush.msra.mxu0 %v465
  %3544 = vmatpush.msra.mxu0 %v464
  %3545 = vmatpush.msra.mxu0 %v463
  %3546 = vmatpush.msra.mxu0 %v462
  %3547 = vmatpush.msra.mxu0 %v461
  %3548 = vmatmul.f32.gmra.mxu0 %v3500
  %v3549 = vpop.f32.mrf.mxu0
  %v3550 = vadd.f32 %v3530, %v3549
  %3551 = vdwg.mxu0
  %3552 = vmatpush.msra.mxu0 %v492
  %3553 = vmatpush.msra.mxu0 %v491
  %3554 = vmatpush.msra.mxu0 %v490
  %3555 = vmatpush.msra.mxu0 %v489
  %3556 = vmatpush.msra.mxu0 %v488
  %3557 = vmatpush.msra.mxu0 %v487
  %3558 = vmatpush.msra.mxu0 %v486
  %3559 = vmatpush.msra.mxu0 %v485
  %3560 = vmatpush.msra.mxu0 %v484
  %3561 = vmatpush.msra.mxu0 %v483
  %3562 = vmatpush.msra.mxu0 %v482
  %3563 = vmatpush.msra.mxu0 %v481
  %3564 = vmatpush.msra.mxu0 %v480
  %3565 = vmatpush.msra.mxu0 %v479
  %3566 = vmatpush.msra.mxu0 %v478
  %3567 = vmatpush.msra.mxu0 %v477
  %3568 = vmatmul.f32.gmra.mxu0 %v3505
  %v3569 = vpop.f32.mrf.mxu0
  %v3570 = vadd.f32 %v3550, %v3569
  %3571 = vdwg.mxu0
  %3572 = vmatpush.msra.mxu0 %v508
  %3573 = vmatpush.msra.mxu0 %v507
  %3574 = vmatpush.msra.mxu0 %v506
  %3575 = vmatpush.msra.mxu0 %v505
  %3576 = vmatpush.msra.mxu0 %v504
  %3577 = vmatpush.msra.mxu0 %v503
  %3578 = vmatpush.msra.mxu0 %v502
  %3579 = vmatpush.msra.mxu0 %v501
  %3580 = vmatpush.msra.mxu0 %v500
  %3581 = vmatpush.msra.mxu0 %v499
  %3582 = vmatpush.msra.mxu0 %v498
  %3583 = vmatpush.msra.mxu0 %v497
  %3584 = vmatpush.msra.mxu0 %v496
  %3585 = vmatpush.msra.mxu0 %v495
  %3586 = vmatpush.msra.mxu0 %v494
  %3587 = vmatpush.msra.mxu0 %v493
  %3588 = vmatmul.f32.gmra.mxu0 %v3510
  %v3589 = vpop.f32.mrf.mxu0
  %v3590 = vadd.f32 %v3570, %v3589
  %3591 = vdwg.mxu0
  %v3592 = vmax.f32 %v3590, 0.0
  %3593 = vst [vmem:[#allocation3 + $0x36] sm:$0x3] %v3592
  %v3594 = vld [vmem:[%s191 + $0x4] sm:$0x1]
  %v3595 = vld [vmem:[%s191 + $0x3c] sm:$0x1]
  %v3596 = vld [vmem:[%s191 + $0x5] sm:$0x1]
  %v3597 = vld [vmem:[%s191 + $0x3d] sm:$0x1]
  %v3598 = vld [vmem:[%s219 + $0x4] sm:$0x1]
  %v3599 = vld [vmem:[%s219 + $0x3c] sm:$0x1]
  %v3600 = vld [vmem:[%s219 + $0x5] sm:$0x1]
  %v3601 = vld [vmem:[%s219 + $0x3d] sm:$0x1]
  %v3604 = vrot.slane %v3595, 7
  %v3605 = vsel %vm521, %v3604, %v3594
  %v3609 = vrot.slane %v3597, 7
  %v3610 = vsel %vm521, %v3609, %v3596
  %v3614 = vrot.slane %v3599, 7
  %v3615 = vsel %vm521, %v3614, %v3598
  %v3619 = vrot.slane %v3601, 7
  %v3620 = vsel %vm521, %v3619, %v3600
  %3622 = vmatpush.msra.mxu0 %v460
  %3623 = vmatpush.msra.mxu0 %v459
  %3624 = vmatpush.msra.mxu0 %v458
  %3625 = vmatpush.msra.mxu0 %v457
  %3626 = vmatpush.msra.mxu0 %v456
  %3627 = vmatpush.msra.mxu0 %v455
  %3628 = vmatpush.msra.mxu0 %v454
  %3629 = vmatpush.msra.mxu0 %v453
  %3630 = vmatpush.msra.mxu0 %v452
  %3631 = vmatpush.msra.mxu0 %v451
  %3632 = vmatpush.msra.mxu0 %v450
  %3633 = vmatpush.msra.mxu0 %v449
  %3634 = vmatpush.msra.mxu0 %v448
  %3635 = vmatpush.msra.mxu0 %v447
  %3636 = vmatpush.msra.mxu0 %v446
  %3637 = vmatpush.msra.mxu0 %v445
  %3638 = vmatmul.f32.gmra.mxu0 %v3605
  %v3639 = vpop.f32.mrf.mxu0
  %v3640 = vadd.f32 %v540, %v3639
  %3641 = vdwg.mxu0
  %3642 = vmatpush.msra.mxu0 %v476
  %3643 = vmatpush.msra.mxu0 %v475
  %3644 = vmatpush.msra.mxu0 %v474
  %3645 = vmatpush.msra.mxu0 %v473
  %3646 = vmatpush.msra.mxu0 %v472
  %3647 = vmatpush.msra.mxu0 %v471
  %3648 = vmatpush.msra.mxu0 %v470
  %3649 = vmatpush.msra.mxu0 %v469
  %3650 = vmatpush.msra.mxu0 %v468
  %3651 = vmatpush.msra.mxu0 %v467
  %3652 = vmatpush.msra.mxu0 %v466
  %3653 = vmatpush.msra.mxu0 %v465
  %3654 = vmatpush.msra.mxu0 %v464
  %3655 = vmatpush.msra.mxu0 %v463
  %3656 = vmatpush.msra.mxu0 %v462
  %3657 = vmatpush.msra.mxu0 %v461
  %3658 = vmatmul.f32.gmra.mxu0 %v3610
  %v3659 = vpop.f32.mrf.mxu0
  %v3660 = vadd.f32 %v3640, %v3659
  %3661 = vdwg.mxu0
  %3662 = vmatpush.msra.mxu0 %v492
  %3663 = vmatpush.msra.mxu0 %v491
  %3664 = vmatpush.msra.mxu0 %v490
  %3665 = vmatpush.msra.mxu0 %v489
  %3666 = vmatpush.msra.mxu0 %v488
  %3667 = vmatpush.msra.mxu0 %v487
  %3668 = vmatpush.msra.mxu0 %v486
  %3669 = vmatpush.msra.mxu0 %v485
  %3670 = vmatpush.msra.mxu0 %v484
  %3671 = vmatpush.msra.mxu0 %v483
  %3672 = vmatpush.msra.mxu0 %v482
  %3673 = vmatpush.msra.mxu0 %v481
  %3674 = vmatpush.msra.mxu0 %v480
  %3675 = vmatpush.msra.mxu0 %v479
  %3676 = vmatpush.msra.mxu0 %v478
  %3677 = vmatpush.msra.mxu0 %v477
  %3678 = vmatmul.f32.gmra.mxu0 %v3615
  %v3679 = vpop.f32.mrf.mxu0
  %v3680 = vadd.f32 %v3660, %v3679
  %3681 = vdwg.mxu0
  %3682 = vmatpush.msra.mxu0 %v508
  %3683 = vmatpush.msra.mxu0 %v507
  %3684 = vmatpush.msra.mxu0 %v506
  %3685 = vmatpush.msra.mxu0 %v505
  %3686 = vmatpush.msra.mxu0 %v504
  %3687 = vmatpush.msra.mxu0 %v503
  %3688 = vmatpush.msra.mxu0 %v502
  %3689 = vmatpush.msra.mxu0 %v501
  %3690 = vmatpush.msra.mxu0 %v500
  %3691 = vmatpush.msra.mxu0 %v499
  %3692 = vmatpush.msra.mxu0 %v498
  %3693 = vmatpush.msra.mxu0 %v497
  %3694 = vmatpush.msra.mxu0 %v496
  %3695 = vmatpush.msra.mxu0 %v495
  %3696 = vmatpush.msra.mxu0 %v494
  %3697 = vmatpush.msra.mxu0 %v493
  %3698 = vmatmul.f32.gmra.mxu0 %v3620
  %v3699 = vpop.f32.mrf.mxu0
  %v3700 = vadd.f32 %v3680, %v3699
  %3701 = vdwg.mxu0
  %v3702 = vmax.f32 %v3700, 0.0
  %3703 = vst [vmem:[#allocation3 + $0x38] sm:$0x3] %v3702
  %v3704 = vld [vmem:[%s191 + $0x5] sm:$0x1]
  %v3705 = vld [vmem:[%s191 + $0x3d] sm:$0x1]
  %v3706 = vld [vmem:[%s191 + $0x6] sm:$0x1]
  %v3707 = vld [vmem:[%s191 + $0x3e] sm:$0x1]
  %v3708 = vld [vmem:[%s219 + $0x5] sm:$0x1]
  %v3709 = vld [vmem:[%s219 + $0x3d] sm:$0x1]
  %v3710 = vld [vmem:[%s219 + $0x6] sm:$0x1]
  %v3711 = vld [vmem:[%s219 + $0x3e] sm:$0x1]
  %v3714 = vrot.slane %v3705, 7
  %v3715 = vsel %vm521, %v3714, %v3704
  %v3719 = vrot.slane %v3707, 7
  %v3720 = vsel %vm521, %v3719, %v3706
  %v3724 = vrot.slane %v3709, 7
  %v3725 = vsel %vm521, %v3724, %v3708
  %v3729 = vrot.slane %v3711, 7
  %v3730 = vsel %vm521, %v3729, %v3710
  %3732 = vmatpush.msra.mxu0 %v460
  %3733 = vmatpush.msra.mxu0 %v459
  %3734 = vmatpush.msra.mxu0 %v458
  %3735 = vmatpush.msra.mxu0 %v457
  %3736 = vmatpush.msra.mxu0 %v456
  %3737 = vmatpush.msra.mxu0 %v455
  %3738 = vmatpush.msra.mxu0 %v454
  %3739 = vmatpush.msra.mxu0 %v453
  %3740 = vmatpush.msra.mxu0 %v452
  %3741 = vmatpush.msra.mxu0 %v451
  %3742 = vmatpush.msra.mxu0 %v450
  %3743 = vmatpush.msra.mxu0 %v449
  %3744 = vmatpush.msra.mxu0 %v448
  %3745 = vmatpush.msra.mxu0 %v447
  %3746 = vmatpush.msra.mxu0 %v446
  %3747 = vmatpush.msra.mxu0 %v445
  %3748 = vmatmul.f32.gmra.mxu0 %v3715
  %v3749 = vpop.f32.mrf.mxu0
  %v3750 = vadd.f32 %v540, %v3749
  %3751 = vdwg.mxu0
  %3752 = vmatpush.msra.mxu0 %v476
  %3753 = vmatpush.msra.mxu0 %v475
  %3754 = vmatpush.msra.mxu0 %v474
  %3755 = vmatpush.msra.mxu0 %v473
  %3756 = vmatpush.msra.mxu0 %v472
  %3757 = vmatpush.msra.mxu0 %v471
  %3758 = vmatpush.msra.mxu0 %v470
  %3759 = vmatpush.msra.mxu0 %v469
  %3760 = vmatpush.msra.mxu0 %v468
  %3761 = vmatpush.msra.mxu0 %v467
  %3762 = vmatpush.msra.mxu0 %v466
  %3763 = vmatpush.msra.mxu0 %v465
  %3764 = vmatpush.msra.mxu0 %v464
  %3765 = vmatpush.msra.mxu0 %v463
  %3766 = vmatpush.msra.mxu0 %v462
  %3767 = vmatpush.msra.mxu0 %v461
  %3768 = vmatmul.f32.gmra.mxu0 %v3720
  %v3769 = vpop.f32.mrf.mxu0
  %v3770 = vadd.f32 %v3750, %v3769
  %3771 = vdwg.mxu0
  %3772 = vmatpush.msra.mxu0 %v492
  %3773 = vmatpush.msra.mxu0 %v491
  %3774 = vmatpush.msra.mxu0 %v490
  %3775 = vmatpush.msra.mxu0 %v489
  %3776 = vmatpush.msra.mxu0 %v488
  %3777 = vmatpush.msra.mxu0 %v487
  %3778 = vmatpush.msra.mxu0 %v486
  %3779 = vmatpush.msra.mxu0 %v485
  %3780 = vmatpush.msra.mxu0 %v484
  %3781 = vmatpush.msra.mxu0 %v483
  %3782 = vmatpush.msra.mxu0 %v482
  %3783 = vmatpush.msra.mxu0 %v481
  %3784 = vmatpush.msra.mxu0 %v480
  %3785 = vmatpush.msra.mxu0 %v479
  %3786 = vmatpush.msra.mxu0 %v478
  %3787 = vmatpush.msra.mxu0 %v477
  %3788 = vmatmul.f32.gmra.mxu0 %v3725
  %v3789 = vpop.f32.mrf.mxu0
  %v3790 = vadd.f32 %v3770, %v3789
  %3791 = vdwg.mxu0
  %3792 = vmatpush.msra.mxu0 %v508
  %3793 = vmatpush.msra.mxu0 %v507
  %3794 = vmatpush.msra.mxu0 %v506
  %3795 = vmatpush.msra.mxu0 %v505
  %3796 = vmatpush.msra.mxu0 %v504
  %3797 = vmatpush.msra.mxu0 %v503
  %3798 = vmatpush.msra.mxu0 %v502
  %3799 = vmatpush.msra.mxu0 %v501
  %3800 = vmatpush.msra.mxu0 %v500
  %3801 = vmatpush.msra.mxu0 %v499
  %3802 = vmatpush.msra.mxu0 %v498
  %3803 = vmatpush.msra.mxu0 %v497
  %3804 = vmatpush.msra.mxu0 %v496
  %3805 = vmatpush.msra.mxu0 %v495
  %3806 = vmatpush.msra.mxu0 %v494
  %3807 = vmatpush.msra.mxu0 %v493
  %3808 = vmatmul.f32.gmra.mxu0 %v3730
  %v3809 = vpop.f32.mrf.mxu0
  %v3810 = vadd.f32 %v3790, %v3809
  %3811 = vdwg.mxu0
  %v3812 = vmax.f32 %v3810, 0.0
  %3813 = vst [vmem:[#allocation3 + $0x3a] sm:$0x3] %v3812
  %v3814 = vld [vmem:[%s219] sm:$0x1]
  %v3815 = vld [vmem:[%s219 + $0x38] sm:$0x1]
  %v3816 = vld [vmem:[%s219 + $0x1] sm:$0x1]
  %v3817 = vld [vmem:[%s219 + $0x39] sm:$0x1]
  %v3818 = vld [vmem:[%s247] sm:$0x1]
  %v3819 = vld [vmem:[%s247 + $0x38] sm:$0x1]
  %v3820 = vld [vmem:[%s247 + $0x1] sm:$0x1]
  %v3821 = vld [vmem:[%s247 + $0x39] sm:$0x1]
  %v3824 = vrot.slane %v3815, 7
  %v3825 = vsel %vm521, %v3824, %v3814
  %v3829 = vrot.slane %v3817, 7
  %v3830 = vsel %vm521, %v3829, %v3816
  %v3834 = vrot.slane %v3819, 7
  %v3835 = vsel %vm521, %v3834, %v3818
  %v3839 = vrot.slane %v3821, 7
  %v3840 = vsel %vm521, %v3839, %v3820
  %3842 = vmatpush.msra.mxu0 %v460
  %3843 = vmatpush.msra.mxu0 %v459
  %3844 = vmatpush.msra.mxu0 %v458
  %3845 = vmatpush.msra.mxu0 %v457
  %3846 = vmatpush.msra.mxu0 %v456
  %3847 = vmatpush.msra.mxu0 %v455
  %3848 = vmatpush.msra.mxu0 %v454
  %3849 = vmatpush.msra.mxu0 %v453
  %3850 = vmatpush.msra.mxu0 %v452
  %3851 = vmatpush.msra.mxu0 %v451
  %3852 = vmatpush.msra.mxu0 %v450
  %3853 = vmatpush.msra.mxu0 %v449
  %3854 = vmatpush.msra.mxu0 %v448
  %3855 = vmatpush.msra.mxu0 %v447
  %3856 = vmatpush.msra.mxu0 %v446
  %3857 = vmatpush.msra.mxu0 %v445
  %3858 = vmatmul.f32.gmra.mxu0 %v3825
  %v3859 = vpop.f32.mrf.mxu0
  %v3860 = vadd.f32 %v540, %v3859
  %3861 = vdwg.mxu0
  %3862 = vmatpush.msra.mxu0 %v476
  %3863 = vmatpush.msra.mxu0 %v475
  %3864 = vmatpush.msra.mxu0 %v474
  %3865 = vmatpush.msra.mxu0 %v473
  %3866 = vmatpush.msra.mxu0 %v472
  %3867 = vmatpush.msra.mxu0 %v471
  %3868 = vmatpush.msra.mxu0 %v470
  %3869 = vmatpush.msra.mxu0 %v469
  %3870 = vmatpush.msra.mxu0 %v468
  %3871 = vmatpush.msra.mxu0 %v467
  %3872 = vmatpush.msra.mxu0 %v466
  %3873 = vmatpush.msra.mxu0 %v465
  %3874 = vmatpush.msra.mxu0 %v464
  %3875 = vmatpush.msra.mxu0 %v463
  %3876 = vmatpush.msra.mxu0 %v462
  %3877 = vmatpush.msra.mxu0 %v461
  %3878 = vmatmul.f32.gmra.mxu0 %v3830
  %v3879 = vpop.f32.mrf.mxu0
  %v3880 = vadd.f32 %v3860, %v3879
  %3881 = vdwg.mxu0
  %3882 = vmatpush.msra.mxu0 %v492
  %3883 = vmatpush.msra.mxu0 %v491
  %3884 = vmatpush.msra.mxu0 %v490
  %3885 = vmatpush.msra.mxu0 %v489
  %3886 = vmatpush.msra.mxu0 %v488
  %3887 = vmatpush.msra.mxu0 %v487
  %3888 = vmatpush.msra.mxu0 %v486
  %3889 = vmatpush.msra.mxu0 %v485
  %3890 = vmatpush.msra.mxu0 %v484
  %3891 = vmatpush.msra.mxu0 %v483
  %3892 = vmatpush.msra.mxu0 %v482
  %3893 = vmatpush.msra.mxu0 %v481
  %3894 = vmatpush.msra.mxu0 %v480
  %3895 = vmatpush.msra.mxu0 %v479
  %3896 = vmatpush.msra.mxu0 %v478
  %3897 = vmatpush.msra.mxu0 %v477
  %3898 = vmatmul.f32.gmra.mxu0 %v3835
  %v3899 = vpop.f32.mrf.mxu0
  %v3900 = vadd.f32 %v3880, %v3899
  %3901 = vdwg.mxu0
  %3902 = vmatpush.msra.mxu0 %v508
  %3903 = vmatpush.msra.mxu0 %v507
  %3904 = vmatpush.msra.mxu0 %v506
  %3905 = vmatpush.msra.mxu0 %v505
  %3906 = vmatpush.msra.mxu0 %v504
  %3907 = vmatpush.msra.mxu0 %v503
  %3908 = vmatpush.msra.mxu0 %v502
  %3909 = vmatpush.msra.mxu0 %v501
  %3910 = vmatpush.msra.mxu0 %v500
  %3911 = vmatpush.msra.mxu0 %v499
  %3912 = vmatpush.msra.mxu0 %v498
  %3913 = vmatpush.msra.mxu0 %v497
  %3914 = vmatpush.msra.mxu0 %v496
  %3915 = vmatpush.msra.mxu0 %v495
  %3916 = vmatpush.msra.mxu0 %v494
  %3917 = vmatpush.msra.mxu0 %v493
  %3918 = vmatmul.f32.gmra.mxu0 %v3840
  %v3919 = vpop.f32.mrf.mxu0
  %v3920 = vadd.f32 %v3900, %v3919
  %3921 = vdwg.mxu0
  %v3922 = vmax.f32 %v3920, 0.0
  %3923 = vst [vmem:[#allocation3 + $0x3c] sm:$0x3] %v3922
  %v3924 = vld [vmem:[%s219 + $0x1] sm:$0x1]
  %v3925 = vld [vmem:[%s219 + $0x39] sm:$0x1]
  %v3926 = vld [vmem:[%s219 + $0x2] sm:$0x1]
  %v3927 = vld [vmem:[%s219 + $0x3a] sm:$0x1]
  %v3928 = vld [vmem:[%s247 + $0x1] sm:$0x1]
  %v3929 = vld [vmem:[%s247 + $0x39] sm:$0x1]
  %v3930 = vld [vmem:[%s247 + $0x2] sm:$0x1]
  %v3931 = vld [vmem:[%s247 + $0x3a] sm:$0x1]
  %v3934 = vrot.slane %v3925, 7
  %v3935 = vsel %vm521, %v3934, %v3924
  %v3939 = vrot.slane %v3927, 7
  %v3940 = vsel %vm521, %v3939, %v3926
  %v3944 = vrot.slane %v3929, 7
  %v3945 = vsel %vm521, %v3944, %v3928
  %v3949 = vrot.slane %v3931, 7
  %v3950 = vsel %vm521, %v3949, %v3930
  %3952 = vmatpush.msra.mxu0 %v460
  %3953 = vmatpush.msra.mxu0 %v459
  %3954 = vmatpush.msra.mxu0 %v458
  %3955 = vmatpush.msra.mxu0 %v457
  %3956 = vmatpush.msra.mxu0 %v456
  %3957 = vmatpush.msra.mxu0 %v455
  %3958 = vmatpush.msra.mxu0 %v454
  %3959 = vmatpush.msra.mxu0 %v453
  %3960 = vmatpush.msra.mxu0 %v452
  %3961 = vmatpush.msra.mxu0 %v451
  %3962 = vmatpush.msra.mxu0 %v450
  %3963 = vmatpush.msra.mxu0 %v449
  %3964 = vmatpush.msra.mxu0 %v448
  %3965 = vmatpush.msra.mxu0 %v447
  %3966 = vmatpush.msra.mxu0 %v446
  %3967 = vmatpush.msra.mxu0 %v445
  %3968 = vmatmul.f32.gmra.mxu0 %v3935
  %v3969 = vpop.f32.mrf.mxu0
  %v3970 = vadd.f32 %v540, %v3969
  %3971 = vdwg.mxu0
  %3972 = vmatpush.msra.mxu0 %v476
  %3973 = vmatpush.msra.mxu0 %v475
  %3974 = vmatpush.msra.mxu0 %v474
  %3975 = vmatpush.msra.mxu0 %v473
  %3976 = vmatpush.msra.mxu0 %v472
  %3977 = vmatpush.msra.mxu0 %v471
  %3978 = vmatpush.msra.mxu0 %v470
  %3979 = vmatpush.msra.mxu0 %v469
  %3980 = vmatpush.msra.mxu0 %v468
  %3981 = vmatpush.msra.mxu0 %v467
  %3982 = vmatpush.msra.mxu0 %v466
  %3983 = vmatpush.msra.mxu0 %v465
  %3984 = vmatpush.msra.mxu0 %v464
  %3985 = vmatpush.msra.mxu0 %v463
  %3986 = vmatpush.msra.mxu0 %v462
  %3987 = vmatpush.msra.mxu0 %v461
  %3988 = vmatmul.f32.gmra.mxu0 %v3940
  %v3989 = vpop.f32.mrf.mxu0
  %v3990 = vadd.f32 %v3970, %v3989
  %3991 = vdwg.mxu0
  %3992 = vmatpush.msra.mxu0 %v492
  %3993 = vmatpush.msra.mxu0 %v491
  %3994 = vmatpush.msra.mxu0 %v490
  %3995 = vmatpush.msra.mxu0 %v489
  %3996 = vmatpush.msra.mxu0 %v488
  %3997 = vmatpush.msra.mxu0 %v487
  %3998 = vmatpush.msra.mxu0 %v486
  %3999 = vmatpush.msra.mxu0 %v485
  %4000 = vmatpush.msra.mxu0 %v484
  %4001 = vmatpush.msra.mxu0 %v483
  %4002 = vmatpush.msra.mxu0 %v482
  %4003 = vmatpush.msra.mxu0 %v481
  %4004 = vmatpush.msra.mxu0 %v480
  %4005 = vmatpush.msra.mxu0 %v479
  %4006 = vmatpush.msra.mxu0 %v478
  %4007 = vmatpush.msra.mxu0 %v477
  %4008 = vmatmul.f32.gmra.mxu0 %v3945
  %v4009 = vpop.f32.mrf.mxu0
  %v4010 = vadd.f32 %v3990, %v4009
  %4011 = vdwg.mxu0
  %4012 = vmatpush.msra.mxu0 %v508
  %4013 = vmatpush.msra.mxu0 %v507
  %4014 = vmatpush.msra.mxu0 %v506
  %4015 = vmatpush.msra.mxu0 %v505
  %4016 = vmatpush.msra.mxu0 %v504
  %4017 = vmatpush.msra.mxu0 %v503
  %4018 = vmatpush.msra.mxu0 %v502
  %4019 = vmatpush.msra.mxu0 %v501
  %4020 = vmatpush.msra.mxu0 %v500
  %4021 = vmatpush.msra.mxu0 %v499
  %4022 = vmatpush.msra.mxu0 %v498
  %4023 = vmatpush.msra.mxu0 %v497
  %4024 = vmatpush.msra.mxu0 %v496
  %4025 = vmatpush.msra.mxu0 %v495
  %4026 = vmatpush.msra.mxu0 %v494
  %4027 = vmatpush.msra.mxu0 %v493
  %4028 = vmatmul.f32.gmra.mxu0 %v3950
  %v4029 = vpop.f32.mrf.mxu0
  %v4030 = vadd.f32 %v4010, %v4029
  %4031 = vdwg.mxu0
  %v4032 = vmax.f32 %v4030, 0.0
  %4033 = vst [vmem:[#allocation3 + $0x3e] sm:$0x3] %v4032
  %v4034 = vld [vmem:[%s219 + $0x2] sm:$0x1]
  %v4035 = vld [vmem:[%s219 + $0x3a] sm:$0x1]
  %v4036 = vld [vmem:[%s219 + $0x3] sm:$0x1]
  %v4037 = vld [vmem:[%s219 + $0x3b] sm:$0x1]
  %v4038 = vld [vmem:[%s247 + $0x2] sm:$0x1]
  %v4039 = vld [vmem:[%s247 + $0x3a] sm:$0x1]
  %v4040 = vld [vmem:[%s247 + $0x3] sm:$0x1]
  %v4041 = vld [vmem:[%s247 + $0x3b] sm:$0x1]
  %v4044 = vrot.slane %v4035, 7
  %v4045 = vsel %vm521, %v4044, %v4034
  %v4049 = vrot.slane %v4037, 7
  %v4050 = vsel %vm521, %v4049, %v4036
  %v4054 = vrot.slane %v4039, 7
  %v4055 = vsel %vm521, %v4054, %v4038
  %v4059 = vrot.slane %v4041, 7
  %v4060 = vsel %vm521, %v4059, %v4040
  %4062 = vmatpush.msra.mxu0 %v460
  %4063 = vmatpush.msra.mxu0 %v459
  %4064 = vmatpush.msra.mxu0 %v458
  %4065 = vmatpush.msra.mxu0 %v457
  %4066 = vmatpush.msra.mxu0 %v456
  %4067 = vmatpush.msra.mxu0 %v455
  %4068 = vmatpush.msra.mxu0 %v454
  %4069 = vmatpush.msra.mxu0 %v453
  %4070 = vmatpush.msra.mxu0 %v452
  %4071 = vmatpush.msra.mxu0 %v451
  %4072 = vmatpush.msra.mxu0 %v450
  %4073 = vmatpush.msra.mxu0 %v449
  %4074 = vmatpush.msra.mxu0 %v448
  %4075 = vmatpush.msra.mxu0 %v447
  %4076 = vmatpush.msra.mxu0 %v446
  %4077 = vmatpush.msra.mxu0 %v445
  %4078 = vmatmul.f32.gmra.mxu0 %v4045
  %v4079 = vpop.f32.mrf.mxu0
  %v4080 = vadd.f32 %v540, %v4079
  %4081 = vdwg.mxu0
  %4082 = vmatpush.msra.mxu0 %v476
  %4083 = vmatpush.msra.mxu0 %v475
  %4084 = vmatpush.msra.mxu0 %v474
  %4085 = vmatpush.msra.mxu0 %v473
  %4086 = vmatpush.msra.mxu0 %v472
  %4087 = vmatpush.msra.mxu0 %v471
  %4088 = vmatpush.msra.mxu0 %v470
  %4089 = vmatpush.msra.mxu0 %v469
  %4090 = vmatpush.msra.mxu0 %v468
  %4091 = vmatpush.msra.mxu0 %v467
  %4092 = vmatpush.msra.mxu0 %v466
  %4093 = vmatpush.msra.mxu0 %v465
  %4094 = vmatpush.msra.mxu0 %v464
  %4095 = vmatpush.msra.mxu0 %v463
  %4096 = vmatpush.msra.mxu0 %v462
  %4097 = vmatpush.msra.mxu0 %v461
  %4098 = vmatmul.f32.gmra.mxu0 %v4050
  %v4099 = vpop.f32.mrf.mxu0
  %v4100 = vadd.f32 %v4080, %v4099
  %4101 = vdwg.mxu0
  %4102 = vmatpush.msra.mxu0 %v492
  %4103 = vmatpush.msra.mxu0 %v491
  %4104 = vmatpush.msra.mxu0 %v490
  %4105 = vmatpush.msra.mxu0 %v489
  %4106 = vmatpush.msra.mxu0 %v488
  %4107 = vmatpush.msra.mxu0 %v487
  %4108 = vmatpush.msra.mxu0 %v486
  %4109 = vmatpush.msra.mxu0 %v485
  %4110 = vmatpush.msra.mxu0 %v484
  %4111 = vmatpush.msra.mxu0 %v483
  %4112 = vmatpush.msra.mxu0 %v482
  %4113 = vmatpush.msra.mxu0 %v481
  %4114 = vmatpush.msra.mxu0 %v480
  %4115 = vmatpush.msra.mxu0 %v479
  %4116 = vmatpush.msra.mxu0 %v478
  %4117 = vmatpush.msra.mxu0 %v477
  %4118 = vmatmul.f32.gmra.mxu0 %v4055
  %v4119 = vpop.f32.mrf.mxu0
  %v4120 = vadd.f32 %v4100, %v4119
  %4121 = vdwg.mxu0
  %4122 = vmatpush.msra.mxu0 %v508
  %4123 = vmatpush.msra.mxu0 %v507
  %4124 = vmatpush.msra.mxu0 %v506
  %4125 = vmatpush.msra.mxu0 %v505
  %4126 = vmatpush.msra.mxu0 %v504
  %4127 = vmatpush.msra.mxu0 %v503
  %4128 = vmatpush.msra.mxu0 %v502
  %4129 = vmatpush.msra.mxu0 %v501
  %4130 = vmatpush.msra.mxu0 %v500
  %4131 = vmatpush.msra.mxu0 %v499
  %4132 = vmatpush.msra.mxu0 %v498
  %4133 = vmatpush.msra.mxu0 %v497
  %4134 = vmatpush.msra.mxu0 %v496
  %4135 = vmatpush.msra.mxu0 %v495
  %4136 = vmatpush.msra.mxu0 %v494
  %4137 = vmatpush.msra.mxu0 %v493
  %4138 = vmatmul.f32.gmra.mxu0 %v4060
  %v4139 = vpop.f32.mrf.mxu0
  %v4140 = vadd.f32 %v4120, %v4139
  %4141 = vdwg.mxu0
  %v4142 = vmax.f32 %v4140, 0.0
  %4143 = vst [vmem:[#allocation3 + $0x40] sm:$0x3] %v4142
  %v4144 = vld [vmem:[%s219 + $0x3] sm:$0x1]
  %v4145 = vld [vmem:[%s219 + $0x3b] sm:$0x1]
  %v4146 = vld [vmem:[%s219 + $0x4] sm:$0x1]
  %v4147 = vld [vmem:[%s219 + $0x3c] sm:$0x1]
  %v4148 = vld [vmem:[%s247 + $0x3] sm:$0x1]
  %v4149 = vld [vmem:[%s247 + $0x3b] sm:$0x1]
  %v4150 = vld [vmem:[%s247 + $0x4] sm:$0x1]
  %v4151 = vld [vmem:[%s247 + $0x3c] sm:$0x1]
  %v4154 = vrot.slane %v4145, 7
  %v4155 = vsel %vm521, %v4154, %v4144
  %v4159 = vrot.slane %v4147, 7
  %v4160 = vsel %vm521, %v4159, %v4146
  %v4164 = vrot.slane %v4149, 7
  %v4165 = vsel %vm521, %v4164, %v4148
  %v4169 = vrot.slane %v4151, 7
  %v4170 = vsel %vm521, %v4169, %v4150
  %4172 = vmatpush.msra.mxu0 %v460
  %4173 = vmatpush.msra.mxu0 %v459
  %4174 = vmatpush.msra.mxu0 %v458
  %4175 = vmatpush.msra.mxu0 %v457
  %4176 = vmatpush.msra.mxu0 %v456
  %4177 = vmatpush.msra.mxu0 %v455
  %4178 = vmatpush.msra.mxu0 %v454
  %4179 = vmatpush.msra.mxu0 %v453
  %4180 = vmatpush.msra.mxu0 %v452
  %4181 = vmatpush.msra.mxu0 %v451
  %4182 = vmatpush.msra.mxu0 %v450
  %4183 = vmatpush.msra.mxu0 %v449
  %4184 = vmatpush.msra.mxu0 %v448
  %4185 = vmatpush.msra.mxu0 %v447
  %4186 = vmatpush.msra.mxu0 %v446
  %4187 = vmatpush.msra.mxu0 %v445
  %4188 = vmatmul.f32.gmra.mxu0 %v4155
  %v4189 = vpop.f32.mrf.mxu0
  %v4190 = vadd.f32 %v540, %v4189
  %4191 = vdwg.mxu0
  %4192 = vmatpush.msra.mxu0 %v476
  %4193 = vmatpush.msra.mxu0 %v475
  %4194 = vmatpush.msra.mxu0 %v474
  %4195 = vmatpush.msra.mxu0 %v473
  %4196 = vmatpush.msra.mxu0 %v472
  %4197 = vmatpush.msra.mxu0 %v471
  %4198 = vmatpush.msra.mxu0 %v470
  %4199 = vmatpush.msra.mxu0 %v469
  %4200 = vmatpush.msra.mxu0 %v468
  %4201 = vmatpush.msra.mxu0 %v467
  %4202 = vmatpush.msra.mxu0 %v466
  %4203 = vmatpush.msra.mxu0 %v465
  %4204 = vmatpush.msra.mxu0 %v464
  %4205 = vmatpush.msra.mxu0 %v463
  %4206 = vmatpush.msra.mxu0 %v462
  %4207 = vmatpush.msra.mxu0 %v461
  %4208 = vmatmul.f32.gmra.mxu0 %v4160
  %v4209 = vpop.f32.mrf.mxu0
  %v4210 = vadd.f32 %v4190, %v4209
  %4211 = vdwg.mxu0
  %4212 = vmatpush.msra.mxu0 %v492
  %4213 = vmatpush.msra.mxu0 %v491
  %4214 = vmatpush.msra.mxu0 %v490
  %4215 = vmatpush.msra.mxu0 %v489
  %4216 = vmatpush.msra.mxu0 %v488
  %4217 = vmatpush.msra.mxu0 %v487
  %4218 = vmatpush.msra.mxu0 %v486
  %4219 = vmatpush.msra.mxu0 %v485
  %4220 = vmatpush.msra.mxu0 %v484
  %4221 = vmatpush.msra.mxu0 %v483
  %4222 = vmatpush.msra.mxu0 %v482
  %4223 = vmatpush.msra.mxu0 %v481
  %4224 = vmatpush.msra.mxu0 %v480
  %4225 = vmatpush.msra.mxu0 %v479
  %4226 = vmatpush.msra.mxu0 %v478
  %4227 = vmatpush.msra.mxu0 %v477
  %4228 = vmatmul.f32.gmra.mxu0 %v4165
  %v4229 = vpop.f32.mrf.mxu0
  %v4230 = vadd.f32 %v4210, %v4229
  %4231 = vdwg.mxu0
  %4232 = vmatpush.msra.mxu0 %v508
  %4233 = vmatpush.msra.mxu0 %v507
  %4234 = vmatpush.msra.mxu0 %v506
  %4235 = vmatpush.msra.mxu0 %v505
  %4236 = vmatpush.msra.mxu0 %v504
  %4237 = vmatpush.msra.mxu0 %v503
  %4238 = vmatpush.msra.mxu0 %v502
  %4239 = vmatpush.msra.mxu0 %v501
  %4240 = vmatpush.msra.mxu0 %v500
  %4241 = vmatpush.msra.mxu0 %v499
  %4242 = vmatpush.msra.mxu0 %v498
  %4243 = vmatpush.msra.mxu0 %v497
  %4244 = vmatpush.msra.mxu0 %v496
  %4245 = vmatpush.msra.mxu0 %v495
  %4246 = vmatpush.msra.mxu0 %v494
  %4247 = vmatpush.msra.mxu0 %v493
  %4248 = vmatmul.f32.gmra.mxu0 %v4170
  %v4249 = vpop.f32.mrf.mxu0
  %v4250 = vadd.f32 %v4230, %v4249
  %4251 = vdwg.mxu0
  %v4252 = vmax.f32 %v4250, 0.0
  %4253 = vst [vmem:[#allocation3 + $0x42] sm:$0x3] %v4252
  %v4254 = vld [vmem:[%s219 + $0x4] sm:$0x1]
  %v4255 = vld [vmem:[%s219 + $0x3c] sm:$0x1]
  %v4256 = vld [vmem:[%s219 + $0x5] sm:$0x1]
  %v4257 = vld [vmem:[%s219 + $0x3d] sm:$0x1]
  %v4258 = vld [vmem:[%s247 + $0x4] sm:$0x1]
  %v4259 = vld [vmem:[%s247 + $0x3c] sm:$0x1]
  %v4260 = vld [vmem:[%s247 + $0x5] sm:$0x1]
  %v4261 = vld [vmem:[%s247 + $0x3d] sm:$0x1]
  %v4264 = vrot.slane %v4255, 7
  %v4265 = vsel %vm521, %v4264, %v4254
  %v4269 = vrot.slane %v4257, 7
  %v4270 = vsel %vm521, %v4269, %v4256
  %v4274 = vrot.slane %v4259, 7
  %v4275 = vsel %vm521, %v4274, %v4258
  %v4279 = vrot.slane %v4261, 7
  %v4280 = vsel %vm521, %v4279, %v4260
  %4282 = vmatpush.msra.mxu0 %v460
  %4283 = vmatpush.msra.mxu0 %v459
  %4284 = vmatpush.msra.mxu0 %v458
  %4285 = vmatpush.msra.mxu0 %v457
  %4286 = vmatpush.msra.mxu0 %v456
  %4287 = vmatpush.msra.mxu0 %v455
  %4288 = vmatpush.msra.mxu0 %v454
  %4289 = vmatpush.msra.mxu0 %v453
  %4290 = vmatpush.msra.mxu0 %v452
  %4291 = vmatpush.msra.mxu0 %v451
  %4292 = vmatpush.msra.mxu0 %v450
  %4293 = vmatpush.msra.mxu0 %v449
  %4294 = vmatpush.msra.mxu0 %v448
  %4295 = vmatpush.msra.mxu0 %v447
  %4296 = vmatpush.msra.mxu0 %v446
  %4297 = vmatpush.msra.mxu0 %v445
  %4298 = vmatmul.f32.gmra.mxu0 %v4265
  %v4299 = vpop.f32.mrf.mxu0
  %v4300 = vadd.f32 %v540, %v4299
  %4301 = vdwg.mxu0
  %4302 = vmatpush.msra.mxu0 %v476
  %4303 = vmatpush.msra.mxu0 %v475
  %4304 = vmatpush.msra.mxu0 %v474
  %4305 = vmatpush.msra.mxu0 %v473
  %4306 = vmatpush.msra.mxu0 %v472
  %4307 = vmatpush.msra.mxu0 %v471
  %4308 = vmatpush.msra.mxu0 %v470
  %4309 = vmatpush.msra.mxu0 %v469
  %4310 = vmatpush.msra.mxu0 %v468
  %4311 = vmatpush.msra.mxu0 %v467
  %4312 = vmatpush.msra.mxu0 %v466
  %4313 = vmatpush.msra.mxu0 %v465
  %4314 = vmatpush.msra.mxu0 %v464
  %4315 = vmatpush.msra.mxu0 %v463
  %4316 = vmatpush.msra.mxu0 %v462
  %4317 = vmatpush.msra.mxu0 %v461
  %4318 = vmatmul.f32.gmra.mxu0 %v4270
  %v4319 = vpop.f32.mrf.mxu0
  %v4320 = vadd.f32 %v4300, %v4319
  %4321 = vdwg.mxu0
  %4322 = vmatpush.msra.mxu0 %v492
  %4323 = vmatpush.msra.mxu0 %v491
  %4324 = vmatpush.msra.mxu0 %v490
  %4325 = vmatpush.msra.mxu0 %v489
  %4326 = vmatpush.msra.mxu0 %v488
  %4327 = vmatpush.msra.mxu0 %v487
  %4328 = vmatpush.msra.mxu0 %v486
  %4329 = vmatpush.msra.mxu0 %v485
  %4330 = vmatpush.msra.mxu0 %v484
  %4331 = vmatpush.msra.mxu0 %v483
  %4332 = vmatpush.msra.mxu0 %v482
  %4333 = vmatpush.msra.mxu0 %v481
  %4334 = vmatpush.msra.mxu0 %v480
  %4335 = vmatpush.msra.mxu0 %v479
  %4336 = vmatpush.msra.mxu0 %v478
  %4337 = vmatpush.msra.mxu0 %v477
  %4338 = vmatmul.f32.gmra.mxu0 %v4275
  %v4339 = vpop.f32.mrf.mxu0
  %v4340 = vadd.f32 %v4320, %v4339
  %4341 = vdwg.mxu0
  %4342 = vmatpush.msra.mxu0 %v508
  %4343 = vmatpush.msra.mxu0 %v507
  %4344 = vmatpush.msra.mxu0 %v506
  %4345 = vmatpush.msra.mxu0 %v505
  %4346 = vmatpush.msra.mxu0 %v504
  %4347 = vmatpush.msra.mxu0 %v503
  %4348 = vmatpush.msra.mxu0 %v502
  %4349 = vmatpush.msra.mxu0 %v501
  %4350 = vmatpush.msra.mxu0 %v500
  %4351 = vmatpush.msra.mxu0 %v499
  %4352 = vmatpush.msra.mxu0 %v498
  %4353 = vmatpush.msra.mxu0 %v497
  %4354 = vmatpush.msra.mxu0 %v496
  %4355 = vmatpush.msra.mxu0 %v495
  %4356 = vmatpush.msra.mxu0 %v494
  %4357 = vmatpush.msra.mxu0 %v493
  %4358 = vmatmul.f32.gmra.mxu0 %v4280
  %v4359 = vpop.f32.mrf.mxu0
  %v4360 = vadd.f32 %v4340, %v4359
  %4361 = vdwg.mxu0
  %v4362 = vmax.f32 %v4360, 0.0
  %4363 = vst [vmem:[#allocation3 + $0x44] sm:$0x3] %v4362
  %v4364 = vld [vmem:[%s219 + $0x5] sm:$0x1]
  %v4365 = vld [vmem:[%s219 + $0x3d] sm:$0x1]
  %v4366 = vld [vmem:[%s219 + $0x6] sm:$0x1]
  %v4367 = vld [vmem:[%s219 + $0x3e] sm:$0x1]
  %v4368 = vld [vmem:[%s247 + $0x5] sm:$0x1]
  %v4369 = vld [vmem:[%s247 + $0x3d] sm:$0x1]
  %v4370 = vld [vmem:[%s247 + $0x6] sm:$0x1]
  %v4371 = vld [vmem:[%s247 + $0x3e] sm:$0x1]
  %v4374 = vrot.slane %v4365, 7
  %v4375 = vsel %vm521, %v4374, %v4364
  %v4379 = vrot.slane %v4367, 7
  %v4380 = vsel %vm521, %v4379, %v4366
  %v4384 = vrot.slane %v4369, 7
  %v4385 = vsel %vm521, %v4384, %v4368
  %v4389 = vrot.slane %v4371, 7
  %v4390 = vsel %vm521, %v4389, %v4370
  %4392 = vmatpush.msra.mxu0 %v460
  %4393 = vmatpush.msra.mxu0 %v459
  %4394 = vmatpush.msra.mxu0 %v458
  %4395 = vmatpush.msra.mxu0 %v457
  %4396 = vmatpush.msra.mxu0 %v456
  %4397 = vmatpush.msra.mxu0 %v455
  %4398 = vmatpush.msra.mxu0 %v454
  %4399 = vmatpush.msra.mxu0 %v453
  %4400 = vmatpush.msra.mxu0 %v452
  %4401 = vmatpush.msra.mxu0 %v451
  %4402 = vmatpush.msra.mxu0 %v450
  %4403 = vmatpush.msra.mxu0 %v449
  %4404 = vmatpush.msra.mxu0 %v448
  %4405 = vmatpush.msra.mxu0 %v447
  %4406 = vmatpush.msra.mxu0 %v446
  %4407 = vmatpush.msra.mxu0 %v445
  %4408 = vmatmul.f32.gmra.mxu0 %v4375
  %v4409 = vpop.f32.mrf.mxu0
  %v4410 = vadd.f32 %v540, %v4409
  %4411 = vdwg.mxu0
  %4412 = vmatpush.msra.mxu0 %v476
  %4413 = vmatpush.msra.mxu0 %v475
  %4414 = vmatpush.msra.mxu0 %v474
  %4415 = vmatpush.msra.mxu0 %v473
  %4416 = vmatpush.msra.mxu0 %v472
  %4417 = vmatpush.msra.mxu0 %v471
  %4418 = vmatpush.msra.mxu0 %v470
  %4419 = vmatpush.msra.mxu0 %v469
  %4420 = vmatpush.msra.mxu0 %v468
  %4421 = vmatpush.msra.mxu0 %v467
  %4422 = vmatpush.msra.mxu0 %v466
  %4423 = vmatpush.msra.mxu0 %v465
  %4424 = vmatpush.msra.mxu0 %v464
  %4425 = vmatpush.msra.mxu0 %v463
  %4426 = vmatpush.msra.mxu0 %v462
  %4427 = vmatpush.msra.mxu0 %v461
  %4428 = vmatmul.f32.gmra.mxu0 %v4380
  %v4429 = vpop.f32.mrf.mxu0
  %v4430 = vadd.f32 %v4410, %v4429
  %4431 = vdwg.mxu0
  %4432 = vmatpush.msra.mxu0 %v492
  %4433 = vmatpush.msra.mxu0 %v491
  %4434 = vmatpush.msra.mxu0 %v490
  %4435 = vmatpush.msra.mxu0 %v489
  %4436 = vmatpush.msra.mxu0 %v488
  %4437 = vmatpush.msra.mxu0 %v487
  %4438 = vmatpush.msra.mxu0 %v486
  %4439 = vmatpush.msra.mxu0 %v485
  %4440 = vmatpush.msra.mxu0 %v484
  %4441 = vmatpush.msra.mxu0 %v483
  %4442 = vmatpush.msra.mxu0 %v482
  %4443 = vmatpush.msra.mxu0 %v481
  %4444 = vmatpush.msra.mxu0 %v480
  %4445 = vmatpush.msra.mxu0 %v479
  %4446 = vmatpush.msra.mxu0 %v478
  %4447 = vmatpush.msra.mxu0 %v477
  %4448 = vmatmul.f32.gmra.mxu0 %v4385
  %v4449 = vpop.f32.mrf.mxu0
  %v4450 = vadd.f32 %v4430, %v4449
  %4451 = vdwg.mxu0
  %4452 = vmatpush.msra.mxu0 %v508
  %4453 = vmatpush.msra.mxu0 %v507
  %4454 = vmatpush.msra.mxu0 %v506
  %4455 = vmatpush.msra.mxu0 %v505
  %4456 = vmatpush.msra.mxu0 %v504
  %4457 = vmatpush.msra.mxu0 %v503
  %4458 = vmatpush.msra.mxu0 %v502
  %4459 = vmatpush.msra.mxu0 %v501
  %4460 = vmatpush.msra.mxu0 %v500
  %4461 = vmatpush.msra.mxu0 %v499
  %4462 = vmatpush.msra.mxu0 %v498
  %4463 = vmatpush.msra.mxu0 %v497
  %4464 = vmatpush.msra.mxu0 %v496
  %4465 = vmatpush.msra.mxu0 %v495
  %4466 = vmatpush.msra.mxu0 %v494
  %4467 = vmatpush.msra.mxu0 %v493
  %4468 = vmatmul.f32.gmra.mxu0 %v4390
  %v4469 = vpop.f32.mrf.mxu0
  %v4470 = vadd.f32 %v4450, %v4469
  %4471 = vdwg.mxu0
  %v4472 = vmax.f32 %v4470, 0.0
  %4473 = vst [vmem:[#allocation3 + $0x46] sm:$0x3] %v4472
  %v4474 = vld [vmem:[#allocation3] sm:$0xff]
  %v4475 = vld [vmem:[#allocation3 + $0x8] sm:$0xff]
  %v4476 = vld [vmem:[#allocation3 + $0x10] sm:$0xff]
  %v4477 = vld [vmem:[#allocation3 + $0x18] sm:$0xff]
  %v4478 = vld [vmem:[#allocation3 + $0x20] sm:$0xff]
  %v4479 = vld [vmem:[#allocation3 + $0x28] sm:$0xff]
  %v4480 = vld [vmem:[#allocation3 + $0x30] sm:$0xff]
  %v4481 = vld [vmem:[#allocation3 + $0x38] sm:$0xff]
  %v4482 = vld [vmem:[#allocation3 + $0x40] sm:$0xff]
  %v4483 = vld [vmem:[%s6] sm:$0xff]
  %v4484 = vld [vmem:[%s6 + $0x8] sm:$0xff]
  %v4485 = vld [vmem:[%s6 + $0x10] sm:$0xff]
  %v4486 = vld [vmem:[%s6 + $0x18] sm:$0xff]
  %v4487 = vld [vmem:[%s6 + $0x20] sm:$0xff]
  %v4488 = vld [vmem:[%s6 + $0x28] sm:$0xff]
  %v4489 = vld [vmem:[%s6 + $0x30] sm:$0xff]
  %v4490 = vld [vmem:[%s6 + $0x38] sm:$0xff]
  %v4491 = vld [vmem:[%s6 + $0x40] sm:$0xff]
  %v4492 = vld [vmem:[%s6 + $0x48] sm:$0xff]
  %v4493 = vld [vmem:[%s6 + $0x50] sm:$0xff]
  %v4494 = vld [vmem:[%s6 + $0x58] sm:$0xff]
  %v4495 = vld [vmem:[%s6 + $0x60] sm:$0xff]
  %v4496 = vld [vmem:[%s6 + $0x68] sm:$0xff]
  %v4497 = vld [vmem:[%s6 + $0x70] sm:$0xff]
  %v4498 = vld [vmem:[%s6 + $0x78] sm:$0xff]
  %v4499 = vld [vmem:[%s6 + $0x80] sm:$0xff]
  %v4500 = vld [vmem:[%s6 + $0x88] sm:$0xff]
  %v4501 = vld [vmem:[%s6 + $0x90] sm:$0xff]
  %v4502 = vld [vmem:[%s6 + $0x98] sm:$0xff]
  %v4503 = vld [vmem:[%s6 + $0xa0] sm:$0xff]
  %v4504 = vld [vmem:[%s6 + $0xa8] sm:$0xff]
  %v4505 = vld [vmem:[%s6 + $0xb0] sm:$0xff]
  %v4506 = vld [vmem:[%s6 + $0xb8] sm:$0xff]
  %v4507 = vld [vmem:[%s6 + $0xc0] sm:$0xff]
  %v4508 = vld [vmem:[%s6 + $0xc8] sm:$0xff]
  %v4509 = vld [vmem:[%s6 + $0xd0] sm:$0xff]
  %v4510 = vld [vmem:[%s6 + $0xd8] sm:$0xff]
  %v4511 = vld [vmem:[%s6 + $0xe0] sm:$0xff]
  %v4512 = vld [vmem:[%s6 + $0xe8] sm:$0xff]
  %v4513 = vld [vmem:[%s6 + $0xf0] sm:$0xff]
  %v4514 = vld [vmem:[%s6 + $0xf8] sm:$0xff]
  %v4515 = vld [vmem:[%s6 + $0x100] sm:$0xff]
  %v4516 = vld [vmem:[%s6 + $0x108] sm:$0xff]
  %v4517 = vld [vmem:[%s6 + $0x110] sm:$0xff]
  %v4518 = vld [vmem:[%s6 + $0x118] sm:$0xff]
  %v4519 = vld [vmem:[%s6 + $0x120] sm:$0xff]
  %v4520 = vld [vmem:[%s6 + $0x128] sm:$0xff]
  %v4521 = vld [vmem:[%s6 + $0x130] sm:$0xff]
  %v4522 = vld [vmem:[%s6 + $0x138] sm:$0xff]
  %v4523 = vld [vmem:[%s6 + $0x140] sm:$0xff]
  %v4524 = vld [vmem:[%s6 + $0x148] sm:$0xff]
  %v4525 = vld [vmem:[%s6 + $0x150] sm:$0xff]
  %v4526 = vld [vmem:[%s6 + $0x158] sm:$0xff]
  %v4527 = vld [vmem:[%s6 + $0x160] sm:$0xff]
  %v4528 = vld [vmem:[%s6 + $0x168] sm:$0xff]
  %v4529 = vld [vmem:[%s6 + $0x170] sm:$0xff]
  %v4530 = vld [vmem:[%s6 + $0x178] sm:$0xff]
  %v4531 = vld [vmem:[%s6 + $0x180] sm:$0xff]
  %v4532 = vld [vmem:[%s6 + $0x188] sm:$0xff]
  %v4533 = vld [vmem:[%s6 + $0x190] sm:$0xff]
  %v4534 = vld [vmem:[%s6 + $0x198] sm:$0xff]
  %v4535 = vld [vmem:[%s6 + $0x1a0] sm:$0xff]
  %v4536 = vld [vmem:[%s6 + $0x1a8] sm:$0xff]
  %v4537 = vld [vmem:[%s6 + $0x1b0] sm:$0xff]
  %v4538 = vld [vmem:[%s6 + $0x1b8] sm:$0xff]
  %v4539 = vld [vmem:[%s6 + $0x1c0] sm:$0xff]
  %v4540 = vld [vmem:[%s6 + $0x1c8] sm:$0xff]
  %v4541 = vld [vmem:[%s6 + $0x1d0] sm:$0xff]
  %v4542 = vld [vmem:[%s6 + $0x1d8] sm:$0xff]
  %v4543 = vld [vmem:[%s6 + $0x1e0] sm:$0xff]
  %v4544 = vld [vmem:[%s6 + $0x1e8] sm:$0xff]
  %v4545 = vld [vmem:[%s6 + $0x1f0] sm:$0xff]
  %v4546 = vld [vmem:[%s6 + $0x1f8] sm:$0xff]
  %v4547 = vld [vmem:[%s6 + $0x200] sm:$0xff]
  %v4548 = vld [vmem:[%s6 + $0x208] sm:$0xff]
  %v4549 = vld [vmem:[%s6 + $0x210] sm:$0xff]
  %v4550 = vld [vmem:[%s6 + $0x218] sm:$0xff]
  %v4551 = vld [vmem:[%s6 + $0x220] sm:$0xff]
  %v4552 = vld [vmem:[%s6 + $0x228] sm:$0xff]
  %v4553 = vld [vmem:[%s6 + $0x230] sm:$0xff]
  %v4554 = vld [vmem:[%s6 + $0x238] sm:$0xff]
  %v4555 = vld [vmem:[%s6 + $0x240] sm:$0xff]
  %v4556 = vld [vmem:[%s6 + $0x248] sm:$0xff]
  %v4557 = vld [vmem:[%s6 + $0x250] sm:$0xff]
  %v4558 = vld [vmem:[%s6 + $0x258] sm:$0xff]
  %v4559 = vld [vmem:[%s6 + $0x260] sm:$0xff]
  %v4560 = vld [vmem:[%s6 + $0x268] sm:$0xff]
  %v4561 = vld [vmem:[%s6 + $0x270] sm:$0xff]
  %v4562 = vld [vmem:[%s6 + $0x278] sm:$0xff]
  %v4563 = vld [vmem:[%s6 + $0x280] sm:$0xff]
  %v4564 = vld [vmem:[%s6 + $0x288] sm:$0xff]
  %v4565 = vld [vmem:[%s6 + $0x290] sm:$0xff]
  %v4566 = vld [vmem:[%s6 + $0x298] sm:$0xff]
  %v4567 = vld [vmem:[%s6 + $0x2a0] sm:$0xff]
  %v4568 = vld [vmem:[%s6 + $0x2a8] sm:$0xff]
  %v4569 = vld [vmem:[%s6 + $0x2b0] sm:$0xff]
  %v4570 = vld [vmem:[%s6 + $0x2b8] sm:$0xff]
  %v4571 = vld [vmem:[%s6 + $0x2c0] sm:$0xff]
  %v4572 = vld [vmem:[%s6 + $0x2c8] sm:$0xff]
  %v4573 = vld [vmem:[%s6 + $0x2d0] sm:$0xff]
  %v4574 = vld [vmem:[%s6 + $0x2d8] sm:$0xff]
  %v4575 = vld [vmem:[%s6 + $0x2e0] sm:$0xff]
  %v4576 = vld [vmem:[%s6 + $0x2e8] sm:$0xff]
  %v4577 = vld [vmem:[%s6 + $0x2f0] sm:$0xff]
  %v4578 = vld [vmem:[%s6 + $0x2f8] sm:$0xff]
  %v4579 = vld [vmem:[%s6 + $0x300] sm:$0xff]
  %v4580 = vld [vmem:[%s6 + $0x308] sm:$0xff]
  %v4581 = vld [vmem:[%s6 + $0x310] sm:$0xff]
  %v4582 = vld [vmem:[%s6 + $0x318] sm:$0xff]
  %v4583 = vld [vmem:[%s6 + $0x320] sm:$0xff]
  %v4584 = vld [vmem:[%s6 + $0x328] sm:$0xff]
  %v4585 = vld [vmem:[%s6 + $0x330] sm:$0xff]
  %v4586 = vld [vmem:[%s6 + $0x338] sm:$0xff]
  %v4587 = vld [vmem:[%s6 + $0x340] sm:$0xff]
  %v4588 = vld [vmem:[%s6 + $0x348] sm:$0xff]
  %v4589 = vld [vmem:[%s6 + $0x350] sm:$0xff]
  %v4590 = vld [vmem:[%s6 + $0x358] sm:$0xff]
  %v4591 = vld [vmem:[%s6 + $0x360] sm:$0xff]
  %v4592 = vld [vmem:[%s6 + $0x368] sm:$0xff]
  %v4593 = vld [vmem:[%s6 + $0x370] sm:$0xff]
  %v4594 = vld [vmem:[%s6 + $0x378] sm:$0xff]
  %v4595 = vld [vmem:[%s6 + $0x380] sm:$0xff]
  %v4596 = vld [vmem:[%s6 + $0x388] sm:$0xff]
  %v4597 = vld [vmem:[%s6 + $0x390] sm:$0xff]
  %v4598 = vld [vmem:[%s6 + $0x398] sm:$0xff]
  %v4599 = vld [vmem:[%s6 + $0x3a0] sm:$0xff]
  %v4600 = vld [vmem:[%s6 + $0x3a8] sm:$0xff]
  %v4601 = vld [vmem:[%s6 + $0x3b0] sm:$0xff]
  %v4602 = vld [vmem:[%s6 + $0x3b8] sm:$0xff]
  %v4603 = vld [vmem:[%s6 + $0x3c0] sm:$0xff]
  %v4604 = vld [vmem:[%s6 + $0x3c8] sm:$0xff]
  %v4605 = vld [vmem:[%s6 + $0x3d0] sm:$0xff]
  %v4606 = vld [vmem:[%s6 + $0x3d8] sm:$0xff]
  %v4607 = vld [vmem:[%s6 + $0x3e0] sm:$0xff]
  %v4608 = vld [vmem:[%s6 + $0x3e8] sm:$0xff]
  %v4609 = vld [vmem:[%s6 + $0x3f0] sm:$0xff]
  %v4610 = vld [vmem:[%s6 + $0x3f8] sm:$0xff]
  %v4611 = vld [vmem:[%s6 + $0x400] sm:$0xff]
  %v4612 = vld [vmem:[%s6 + $0x408] sm:$0xff]
  %v4613 = vld [vmem:[%s6 + $0x410] sm:$0xff]
  %v4614 = vld [vmem:[%s6 + $0x418] sm:$0xff]
  %v4615 = vld [vmem:[%s6 + $0x420] sm:$0xff]
  %v4616 = vld [vmem:[%s6 + $0x428] sm:$0xff]
  %v4617 = vld [vmem:[%s6 + $0x430] sm:$0xff]
  %v4618 = vld [vmem:[%s6 + $0x438] sm:$0xff]
  %v4619 = vld [vmem:[%s6 + $0x440] sm:$0xff]
  %v4620 = vld [vmem:[%s6 + $0x448] sm:$0xff]
  %v4621 = vld [vmem:[%s6 + $0x450] sm:$0xff]
  %v4622 = vld [vmem:[%s6 + $0x458] sm:$0xff]
  %v4623 = vld [vmem:[%s6 + $0x460] sm:$0xff]
  %v4624 = vld [vmem:[%s6 + $0x468] sm:$0xff]
  %v4625 = vld [vmem:[%s6 + $0x470] sm:$0xff]
  %v4626 = vld [vmem:[%s6 + $0x478] sm:$0xff]
  %v4627 = vld [vmem:[%s6 + $0x480] sm:$0xff]
  %v4628 = vld [vmem:[%s6 + $0x488] sm:$0xff]
  %v4629 = vld [vmem:[%s6 + $0x490] sm:$0xff]
  %v4630 = vld [vmem:[%s6 + $0x498] sm:$0xff]
  %v4631 = vld [vmem:[%s6 + $0x4a0] sm:$0xff]
  %v4632 = vld [vmem:[%s6 + $0x4a8] sm:$0xff]
  %v4633 = vld [vmem:[%s6 + $0x4b0] sm:$0xff]
  %v4634 = vld [vmem:[%s6 + $0x4b8] sm:$0xff]
  %v4635 = vld [vmem:[%s6 + $0x4c0] sm:$0xff]
  %v4636 = vld [vmem:[%s6 + $0x4c8] sm:$0xff]
  %v4637 = vld [vmem:[%s6 + $0x4d0] sm:$0xff]
  %v4638 = vld [vmem:[%s6 + $0x4d8] sm:$0xff]
  %v4639 = vld [vmem:[%s6 + $0x4e0] sm:$0xff]
  %v4640 = vld [vmem:[%s6 + $0x4e8] sm:$0xff]
  %v4641 = vld [vmem:[%s6 + $0x4f0] sm:$0xff]
  %v4642 = vld [vmem:[%s6 + $0x4f8] sm:$0xff]
  %v4643 = vld [vmem:[%s6 + $0x500] sm:$0xff]
  %v4644 = vld [vmem:[%s6 + $0x508] sm:$0xff]
  %v4645 = vld [vmem:[%s6 + $0x510] sm:$0xff]
  %v4646 = vld [vmem:[%s6 + $0x518] sm:$0xff]
  %v4647 = vld [vmem:[%s6 + $0x520] sm:$0xff]
  %v4648 = vld [vmem:[%s6 + $0x528] sm:$0xff]
  %v4649 = vld [vmem:[%s6 + $0x530] sm:$0xff]
  %v4650 = vld [vmem:[%s6 + $0x538] sm:$0xff]
  %v4651 = vld [vmem:[%s6 + $0x540] sm:$0xff]
  %v4652 = vld [vmem:[%s6 + $0x548] sm:$0xff]
  %v4653 = vld [vmem:[%s6 + $0x550] sm:$0xff]
  %v4654 = vld [vmem:[%s6 + $0x558] sm:$0xff]
  %v4655 = vld [vmem:[%s6 + $0x560] sm:$0xff]
  %v4656 = vld [vmem:[%s6 + $0x568] sm:$0xff]
  %v4657 = vld [vmem:[%s6 + $0x570] sm:$0xff]
  %v4658 = vld [vmem:[%s6 + $0x578] sm:$0xff]
  %v4659 = vld [vmem:[%s6 + $0x580] sm:$0xff]
  %v4660 = vld [vmem:[%s6 + $0x588] sm:$0xff]
  %v4661 = vld [vmem:[%s6 + $0x590] sm:$0xff]
  %v4662 = vld [vmem:[%s6 + $0x598] sm:$0xff]
  %v4663 = vld [vmem:[%s6 + $0x5a0] sm:$0xff]
  %v4664 = vld [vmem:[%s6 + $0x5a8] sm:$0xff]
  %v4665 = vld [vmem:[%s6 + $0x5b0] sm:$0xff]
  %v4666 = vld [vmem:[%s6 + $0x5b8] sm:$0xff]
  %v4667 = vld [vmem:[%s6 + $0x5c0] sm:$0xff]
  %v4668 = vld [vmem:[%s6 + $0x5c8] sm:$0xff]
  %v4669 = vld [vmem:[%s6 + $0x5d0] sm:$0xff]
  %v4670 = vld [vmem:[%s6 + $0x5d8] sm:$0xff]
  %v4671 = vld [vmem:[%s6 + $0x5e0] sm:$0xff]
  %v4672 = vld [vmem:[%s6 + $0x5e8] sm:$0xff]
  %v4673 = vld [vmem:[%s6 + $0x5f0] sm:$0xff]
  %v4674 = vld [vmem:[%s6 + $0x5f8] sm:$0xff]
  %v4675 = vld [vmem:[%s6 + $0x600] sm:$0xff]
  %v4676 = vld [vmem:[%s6 + $0x608] sm:$0xff]
  %v4677 = vld [vmem:[%s6 + $0x610] sm:$0xff]
  %v4678 = vld [vmem:[%s6 + $0x618] sm:$0xff]
  %v4679 = vld [vmem:[%s6 + $0x620] sm:$0xff]
  %v4680 = vld [vmem:[%s6 + $0x628] sm:$0xff]
  %v4681 = vld [vmem:[%s6 + $0x630] sm:$0xff]
  %v4682 = vld [vmem:[%s6 + $0x638] sm:$0xff]
  %v4683 = vld [vmem:[%s6 + $0x640] sm:$0xff]
  %v4684 = vld [vmem:[%s6 + $0x648] sm:$0xff]
  %v4685 = vld [vmem:[%s6 + $0x650] sm:$0xff]
  %v4686 = vld [vmem:[%s6 + $0x658] sm:$0xff]
  %v4687 = vld [vmem:[%s6 + $0x660] sm:$0xff]
  %v4688 = vld [vmem:[%s6 + $0x668] sm:$0xff]
  %v4689 = vld [vmem:[%s6 + $0x670] sm:$0xff]
  %v4690 = vld [vmem:[%s6 + $0x678] sm:$0xff]
  %v4691 = vld [vmem:[%s6 + $0x680] sm:$0xff]
  %v4692 = vld [vmem:[%s6 + $0x688] sm:$0xff]
  %v4693 = vld [vmem:[%s6 + $0x690] sm:$0xff]
  %v4694 = vld [vmem:[%s6 + $0x698] sm:$0xff]
  %v4695 = vld [vmem:[%s6 + $0x6a0] sm:$0xff]
  %v4696 = vld [vmem:[%s6 + $0x6a8] sm:$0xff]
  %v4697 = vld [vmem:[%s6 + $0x6b0] sm:$0xff]
  %v4698 = vld [vmem:[%s6 + $0x6b8] sm:$0xff]
  %v4699 = vld [vmem:[%s6 + $0x6c0] sm:$0xff]
  %v4700 = vld [vmem:[%s6 + $0x6c8] sm:$0xff]
  %v4701 = vld [vmem:[%s6 + $0x6d0] sm:$0xff]
  %v4702 = vld [vmem:[%s6 + $0x6d8] sm:$0xff]
  %v4703 = vld [vmem:[%s6 + $0x6e0] sm:$0xff]
  %v4704 = vld [vmem:[%s6 + $0x6e8] sm:$0xff]
  %v4705 = vld [vmem:[%s6 + $0x6f0] sm:$0xff]
  %v4706 = vld [vmem:[%s6 + $0x6f8] sm:$0xff]
  %v4707 = vld [vmem:[%s6 + $0x700] sm:$0xff]
  %v4708 = vld [vmem:[%s6 + $0x708] sm:$0xff]
  %v4709 = vld [vmem:[%s6 + $0x710] sm:$0xff]
  %v4710 = vld [vmem:[%s6 + $0x718] sm:$0xff]
  %v4711 = vld [vmem:[%s6 + $0x720] sm:$0xff]
  %v4712 = vld [vmem:[%s6 + $0x728] sm:$0xff]
  %v4713 = vld [vmem:[%s6 + $0x730] sm:$0xff]
  %v4714 = vld [vmem:[%s6 + $0x738] sm:$0xff]
  %v4715 = vld [vmem:[%s6 + $0x740] sm:$0xff]
  %v4716 = vld [vmem:[%s6 + $0x748] sm:$0xff]
  %v4717 = vld [vmem:[%s6 + $0x750] sm:$0xff]
  %v4718 = vld [vmem:[%s6 + $0x758] sm:$0xff]
  %v4719 = vld [vmem:[%s6 + $0x760] sm:$0xff]
  %v4720 = vld [vmem:[%s6 + $0x768] sm:$0xff]
  %v4721 = vld [vmem:[%s6 + $0x770] sm:$0xff]
  %v4722 = vld [vmem:[%s6 + $0x778] sm:$0xff]
  %v4723 = vld [vmem:[%s6 + $0x780] sm:$0xff]
  %v4724 = vld [vmem:[%s6 + $0x788] sm:$0xff]
  %v4725 = vld [vmem:[%s6 + $0x790] sm:$0xff]
  %v4726 = vld [vmem:[%s6 + $0x798] sm:$0xff]
  %v4727 = vld [vmem:[%s6 + $0x7a0] sm:$0xff]
  %v4728 = vld [vmem:[%s6 + $0x7a8] sm:$0xff]
  %v4729 = vld [vmem:[%s6 + $0x7b0] sm:$0xff]
  %v4730 = vld [vmem:[%s6 + $0x7b8] sm:$0xff]
  %v4731 = vld [vmem:[%s6 + $0x7c0] sm:$0xff]
  %v4732 = vld [vmem:[%s6 + $0x7c8] sm:$0xff]
  %v4733 = vld [vmem:[%s6 + $0x7d0] sm:$0xff]
  %v4734 = vld [vmem:[%s6 + $0x7d8] sm:$0xff]
  %v4735 = vld [vmem:[%s6 + $0x7e0] sm:$0xff]
  %v4736 = vld [vmem:[%s6 + $0x7e8] sm:$0xff]
  %v4737 = vld [vmem:[%s6 + $0x7f0] sm:$0xff]
  %v4738 = vld [vmem:[%s6 + $0x7f8] sm:$0xff]
  %v4739 = vld [vmem:[%s6 + $0x800] sm:$0xff]
  %v4740 = vld [vmem:[%s6 + $0x808] sm:$0xff]
  %v4741 = vld [vmem:[%s6 + $0x810] sm:$0xff]
  %v4742 = vld [vmem:[%s6 + $0x818] sm:$0xff]
  %v4743 = vld [vmem:[%s6 + $0x820] sm:$0xff]
  %v4744 = vld [vmem:[%s6 + $0x828] sm:$0xff]
  %v4745 = vld [vmem:[%s6 + $0x830] sm:$0xff]
  %v4746 = vld [vmem:[%s6 + $0x838] sm:$0xff]
  %v4747 = vld [vmem:[%s6 + $0x840] sm:$0xff]
  %v4748 = vld [vmem:[%s6 + $0x848] sm:$0xff]
  %v4749 = vld [vmem:[%s6 + $0x850] sm:$0xff]
  %v4750 = vld [vmem:[%s6 + $0x858] sm:$0xff]
  %v4751 = vld [vmem:[%s6 + $0x860] sm:$0xff]
  %v4752 = vld [vmem:[%s6 + $0x868] sm:$0xff]
  %v4753 = vld [vmem:[%s6 + $0x870] sm:$0xff]
  %v4754 = vld [vmem:[%s6 + $0x878] sm:$0xff]
  %v4755 = vld [vmem:[%s6 + $0x880] sm:$0xff]
  %v4756 = vld [vmem:[%s6 + $0x888] sm:$0xff]
  %v4757 = vld [vmem:[%s6 + $0x890] sm:$0xff]
  %v4758 = vld [vmem:[%s6 + $0x898] sm:$0xff]
  %v4759 = vld [vmem:[%s6 + $0x8a0] sm:$0xff]
  %v4760 = vld [vmem:[%s6 + $0x8a8] sm:$0xff]
  %v4761 = vld [vmem:[%s6 + $0x8b0] sm:$0xff]
  %v4762 = vld [vmem:[%s6 + $0x8b8] sm:$0xff]
  %v4763 = vld [vmem:[%s6 + $0x8c0] sm:$0xff]
  %v4764 = vld [vmem:[%s6 + $0x8c8] sm:$0xff]
  %v4765 = vld [vmem:[%s6 + $0x8d0] sm:$0xff]
  %v4766 = vld [vmem:[%s6 + $0x8d8] sm:$0xff]
  %v4767 = vld [vmem:[%s6 + $0x8e0] sm:$0xff]
  %v4768 = vld [vmem:[%s6 + $0x8e8] sm:$0xff]
  %v4769 = vld [vmem:[%s6 + $0x8f0] sm:$0xff]
  %v4770 = vld [vmem:[%s6 + $0x8f8] sm:$0xff]
  %v4771 = vld [vmem:[%s6 + $0x900] sm:$0xff]
  %v4772 = vld [vmem:[%s6 + $0x908] sm:$0xff]
  %v4773 = vld [vmem:[%s6 + $0x910] sm:$0xff]
  %v4774 = vld [vmem:[%s6 + $0x918] sm:$0xff]
  %v4775 = vld [vmem:[%s6 + $0x920] sm:$0xff]
  %v4776 = vld [vmem:[%s6 + $0x928] sm:$0xff]
  %v4777 = vld [vmem:[%s6 + $0x930] sm:$0xff]
  %v4778 = vld [vmem:[%s6 + $0x938] sm:$0xff]
  %v4779 = vld [vmem:[%s6 + $0x940] sm:$0xff]
  %v4780 = vld [vmem:[%s6 + $0x948] sm:$0xff]
  %v4781 = vld [vmem:[%s6 + $0x950] sm:$0xff]
  %v4782 = vld [vmem:[%s6 + $0x958] sm:$0xff]
  %v4783 = vld [vmem:[%s6 + $0x960] sm:$0xff]
  %v4784 = vld [vmem:[%s6 + $0x968] sm:$0xff]
  %v4785 = vld [vmem:[%s6 + $0x970] sm:$0xff]
  %v4786 = vld [vmem:[%s6 + $0x978] sm:$0xff]
  %v4787 = vld [vmem:[%s6 + $0x980] sm:$0xff]
  %v4788 = vld [vmem:[%s6 + $0x988] sm:$0xff]
  %v4789 = vld [vmem:[%s6 + $0x990] sm:$0xff]
  %v4790 = vld [vmem:[%s6 + $0x998] sm:$0xff]
  %v4791 = vld [vmem:[%s6 + $0x9a0] sm:$0xff]
  %v4792 = vld [vmem:[%s6 + $0x9a8] sm:$0xff]
  %v4793 = vld [vmem:[%s6 + $0x9b0] sm:$0xff]
  %v4794 = vld [vmem:[%s6 + $0x9b8] sm:$0xff]
  %v4795 = vld [vmem:[%s6 + $0x9c0] sm:$0xff]
  %v4796 = vld [vmem:[%s6 + $0x9c8] sm:$0xff]
  %v4797 = vld [vmem:[%s6 + $0x9d0] sm:$0xff]
  %v4798 = vld [vmem:[%s6 + $0x9d8] sm:$0xff]
  %v4799 = vld [vmem:[%s6 + $0x9e0] sm:$0xff]
  %v4800 = vld [vmem:[%s6 + $0x9e8] sm:$0xff]
  %v4801 = vld [vmem:[%s6 + $0x9f0] sm:$0xff]
  %v4802 = vld [vmem:[%s6 + $0x9f8] sm:$0xff]
  %v4803 = vld [vmem:[%s6 + $0xa00] sm:$0xff]
  %v4804 = vld [vmem:[%s6 + $0xa08] sm:$0xff]
  %v4805 = vld [vmem:[%s6 + $0xa10] sm:$0xff]
  %v4806 = vld [vmem:[%s6 + $0xa18] sm:$0xff]
  %v4807 = vld [vmem:[%s6 + $0xa20] sm:$0xff]
  %v4808 = vld [vmem:[%s6 + $0xa28] sm:$0xff]
  %v4809 = vld [vmem:[%s6 + $0xa30] sm:$0xff]
  %v4810 = vld [vmem:[%s6 + $0xa38] sm:$0xff]
  %v4811 = vld [vmem:[%s6 + $0xa40] sm:$0xff]
  %v4812 = vld [vmem:[%s6 + $0xa48] sm:$0xff]
  %v4813 = vld [vmem:[%s6 + $0xa50] sm:$0xff]
  %v4814 = vld [vmem:[%s6 + $0xa58] sm:$0xff]
  %v4815 = vld [vmem:[%s6 + $0xa60] sm:$0xff]
  %v4816 = vld [vmem:[%s6 + $0xa68] sm:$0xff]
  %v4817 = vld [vmem:[%s6 + $0xa70] sm:$0xff]
  %v4818 = vld [vmem:[%s6 + $0xa78] sm:$0xff]
  %v4819 = vld [vmem:[%s6 + $0xa80] sm:$0xff]
  %v4820 = vld [vmem:[%s6 + $0xa88] sm:$0xff]
  %v4821 = vld [vmem:[%s6 + $0xa90] sm:$0xff]
  %v4822 = vld [vmem:[%s6 + $0xa98] sm:$0xff]
  %v4823 = vld [vmem:[%s6 + $0xaa0] sm:$0xff]
  %v4824 = vld [vmem:[%s6 + $0xaa8] sm:$0xff]
  %v4825 = vld [vmem:[%s6 + $0xab0] sm:$0xff]
  %v4826 = vld [vmem:[%s6 + $0xab8] sm:$0xff]
  %v4827 = vld [vmem:[%s6 + $0xac0] sm:$0xff]
  %v4828 = vld [vmem:[%s6 + $0xac8] sm:$0xff]
  %v4829 = vld [vmem:[%s6 + $0xad0] sm:$0xff]
  %v4830 = vld [vmem:[%s6 + $0xad8] sm:$0xff]
  %v4831 = vld [vmem:[%s6 + $0xae0] sm:$0xff]
  %v4832 = vld [vmem:[%s6 + $0xae8] sm:$0xff]
  %v4833 = vld [vmem:[%s6 + $0xaf0] sm:$0xff]
  %v4834 = vld [vmem:[%s6 + $0xaf8] sm:$0xff]
  %v4835 = vld [vmem:[%s6 + $0xb00] sm:$0xff]
  %v4836 = vld [vmem:[%s6 + $0xb08] sm:$0xff]
  %v4837 = vld [vmem:[%s6 + $0xb10] sm:$0xff]
  %v4838 = vld [vmem:[%s6 + $0xb18] sm:$0xff]
  %v4839 = vld [vmem:[%s6 + $0xb20] sm:$0xff]
  %v4840 = vld [vmem:[%s6 + $0xb28] sm:$0xff]
  %v4841 = vld [vmem:[%s6 + $0xb30] sm:$0xff]
  %v4842 = vld [vmem:[%s6 + $0xb38] sm:$0xff]
  %v4843 = vld [vmem:[%s6 + $0xb40] sm:$0xff]
  %v4844 = vld [vmem:[%s6 + $0xb48] sm:$0xff]
  %v4845 = vld [vmem:[%s6 + $0xb50] sm:$0xff]
  %v4846 = vld [vmem:[%s6 + $0xb58] sm:$0xff]
  %v4847 = vld [vmem:[%s6 + $0xb60] sm:$0xff]
  %v4848 = vld [vmem:[%s6 + $0xb68] sm:$0xff]
  %v4849 = vld [vmem:[%s6 + $0xb70] sm:$0xff]
  %v4850 = vld [vmem:[%s6 + $0xb78] sm:$0xff]
  %v4851 = vld [vmem:[%s6 + $0xb80] sm:$0xff]
  %v4852 = vld [vmem:[%s6 + $0xb88] sm:$0xff]
  %v4853 = vld [vmem:[%s6 + $0xb90] sm:$0xff]
  %v4854 = vld [vmem:[%s6 + $0xb98] sm:$0xff]
  %v4855 = vld [vmem:[%s6 + $0xba0] sm:$0xff]
  %v4856 = vld [vmem:[%s6 + $0xba8] sm:$0xff]
  %v4857 = vld [vmem:[%s6 + $0xbb0] sm:$0xff]
  %v4858 = vld [vmem:[%s6 + $0xbb8] sm:$0xff]
  %v4859 = vld [vmem:[%s6 + $0xbc0] sm:$0xff]
  %v4860 = vld [vmem:[%s6 + $0xbc8] sm:$0xff]
  %v4861 = vld [vmem:[%s6 + $0xbd0] sm:$0xff]
  %v4862 = vld [vmem:[%s6 + $0xbd8] sm:$0xff]
  %v4863 = vld [vmem:[%s6 + $0xbe0] sm:$0xff]
  %v4864 = vld [vmem:[%s6 + $0xbe8] sm:$0xff]
  %v4865 = vld [vmem:[%s6 + $0xbf0] sm:$0xff]
  %v4866 = vld [vmem:[%s6 + $0xbf8] sm:$0xff]
  %v4867 = vld [vmem:[%s6 + $0xc00] sm:$0xff]
  %v4868 = vld [vmem:[%s6 + $0xc08] sm:$0xff]
  %v4869 = vld [vmem:[%s6 + $0xc10] sm:$0xff]
  %v4870 = vld [vmem:[%s6 + $0xc18] sm:$0xff]
  %v4871 = vld [vmem:[%s6 + $0xc20] sm:$0xff]
  %v4872 = vld [vmem:[%s6 + $0xc28] sm:$0xff]
  %v4873 = vld [vmem:[%s6 + $0xc30] sm:$0xff]
  %v4874 = vld [vmem:[%s6 + $0xc38] sm:$0xff]
  %v4875 = vld [vmem:[%s6 + $0xc40] sm:$0xff]
  %v4876 = vld [vmem:[%s6 + $0xc48] sm:$0xff]
  %v4877 = vld [vmem:[%s6 + $0xc50] sm:$0xff]
  %v4878 = vld [vmem:[%s6 + $0xc58] sm:$0xff]
  %v4879 = vld [vmem:[%s6 + $0xc60] sm:$0xff]
  %v4880 = vld [vmem:[%s6 + $0xc68] sm:$0xff]
  %v4881 = vld [vmem:[%s6 + $0xc70] sm:$0xff]
  %v4882 = vld [vmem:[%s6 + $0xc78] sm:$0xff]
  %v4883 = vld [vmem:[%s6 + $0xc80] sm:$0xff]
  %v4884 = vld [vmem:[%s6 + $0xc88] sm:$0xff]
  %v4885 = vld [vmem:[%s6 + $0xc90] sm:$0xff]
  %v4886 = vld [vmem:[%s6 + $0xc98] sm:$0xff]
  %v4887 = vld [vmem:[%s6 + $0xca0] sm:$0xff]
  %v4888 = vld [vmem:[%s6 + $0xca8] sm:$0xff]
  %v4889 = vld [vmem:[%s6 + $0xcb0] sm:$0xff]
  %v4890 = vld [vmem:[%s6 + $0xcb8] sm:$0xff]
  %v4891 = vld [vmem:[%s6 + $0xcc0] sm:$0xff]
  %v4892 = vld [vmem:[%s6 + $0xcc8] sm:$0xff]
  %v4893 = vld [vmem:[%s6 + $0xcd0] sm:$0xff]
  %v4894 = vld [vmem:[%s6 + $0xcd8] sm:$0xff]
  %v4895 = vld [vmem:[%s6 + $0xce0] sm:$0xff]
  %v4896 = vld [vmem:[%s6 + $0xce8] sm:$0xff]
  %v4897 = vld [vmem:[%s6 + $0xcf0] sm:$0xff]
  %v4898 = vld [vmem:[%s6 + $0xcf8] sm:$0xff]
  %v4899 = vld [vmem:[%s6 + $0xd00] sm:$0xff]
  %v4900 = vld [vmem:[%s6 + $0xd08] sm:$0xff]
  %v4901 = vld [vmem:[%s6 + $0xd10] sm:$0xff]
  %v4902 = vld [vmem:[%s6 + $0xd18] sm:$0xff]
  %v4903 = vld [vmem:[%s6 + $0xd20] sm:$0xff]
  %v4904 = vld [vmem:[%s6 + $0xd28] sm:$0xff]
  %v4905 = vld [vmem:[%s6 + $0xd30] sm:$0xff]
  %v4906 = vld [vmem:[%s6 + $0xd38] sm:$0xff]
  %v4907 = vld [vmem:[%s6 + $0xd40] sm:$0xff]
  %v4908 = vld [vmem:[%s6 + $0xd48] sm:$0xff]
  %v4909 = vld [vmem:[%s6 + $0xd50] sm:$0xff]
  %v4910 = vld [vmem:[%s6 + $0xd58] sm:$0xff]
  %v4911 = vld [vmem:[%s6 + $0xd60] sm:$0xff]
  %v4912 = vld [vmem:[%s6 + $0xd68] sm:$0xff]
  %v4913 = vld [vmem:[%s6 + $0xd70] sm:$0xff]
  %v4914 = vld [vmem:[%s6 + $0xd78] sm:$0xff]
  %v4915 = vld [vmem:[%s6 + $0xd80] sm:$0xff]
  %v4916 = vld [vmem:[%s6 + $0xd88] sm:$0xff]
  %v4917 = vld [vmem:[%s6 + $0xd90] sm:$0xff]
  %v4918 = vld [vmem:[%s6 + $0xd98] sm:$0xff]
  %v4919 = vld [vmem:[%s6 + $0xda0] sm:$0xff]
  %v4920 = vld [vmem:[%s6 + $0xda8] sm:$0xff]
  %v4921 = vld [vmem:[%s6 + $0xdb0] sm:$0xff]
  %v4922 = vld [vmem:[%s6 + $0xdb8] sm:$0xff]
  %v4923 = vld [vmem:[%s6 + $0xdc0] sm:$0xff]
  %v4924 = vld [vmem:[%s6 + $0xdc8] sm:$0xff]
  %v4925 = vld [vmem:[%s6 + $0xdd0] sm:$0xff]
  %v4926 = vld [vmem:[%s6 + $0xdd8] sm:$0xff]
  %v4927 = vld [vmem:[%s6 + $0xde0] sm:$0xff]
  %v4928 = vld [vmem:[%s6 + $0xde8] sm:$0xff]
  %v4929 = vld [vmem:[%s6 + $0xdf0] sm:$0xff]
  %v4930 = vld [vmem:[%s6 + $0xdf8] sm:$0xff]
  %v4931 = vld [vmem:[%s6 + $0xe00] sm:$0xff]
  %v4932 = vld [vmem:[%s6 + $0xe08] sm:$0xff]
  %v4933 = vld [vmem:[%s6 + $0xe10] sm:$0xff]
  %v4934 = vld [vmem:[%s6 + $0xe18] sm:$0xff]
  %v4935 = vld [vmem:[%s6 + $0xe20] sm:$0xff]
  %v4936 = vld [vmem:[%s6 + $0xe28] sm:$0xff]
  %v4937 = vld [vmem:[%s6 + $0xe30] sm:$0xff]
  %v4938 = vld [vmem:[%s6 + $0xe38] sm:$0xff]
  %v4939 = vld [vmem:[%s6 + $0xe40] sm:$0xff]
  %v4940 = vld [vmem:[%s6 + $0xe48] sm:$0xff]
  %v4941 = vld [vmem:[%s6 + $0xe50] sm:$0xff]
  %v4942 = vld [vmem:[%s6 + $0xe58] sm:$0xff]
  %v4943 = vld [vmem:[%s6 + $0xe60] sm:$0xff]
  %v4944 = vld [vmem:[%s6 + $0xe68] sm:$0xff]
  %v4945 = vld [vmem:[%s6 + $0xe70] sm:$0xff]
  %v4946 = vld [vmem:[%s6 + $0xe78] sm:$0xff]
  %v4947 = vld [vmem:[%s6 + $0xe80] sm:$0xff]
  %v4948 = vld [vmem:[%s6 + $0xe88] sm:$0xff]
  %v4949 = vld [vmem:[%s6 + $0xe90] sm:$0xff]
  %v4950 = vld [vmem:[%s6 + $0xe98] sm:$0xff]
  %v4951 = vld [vmem:[%s6 + $0xea0] sm:$0xff]
  %v4952 = vld [vmem:[%s6 + $0xea8] sm:$0xff]
  %v4953 = vld [vmem:[%s6 + $0xeb0] sm:$0xff]
  %v4954 = vld [vmem:[%s6 + $0xeb8] sm:$0xff]
  %v4955 = vld [vmem:[%s6 + $0xec0] sm:$0xff]
  %v4956 = vld [vmem:[%s6 + $0xec8] sm:$0xff]
  %v4957 = vld [vmem:[%s6 + $0xed0] sm:$0xff]
  %v4958 = vld [vmem:[%s6 + $0xed8] sm:$0xff]
  %v4959 = vld [vmem:[%s6 + $0xee0] sm:$0xff]
  %v4960 = vld [vmem:[%s6 + $0xee8] sm:$0xff]
  %v4961 = vld [vmem:[%s6 + $0xef0] sm:$0xff]
  %v4962 = vld [vmem:[%s6 + $0xef8] sm:$0xff]
  %v4963 = vld [vmem:[%s6 + $0xf00] sm:$0xff]
  %v4964 = vld [vmem:[%s6 + $0xf08] sm:$0xff]
  %v4965 = vld [vmem:[%s6 + $0xf10] sm:$0xff]
  %v4966 = vld [vmem:[%s6 + $0xf18] sm:$0xff]
  %v4967 = vld [vmem:[%s6 + $0xf20] sm:$0xff]
  %v4968 = vld [vmem:[%s6 + $0xf28] sm:$0xff]
  %v4969 = vld [vmem:[%s6 + $0xf30] sm:$0xff]
  %v4970 = vld [vmem:[%s6 + $0xf38] sm:$0xff]
  %v4971 = vld [vmem:[%s6 + $0xf40] sm:$0xff]
  %v4972 = vld [vmem:[%s6 + $0xf48] sm:$0xff]
  %v4973 = vld [vmem:[%s6 + $0xf50] sm:$0xff]
  %v4974 = vld [vmem:[%s6 + $0xf58] sm:$0xff]
  %v4975 = vld [vmem:[%s6 + $0xf60] sm:$0xff]
  %v4976 = vld [vmem:[%s6 + $0xf68] sm:$0xff]
  %v4977 = vld [vmem:[%s6 + $0xf70] sm:$0xff]
  %v4978 = vld [vmem:[%s6 + $0xf78] sm:$0xff]
  %v4979 = vld [vmem:[%s6 + $0xf80] sm:$0xff]
  %v4980 = vld [vmem:[%s6 + $0xf88] sm:$0xff]
  %v4981 = vld [vmem:[%s6 + $0xf90] sm:$0xff]
  %v4982 = vld [vmem:[%s6 + $0xf98] sm:$0xff]
  %v4983 = vld [vmem:[%s6 + $0xfa0] sm:$0xff]
  %v4984 = vld [vmem:[%s6 + $0xfa8] sm:$0xff]
  %v4985 = vld [vmem:[%s6 + $0xfb0] sm:$0xff]
  %v4986 = vld [vmem:[%s6 + $0xfb8] sm:$0xff]
  %v4987 = vld [vmem:[%s6 + $0xfc0] sm:$0xff]
  %v4988 = vld [vmem:[%s6 + $0xfc8] sm:$0xff]
  %v4989 = vld [vmem:[%s6 + $0xfd0] sm:$0xff]
  %v4990 = vld [vmem:[%s6 + $0xfd8] sm:$0xff]
  %v4991 = vld [vmem:[%s6 + $0xfe0] sm:$0xff]
  %v4992 = vld [vmem:[%s6 + $0xfe8] sm:$0xff]
  %v4993 = vld [vmem:[%s6 + $0xff0] sm:$0xff]
  %v4994 = vld [vmem:[%s6 + $0xff8] sm:$0xff]
  %v4995 = vld [vmem:[%s6 + $0x1000] sm:$0xff]
  %v4996 = vld [vmem:[%s6 + $0x1008] sm:$0xff]
  %v4997 = vld [vmem:[%s6 + $0x1010] sm:$0xff]
  %v4998 = vld [vmem:[%s6 + $0x1018] sm:$0xff]
  %v4999 = vld [vmem:[%s6 + $0x1020] sm:$0xff]
  %v5000 = vld [vmem:[%s6 + $0x1028] sm:$0xff]
  %v5001 = vld [vmem:[%s6 + $0x1030] sm:$0xff]
  %v5002 = vld [vmem:[%s6 + $0x1038] sm:$0xff]
  %v5003 = vld [vmem:[%s6 + $0x1040] sm:$0xff]
  %v5004 = vld [vmem:[%s6 + $0x1048] sm:$0xff]
  %v5005 = vld [vmem:[%s6 + $0x1050] sm:$0xff]
  %v5006 = vld [vmem:[%s6 + $0x1058] sm:$0xff]
  %v5007 = vld [vmem:[%s6 + $0x1060] sm:$0xff]
  %v5008 = vld [vmem:[%s6 + $0x1068] sm:$0xff]
  %v5009 = vld [vmem:[%s6 + $0x1070] sm:$0xff]
  %v5010 = vld [vmem:[%s6 + $0x1078] sm:$0xff]
  %v5011 = vld [vmem:[%s6 + $0x1080] sm:$0xff]
  %v5012 = vld [vmem:[%s6 + $0x1088] sm:$0xff]
  %v5013 = vld [vmem:[%s6 + $0x1090] sm:$0xff]
  %v5014 = vld [vmem:[%s6 + $0x1098] sm:$0xff]
  %v5015 = vld [vmem:[%s6 + $0x10a0] sm:$0xff]
  %v5016 = vld [vmem:[%s6 + $0x10a8] sm:$0xff]
  %v5017 = vld [vmem:[%s6 + $0x10b0] sm:$0xff]
  %v5018 = vld [vmem:[%s6 + $0x10b8] sm:$0xff]
  %v5019 = vld [vmem:[%s6 + $0x10c0] sm:$0xff]
  %v5020 = vld [vmem:[%s6 + $0x10c8] sm:$0xff]
  %v5021 = vld [vmem:[%s6 + $0x10d0] sm:$0xff]
  %v5022 = vld [vmem:[%s6 + $0x10d8] sm:$0xff]
  %v5023 = vld [vmem:[%s6 + $0x10e0] sm:$0xff]
  %v5024 = vld [vmem:[%s6 + $0x10e8] sm:$0xff]
  %v5025 = vld [vmem:[%s6 + $0x10f0] sm:$0xff]
  %v5026 = vld [vmem:[%s6 + $0x10f8] sm:$0xff]
  %v5027 = vld [vmem:[%s6 + $0x1100] sm:$0xff]
  %v5028 = vld [vmem:[%s6 + $0x1108] sm:$0xff]
  %v5029 = vld [vmem:[%s6 + $0x1110] sm:$0xff]
  %v5030 = vld [vmem:[%s6 + $0x1118] sm:$0xff]
  %v5031 = vld [vmem:[%s6 + $0x1120] sm:$0xff]
  %v5032 = vld [vmem:[%s6 + $0x1128] sm:$0xff]
  %v5033 = vld [vmem:[%s6 + $0x1130] sm:$0xff]
  %v5034 = vld [vmem:[%s6 + $0x1138] sm:$0xff]
  %v5035 = vld [vmem:[%s6 + $0x1140] sm:$0xff]
  %v5036 = vld [vmem:[%s6 + $0x1148] sm:$0xff]
  %v5037 = vld [vmem:[%s6 + $0x1150] sm:$0xff]
  %v5038 = vld [vmem:[%s6 + $0x1158] sm:$0xff]
  %v5039 = vld [vmem:[%s6 + $0x1160] sm:$0xff]
  %v5040 = vld [vmem:[%s6 + $0x1168] sm:$0xff]
  %v5041 = vld [vmem:[%s6 + $0x1170] sm:$0xff]
  %v5042 = vld [vmem:[%s6 + $0x1178] sm:$0xff]
  %v5043 = vld [vmem:[%s6 + $0x1180] sm:$0xff]
  %v5044 = vld [vmem:[%s6 + $0x1188] sm:$0xff]
  %v5045 = vld [vmem:[%s6 + $0x1190] sm:$0xff]
  %v5046 = vld [vmem:[%s6 + $0x1198] sm:$0xff]
  %v5047 = vld [vmem:[%s6 + $0x11a0] sm:$0xff]
  %v5048 = vld [vmem:[%s6 + $0x11a8] sm:$0xff]
  %v5049 = vld [vmem:[%s6 + $0x11b0] sm:$0xff]
  %v5050 = vld [vmem:[%s6 + $0x11b8] sm:$0xff]
  %v5051 = vld [vmem:[%s6 + $0x11c0] sm:$0xff]
  %v5052 = vld [vmem:[%s6 + $0x11c8] sm:$0xff]
  %v5053 = vld [vmem:[%s6 + $0x11d0] sm:$0xff]
  %v5054 = vld [vmem:[%s6 + $0x11d8] sm:$0xff]
  %v5055 = vld [vmem:[%s6 + $0x11e0] sm:$0xff]
  %v5056 = vld [vmem:[%s6 + $0x11e8] sm:$0xff]
  %v5057 = vld [vmem:[%s6 + $0x11f0] sm:$0xff]
  %v5058 = vld [vmem:[%s6 + $0x11f8] sm:$0xff]
  %v5059 = vld [vmem:[%s7] sm:$0x1]
  %v5061 = vperm.slane %v5059, 0
  %5072 = vst [vmem:[#allocation1] ss:$4 sm:$0xff] %v4474
  %s5073 = scalar_lea.vmem [#allocation1], 32
  %5074 = vst [vmem:[%s5073] ss:$4 sm:$0xff] %v4475
  %v5075 = vld.sshfl [vmem:[#allocation1] sm:$0xff pattern:$0x73625140]
  %v5076 = vld.sshfl [vmem:[#allocation1 + $0x8] sm:$0xff pattern:$0x73625140]
  %v5077 = vld.sshfl [vmem:[#allocation1 + $0x10] sm:$0xff pattern:$0x73625140]
  %v5078 = vld.sshfl [vmem:[#allocation1 + $0x18] sm:$0xff pattern:$0x73625140]
  %v5079 = vld.sshfl [vmem:[#allocation1 + $0x20] sm:$0xff pattern:$0x73625140]
  %v5080 = vld.sshfl [vmem:[#allocation1 + $0x28] sm:$0xff pattern:$0x73625140]
  %v5081 = vld.sshfl [vmem:[#allocation1 + $0x30] sm:$0xff pattern:$0x73625140]
  %v5082 = vld.sshfl [vmem:[#allocation1 + $0x38] sm:$0xff pattern:$0x73625140]
  %5083 = vst [vmem:[#allocation1] ss:$4 sm:$0xff] %v4476
  %5084 = vst [vmem:[%s5073] ss:$4 sm:$0xff] %v4477
  %v5085 = vld.sshfl [vmem:[#allocation1] sm:$0xff pattern:$0x73625140]
  %v5086 = vld.sshfl [vmem:[#allocation1 + $0x8] sm:$0xff pattern:$0x73625140]
  %v5087 = vld.sshfl [vmem:[#allocation1 + $0x10] sm:$0xff pattern:$0x73625140]
  %v5088 = vld.sshfl [vmem:[#allocation1 + $0x18] sm:$0xff pattern:$0x73625140]
  %v5089 = vld.sshfl [vmem:[#allocation1 + $0x20] sm:$0xff pattern:$0x73625140]
  %v5090 = vld.sshfl [vmem:[#allocation1 + $0x28] sm:$0xff pattern:$0x73625140]
  %v5091 = vld.sshfl [vmem:[#allocation1 + $0x30] sm:$0xff pattern:$0x73625140]
  %v5092 = vld.sshfl [vmem:[#allocation1 + $0x38] sm:$0xff pattern:$0x73625140]
  %5093 = vst [vmem:[#allocation1] ss:$4 sm:$0xff] %v4478
  %5094 = vst [vmem:[%s5073] ss:$4 sm:$0xff] %v4479
  %v5095 = vld.sshfl [vmem:[#allocation1] sm:$0xff pattern:$0x73625140]
  %v5096 = vld.sshfl [vmem:[#allocation1 + $0x8] sm:$0xff pattern:$0x73625140]
  %v5097 = vld.sshfl [vmem:[#allocation1 + $0x10] sm:$0xff pattern:$0x73625140]
  %v5098 = vld.sshfl [vmem:[#allocation1 + $0x18] sm:$0xff pattern:$0x73625140]
  %v5099 = vld.sshfl [vmem:[#allocation1 + $0x20] sm:$0xff pattern:$0x73625140]
  %v5100 = vld.sshfl [vmem:[#allocation1 + $0x28] sm:$0xff pattern:$0x73625140]
  %v5101 = vld.sshfl [vmem:[#allocation1 + $0x30] sm:$0xff pattern:$0x73625140]
  %v5102 = vld.sshfl [vmem:[#allocation1 + $0x38] sm:$0xff pattern:$0x73625140]
  %5103 = vst [vmem:[#allocation1] ss:$4 sm:$0xff] %v4480
  %5104 = vst [vmem:[%s5073] ss:$4 sm:$0xff] %v4481
  %v5105 = vld.sshfl [vmem:[#allocation1] sm:$0xff pattern:$0x73625140]
  %v5106 = vld.sshfl [vmem:[#allocation1 + $0x8] sm:$0xff pattern:$0x73625140]
  %v5107 = vld.sshfl [vmem:[#allocation1 + $0x10] sm:$0xff pattern:$0x73625140]
  %v5108 = vld.sshfl [vmem:[#allocation1 + $0x18] sm:$0xff pattern:$0x73625140]
  %v5109 = vld.sshfl [vmem:[#allocation1 + $0x20] sm:$0xff pattern:$0x73625140]
  %v5110 = vld.sshfl [vmem:[#allocation1 + $0x28] sm:$0xff pattern:$0x73625140]
  %v5111 = vld.sshfl [vmem:[#allocation1 + $0x30] sm:$0xff pattern:$0x73625140]
  %v5112 = vld.sshfl [vmem:[#allocation1 + $0x38] sm:$0xff pattern:$0x73625140]
  %5113 = vst [vmem:[#allocation1] ss:$4 sm:$0xff] %v4482
  %v5114 = vld.sshfl [vmem:[#allocation1] sm:$0xff pattern:$0x73625140]
  %v5115 = vld.sshfl [vmem:[#allocation1 + $0x8] sm:$0xff pattern:$0x73625140]
  %v5116 = vld.sshfl [vmem:[#allocation1 + $0x10] sm:$0xff pattern:$0x73625140]
  %v5117 = vld.sshfl [vmem:[#allocation1 + $0x18] sm:$0xff pattern:$0x73625140]
  %5154 = vmatpush.msra.mxu0 %v4498
  %5155 = vmatpush.msra.mxu0 %v4497
  %5156 = vmatpush.msra.mxu0 %v4496
  %5157 = vmatpush.msra.mxu0 %v4495
  %5158 = vmatpush.msra.mxu0 %v4494
  %5159 = vmatpush.msra.mxu0 %v4493
  %5160 = vmatpush.msra.mxu0 %v4492
  %5161 = vmatpush.msra.mxu0 %v4491
  %5162 = vmatpush.msra.mxu0 %v4490
  %5163 = vmatpush.msra.mxu0 %v4489
  %5164 = vmatpush.msra.mxu0 %v4488
  %5165 = vmatpush.msra.mxu0 %v4487
  %5166 = vmatpush.msra.mxu0 %v4486
  %5167 = vmatpush.msra.mxu0 %v4485
  %5168 = vmatpush.msra.mxu0 %v4484
  %5169 = vmatpush.msra.mxu0 %v4483
  %5170 = vmatmul.f32.gmra.mxu0 %v5075
  %v5171 = vpop.f32.mrf.mxu0
  %v5172 = vadd.f32 %v5061, %v5171
  %5173 = vdwg.mxu0
  %5174 = vmatpush.msra.mxu0 %v4514
  %5175 = vmatpush.msra.mxu0 %v4513
  %5176 = vmatpush.msra.mxu0 %v4512
  %5177 = vmatpush.msra.mxu0 %v4511
  %5178 = vmatpush.msra.mxu0 %v4510
  %5179 = vmatpush.msra.mxu0 %v4509
  %5180 = vmatpush.msra.mxu0 %v4508
  %5181 = vmatpush.msra.mxu0 %v4507
  %5182 = vmatpush.msra.mxu0 %v4506
  %5183 = vmatpush.msra.mxu0 %v4505
  %5184 = vmatpush.msra.mxu0 %v4504
  %5185 = vmatpush.msra.mxu0 %v4503
  %5186 = vmatpush.msra.mxu0 %v4502
  %5187 = vmatpush.msra.mxu0 %v4501
  %5188 = vmatpush.msra.mxu0 %v4500
  %5189 = vmatpush.msra.mxu0 %v4499
  %5190 = vmatmul.f32.gmra.mxu0 %v5076
  %v5191 = vpop.f32.mrf.mxu0
  %v5192 = vadd.f32 %v5172, %v5191
  %5193 = vdwg.mxu0
  %5194 = vmatpush.msra.mxu0 %v4530
  %5195 = vmatpush.msra.mxu0 %v4529
  %5196 = vmatpush.msra.mxu0 %v4528
  %5197 = vmatpush.msra.mxu0 %v4527
  %5198 = vmatpush.msra.mxu0 %v4526
  %5199 = vmatpush.msra.mxu0 %v4525
  %5200 = vmatpush.msra.mxu0 %v4524
  %5201 = vmatpush.msra.mxu0 %v4523
  %5202 = vmatpush.msra.mxu0 %v4522
  %5203 = vmatpush.msra.mxu0 %v4521
  %5204 = vmatpush.msra.mxu0 %v4520
  %5205 = vmatpush.msra.mxu0 %v4519
  %5206 = vmatpush.msra.mxu0 %v4518
  %5207 = vmatpush.msra.mxu0 %v4517
  %5208 = vmatpush.msra.mxu0 %v4516
  %5209 = vmatpush.msra.mxu0 %v4515
  %5210 = vmatmul.f32.gmra.mxu0 %v5077
  %v5211 = vpop.f32.mrf.mxu0
  %v5212 = vadd.f32 %v5192, %v5211
  %5213 = vdwg.mxu0
  %5214 = vmatpush.msra.mxu0 %v4546
  %5215 = vmatpush.msra.mxu0 %v4545
  %5216 = vmatpush.msra.mxu0 %v4544
  %5217 = vmatpush.msra.mxu0 %v4543
  %5218 = vmatpush.msra.mxu0 %v4542
  %5219 = vmatpush.msra.mxu0 %v4541
  %5220 = vmatpush.msra.mxu0 %v4540
  %5221 = vmatpush.msra.mxu0 %v4539
  %5222 = vmatpush.msra.mxu0 %v4538
  %5223 = vmatpush.msra.mxu0 %v4537
  %5224 = vmatpush.msra.mxu0 %v4536
  %5225 = vmatpush.msra.mxu0 %v4535
  %5226 = vmatpush.msra.mxu0 %v4534
  %5227 = vmatpush.msra.mxu0 %v4533
  %5228 = vmatpush.msra.mxu0 %v4532
  %5229 = vmatpush.msra.mxu0 %v4531
  %5230 = vmatmul.f32.gmra.mxu0 %v5078
  %v5231 = vpop.f32.mrf.mxu0
  %v5232 = vadd.f32 %v5212, %v5231
  %5233 = vdwg.mxu0
  %5234 = vmatpush.msra.mxu0 %v4562
  %5235 = vmatpush.msra.mxu0 %v4561
  %5236 = vmatpush.msra.mxu0 %v4560
  %5237 = vmatpush.msra.mxu0 %v4559
  %5238 = vmatpush.msra.mxu0 %v4558
  %5239 = vmatpush.msra.mxu0 %v4557
  %5240 = vmatpush.msra.mxu0 %v4556
  %5241 = vmatpush.msra.mxu0 %v4555
  %5242 = vmatpush.msra.mxu0 %v4554
  %5243 = vmatpush.msra.mxu0 %v4553
  %5244 = vmatpush.msra.mxu0 %v4552
  %5245 = vmatpush.msra.mxu0 %v4551
  %5246 = vmatpush.msra.mxu0 %v4550
  %5247 = vmatpush.msra.mxu0 %v4549
  %5248 = vmatpush.msra.mxu0 %v4548
  %5249 = vmatpush.msra.mxu0 %v4547
  %5250 = vmatmul.f32.gmra.mxu0 %v5079
  %v5251 = vpop.f32.mrf.mxu0
  %v5252 = vadd.f32 %v5232, %v5251
  %5253 = vdwg.mxu0
  %5254 = vmatpush.msra.mxu0 %v4578
  %5255 = vmatpush.msra.mxu0 %v4577
  %5256 = vmatpush.msra.mxu0 %v4576
  %5257 = vmatpush.msra.mxu0 %v4575
  %5258 = vmatpush.msra.mxu0 %v4574
  %5259 = vmatpush.msra.mxu0 %v4573
  %5260 = vmatpush.msra.mxu0 %v4572
  %5261 = vmatpush.msra.mxu0 %v4571
  %5262 = vmatpush.msra.mxu0 %v4570
  %5263 = vmatpush.msra.mxu0 %v4569
  %5264 = vmatpush.msra.mxu0 %v4568
  %5265 = vmatpush.msra.mxu0 %v4567
  %5266 = vmatpush.msra.mxu0 %v4566
  %5267 = vmatpush.msra.mxu0 %v4565
  %5268 = vmatpush.msra.mxu0 %v4564
  %5269 = vmatpush.msra.mxu0 %v4563
  %5270 = vmatmul.f32.gmra.mxu0 %v5080
  %v5271 = vpop.f32.mrf.mxu0
  %v5272 = vadd.f32 %v5252, %v5271
  %5273 = vdwg.mxu0
  %5274 = vmatpush.msra.mxu0 %v4594
  %5275 = vmatpush.msra.mxu0 %v4593
  %5276 = vmatpush.msra.mxu0 %v4592
  %5277 = vmatpush.msra.mxu0 %v4591
  %5278 = vmatpush.msra.mxu0 %v4590
  %5279 = vmatpush.msra.mxu0 %v4589
  %5280 = vmatpush.msra.mxu0 %v4588
  %5281 = vmatpush.msra.mxu0 %v4587
  %5282 = vmatpush.msra.mxu0 %v4586
  %5283 = vmatpush.msra.mxu0 %v4585
  %5284 = vmatpush.msra.mxu0 %v4584
  %5285 = vmatpush.msra.mxu0 %v4583
  %5286 = vmatpush.msra.mxu0 %v4582
  %5287 = vmatpush.msra.mxu0 %v4581
  %5288 = vmatpush.msra.mxu0 %v4580
  %5289 = vmatpush.msra.mxu0 %v4579
  %5290 = vmatmul.f32.gmra.mxu0 %v5081
  %v5291 = vpop.f32.mrf.mxu0
  %v5292 = vadd.f32 %v5272, %v5291
  %5293 = vdwg.mxu0
  %5294 = vmatpush.msra.mxu0 %v4610
  %5295 = vmatpush.msra.mxu0 %v4609
  %5296 = vmatpush.msra.mxu0 %v4608
  %5297 = vmatpush.msra.mxu0 %v4607
  %5298 = vmatpush.msra.mxu0 %v4606
  %5299 = vmatpush.msra.mxu0 %v4605
  %5300 = vmatpush.msra.mxu0 %v4604
  %5301 = vmatpush.msra.mxu0 %v4603
  %5302 = vmatpush.msra.mxu0 %v4602
  %5303 = vmatpush.msra.mxu0 %v4601
  %5304 = vmatpush.msra.mxu0 %v4600
  %5305 = vmatpush.msra.mxu0 %v4599
  %5306 = vmatpush.msra.mxu0 %v4598
  %5307 = vmatpush.msra.mxu0 %v4597
  %5308 = vmatpush.msra.mxu0 %v4596
  %5309 = vmatpush.msra.mxu0 %v4595
  %5310 = vmatmul.f32.gmra.mxu0 %v5082
  %v5311 = vpop.f32.mrf.mxu0
  %v5312 = vadd.f32 %v5292, %v5311
  %5313 = vdwg.mxu0
  %5314 = vmatpush.msra.mxu0 %v4626
  %5315 = vmatpush.msra.mxu0 %v4625
  %5316 = vmatpush.msra.mxu0 %v4624
  %5317 = vmatpush.msra.mxu0 %v4623
  %5318 = vmatpush.msra.mxu0 %v4622
  %5319 = vmatpush.msra.mxu0 %v4621
  %5320 = vmatpush.msra.mxu0 %v4620
  %5321 = vmatpush.msra.mxu0 %v4619
  %5322 = vmatpush.msra.mxu0 %v4618
  %5323 = vmatpush.msra.mxu0 %v4617
  %5324 = vmatpush.msra.mxu0 %v4616
  %5325 = vmatpush.msra.mxu0 %v4615
  %5326 = vmatpush.msra.mxu0 %v4614
  %5327 = vmatpush.msra.mxu0 %v4613
  %5328 = vmatpush.msra.mxu0 %v4612
  %5329 = vmatpush.msra.mxu0 %v4611
  %5330 = vmatmul.f32.gmra.mxu0 %v5085
  %v5331 = vpop.f32.mrf.mxu0
  %v5332 = vadd.f32 %v5312, %v5331
  %5333 = vdwg.mxu0
  %5334 = vmatpush.msra.mxu0 %v4642
  %5335 = vmatpush.msra.mxu0 %v4641
  %5336 = vmatpush.msra.mxu0 %v4640
  %5337 = vmatpush.msra.mxu0 %v4639
  %5338 = vmatpush.msra.mxu0 %v4638
  %5339 = vmatpush.msra.mxu0 %v4637
  %5340 = vmatpush.msra.mxu0 %v4636
  %5341 = vmatpush.msra.mxu0 %v4635
  %5342 = vmatpush.msra.mxu0 %v4634
  %5343 = vmatpush.msra.mxu0 %v4633
  %5344 = vmatpush.msra.mxu0 %v4632
  %5345 = vmatpush.msra.mxu0 %v4631
  %5346 = vmatpush.msra.mxu0 %v4630
  %5347 = vmatpush.msra.mxu0 %v4629
  %5348 = vmatpush.msra.mxu0 %v4628
  %5349 = vmatpush.msra.mxu0 %v4627
  %5350 = vmatmul.f32.gmra.mxu0 %v5086
  %v5351 = vpop.f32.mrf.mxu0
  %v5352 = vadd.f32 %v5332, %v5351
  %5353 = vdwg.mxu0
  %5354 = vmatpush.msra.mxu0 %v4658
  %5355 = vmatpush.msra.mxu0 %v4657
  %5356 = vmatpush.msra.mxu0 %v4656
  %5357 = vmatpush.msra.mxu0 %v4655
  %5358 = vmatpush.msra.mxu0 %v4654
  %5359 = vmatpush.msra.mxu0 %v4653
  %5360 = vmatpush.msra.mxu0 %v4652
  %5361 = vmatpush.msra.mxu0 %v4651
  %5362 = vmatpush.msra.mxu0 %v4650
  %5363 = vmatpush.msra.mxu0 %v4649
  %5364 = vmatpush.msra.mxu0 %v4648
  %5365 = vmatpush.msra.mxu0 %v4647
  %5366 = vmatpush.msra.mxu0 %v4646
  %5367 = vmatpush.msra.mxu0 %v4645
  %5368 = vmatpush.msra.mxu0 %v4644
  %5369 = vmatpush.msra.mxu0 %v4643
  %5370 = vmatmul.f32.gmra.mxu0 %v5087
  %v5371 = vpop.f32.mrf.mxu0
  %v5372 = vadd.f32 %v5352, %v5371
  %5373 = vdwg.mxu0
  %5374 = vmatpush.msra.mxu0 %v4674
  %5375 = vmatpush.msra.mxu0 %v4673
  %5376 = vmatpush.msra.mxu0 %v4672
  %5377 = vmatpush.msra.mxu0 %v4671
  %5378 = vmatpush.msra.mxu0 %v4670
  %5379 = vmatpush.msra.mxu0 %v4669
  %5380 = vmatpush.msra.mxu0 %v4668
  %5381 = vmatpush.msra.mxu0 %v4667
  %5382 = vmatpush.msra.mxu0 %v4666
  %5383 = vmatpush.msra.mxu0 %v4665
  %5384 = vmatpush.msra.mxu0 %v4664
  %5385 = vmatpush.msra.mxu0 %v4663
  %5386 = vmatpush.msra.mxu0 %v4662
  %5387 = vmatpush.msra.mxu0 %v4661
  %5388 = vmatpush.msra.mxu0 %v4660
  %5389 = vmatpush.msra.mxu0 %v4659
  %5390 = vmatmul.f32.gmra.mxu0 %v5088
  %v5391 = vpop.f32.mrf.mxu0
  %v5392 = vadd.f32 %v5372, %v5391
  %5393 = vdwg.mxu0
  %5394 = vmatpush.msra.mxu0 %v4690
  %5395 = vmatpush.msra.mxu0 %v4689
  %5396 = vmatpush.msra.mxu0 %v4688
  %5397 = vmatpush.msra.mxu0 %v4687
  %5398 = vmatpush.msra.mxu0 %v4686
  %5399 = vmatpush.msra.mxu0 %v4685
  %5400 = vmatpush.msra.mxu0 %v4684
  %5401 = vmatpush.msra.mxu0 %v4683
  %5402 = vmatpush.msra.mxu0 %v4682
  %5403 = vmatpush.msra.mxu0 %v4681
  %5404 = vmatpush.msra.mxu0 %v4680
  %5405 = vmatpush.msra.mxu0 %v4679
  %5406 = vmatpush.msra.mxu0 %v4678
  %5407 = vmatpush.msra.mxu0 %v4677
  %5408 = vmatpush.msra.mxu0 %v4676
  %5409 = vmatpush.msra.mxu0 %v4675
  %5410 = vmatmul.f32.gmra.mxu0 %v5089
  %v5411 = vpop.f32.mrf.mxu0
  %v5412 = vadd.f32 %v5392, %v5411
  %5413 = vdwg.mxu0
  %5414 = vmatpush.msra.mxu0 %v4706
  %5415 = vmatpush.msra.mxu0 %v4705
  %5416 = vmatpush.msra.mxu0 %v4704
  %5417 = vmatpush.msra.mxu0 %v4703
  %5418 = vmatpush.msra.mxu0 %v4702
  %5419 = vmatpush.msra.mxu0 %v4701
  %5420 = vmatpush.msra.mxu0 %v4700
  %5421 = vmatpush.msra.mxu0 %v4699
  %5422 = vmatpush.msra.mxu0 %v4698
  %5423 = vmatpush.msra.mxu0 %v4697
  %5424 = vmatpush.msra.mxu0 %v4696
  %5425 = vmatpush.msra.mxu0 %v4695
  %5426 = vmatpush.msra.mxu0 %v4694
  %5427 = vmatpush.msra.mxu0 %v4693
  %5428 = vmatpush.msra.mxu0 %v4692
  %5429 = vmatpush.msra.mxu0 %v4691
  %5430 = vmatmul.f32.gmra.mxu0 %v5090
  %v5431 = vpop.f32.mrf.mxu0
  %v5432 = vadd.f32 %v5412, %v5431
  %5433 = vdwg.mxu0
  %5434 = vmatpush.msra.mxu0 %v4722
  %5435 = vmatpush.msra.mxu0 %v4721
  %5436 = vmatpush.msra.mxu0 %v4720
  %5437 = vmatpush.msra.mxu0 %v4719
  %5438 = vmatpush.msra.mxu0 %v4718
  %5439 = vmatpush.msra.mxu0 %v4717
  %5440 = vmatpush.msra.mxu0 %v4716
  %5441 = vmatpush.msra.mxu0 %v4715
  %5442 = vmatpush.msra.mxu0 %v4714
  %5443 = vmatpush.msra.mxu0 %v4713
  %5444 = vmatpush.msra.mxu0 %v4712
  %5445 = vmatpush.msra.mxu0 %v4711
  %5446 = vmatpush.msra.mxu0 %v4710
  %5447 = vmatpush.msra.mxu0 %v4709
  %5448 = vmatpush.msra.mxu0 %v4708
  %5449 = vmatpush.msra.mxu0 %v4707
  %5450 = vmatmul.f32.gmra.mxu0 %v5091
  %v5451 = vpop.f32.mrf.mxu0
  %v5452 = vadd.f32 %v5432, %v5451
  %5453 = vdwg.mxu0
  %5454 = vmatpush.msra.mxu0 %v4738
  %5455 = vmatpush.msra.mxu0 %v4737
  %5456 = vmatpush.msra.mxu0 %v4736
  %5457 = vmatpush.msra.mxu0 %v4735
  %5458 = vmatpush.msra.mxu0 %v4734
  %5459 = vmatpush.msra.mxu0 %v4733
  %5460 = vmatpush.msra.mxu0 %v4732
  %5461 = vmatpush.msra.mxu0 %v4731
  %5462 = vmatpush.msra.mxu0 %v4730
  %5463 = vmatpush.msra.mxu0 %v4729
  %5464 = vmatpush.msra.mxu0 %v4728
  %5465 = vmatpush.msra.mxu0 %v4727
  %5466 = vmatpush.msra.mxu0 %v4726
  %5467 = vmatpush.msra.mxu0 %v4725
  %5468 = vmatpush.msra.mxu0 %v4724
  %5469 = vmatpush.msra.mxu0 %v4723
  %5470 = vmatmul.f32.gmra.mxu0 %v5092
  %v5471 = vpop.f32.mrf.mxu0
  %v5472 = vadd.f32 %v5452, %v5471
  %5473 = vdwg.mxu0
  %5474 = vmatpush.msra.mxu0 %v4754
  %5475 = vmatpush.msra.mxu0 %v4753
  %5476 = vmatpush.msra.mxu0 %v4752
  %5477 = vmatpush.msra.mxu0 %v4751
  %5478 = vmatpush.msra.mxu0 %v4750
  %5479 = vmatpush.msra.mxu0 %v4749
  %5480 = vmatpush.msra.mxu0 %v4748
  %5481 = vmatpush.msra.mxu0 %v4747
  %5482 = vmatpush.msra.mxu0 %v4746
  %5483 = vmatpush.msra.mxu0 %v4745
  %5484 = vmatpush.msra.mxu0 %v4744
  %5485 = vmatpush.msra.mxu0 %v4743
  %5486 = vmatpush.msra.mxu0 %v4742
  %5487 = vmatpush.msra.mxu0 %v4741
  %5488 = vmatpush.msra.mxu0 %v4740
  %5489 = vmatpush.msra.mxu0 %v4739
  %5490 = vmatmul.f32.gmra.mxu0 %v5095
  %v5491 = vpop.f32.mrf.mxu0
  %v5492 = vadd.f32 %v5472, %v5491
  %5493 = vdwg.mxu0
  %5494 = vmatpush.msra.mxu0 %v4770
  %5495 = vmatpush.msra.mxu0 %v4769
  %5496 = vmatpush.msra.mxu0 %v4768
  %5497 = vmatpush.msra.mxu0 %v4767
  %5498 = vmatpush.msra.mxu0 %v4766
  %5499 = vmatpush.msra.mxu0 %v4765
  %5500 = vmatpush.msra.mxu0 %v4764
  %5501 = vmatpush.msra.mxu0 %v4763
  %5502 = vmatpush.msra.mxu0 %v4762
  %5503 = vmatpush.msra.mxu0 %v4761
  %5504 = vmatpush.msra.mxu0 %v4760
  %5505 = vmatpush.msra.mxu0 %v4759
  %5506 = vmatpush.msra.mxu0 %v4758
  %5507 = vmatpush.msra.mxu0 %v4757
  %5508 = vmatpush.msra.mxu0 %v4756
  %5509 = vmatpush.msra.mxu0 %v4755
  %5510 = vmatmul.f32.gmra.mxu0 %v5096
  %v5511 = vpop.f32.mrf.mxu0
  %v5512 = vadd.f32 %v5492, %v5511
  %5513 = vdwg.mxu0
  %5514 = vmatpush.msra.mxu0 %v4786
  %5515 = vmatpush.msra.mxu0 %v4785
  %5516 = vmatpush.msra.mxu0 %v4784
  %5517 = vmatpush.msra.mxu0 %v4783
  %5518 = vmatpush.msra.mxu0 %v4782
  %5519 = vmatpush.msra.mxu0 %v4781
  %5520 = vmatpush.msra.mxu0 %v4780
  %5521 = vmatpush.msra.mxu0 %v4779
  %5522 = vmatpush.msra.mxu0 %v4778
  %5523 = vmatpush.msra.mxu0 %v4777
  %5524 = vmatpush.msra.mxu0 %v4776
  %5525 = vmatpush.msra.mxu0 %v4775
  %5526 = vmatpush.msra.mxu0 %v4774
  %5527 = vmatpush.msra.mxu0 %v4773
  %5528 = vmatpush.msra.mxu0 %v4772
  %5529 = vmatpush.msra.mxu0 %v4771
  %5530 = vmatmul.f32.gmra.mxu0 %v5097
  %v5531 = vpop.f32.mrf.mxu0
  %v5532 = vadd.f32 %v5512, %v5531
  %5533 = vdwg.mxu0
  %5534 = vmatpush.msra.mxu0 %v4802
  %5535 = vmatpush.msra.mxu0 %v4801
  %5536 = vmatpush.msra.mxu0 %v4800
  %5537 = vmatpush.msra.mxu0 %v4799
  %5538 = vmatpush.msra.mxu0 %v4798
  %5539 = vmatpush.msra.mxu0 %v4797
  %5540 = vmatpush.msra.mxu0 %v4796
  %5541 = vmatpush.msra.mxu0 %v4795
  %5542 = vmatpush.msra.mxu0 %v4794
  %5543 = vmatpush.msra.mxu0 %v4793
  %5544 = vmatpush.msra.mxu0 %v4792
  %5545 = vmatpush.msra.mxu0 %v4791
  %5546 = vmatpush.msra.mxu0 %v4790
  %5547 = vmatpush.msra.mxu0 %v4789
  %5548 = vmatpush.msra.mxu0 %v4788
  %5549 = vmatpush.msra.mxu0 %v4787
  %5550 = vmatmul.f32.gmra.mxu0 %v5098
  %v5551 = vpop.f32.mrf.mxu0
  %v5552 = vadd.f32 %v5532, %v5551
  %5553 = vdwg.mxu0
  %5554 = vmatpush.msra.mxu0 %v4818
  %5555 = vmatpush.msra.mxu0 %v4817
  %5556 = vmatpush.msra.mxu0 %v4816
  %5557 = vmatpush.msra.mxu0 %v4815
  %5558 = vmatpush.msra.mxu0 %v4814
  %5559 = vmatpush.msra.mxu0 %v4813
  %5560 = vmatpush.msra.mxu0 %v4812
  %5561 = vmatpush.msra.mxu0 %v4811
  %5562 = vmatpush.msra.mxu0 %v4810
  %5563 = vmatpush.msra.mxu0 %v4809
  %5564 = vmatpush.msra.mxu0 %v4808
  %5565 = vmatpush.msra.mxu0 %v4807
  %5566 = vmatpush.msra.mxu0 %v4806
  %5567 = vmatpush.msra.mxu0 %v4805
  %5568 = vmatpush.msra.mxu0 %v4804
  %5569 = vmatpush.msra.mxu0 %v4803
  %5570 = vmatmul.f32.gmra.mxu0 %v5099
  %v5571 = vpop.f32.mrf.mxu0
  %v5572 = vadd.f32 %v5552, %v5571
  %5573 = vdwg.mxu0
  %5574 = vmatpush.msra.mxu0 %v4834
  %5575 = vmatpush.msra.mxu0 %v4833
  %5576 = vmatpush.msra.mxu0 %v4832
  %5577 = vmatpush.msra.mxu0 %v4831
  %5578 = vmatpush.msra.mxu0 %v4830
  %5579 = vmatpush.msra.mxu0 %v4829
  %5580 = vmatpush.msra.mxu0 %v4828
  %5581 = vmatpush.msra.mxu0 %v4827
  %5582 = vmatpush.msra.mxu0 %v4826
  %5583 = vmatpush.msra.mxu0 %v4825
  %5584 = vmatpush.msra.mxu0 %v4824
  %5585 = vmatpush.msra.mxu0 %v4823
  %5586 = vmatpush.msra.mxu0 %v4822
  %5587 = vmatpush.msra.mxu0 %v4821
  %5588 = vmatpush.msra.mxu0 %v4820
  %5589 = vmatpush.msra.mxu0 %v4819
  %5590 = vmatmul.f32.gmra.mxu0 %v5100
  %v5591 = vpop.f32.mrf.mxu0
  %v5592 = vadd.f32 %v5572, %v5591
  %5593 = vdwg.mxu0
  %5594 = vmatpush.msra.mxu0 %v4850
  %5595 = vmatpush.msra.mxu0 %v4849
  %5596 = vmatpush.msra.mxu0 %v4848
  %5597 = vmatpush.msra.mxu0 %v4847
  %5598 = vmatpush.msra.mxu0 %v4846
  %5599 = vmatpush.msra.mxu0 %v4845
  %5600 = vmatpush.msra.mxu0 %v4844
  %5601 = vmatpush.msra.mxu0 %v4843
  %5602 = vmatpush.msra.mxu0 %v4842
  %5603 = vmatpush.msra.mxu0 %v4841
  %5604 = vmatpush.msra.mxu0 %v4840
  %5605 = vmatpush.msra.mxu0 %v4839
  %5606 = vmatpush.msra.mxu0 %v4838
  %5607 = vmatpush.msra.mxu0 %v4837
  %5608 = vmatpush.msra.mxu0 %v4836
  %5609 = vmatpush.msra.mxu0 %v4835
  %5610 = vmatmul.f32.gmra.mxu0 %v5101
  %v5611 = vpop.f32.mrf.mxu0
  %v5612 = vadd.f32 %v5592, %v5611
  %5613 = vdwg.mxu0
  %5614 = vmatpush.msra.mxu0 %v4866
  %5615 = vmatpush.msra.mxu0 %v4865
  %5616 = vmatpush.msra.mxu0 %v4864
  %5617 = vmatpush.msra.mxu0 %v4863
  %5618 = vmatpush.msra.mxu0 %v4862
  %5619 = vmatpush.msra.mxu0 %v4861
  %5620 = vmatpush.msra.mxu0 %v4860
  %5621 = vmatpush.msra.mxu0 %v4859
  %5622 = vmatpush.msra.mxu0 %v4858
  %5623 = vmatpush.msra.mxu0 %v4857
  %5624 = vmatpush.msra.mxu0 %v4856
  %5625 = vmatpush.msra.mxu0 %v4855
  %5626 = vmatpush.msra.mxu0 %v4854
  %5627 = vmatpush.msra.mxu0 %v4853
  %5628 = vmatpush.msra.mxu0 %v4852
  %5629 = vmatpush.msra.mxu0 %v4851
  %5630 = vmatmul.f32.gmra.mxu0 %v5102
  %v5631 = vpop.f32.mrf.mxu0
  %v5632 = vadd.f32 %v5612, %v5631
  %5633 = vdwg.mxu0
  %5634 = vmatpush.msra.mxu0 %v4882
  %5635 = vmatpush.msra.mxu0 %v4881
  %5636 = vmatpush.msra.mxu0 %v4880
  %5637 = vmatpush.msra.mxu0 %v4879
  %5638 = vmatpush.msra.mxu0 %v4878
  %5639 = vmatpush.msra.mxu0 %v4877
  %5640 = vmatpush.msra.mxu0 %v4876
  %5641 = vmatpush.msra.mxu0 %v4875
  %5642 = vmatpush.msra.mxu0 %v4874
  %5643 = vmatpush.msra.mxu0 %v4873
  %5644 = vmatpush.msra.mxu0 %v4872
  %5645 = vmatpush.msra.mxu0 %v4871
  %5646 = vmatpush.msra.mxu0 %v4870
  %5647 = vmatpush.msra.mxu0 %v4869
  %5648 = vmatpush.msra.mxu0 %v4868
  %5649 = vmatpush.msra.mxu0 %v4867
  %5650 = vmatmul.f32.gmra.mxu0 %v5105
  %v5651 = vpop.f32.mrf.mxu0
  %v5652 = vadd.f32 %v5632, %v5651
  %5653 = vdwg.mxu0
  %5654 = vmatpush.msra.mxu0 %v4898
  %5655 = vmatpush.msra.mxu0 %v4897
  %5656 = vmatpush.msra.mxu0 %v4896
  %5657 = vmatpush.msra.mxu0 %v4895
  %5658 = vmatpush.msra.mxu0 %v4894
  %5659 = vmatpush.msra.mxu0 %v4893
  %5660 = vmatpush.msra.mxu0 %v4892
  %5661 = vmatpush.msra.mxu0 %v4891
  %5662 = vmatpush.msra.mxu0 %v4890
  %5663 = vmatpush.msra.mxu0 %v4889
  %5664 = vmatpush.msra.mxu0 %v4888
  %5665 = vmatpush.msra.mxu0 %v4887
  %5666 = vmatpush.msra.mxu0 %v4886
  %5667 = vmatpush.msra.mxu0 %v4885
  %5668 = vmatpush.msra.mxu0 %v4884
  %5669 = vmatpush.msra.mxu0 %v4883
  %5670 = vmatmul.f32.gmra.mxu0 %v5106
  %v5671 = vpop.f32.mrf.mxu0
  %v5672 = vadd.f32 %v5652, %v5671
  %5673 = vdwg.mxu0
  %5674 = vmatpush.msra.mxu0 %v4914
  %5675 = vmatpush.msra.mxu0 %v4913
  %5676 = vmatpush.msra.mxu0 %v4912
  %5677 = vmatpush.msra.mxu0 %v4911
  %5678 = vmatpush.msra.mxu0 %v4910
  %5679 = vmatpush.msra.mxu0 %v4909
  %5680 = vmatpush.msra.mxu0 %v4908
  %5681 = vmatpush.msra.mxu0 %v4907
  %5682 = vmatpush.msra.mxu0 %v4906
  %5683 = vmatpush.msra.mxu0 %v4905
  %5684 = vmatpush.msra.mxu0 %v4904
  %5685 = vmatpush.msra.mxu0 %v4903
  %5686 = vmatpush.msra.mxu0 %v4902
  %5687 = vmatpush.msra.mxu0 %v4901
  %5688 = vmatpush.msra.mxu0 %v4900
  %5689 = vmatpush.msra.mxu0 %v4899
  %5690 = vmatmul.f32.gmra.mxu0 %v5107
  %v5691 = vpop.f32.mrf.mxu0
  %v5692 = vadd.f32 %v5672, %v5691
  %5693 = vdwg.mxu0
  %5694 = vmatpush.msra.mxu0 %v4930
  %5695 = vmatpush.msra.mxu0 %v4929
  %5696 = vmatpush.msra.mxu0 %v4928
  %5697 = vmatpush.msra.mxu0 %v4927
  %5698 = vmatpush.msra.mxu0 %v4926
  %5699 = vmatpush.msra.mxu0 %v4925
  %5700 = vmatpush.msra.mxu0 %v4924
  %5701 = vmatpush.msra.mxu0 %v4923
  %5702 = vmatpush.msra.mxu0 %v4922
  %5703 = vmatpush.msra.mxu0 %v4921
  %5704 = vmatpush.msra.mxu0 %v4920
  %5705 = vmatpush.msra.mxu0 %v4919
  %5706 = vmatpush.msra.mxu0 %v4918
  %5707 = vmatpush.msra.mxu0 %v4917
  %5708 = vmatpush.msra.mxu0 %v4916
  %5709 = vmatpush.msra.mxu0 %v4915
  %5710 = vmatmul.f32.gmra.mxu0 %v5108
  %v5711 = vpop.f32.mrf.mxu0
  %v5712 = vadd.f32 %v5692, %v5711
  %5713 = vdwg.mxu0
  %5714 = vmatpush.msra.mxu0 %v4946
  %5715 = vmatpush.msra.mxu0 %v4945
  %5716 = vmatpush.msra.mxu0 %v4944
  %5717 = vmatpush.msra.mxu0 %v4943
  %5718 = vmatpush.msra.mxu0 %v4942
  %5719 = vmatpush.msra.mxu0 %v4941
  %5720 = vmatpush.msra.mxu0 %v4940
  %5721 = vmatpush.msra.mxu0 %v4939
  %5722 = vmatpush.msra.mxu0 %v4938
  %5723 = vmatpush.msra.mxu0 %v4937
  %5724 = vmatpush.msra.mxu0 %v4936
  %5725 = vmatpush.msra.mxu0 %v4935
  %5726 = vmatpush.msra.mxu0 %v4934
  %5727 = vmatpush.msra.mxu0 %v4933
  %5728 = vmatpush.msra.mxu0 %v4932
  %5729 = vmatpush.msra.mxu0 %v4931
  %5730 = vmatmul.f32.gmra.mxu0 %v5109
  %v5731 = vpop.f32.mrf.mxu0
  %v5732 = vadd.f32 %v5712, %v5731
  %5733 = vdwg.mxu0
  %5734 = vmatpush.msra.mxu0 %v4962
  %5735 = vmatpush.msra.mxu0 %v4961
  %5736 = vmatpush.msra.mxu0 %v4960
  %5737 = vmatpush.msra.mxu0 %v4959
  %5738 = vmatpush.msra.mxu0 %v4958
  %5739 = vmatpush.msra.mxu0 %v4957
  %5740 = vmatpush.msra.mxu0 %v4956
  %5741 = vmatpush.msra.mxu0 %v4955
  %5742 = vmatpush.msra.mxu0 %v4954
  %5743 = vmatpush.msra.mxu0 %v4953
  %5744 = vmatpush.msra.mxu0 %v4952
  %5745 = vmatpush.msra.mxu0 %v4951
  %5746 = vmatpush.msra.mxu0 %v4950
  %5747 = vmatpush.msra.mxu0 %v4949
  %5748 = vmatpush.msra.mxu0 %v4948
  %5749 = vmatpush.msra.mxu0 %v4947
  %5750 = vmatmul.f32.gmra.mxu0 %v5110
  %v5751 = vpop.f32.mrf.mxu0
  %v5752 = vadd.f32 %v5732, %v5751
  %5753 = vdwg.mxu0
  %5754 = vmatpush.msra.mxu0 %v4978
  %5755 = vmatpush.msra.mxu0 %v4977
  %5756 = vmatpush.msra.mxu0 %v4976
  %5757 = vmatpush.msra.mxu0 %v4975
  %5758 = vmatpush.msra.mxu0 %v4974
  %5759 = vmatpush.msra.mxu0 %v4973
  %5760 = vmatpush.msra.mxu0 %v4972
  %5761 = vmatpush.msra.mxu0 %v4971
  %5762 = vmatpush.msra.mxu0 %v4970
  %5763 = vmatpush.msra.mxu0 %v4969
  %5764 = vmatpush.msra.mxu0 %v4968
  %5765 = vmatpush.msra.mxu0 %v4967
  %5766 = vmatpush.msra.mxu0 %v4966
  %5767 = vmatpush.msra.mxu0 %v4965
  %5768 = vmatpush.msra.mxu0 %v4964
  %5769 = vmatpush.msra.mxu0 %v4963
  %5770 = vmatmul.f32.gmra.mxu0 %v5111
  %v5771 = vpop.f32.mrf.mxu0
  %v5772 = vadd.f32 %v5752, %v5771
  %5773 = vdwg.mxu0
  %5774 = vmatpush.msra.mxu0 %v4994
  %5775 = vmatpush.msra.mxu0 %v4993
  %5776 = vmatpush.msra.mxu0 %v4992
  %5777 = vmatpush.msra.mxu0 %v4991
  %5778 = vmatpush.msra.mxu0 %v4990
  %5779 = vmatpush.msra.mxu0 %v4989
  %5780 = vmatpush.msra.mxu0 %v4988
  %5781 = vmatpush.msra.mxu0 %v4987
  %5782 = vmatpush.msra.mxu0 %v4986
  %5783 = vmatpush.msra.mxu0 %v4985
  %5784 = vmatpush.msra.mxu0 %v4984
  %5785 = vmatpush.msra.mxu0 %v4983
  %5786 = vmatpush.msra.mxu0 %v4982
  %5787 = vmatpush.msra.mxu0 %v4981
  %5788 = vmatpush.msra.mxu0 %v4980
  %5789 = vmatpush.msra.mxu0 %v4979
  %5790 = vmatmul.f32.gmra.mxu0 %v5112
  %v5791 = vpop.f32.mrf.mxu0
  %v5792 = vadd.f32 %v5772, %v5791
  %5793 = vdwg.mxu0
  %5794 = vmatpush.msra.mxu0 %v5010
  %5795 = vmatpush.msra.mxu0 %v5009
  %5796 = vmatpush.msra.mxu0 %v5008
  %5797 = vmatpush.msra.mxu0 %v5007
  %5798 = vmatpush.msra.mxu0 %v5006
  %5799 = vmatpush.msra.mxu0 %v5005
  %5800 = vmatpush.msra.mxu0 %v5004
  %5801 = vmatpush.msra.mxu0 %v5003
  %5802 = vmatpush.msra.mxu0 %v5002
  %5803 = vmatpush.msra.mxu0 %v5001
  %5804 = vmatpush.msra.mxu0 %v5000
  %5805 = vmatpush.msra.mxu0 %v4999
  %5806 = vmatpush.msra.mxu0 %v4998
  %5807 = vmatpush.msra.mxu0 %v4997
  %5808 = vmatpush.msra.mxu0 %v4996
  %5809 = vmatpush.msra.mxu0 %v4995
  %5810 = vmatmul.f32.gmra.mxu0 %v5114
  %v5811 = vpop.f32.mrf.mxu0
  %v5812 = vadd.f32 %v5792, %v5811
  %5813 = vdwg.mxu0
  %5814 = vmatpush.msra.mxu0 %v5026
  %5815 = vmatpush.msra.mxu0 %v5025
  %5816 = vmatpush.msra.mxu0 %v5024
  %5817 = vmatpush.msra.mxu0 %v5023
  %5818 = vmatpush.msra.mxu0 %v5022
  %5819 = vmatpush.msra.mxu0 %v5021
  %5820 = vmatpush.msra.mxu0 %v5020
  %5821 = vmatpush.msra.mxu0 %v5019
  %5822 = vmatpush.msra.mxu0 %v5018
  %5823 = vmatpush.msra.mxu0 %v5017
  %5824 = vmatpush.msra.mxu0 %v5016
  %5825 = vmatpush.msra.mxu0 %v5015
  %5826 = vmatpush.msra.mxu0 %v5014
  %5827 = vmatpush.msra.mxu0 %v5013
  %5828 = vmatpush.msra.mxu0 %v5012
  %5829 = vmatpush.msra.mxu0 %v5011
  %5830 = vmatmul.f32.gmra.mxu0 %v5115
  %v5831 = vpop.f32.mrf.mxu0
  %v5832 = vadd.f32 %v5812, %v5831
  %5833 = vdwg.mxu0
  %5834 = vmatpush.msra.mxu0 %v5042
  %5835 = vmatpush.msra.mxu0 %v5041
  %5836 = vmatpush.msra.mxu0 %v5040
  %5837 = vmatpush.msra.mxu0 %v5039
  %5838 = vmatpush.msra.mxu0 %v5038
  %5839 = vmatpush.msra.mxu0 %v5037
  %5840 = vmatpush.msra.mxu0 %v5036
  %5841 = vmatpush.msra.mxu0 %v5035
  %5842 = vmatpush.msra.mxu0 %v5034
  %5843 = vmatpush.msra.mxu0 %v5033
  %5844 = vmatpush.msra.mxu0 %v5032
  %5845 = vmatpush.msra.mxu0 %v5031
  %5846 = vmatpush.msra.mxu0 %v5030
  %5847 = vmatpush.msra.mxu0 %v5029
  %5848 = vmatpush.msra.mxu0 %v5028
  %5849 = vmatpush.msra.mxu0 %v5027
  %5850 = vmatmul.f32.gmra.mxu0 %v5116
  %v5851 = vpop.f32.mrf.mxu0
  %v5852 = vadd.f32 %v5832, %v5851
  %5853 = vdwg.mxu0
  %5854 = vmatpush.msra.mxu0 %v5058
  %5855 = vmatpush.msra.mxu0 %v5057
  %5856 = vmatpush.msra.mxu0 %v5056
  %5857 = vmatpush.msra.mxu0 %v5055
  %5858 = vmatpush.msra.mxu0 %v5054
  %5859 = vmatpush.msra.mxu0 %v5053
  %5860 = vmatpush.msra.mxu0 %v5052
  %5861 = vmatpush.msra.mxu0 %v5051
  %5862 = vmatpush.msra.mxu0 %v5050
  %5863 = vmatpush.msra.mxu0 %v5049
  %5864 = vmatpush.msra.mxu0 %v5048
  %5865 = vmatpush.msra.mxu0 %v5047
  %5866 = vmatpush.msra.mxu0 %v5046
  %5867 = vmatpush.msra.mxu0 %v5045
  %5868 = vmatpush.msra.mxu0 %v5044
  %5869 = vmatpush.msra.mxu0 %v5043
  %5870 = vmatmul.f32.gmra.mxu0 %v5117
  %v5871 = vpop.f32.mrf.mxu0
  %v5872 = vadd.f32 %v5852, %v5871
  %5873 = vdwg.mxu0
  %v5874 = vmax.f32 %v5872, 0.0
  %v5875 = vld [vmem:[%s8] sm:$0xff]
  %v5876 = vld [vmem:[%s8 + $0x8] sm:$0xff]
  %v5877 = vld [vmem:[%s8 + $0x10] sm:$0xff]
  %v5878 = vld [vmem:[%s8 + $0x18] sm:$0xff]
  %v5879 = vld [vmem:[%s8 + $0x20] sm:$0xff]
  %v5880 = vld [vmem:[%s8 + $0x28] sm:$0xff]
  %v5881 = vld [vmem:[%s8 + $0x30] sm:$0xff]
  %v5882 = vld [vmem:[%s8 + $0x38] sm:$0xff]
  %v5883 = vld [vmem:[%s8 + $0x40] sm:$0xff]
  %v5884 = vld [vmem:[%s8 + $0x48] sm:$0xff]
  %v5885 = vld [vmem:[%s8 + $0x50] sm:$0xff]
  %v5886 = vld [vmem:[%s8 + $0x58] sm:$0xff]
  %v5887 = vld [vmem:[%s8 + $0x60] sm:$0xff]
  %v5888 = vld [vmem:[%s8 + $0x68] sm:$0xff]
  %v5889 = vld [vmem:[%s8 + $0x70] sm:$0xff]
  %v5890 = vld [vmem:[%s8 + $0x78] sm:$0xff]
  %v5891 = vld [vmem:[%s1] sm:$0x3]
  %v5892 = vld [vmem:[%s9] sm:$0x3]
  %vm5893 = vcmask 15360
  %v5895 = vsel %vm5893, %v5891, 0
  %vm5897 = vcmask 1041408
  %v5899 = vsel %vm5897, %v5892, 0
  %5901 = vmatpush.msra.mxu0 0.0
  %5902 = vmatpush.msra.mxu0 0.0
  %5903 = vmatpush.msra.mxu0 0.0
  %5904 = vmatpush.msra.mxu0 0.0
  %5905 = vmatpush.msra.mxu0 0.0
  %5906 = vmatpush.msra.mxu0 0.0
  %5907 = vmatpush.msra.mxu0 0.0
  %5908 = vmatpush.msra.mxu0 0.0
  %5909 = vmatpush.msra.mxu0 0.0
  %5910 = vmatpush.msra.mxu0 0.0
  %5911 = vmatpush.msra.mxu0 0.0
  %5912 = vmatpush.msra.mxu0 0.0
  %5913 = vmatpush.msra.mxu0 0.0
  %5914 = vmatpush.msra.mxu0 0.0
  %5915 = vmatpush.msra.mxu0 0.0
  %5916 = vmatpush.msra.mxu0 %v5899
  %5917 = vmatmul.f32.gmra.mxu0 %v5895
  %v5918 = vpop.f32.mrf.mxu0
  %v5919 = vadd.f32 0.0, %v5918
  %5920 = vdwg.mxu0
  %5921 = vmatpush.msra.mxu0 %v5890
  %5922 = vmatpush.msra.mxu0 %v5889
  %5923 = vmatpush.msra.mxu0 %v5888
  %5924 = vmatpush.msra.mxu0 %v5887
  %5925 = vmatpush.msra.mxu0 %v5886
  %5926 = vmatpush.msra.mxu0 %v5885
  %5927 = vmatpush.msra.mxu0 %v5884
  %5928 = vmatpush.msra.mxu0 %v5883
  %5929 = vmatpush.msra.mxu0 %v5882
  %5930 = vmatpush.msra.mxu0 %v5881
  %5931 = vmatpush.msra.mxu0 %v5880
  %5932 = vmatpush.msra.mxu0 %v5879
  %5933 = vmatpush.msra.mxu0 %v5878
  %5934 = vmatpush.msra.mxu0 %v5877
  %5935 = vmatpush.msra.mxu0 %v5876
  %5936 = vmatpush.msra.mxu0 %v5875
  %5937 = vmatmul.f32.gmra.mxu0 %v5874
  %v5938 = vpop.f32.mrf.mxu0
  %v5939 = vadd.f32 %v5919, %v5938
  %5940 = vdwg.mxu0
  %v5941 = vld [vmem:[%s10] sm:$0x1]
  %v5943 = vperm.slane %v5941, 0
  %v5945 = vadd.f32 %v5939, %v5943
  %v5946 = vmax.f32 %v5945, 0.0
  %v5947 = vld [vmem:[%s11] sm:$0xff]
  %v5948 = vld [vmem:[%s11 + $0x8] sm:$0xff]
  %v5949 = vld [vmem:[%s11 + $0x10] sm:$0xff]
  %v5950 = vld [vmem:[%s11 + $0x18] sm:$0xff]
  %v5951 = vld [vmem:[%s11 + $0x20] sm:$0xff]
  %v5952 = vld [vmem:[%s11 + $0x28] sm:$0xff]
  %v5953 = vld [vmem:[%s11 + $0x30] sm:$0xff]
  %v5954 = vld [vmem:[%s11 + $0x38] sm:$0xff]
  %v5955 = vld [vmem:[%s11 + $0x40] sm:$0xff]
  %v5956 = vld [vmem:[%s11 + $0x48] sm:$0xff]
  %v5957 = vld [vmem:[%s11 + $0x50] sm:$0xff]
  %v5958 = vld [vmem:[%s11 + $0x58] sm:$0xff]
  %v5959 = vld [vmem:[%s11 + $0x60] sm:$0xff]
  %v5960 = vld [vmem:[%s11 + $0x68] sm:$0xff]
  %v5961 = vld [vmem:[%s11 + $0x70] sm:$0xff]
  %v5962 = vld [vmem:[%s11 + $0x78] sm:$0xff]
  %v5963 = vld [vmem:[%s12] sm:$0x1]
  %v5965 = vperm.slane %v5963, 0
  %5967 = vmatpush.msra.mxu0 %v5962
  %5968 = vmatpush.msra.mxu0 %v5961
  %5969 = vmatpush.msra.mxu0 %v5960
  %5970 = vmatpush.msra.mxu0 %v5959
  %5971 = vmatpush.msra.mxu0 %v5958
  %5972 = vmatpush.msra.mxu0 %v5957
  %5973 = vmatpush.msra.mxu0 %v5956
  %5974 = vmatpush.msra.mxu0 %v5955
  %5975 = vmatpush.msra.mxu0 %v5954
  %5976 = vmatpush.msra.mxu0 %v5953
  %5977 = vmatpush.msra.mxu0 %v5952
  %5978 = vmatpush.msra.mxu0 %v5951
  %5979 = vmatpush.msra.mxu0 %v5950
  %5980 = vmatpush.msra.mxu0 %v5949
  %5981 = vmatpush.msra.mxu0 %v5948
  %5982 = vmatpush.msra.mxu0 %v5947
  %5983 = vmatmul.f32.gmra.mxu0 %v5946
  %v5984 = vpop.f32.mrf.mxu0
  %v5985 = vadd.f32 %v5965, %v5984
  %5986 = vdwg.mxu0
  %v5987 = vlaneseq
  %v5988 = vand.u32 %v5987, 127
  %vm5989 = vcmp.ge.s32.totalorder %v5988, 4
  %vm5990 = vcmp.lt.s32.totalorder %v5988, 8
  %vm5991 = vmand %vm5989, %vm5990
  %v5992 = vmax.f32 %v5985, -20.0
  %v5993 = vmin.f32 %v5992, 2.0
  %v5994 = vsel %vm5991, %v5993, %v5985
  %5995 = vst [vmem:[%s13] sm:$0x3] %v5994
  // Predicated region
  $region54: #{actor_forward.1} parent=0 // pred_check
    _
  $region55: #{actor_forward.1} parent=0 // pred_check_branch
    %5997 = sbr.rel (0) target = $region57
  $region56: #{actor_forward.1} parent=0 // pred_region
    _
  $region57: #{actor_forward.1} parent=0 // pred_fallthru
    _
  // Predicated region
  $region58: #{actor_forward.1} parent=0 // pred_check
    _
  $region59: #{actor_forward.1} parent=0 // pred_check_branch
    %5999 = sbr.rel (0) target = $region61
  $region60: #{actor_forward.1} parent=0 // pred_region
    _
  $region61: #{actor_forward.1} parent=0 // pred_fallthru
    _

</llo_original>
